<compile_context>
chip_gen: v7x
topology: tpu7x:2x2x1
jax: 0.10.0
libtpu: 0.0.40
codegen_flags: <defaults>
</compile_context>

<pallas_src>
import math
import functools

import jax
import jax.numpy as jnp
from jax.experimental import pallas as pl
from jax.experimental.pallas import tpu as pltpu


# ----------------------------- in-kernel helpers -----------------------------

def _erf(x):
    # Abramowitz & Stegun 7.1.26 polynomial erf (max err ~1.5e-7, i.e. ~f32 exact).
    p = 0.3275911
    a1, a2, a3, a4, a5 = 0.254829592, -0.284496736, 1.421413741, -1.453152027, 1.061405429
    ax = jnp.abs(x)
    t = 1.0 / (1.0 + p * ax)
    poly = ((((a5 * t + a4) * t + a3) * t + a2) * t + a1) * t
    y = 1.0 - poly * jnp.exp(-ax * ax)
    return jnp.where(x >= 0, y, -y)


def _gelu_exact(x):
    # matches torch.nn.functional.gelu (erf form)
    return 0.5 * x * (1.0 + _erf(x * 0.7071067811865475))


def _layernorm(x, g, b, eps=1e-5):
    mu = jnp.mean(x, axis=-1, keepdims=True)
    var = jnp.mean((x - mu) ** 2, axis=-1, keepdims=True)
    return (x - mu) * jax.lax.rsqrt(var + eps) * g + b


# ----------------------------- fused Pallas kernel ----------------------------

def fused_decoder_kernel(pe_ref, kmask_ref, maskt_ref, ca_ref,
                         wqkv_ref, bqkv_ref, wo_ref, bo_ref, ln_ref,
                         w1_ref, b1_ref, w2_ref, b2_ref,
                         wf_ref, bf_ref,
                         out_ref, *, num_layers, num_heads, d_model):
    """Entire decoder stack (all layers + final Linear + mask) for ONE batch element."""
    T = pe_ref.shape[0]
    hd = d_model // num_heads
    scale = 1.0 / math.sqrt(hd)

    # timequeries = zeros + sinusoidal positional encoding (PositionalEncoding forward,
    # dropout = identity in eval mode).
    x = pe_ref[...].astype(jnp.float32)          # (T, d)
    valid = kmask_ref[...] > 0.5                 # (1, T) True = attend

    for l in range(num_layers):
        ln = ln_ref[l]                           # (6, d) [g1,b1,g2,b2,g3,b3]

        # -------- self-attention: per-head weight slabs, accumulate into (T, d) --------
        acc = jnp.zeros((T, d_model), jnp.float32)
        for h in range(num_heads):
            iq = (l * 3 + 0) * num_heads + h
            ik = (l * 3 + 1) * num_heads + h
            iv = (l * 3 + 2) * num_heads + h
            qh = jnp.dot(x, wqkv_ref[iq], preferred_element_type=jnp.float32) + bqkv_ref[iq]
            kh = jnp.dot(x, wqkv_ref[ik], preferred_element_type=jnp.float32) + bqkv_ref[ik]
            vh = jnp.dot(x, wqkv_ref[iv], preferred_element_type=jnp.float32) + bqkv_ref[iv]
            s = jnp.einsum('qd,kd->qk', qh, kh,
                           preferred_element_type=jnp.float32) * scale        # (T, T)
            s = jnp.where(valid, s, -1e30)                                    # mask padded keys
            m = jnp.max(s, axis=-1, keepdims=True)
            e = jnp.exp(s - m)
            p = e * pl.reciprocal(jnp.sum(e, axis=-1, keepdims=True), approx=True)
            oh = jnp.dot(p, vh, preferred_element_type=jnp.float32)           # (T, hd)
            acc = acc + jnp.dot(oh, wo_ref[l * num_heads + h],
                                preferred_element_type=jnp.float32)           # (T, d)
        sa = acc + bo_ref[l]
        x = _layernorm(x + sa, ln[0:1, :], ln[1:2, :])

        # -------- cross-attention with length-1 memory (softmax == 1) ------------------
        # precomputed per batch & layer in plain JAX, broadcast over all queries.
        x = _layernorm(x + ca_ref[l:l + 1, :], ln[2:3, :], ln[3:4, :])

        # -------- feed-forward (gelu) ---------------------------------------------------
        h1 = jnp.dot(x, w1_ref[l], preferred_element_type=jnp.float32) + b1_ref[l]
        h1 = _gelu_exact(h1)
        ffo = jnp.dot(h1, w2_ref[l], preferred_element_type=jnp.float32) + b2_ref[l]
        x = _layernorm(x + ffo, ln[4:5, :], ln[5:6, :])

    # -------- final Linear (lane-dense, zero-padded width) + output[~mask.T] = 0 --------
    y = jnp.dot(x, wf_ref[...], preferred_element_type=jnp.float32) + bf_ref[...]
    out_ref[...] = (y * maskt_ref[...]).astype(out_ref.dtype)


# ----------------------------- wrappers ---------------------------------------

def run_fused_decoder(pe, kmask, maskt, ca, packed, *, num_layers, num_heads):
    bs = kmask.shape[0]
    T, d = pe.shape
    ff = packed['w1'].shape[-1]
    Fpad = packed['wf'].shape[-1]
    hd = d // num_heads
    kernel = functools.partial(fused_decoder_kernel, num_layers=num_layers,
                               num_heads=num_heads, d_model=d)
    zero2 = lambda b: (0, 0)
    zero3 = lambda b: (0, 0, 0)
    return pl.pallas_call(
        kernel,
        out_shape=jax.ShapeDtypeStruct((bs, T, Fpad), jnp.float32),
        grid=(bs,),
        in_specs=[
            pl.BlockSpec((T, d), zero2),                                   # positional encoding (shared)
            pl.BlockSpec((None, 1, T), lambda b: (b, 0, 0)),               # key-valid mask
            pl.BlockSpec((None, T, 1), lambda b: (b, 0, 0)),               # frame mask for zeroing
            pl.BlockSpec((None, num_layers, d), lambda b: (b, 0, 0)),      # precomputed cross-attn
            pl.BlockSpec((num_layers * 3 * num_heads, d, hd), zero3),      # per-head QKV weights
            pl.BlockSpec((num_layers * 3 * num_heads, 1, hd), zero3),      # per-head QKV biases
            pl.BlockSpec((num_layers * num_heads, hd, d), zero3),          # per-head out-proj W
            pl.BlockSpec((num_layers, 1, d), zero3),                       # out-proj bias
            pl.BlockSpec((num_layers, 6, d), zero3),                       # layernorm params
            pl.BlockSpec((num_layers, d, ff), zero3),                      # ffn W1
            pl.BlockSpec((num_layers, 1, ff), zero3),                      # ffn b1
            pl.BlockSpec((num_layers, ff, d), zero3),                      # ffn W2
            pl.BlockSpec((num_layers, 1, d), zero3),                       # ffn b2
            pl.BlockSpec((d, Fpad), zero2),                                # final W (zero-padded)
            pl.BlockSpec((1, Fpad), zero2),                                # final b (zero-padded)
        ],
        out_specs=pl.BlockSpec((None, T, Fpad), lambda b: (b, 0, 0)),
        compiler_params=pltpu.CompilerParams(dimension_semantics=("parallel",)),
    )(pe, kmask, maskt, ca,
      packed['wqkv'], packed['bqkv'], packed['wo'], packed['bo'], packed['ln'],
      packed['w1'], packed['b1'], packed['w2'], packed['b2'],
      packed['wf'], packed['bf'])


def pack_decoder_params(params, *, d, num_heads, out_pad=128):
    """Host-side (plain JAX) repack of per-layer weights into stacked, per-head slabs."""
    layers = params['layers']
    hd = d // num_heads
    # self-attn in_proj: (d, 3d) -> (3*H, d, hd)  (Q heads, K heads, V heads)
    wqkv = jnp.concatenate(
        [lp['swin'].reshape(d, 3 * num_heads, hd).transpose(1, 0, 2) for lp in layers], axis=0)
    bqkv = jnp.concatenate(
        [lp['sbin'].reshape(3 * num_heads, 1, hd) for lp in layers], axis=0)
    # self-attn out_proj: (d, d) -> (H, hd, d)
    wo = jnp.concatenate([lp['swo'].reshape(num_heads, hd, d) for lp in layers], axis=0)
    bo = jnp.stack([lp['sbo'] for lp in layers], axis=0)            # (L, 1, d)
    ln = jnp.stack([lp['ln'] for lp in layers], axis=0)             # (L, 6, d)
    w1 = jnp.stack([lp['w1'] for lp in layers], axis=0)             # (L, d, ff)
    b1 = jnp.stack([lp['b1'] for lp in layers], axis=0)             # (L, 1, ff)
    w2 = jnp.stack([lp['w2'] for lp in layers], axis=0)             # (L, ff, d)
    b2 = jnp.stack([lp['b2'] for lp in layers], axis=0)             # (L, 1, d)
    # final layer, zero-padded to a lane-dense width (multiple of 128)
    F = params['final_w'].shape[1]
    Fpad = ((F + out_pad - 1) // out_pad) * out_pad
    wf = jnp.zeros((d, Fpad), jnp.float32).at[:, :F].set(params['final_w'])
    bf = jnp.zeros((1, Fpad), jnp.float32).at[:, :F].set(params['final_b'])
    return dict(wqkv=wqkv, bqkv=bqkv, wo=wo, bo=bo, ln=ln,
                w1=w1, b1=b1, w2=w2, b2=b2, wf=wf, bf=bf), F


def precompute_cross_attention(mem, layers, d):
    """Memory has sequence length 1 -> softmax over a single key == 1, so
    MHA(x, mem) = (mem @ Wv + bv) @ Wo + bo, identical for every query (exact)."""
    cas = []
    for lp in layers:
        vm = mem @ lp['cwin'][:, 2 * d:3 * d] + lp['cbin'][:, 2 * d:3 * d]   # (bs, d)
        cas.append(vm @ lp['cwo'] + lp['cbo'])                               # (bs, d)
    return jnp.stack(cas, axis=1)                                            # (bs, L, d)


def positional_encoding(T, d):
    pos = jnp.arange(T, dtype=jnp.float32)[:, None]
    div = jnp.exp(jnp.arange(0, d, 2, dtype=jnp.float32) * (-math.log(10000.0) / d))
    pe = jnp.zeros((T, d), jnp.float32)
    pe = pe.at[:, 0::2].set(jnp.sin(pos * div))
    pe = pe.at[:, 1::2].set(jnp.cos(pos * div))
    return pe


def decoder_transformer_forward(params, z, y, mask, lengths, alphas, cfg):
    del lengths  # only used by the 'time_encoding' ablation
    bs, T = mask.shape
    d = z.shape[1]
    njoints, nfeats = cfg['njoints'], cfg['nfeats']
    num_heads = cfg['num_heads']
    num_layers = len(params['layers'])
    num_classes = 35
    nact = num_classes - 25  # 10 base actions

    # ---- action one-hot + compositional-action alpha blending (glue) ----
    y_oh = jax.nn.one_hot(y, num_classes, dtype=jnp.float32)[:, :nact]
    comp = jnp.asarray(cfg['compositional_actions'], dtype=jnp.int32)   # (25, 2)
    is_comp = y > 9
    act_class = jnp.clip(y - 10, 0, comp.shape[0] - 1)
    oh1 = jax.nn.one_hot(comp[act_class, 0], nact, dtype=jnp.float32)
    oh2 = jax.nn.one_hot(comp[act_class, 1], nact, dtype=jnp.float32)
    a = alphas.astype(jnp.float32)[:, None]
    y_one_hot = jnp.where(is_comp[:, None], oh1 * a + oh2 * (1.0 - a), y_oh)

    # ---- actionlinear (tiny 10->d matmul, glue) + memory of seq length 1 ----
    actiontoken = y_one_hot @ params['actionlinear_w'] + params['actionlinear_b']
    mem = z + actiontoken                                               # (bs, d)

    # ---- PositionalEncoding: timequeries = zeros + pe (dropout = identity) ----
    pe = positional_encoding(T, d)                                      # (T, d)

    maskf = mask.astype(jnp.float32)
    kmask = maskf[:, None, :]                                           # (bs, 1, T)
    maskt = maskf[:, :, None]                                           # (bs, T, 1)

    # ---- precompute per-layer cross-attention contribution (exact shortcut) ----
    ca = precompute_cross_attention(mem, params['layers'], d)           # (bs, L, d)

    # ---- pack weights & run the single fused kernel ----
    packed, F = pack_decoder_params(params, d=d, num_heads=num_heads)
    out_pad = run_fused_decoder(pe, kmask, maskt, ca, packed,
                                num_layers=num_layers, num_heads=num_heads)

    out = out_pad[:, :, :F].reshape(bs, T, njoints, nfeats)
    # PyTorch: (T, bs, nj, nf).permute(1, 2, 3, 0) -> (bs, nj, nf, T)
    return jnp.transpose(out, (0, 2, 3, 1))


# ----------------------------- parameter init ---------------------------------

def init_params(key, *, d, ff, num_layers, input_feats, nact):
    s = 0.02

    def nxt():
        nonlocal key
        key, sub = jax.random.split(key)
        return sub

    layers = []
    ln = jnp.concatenate([jnp.ones((1, d), jnp.float32),
                          jnp.zeros((1, d), jnp.float32)] * 3, axis=0)   # g1,b1,g2,b2,g3,b3
    for _ in range(num_layers):
        layers.append(dict(
            swin=jax.random.normal(nxt(), (d, 3 * d), jnp.float32) * s,
            sbin=jax.random.normal(nxt(), (1, 3 * d), jnp.float32) * s,
            swo=jax.random.normal(nxt(), (d, d), jnp.float32) * s,
            sbo=jax.random.normal(nxt(), (1, d), jnp.float32) * s,
            cwin=jax.random.normal(nxt(), (d, 3 * d), jnp.float32) * s,
            cbin=jax.random.normal(nxt(), (1, 3 * d), jnp.float32) * s,
            cwo=jax.random.normal(nxt(), (d, d), jnp.float32) * s,
            cbo=jax.random.normal(nxt(), (1, d), jnp.float32) * s,
            ln=ln,
            w1=jax.random.normal(nxt(), (d, ff), jnp.float32) * s,
            b1=jax.random.normal(nxt(), (1, ff), jnp.float32) * s,
            w2=jax.random.normal(nxt(), (ff, d), jnp.float32) * s,
            b2=jax.random.normal(nxt(), (1, d), jnp.float32) * s,
        ))
    return dict(
        layers=layers,
        final_w=jax.random.normal(nxt(), (d, input_feats), jnp.float32) * s,
        final_b=jax.random.normal(nxt(), (1, input_feats), jnp.float32) * s,
        actionlinear_w=jax.random.normal(nxt(), (nact, d), jnp.float32) * s,
        actionlinear_b=jax.random.normal(nxt(), (d,), jnp.float32) * s,
        # actionBiases exists in the PyTorch module but is unused for ablation=None
        actionBiases=jax.random.normal(nxt(), (35, d), jnp.float32),
    )


# ----------------------------- main --------------------------------------------

if __name__ == "__main__":
    bs, T = 2, 16            # batch, nframes
    d = 64                   # latent_dim
    num_heads = 4
    ff = 128                 # ff_size
    num_layers = 2
    njoints, nfeats = 6, 4
    input_feats = njoints * nfeats
    compositional_actions = [(i % 10, (i + 3) % 10) for i in range(25)]

    key = jax.random.PRNGKey(0)
    kp, kz = jax.random.split(key)
    params = init_params(kp, d=d, ff=ff, num_layers=num_layers,
                         input_feats=input_feats, nact=10)

    z = jax.random.normal(kz, (bs, d), jnp.float32)
    y = jnp.array([3, 12], dtype=jnp.int32)         # one base action, one compositional (>9)
    lengths = jnp.array([T, 10], dtype=jnp.int32)
    mask = jnp.arange(T)[None, :] < lengths[:, None]
    alphas = jnp.array([0.3, 0.7], jnp.float32)

    cfg = dict(njoints=njoints, nfeats=nfeats, num_heads=num_heads,
               compositional_actions=compositional_actions)

    out = decoder_transformer_forward(params, z, y, mask, lengths, alphas, cfg)
    out = jax.block_until_ready(out)

    assert out.shape == (bs, njoints, nfeats, T), out.shape
    assert bool(jnp.all(jnp.isfinite(out)))
    # frames beyond each sequence length must be zeroed (output[~mask.T] = 0)
    assert bool(jnp.all(out[1, :, :, 10:] == 0.0))

    print("KERNEL_OK")
</pallas_src>

<mosaic_0001>
module attributes {stable_mosaic.version = 11 : i64} {
  func.func @fused_decoder_kernel(%arg0: i32, %arg1: memref<16x64xf32, #tpu.memory_space<vmem>>, %arg2: memref<1x1x16xf32, #tpu.memory_space<vmem>>, %arg3: memref<1x16x1xf32, #tpu.memory_space<vmem>>, %arg4: memref<1x2x64xf32, #tpu.memory_space<vmem>>, %arg5: memref<24x64x16xf32, #tpu.memory_space<vmem>>, %arg6: memref<24x1x16xf32, #tpu.memory_space<vmem>>, %arg7: memref<8x16x64xf32, #tpu.memory_space<vmem>>, %arg8: memref<2x1x64xf32, #tpu.memory_space<vmem>>, %arg9: memref<2x6x64xf32, #tpu.memory_space<vmem>>, %arg10: memref<2x64x128xf32, #tpu.memory_space<vmem>>, %arg11: memref<2x1x128xf32, #tpu.memory_space<vmem>>, %arg12: memref<2x128x64xf32, #tpu.memory_space<vmem>>, %arg13: memref<2x1x64xf32, #tpu.memory_space<vmem>>, %arg14: memref<64x128xf32, #tpu.memory_space<vmem>>, %arg15: memref<1x128xf32, #tpu.memory_space<vmem>>, %arg16: memref<1x16x128xf32, #tpu.memory_space<vmem>>) attributes {dimension_semantics = [#tpu.dimension_semantics<parallel>], iteration_bounds = array<i64: 2>, scalar_prefetch = 0 : i64, scratch_operands = 0 : i64, tpu.core_type = #tpu.core_type<tc>, window_params = [{pipeline_mode = #tpu.pipeline_mode<synchronous>, transform_indices = @transform_0, window_bounds = array<i64: 16, 64>}, {transform_indices = @transform_1, window_bounds = array<i64: 1, 1, 16>}, {transform_indices = @transform_2, window_bounds = array<i64: 1, 16, 1>}, {transform_indices = @transform_3, window_bounds = array<i64: 1, 2, 64>}, {pipeline_mode = #tpu.pipeline_mode<synchronous>, transform_indices = @transform_4, window_bounds = array<i64: 24, 64, 16>}, {pipeline_mode = #tpu.pipeline_mode<synchronous>, transform_indices = @transform_5, window_bounds = array<i64: 24, 1, 16>}, {pipeline_mode = #tpu.pipeline_mode<synchronous>, transform_indices = @transform_6, window_bounds = array<i64: 8, 16, 64>}, {pipeline_mode = #tpu.pipeline_mode<synchronous>, transform_indices = @transform_7, window_bounds = array<i64: 2, 1, 64>}, {pipeline_mode = #tpu.pipeline_mode<synchronous>, transform_indices = @transform_8, window_bounds = array<i64: 2, 6, 64>}, {pipeline_mode = #tpu.pipeline_mode<synchronous>, transform_indices = @transform_9, window_bounds = array<i64: 2, 64, 128>}, {pipeline_mode = #tpu.pipeline_mode<synchronous>, transform_indices = @transform_10, window_bounds = array<i64: 2, 1, 128>}, {pipeline_mode = #tpu.pipeline_mode<synchronous>, transform_indices = @transform_11, window_bounds = array<i64: 2, 128, 64>}, {pipeline_mode = #tpu.pipeline_mode<synchronous>, transform_indices = @transform_12, window_bounds = array<i64: 2, 1, 64>}, {pipeline_mode = #tpu.pipeline_mode<synchronous>, transform_indices = @transform_13, window_bounds = array<i64: 64, 128>}, {pipeline_mode = #tpu.pipeline_mode<synchronous>, transform_indices = @transform_14, window_bounds = array<i64: 1, 128>}, {transform_indices = @transform_15, window_bounds = array<i64: 1, 16, 128>}]} {
    %c0 = arith.constant 0 : index
    %c0_0 = arith.constant 0 : index
    %0 = vector.load %arg1[%c0, %c0_0] : memref<16x64xf32, #tpu.memory_space<vmem>>, vector<16x64xf32>
    %c0_1 = arith.constant 0 : index
    %c0_2 = arith.constant 0 : index
    %c0_3 = arith.constant 0 : index
    %1 = vector.load %arg2[%c0_1, %c0_2, %c0_3] : memref<1x1x16xf32, #tpu.memory_space<vmem>>, vector<1x1x16xf32>
    %2 = vector.shape_cast %1 : vector<1x1x16xf32> to vector<1x16xf32>
    %cst = arith.constant 5.000000e-01 : f32
    %3 = vector.broadcast %cst : f32 to vector<1x16xf32>
    %4 = arith.cmpf ogt, %2, %3 : vector<1x16xf32>
    %c0_4 = arith.constant 0 : index
    %c0_5 = arith.constant 0 : index
    %c0_6 = arith.constant 0 : index
    %5 = vector.load %arg9[%c0_4, %c0_5, %c0_6] : memref<2x6x64xf32, #tpu.memory_space<vmem>>, vector<1x6x64xf32>
    %6 = vector.shape_cast %5 : vector<1x6x64xf32> to vector<6x64xf32>
    %cst_7 = arith.constant 0.000000e+00 : f32
    %7 = vector.broadcast %cst_7 : f32 to vector<16x64xf32>
    %c0_8 = arith.constant 0 : index
    %c0_9 = arith.constant 0 : index
    %c0_10 = arith.constant 0 : index
    %8 = vector.load %arg5[%c0_8, %c0_9, %c0_10] : memref<24x64x16xf32, #tpu.memory_space<vmem>>, vector<1x64x16xf32>
    %9 = vector.shape_cast %8 : vector<1x64x16xf32> to vector<64x16xf32>
    %cst_11 = arith.constant dense<0.000000e+00> : vector<16x16xf32>
    %10 = tpu.matmul %0, %9, %cst_11 {dimension_numbers = #tpu.dot_dimension_numbers<[1], [0], [0], [1], [0, 0, 1, 1], [], []>} : vector<16x64xf32>, vector<64x16xf32>, vector<16x16xf32> -> vector<16x16xf32>
    %c0_12 = arith.constant 0 : index
    %c0_13 = arith.constant 0 : index
    %c0_14 = arith.constant 0 : index
    %11 = vector.load %arg6[%c0_12, %c0_13, %c0_14] : memref<24x1x16xf32, #tpu.memory_space<vmem>>, vector<1x1x16xf32>
    %12 = vector.shape_cast %11 : vector<1x1x16xf32> to vector<1x16xf32>
    %13 = vector.broadcast %12 : vector<1x16xf32> to vector<16x16xf32>
    %14 = arith.addf %10, %13 : vector<16x16xf32>
    %c4 = arith.constant 4 : index
    %c0_15 = arith.constant 0 : index
    %c0_16 = arith.constant 0 : index
    %15 = vector.load %arg5[%c4, %c0_15, %c0_16] : memref<24x64x16xf32, #tpu.memory_space<vmem>>, vector<1x64x16xf32>
    %16 = vector.shape_cast %15 : vector<1x64x16xf32> to vector<64x16xf32>
    %cst_17 = arith.constant dense<0.000000e+00> : vector<16x16xf32>
    %17 = tpu.matmul %0, %16, %cst_17 {dimension_numbers = #tpu.dot_dimension_numbers<[1], [0], [0], [1], [0, 0, 1, 1], [], []>} : vector<16x64xf32>, vector<64x16xf32>, vector<16x16xf32> -> vector<16x16xf32>
    %c4_18 = arith.constant 4 : index
    %c0_19 = arith.constant 0 : index
    %c0_20 = arith.constant 0 : index
    %18 = vector.load %arg6[%c4_18, %c0_19, %c0_20] : memref<24x1x16xf32, #tpu.memory_space<vmem>>, vector<1x1x16xf32>
    %19 = vector.shape_cast %18 : vector<1x1x16xf32> to vector<1x16xf32>
    %20 = vector.broadcast %19 : vector<1x16xf32> to vector<16x16xf32>
    %21 = arith.addf %17, %20 : vector<16x16xf32>
    %c8 = arith.constant 8 : index
    %c0_21 = arith.constant 0 : index
    %c0_22 = arith.constant 0 : index
    %22 = vector.load %arg5[%c8, %c0_21, %c0_22] : memref<24x64x16xf32, #tpu.memory_space<vmem>>, vector<1x64x16xf32>
    %23 = vector.shape_cast %22 : vector<1x64x16xf32> to vector<64x16xf32>
    %cst_23 = arith.constant dense<0.000000e+00> : vector<16x16xf32>
    %24 = tpu.matmul %0, %23, %cst_23 {dimension_numbers = #tpu.dot_dimension_numbers<[1], [0], [0], [1], [0, 0, 1, 1], [], []>} : vector<16x64xf32>, vector<64x16xf32>, vector<16x16xf32> -> vector<16x16xf32>
    %c8_24 = arith.constant 8 : index
    %c0_25 = arith.constant 0 : index
    %c0_26 = arith.constant 0 : index
    %25 = vector.load %arg6[%c8_24, %c0_25, %c0_26] : memref<24x1x16xf32, #tpu.memory_space<vmem>>, vector<1x1x16xf32>
    %26 = vector.shape_cast %25 : vector<1x1x16xf32> to vector<1x16xf32>
    %27 = vector.broadcast %26 : vector<1x16xf32> to vector<16x16xf32>
    %28 = arith.addf %24, %27 : vector<16x16xf32>
    "tpu.trace_start"() <{level = 10 : i32, message = "qd,kd->qk"}> : () -> ()
    %cst_27 = arith.constant dense<0.000000e+00> : vector<16x16xf32>
    %29 = tpu.matmul %14, %21, %cst_27 {dimension_numbers = #tpu.dot_dimension_numbers<[1], [1], [0], [0], [0, 0, 1, 0], [], []>} : vector<16x16xf32>, vector<16x16xf32>, vector<16x16xf32> -> vector<16x16xf32>
    "tpu.trace_stop"() : () -> ()
    %cst_28 = arith.constant 2.500000e-01 : f32
    %30 = vector.broadcast %cst_28 : f32 to vector<16x16xf32>
    %31 = arith.mulf %29, %30 : vector<16x16xf32>
    %cst_29 = arith.constant -1.000000e+30 : f32
    %32 = vector.shape_cast %4 : vector<1x16xi1> to vector<1x16xi1>
    %33 = vector.broadcast %32 : vector<1x16xi1> to vector<16x16xi1>
    %34 = vector.broadcast %cst_29 : f32 to vector<16x16xf32>
    %35 = arith.select %33, %31, %34 : vector<16x16xi1>, vector<16x16xf32>
    %cst_30 = arith.constant dense<0xFF800000> : vector<16xf32>
    %36 = vector.multi_reduction <maximumf>, %35, %cst_30 [1] : vector<16x16xf32> to vector<16xf32>
    %37 = vector.shape_cast %36 : vector<16xf32> to vector<16x1xf32>
    %38 = vector.broadcast %37 : vector<16x1xf32> to vector<16x16xf32>
    %39 = arith.subf %35, %38 : vector<16x16xf32>
    %40 = math.exp %39 : vector<16x16xf32>
    %cst_31 = arith.constant dense<0.000000e+00> : vector<16xf32>
    %41 = vector.multi_reduction <add>, %40, %cst_31 [1] : vector<16x16xf32> to vector<16xf32>
    %42 = vector.shape_cast %41 : vector<16xf32> to vector<16x1xf32>
    %43 = tpu.reciprocal %42 {approx = true} : vector<16x1xf32> -> vector<16x1xf32>
    %44 = vector.broadcast %43 : vector<16x1xf32> to vector<16x16xf32>
    %45 = arith.mulf %40, %44 : vector<16x16xf32>
    %cst_32 = arith.constant dense<0.000000e+00> : vector<16x16xf32>
    %46 = tpu.matmul %45, %28, %cst_32 {dimension_numbers = #tpu.dot_dimension_numbers<[1], [0], [0], [1], [0, 0, 1, 1], [], []>} : vector<16x16xf32>, vector<16x16xf32>, vector<16x16xf32> -> vector<16x16xf32>
    %c0_33 = arith.constant 0 : index
    %c0_34 = arith.constant 0 : index
    %c0_35 = arith.constant 0 : index
    %47 = vector.load %arg7[%c0_33, %c0_34, %c0_35] : memref<8x16x64xf32, #tpu.memory_space<vmem>>, vector<1x16x64xf32>
    %48 = vector.shape_cast %47 : vector<1x16x64xf32> to vector<16x64xf32>
    %cst_36 = arith.constant dense<0.000000e+00> : vector<16x64xf32>
    %49 = tpu.matmul %46, %48, %cst_36 {dimension_numbers = #tpu.dot_dimension_numbers<[1], [0], [0], [1], [0, 0, 1, 1], [], []>} : vector<16x16xf32>, vector<16x64xf32>, vector<16x64xf32> -> vector<16x64xf32>
    %50 = arith.addf %7, %49 : vector<16x64xf32>
    %c1 = arith.constant 1 : index
    %c0_37 = arith.constant 0 : index
    %c0_38 = arith.constant 0 : index
    %51 = vector.load %arg5[%c1, %c0_37, %c0_38] : memref<24x64x16xf32, #tpu.memory_space<vmem>>, vector<1x64x16xf32>
    %52 = vector.shape_cast %51 : vector<1x64x16xf32> to vector<64x16xf32>
    %cst_39 = arith.constant dense<0.000000e+00> : vector<16x16xf32>
    %53 = tpu.matmul %0, %52, %cst_39 {dimension_numbers = #tpu.dot_dimension_numbers<[1], [0], [0], [1], [0, 0, 1, 1], [], []>} : vector<16x64xf32>, vector<64x16xf32>, vector<16x16xf32> -> vector<16x16xf32>
    %c1_40 = arith.constant 1 : index
    %c0_41 = arith.constant 0 : index
    %c0_42 = arith.constant 0 : index
    %54 = vector.load %arg6[%c1_40, %c0_41, %c0_42] : memref<24x1x16xf32, #tpu.memory_space<vmem>>, vector<1x1x16xf32>
    %55 = vector.shape_cast %54 : vector<1x1x16xf32> to vector<1x16xf32>
    %56 = vector.broadcast %55 : vector<1x16xf32> to vector<16x16xf32>
    %57 = arith.addf %53, %56 : vector<16x16xf32>
    %c5 = arith.constant 5 : index
    %c0_43 = arith.constant 0 : index
    %c0_44 = arith.constant 0 : index
    %58 = vector.load %arg5[%c5, %c0_43, %c0_44] : memref<24x64x16xf32, #tpu.memory_space<vmem>>, vector<1x64x16xf32>
    %59 = vector.shape_cast %58 : vector<1x64x16xf32> to vector<64x16xf32>
    %cst_45 = arith.constant dense<0.000000e+00> : vector<16x16xf32>
    %60 = tpu.matmul %0, %59, %cst_45 {dimension_numbers = #tpu.dot_dimension_numbers<[1], [0], [0], [1], [0, 0, 1, 1], [], []>} : vector<16x64xf32>, vector<64x16xf32>, vector<16x16xf32> -> vector<16x16xf32>
    %c5_46 = arith.constant 5 : index
    %c0_47 = arith.constant 0 : index
    %c0_48 = arith.constant 0 : index
    %61 = vector.load %arg6[%c5_46, %c0_47, %c0_48] : memref<24x1x16xf32, #tpu.memory_space<vmem>>, vector<1x1x16xf32>
    %62 = vector.shape_cast %61 : vector<1x1x16xf32> to vector<1x16xf32>
    %63 = vector.broadcast %62 : vector<1x16xf32> to vector<16x16xf32>
    %64 = arith.addf %60, %63 : vector<16x16xf32>
    %c9 = arith.constant 9 : index
    %c0_49 = arith.constant 0 : index
    %c0_50 = arith.constant 0 : index
    %65 = vector.load %arg5[%c9, %c0_49, %c0_50] : memref<24x64x16xf32, #tpu.memory_space<vmem>>, vector<1x64x16xf32>
    %66 = vector.shape_cast %65 : vector<1x64x16xf32> to vector<64x16xf32>
    %cst_51 = arith.constant dense<0.000000e+00> : vector<16x16xf32>
    %67 = tpu.matmul %0, %66, %cst_51 {dimension_numbers = #tpu.dot_dimension_numbers<[1], [0], [0], [1], [0, 0, 1, 1], [], []>} : vector<16x64xf32>, vector<64x16xf32>, vector<16x16xf32> -> vector<16x16xf32>
    %c9_52 = arith.constant 9 : index
    %c0_53 = arith.constant 0 : index
    %c0_54 = arith.constant 0 : index
    %68 = vector.load %arg6[%c9_52, %c0_53, %c0_54] : memref<24x1x16xf32, #tpu.memory_space<vmem>>, vector<1x1x16xf32>
    %69 = vector.shape_cast %68 : vector<1x1x16xf32> to vector<1x16xf32>
    %70 = vector.broadcast %69 : vector<1x16xf32> to vector<16x16xf32>
    %71 = arith.addf %67, %70 : vector<16x16xf32>
    "tpu.trace_start"() <{level = 10 : i32, message = "qd,kd->qk"}> : () -> ()
    %cst_55 = arith.constant dense<0.000000e+00> : vector<16x16xf32>
    %72 = tpu.matmul %57, %64, %cst_55 {dimension_numbers = #tpu.dot_dimension_numbers<[1], [1], [0], [0], [0, 0, 1, 0], [], []>} : vector<16x16xf32>, vector<16x16xf32>, vector<16x16xf32> -> vector<16x16xf32>
    "tpu.trace_stop"() : () -> ()
    %cst_56 = arith.constant 2.500000e-01 : f32
    %73 = vector.broadcast %cst_56 : f32 to vector<16x16xf32>
    %74 = arith.mulf %72, %73 : vector<16x16xf32>
    %cst_57 = arith.constant -1.000000e+30 : f32
    %75 = vector.shape_cast %4 : vector<1x16xi1> to vector<1x16xi1>
    %76 = vector.broadcast %75 : vector<1x16xi1> to vector<16x16xi1>
    %77 = vector.broadcast %cst_57 : f32 to vector<16x16xf32>
    %78 = arith.select %76, %74, %77 : vector<16x16xi1>, vector<16x16xf32>
    %cst_58 = arith.constant dense<0xFF800000> : vector<16xf32>
    %79 = vector.multi_reduction <maximumf>, %78, %cst_58 [1] : vector<16x16xf32> to vector<16xf32>
    %80 = vector.shape_cast %79 : vector<16xf32> to vector<16x1xf32>
    %81 = vector.broadcast %80 : vector<16x1xf32> to vector<16x16xf32>
    %82 = arith.subf %78, %81 : vector<16x16xf32>
    %83 = math.exp %82 : vector<16x16xf32>
    %cst_59 = arith.constant dense<0.000000e+00> : vector<16xf32>
    %84 = vector.multi_reduction <add>, %83, %cst_59 [1] : vector<16x16xf32> to vector<16xf32>
    %85 = vector.shape_cast %84 : vector<16xf32> to vector<16x1xf32>
    %86 = tpu.reciprocal %85 {approx = true} : vector<16x1xf32> -> vector<16x1xf32>
    %87 = vector.broadcast %86 : vector<16x1xf32> to vector<16x16xf32>
    %88 = arith.mulf %83, %87 : vector<16x16xf32>
    %cst_60 = arith.constant dense<0.000000e+00> : vector<16x16xf32>
    %89 = tpu.matmul %88, %71, %cst_60 {dimension_numbers = #tpu.dot_dimension_numbers<[1], [0], [0], [1], [0, 0, 1, 1], [], []>} : vector<16x16xf32>, vector<16x16xf32>, vector<16x16xf32> -> vector<16x16xf32>
    %c1_61 = arith.constant 1 : index
    %c0_62 = arith.constant 0 : index
    %c0_63 = arith.constant 0 : index
    %90 = vector.load %arg7[%c1_61, %c0_62, %c0_63] : memref<8x16x64xf32, #tpu.memory_space<vmem>>, vector<1x16x64xf32>
    %91 = vector.shape_cast %90 : vector<1x16x64xf32> to vector<16x64xf32>
    %cst_64 = arith.constant dense<0.000000e+00> : vector<16x64xf32>
    %92 = tpu.matmul %89, %91, %cst_64 {dimension_numbers = #tpu.dot_dimension_numbers<[1], [0], [0], [1], [0, 0, 1, 1], [], []>} : vector<16x16xf32>, vector<16x64xf32>, vector<16x64xf32> -> vector<16x64xf32>
    %93 = arith.addf %50, %92 : vector<16x64xf32>
    %c2 = arith.constant 2 : index
    %c0_65 = arith.constant 0 : index
    %c0_66 = arith.constant 0 : index
    %94 = vector.load %arg5[%c2, %c0_65, %c0_66] : memref<24x64x16xf32, #tpu.memory_space<vmem>>, vector<1x64x16xf32>
    %95 = vector.shape_cast %94 : vector<1x64x16xf32> to vector<64x16xf32>
    %cst_67 = arith.constant dense<0.000000e+00> : vector<16x16xf32>
    %96 = tpu.matmul %0, %95, %cst_67 {dimension_numbers = #tpu.dot_dimension_numbers<[1], [0], [0], [1], [0, 0, 1, 1], [], []>} : vector<16x64xf32>, vector<64x16xf32>, vector<16x16xf32> -> vector<16x16xf32>
    %c2_68 = arith.constant 2 : index
    %c0_69 = arith.constant 0 : index
    %c0_70 = arith.constant 0 : index
    %97 = vector.load %arg6[%c2_68, %c0_69, %c0_70] : memref<24x1x16xf32, #tpu.memory_space<vmem>>, vector<1x1x16xf32>
    %98 = vector.shape_cast %97 : vector<1x1x16xf32> to vector<1x16xf32>
    %99 = vector.broadcast %98 : vector<1x16xf32> to vector<16x16xf32>
    %100 = arith.addf %96, %99 : vector<16x16xf32>
    %c6 = arith.constant 6 : index
    %c0_71 = arith.constant 0 : index
    %c0_72 = arith.constant 0 : index
    %101 = vector.load %arg5[%c6, %c0_71, %c0_72] : memref<24x64x16xf32, #tpu.memory_space<vmem>>, vector<1x64x16xf32>
    %102 = vector.shape_cast %101 : vector<1x64x16xf32> to vector<64x16xf32>
    %cst_73 = arith.constant dense<0.000000e+00> : vector<16x16xf32>
    %103 = tpu.matmul %0, %102, %cst_73 {dimension_numbers = #tpu.dot_dimension_numbers<[1], [0], [0], [1], [0, 0, 1, 1], [], []>} : vector<16x64xf32>, vector<64x16xf32>, vector<16x16xf32> -> vector<16x16xf32>
    %c6_74 = arith.constant 6 : index
    %c0_75 = arith.constant 0 : index
    %c0_76 = arith.constant 0 : index
    %104 = vector.load %arg6[%c6_74, %c0_75, %c0_76] : memref<24x1x16xf32, #tpu.memory_space<vmem>>, vector<1x1x16xf32>
    %105 = vector.shape_cast %104 : vector<1x1x16xf32> to vector<1x16xf32>
    %106 = vector.broadcast %105 : vector<1x16xf32> to vector<16x16xf32>
    %107 = arith.addf %103, %106 : vector<16x16xf32>
    %c10 = arith.constant 10 : index
    %c0_77 = arith.constant 0 : index
    %c0_78 = arith.constant 0 : index
    %108 = vector.load %arg5[%c10, %c0_77, %c0_78] : memref<24x64x16xf32, #tpu.memory_space<vmem>>, vector<1x64x16xf32>
    %109 = vector.shape_cast %108 : vector<1x64x16xf32> to vector<64x16xf32>
    %cst_79 = arith.constant dense<0.000000e+00> : vector<16x16xf32>
    %110 = tpu.matmul %0, %109, %cst_79 {dimension_numbers = #tpu.dot_dimension_numbers<[1], [0], [0], [1], [0, 0, 1, 1], [], []>} : vector<16x64xf32>, vector<64x16xf32>, vector<16x16xf32> -> vector<16x16xf32>
    %c10_80 = arith.constant 10 : index
    %c0_81 = arith.constant 0 : index
    %c0_82 = arith.constant 0 : index
    %111 = vector.load %arg6[%c10_80, %c0_81, %c0_82] : memref<24x1x16xf32, #tpu.memory_space<vmem>>, vector<1x1x16xf32>
    %112 = vector.shape_cast %111 : vector<1x1x16xf32> to vector<1x16xf32>
    %113 = vector.broadcast %112 : vector<1x16xf32> to vector<16x16xf32>
    %114 = arith.addf %110, %113 : vector<16x16xf32>
    "tpu.trace_start"() <{level = 10 : i32, message = "qd,kd->qk"}> : () -> ()
    %cst_83 = arith.constant dense<0.000000e+00> : vector<16x16xf32>
    %115 = tpu.matmul %100, %107, %cst_83 {dimension_numbers = #tpu.dot_dimension_numbers<[1], [1], [0], [0], [0, 0, 1, 0], [], []>} : vector<16x16xf32>, vector<16x16xf32>, vector<16x16xf32> -> vector<16x16xf32>
    "tpu.trace_stop"() : () -> ()
    %cst_84 = arith.constant 2.500000e-01 : f32
    %116 = vector.broadcast %cst_84 : f32 to vector<16x16xf32>
    %117 = arith.mulf %115, %116 : vector<16x16xf32>
    %cst_85 = arith.constant -1.000000e+30 : f32
    %118 = vector.shape_cast %4 : vector<1x16xi1> to vector<1x16xi1>
    %119 = vector.broadcast %118 : vector<1x16xi1> to vector<16x16xi1>
    %120 = vector.broadcast %cst_85 : f32 to vector<16x16xf32>
    %121 = arith.select %119, %117, %120 : vector<16x16xi1>, vector<16x16xf32>
    %cst_86 = arith.constant dense<0xFF800000> : vector<16xf32>
    %122 = vector.multi_reduction <maximumf>, %121, %cst_86 [1] : vector<16x16xf32> to vector<16xf32>
    %123 = vector.shape_cast %122 : vector<16xf32> to vector<16x1xf32>
    %124 = vector.broadcast %123 : vector<16x1xf32> to vector<16x16xf32>
    %125 = arith.subf %121, %124 : vector<16x16xf32>
    %126 = math.exp %125 : vector<16x16xf32>
    %cst_87 = arith.constant dense<0.000000e+00> : vector<16xf32>
    %127 = vector.multi_reduction <add>, %126, %cst_87 [1] : vector<16x16xf32> to vector<16xf32>
    %128 = vector.shape_cast %127 : vector<16xf32> to vector<16x1xf32>
    %129 = tpu.reciprocal %128 {approx = true} : vector<16x1xf32> -> vector<16x1xf32>
    %130 = vector.broadcast %129 : vector<16x1xf32> to vector<16x16xf32>
    %131 = arith.mulf %126, %130 : vector<16x16xf32>
    %cst_88 = arith.constant dense<0.000000e+00> : vector<16x16xf32>
    %132 = tpu.matmul %131, %114, %cst_88 {dimension_numbers = #tpu.dot_dimension_numbers<[1], [0], [0], [1], [0, 0, 1, 1], [], []>} : vector<16x16xf32>, vector<16x16xf32>, vector<16x16xf32> -> vector<16x16xf32>
    %c2_89 = arith.constant 2 : index
    %c0_90 = arith.constant 0 : index
    %c0_91 = arith.constant 0 : index
    %133 = vector.load %arg7[%c2_89, %c0_90, %c0_91] : memref<8x16x64xf32, #tpu.memory_space<vmem>>, vector<1x16x64xf32>
    %134 = vector.shape_cast %133 : vector<1x16x64xf32> to vector<16x64xf32>
    %cst_92 = arith.constant dense<0.000000e+00> : vector<16x64xf32>
    %135 = tpu.matmul %132, %134, %cst_92 {dimension_numbers = #tpu.dot_dimension_numbers<[1], [0], [0], [1], [0, 0, 1, 1], [], []>} : vector<16x16xf32>, vector<16x64xf32>, vector<16x64xf32> -> vector<16x64xf32>
    %136 = arith.addf %93, %135 : vector<16x64xf32>
    %c3 = arith.constant 3 : index
    %c0_93 = arith.constant 0 : index
    %c0_94 = arith.constant 0 : index
    %137 = vector.load %arg5[%c3, %c0_93, %c0_94] : memref<24x64x16xf32, #tpu.memory_space<vmem>>, vector<1x64x16xf32>
    %138 = vector.shape_cast %137 : vector<1x64x16xf32> to vector<64x16xf32>
    %cst_95 = arith.constant dense<0.000000e+00> : vector<16x16xf32>
    %139 = tpu.matmul %0, %138, %cst_95 {dimension_numbers = #tpu.dot_dimension_numbers<[1], [0], [0], [1], [0, 0, 1, 1], [], []>} : vector<16x64xf32>, vector<64x16xf32>, vector<16x16xf32> -> vector<16x16xf32>
    %c3_96 = arith.constant 3 : index
    %c0_97 = arith.constant 0 : index
    %c0_98 = arith.constant 0 : index
    %140 = vector.load %arg6[%c3_96, %c0_97, %c0_98] : memref<24x1x16xf32, #tpu.memory_space<vmem>>, vector<1x1x16xf32>
    %141 = vector.shape_cast %140 : vector<1x1x16xf32> to vector<1x16xf32>
    %142 = vector.broadcast %141 : vector<1x16xf32> to vector<16x16xf32>
    %143 = arith.addf %139, %142 : vector<16x16xf32>
    %c7 = arith.constant 7 : index
    %c0_99 = arith.constant 0 : index
    %c0_100 = arith.constant 0 : index
    %144 = vector.load %arg5[%c7, %c0_99, %c0_100] : memref<24x64x16xf32, #tpu.memory_space<vmem>>, vector<1x64x16xf32>
    %145 = vector.shape_cast %144 : vector<1x64x16xf32> to vector<64x16xf32>
    %cst_101 = arith.constant dense<0.000000e+00> : vector<16x16xf32>
    %146 = tpu.matmul %0, %145, %cst_101 {dimension_numbers = #tpu.dot_dimension_numbers<[1], [0], [0], [1], [0, 0, 1, 1], [], []>} : vector<16x64xf32>, vector<64x16xf32>, vector<16x16xf32> -> vector<16x16xf32>
    %c7_102 = arith.constant 7 : index
    %c0_103 = arith.constant 0 : index
    %c0_104 = arith.constant 0 : index
    %147 = vector.load %arg6[%c7_102, %c0_103, %c0_104] : memref<24x1x16xf32, #tpu.memory_space<vmem>>, vector<1x1x16xf32>
    %148 = vector.shape_cast %147 : vector<1x1x16xf32> to vector<1x16xf32>
    %149 = vector.broadcast %148 : vector<1x16xf32> to vector<16x16xf32>
    %150 = arith.addf %146, %149 : vector<16x16xf32>
    %c11 = arith.constant 11 : index
    %c0_105 = arith.constant 0 : index
    %c0_106 = arith.constant 0 : index
    %151 = vector.load %arg5[%c11, %c0_105, %c0_106] : memref<24x64x16xf32, #tpu.memory_space<vmem>>, vector<1x64x16xf32>
    %152 = vector.shape_cast %151 : vector<1x64x16xf32> to vector<64x16xf32>
    %cst_107 = arith.constant dense<0.000000e+00> : vector<16x16xf32>
    %153 = tpu.matmul %0, %152, %cst_107 {dimension_numbers = #tpu.dot_dimension_numbers<[1], [0], [0], [1], [0, 0, 1, 1], [], []>} : vector<16x64xf32>, vector<64x16xf32>, vector<16x16xf32> -> vector<16x16xf32>
    %c11_108 = arith.constant 11 : index
    %c0_109 = arith.constant 0 : index
    %c0_110 = arith.constant 0 : index
    %154 = vector.load %arg6[%c11_108, %c0_109, %c0_110] : memref<24x1x16xf32, #tpu.memory_space<vmem>>, vector<1x1x16xf32>
    %155 = vector.shape_cast %154 : vector<1x1x16xf32> to vector<1x16xf32>
    %156 = vector.broadcast %155 : vector<1x16xf32> to vector<16x16xf32>
    %157 = arith.addf %153, %156 : vector<16x16xf32>
    "tpu.trace_start"() <{level = 10 : i32, message = "qd,kd->qk"}> : () -> ()
    %cst_111 = arith.constant dense<0.000000e+00> : vector<16x16xf32>
    %158 = tpu.matmul %143, %150, %cst_111 {dimension_numbers = #tpu.dot_dimension_numbers<[1], [1], [0], [0], [0, 0, 1, 0], [], []>} : vector<16x16xf32>, vector<16x16xf32>, vector<16x16xf32> -> vector<16x16xf32>
    "tpu.trace_stop"() : () -> ()
    %cst_112 = arith.constant 2.500000e-01 : f32
    %159 = vector.broadcast %cst_112 : f32 to vector<16x16xf32>
    %160 = arith.mulf %158, %159 : vector<16x16xf32>
    %cst_113 = arith.constant -1.000000e+30 : f32
    %161 = vector.shape_cast %4 : vector<1x16xi1> to vector<1x16xi1>
    %162 = vector.broadcast %161 : vector<1x16xi1> to vector<16x16xi1>
    %163 = vector.broadcast %cst_113 : f32 to vector<16x16xf32>
    %164 = arith.select %162, %160, %163 : vector<16x16xi1>, vector<16x16xf32>
    %cst_114 = arith.constant dense<0xFF800000> : vector<16xf32>
    %165 = vector.multi_reduction <maximumf>, %164, %cst_114 [1] : vector<16x16xf32> to vector<16xf32>
    %166 = vector.shape_cast %165 : vector<16xf32> to vector<16x1xf32>
    %167 = vector.broadcast %166 : vector<16x1xf32> to vector<16x16xf32>
    %168 = arith.subf %164, %167 : vector<16x16xf32>
    %169 = math.exp %168 : vector<16x16xf32>
    %cst_115 = arith.constant dense<0.000000e+00> : vector<16xf32>
    %170 = vector.multi_reduction <add>, %169, %cst_115 [1] : vector<16x16xf32> to vector<16xf32>
    %171 = vector.shape_cast %170 : vector<16xf32> to vector<16x1xf32>
    %172 = tpu.reciprocal %171 {approx = true} : vector<16x1xf32> -> vector<16x1xf32>
    %173 = vector.broadcast %172 : vector<16x1xf32> to vector<16x16xf32>
    %174 = arith.mulf %169, %173 : vector<16x16xf32>
    %cst_116 = arith.constant dense<0.000000e+00> : vector<16x16xf32>
    %175 = tpu.matmul %174, %157, %cst_116 {dimension_numbers = #tpu.dot_dimension_numbers<[1], [0], [0], [1], [0, 0, 1, 1], [], []>} : vector<16x16xf32>, vector<16x16xf32>, vector<16x16xf32> -> vector<16x16xf32>
    %c3_117 = arith.constant 3 : index
    %c0_118 = arith.constant 0 : index
    %c0_119 = arith.constant 0 : index
    %176 = vector.load %arg7[%c3_117, %c0_118, %c0_119] : memref<8x16x64xf32, #tpu.memory_space<vmem>>, vector<1x16x64xf32>
    %177 = vector.shape_cast %176 : vector<1x16x64xf32> to vector<16x64xf32>
    %cst_120 = arith.constant dense<0.000000e+00> : vector<16x64xf32>
    %178 = tpu.matmul %175, %177, %cst_120 {dimension_numbers = #tpu.dot_dimension_numbers<[1], [0], [0], [1], [0, 0, 1, 1], [], []>} : vector<16x16xf32>, vector<16x64xf32>, vector<16x64xf32> -> vector<16x64xf32>
    %179 = arith.addf %136, %178 : vector<16x64xf32>
    %c0_121 = arith.constant 0 : index
    %c0_122 = arith.constant 0 : index
    %c0_123 = arith.constant 0 : index
    %180 = vector.load %arg8[%c0_121, %c0_122, %c0_123] : memref<2x1x64xf32, #tpu.memory_space<vmem>>, vector<1x1x64xf32>
    %181 = vector.shape_cast %180 : vector<1x1x64xf32> to vector<1x64xf32>
    %182 = vector.broadcast %181 : vector<1x64xf32> to vector<16x64xf32>
    %183 = arith.addf %179, %182 : vector<16x64xf32>
    %184 = arith.addf %0, %183 : vector<16x64xf32>
    %185 = vector.extract_strided_slice %6 {offsets = [0, 0], sizes = [1, 64], strides = [1, 1]} : vector<6x64xf32> to vector<1x64xf32>
    %186 = vector.extract_strided_slice %6 {offsets = [1, 0], sizes = [1, 64], strides = [1, 1]} : vector<6x64xf32> to vector<1x64xf32>
    %cst_124 = arith.constant dense<0.000000e+00> : vector<16xf32>
    %187 = vector.multi_reduction <add>, %184, %cst_124 [1] : vector<16x64xf32> to vector<16xf32>
    %188 = vector.shape_cast %187 : vector<16xf32> to vector<16x1xf32>
    %cst_125 = arith.constant 6.400000e+01 : f32
    %189 = vector.broadcast %cst_125 : f32 to vector<16x1xf32>
    %190 = arith.divf %188, %189 : vector<16x1xf32>
    %191 = vector.broadcast %190 : vector<16x1xf32> to vector<16x64xf32>
    %192 = arith.subf %184, %191 : vector<16x64xf32>
    %193 = arith.mulf %192, %192 : vector<16x64xf32>
    %cst_126 = arith.constant dense<0.000000e+00> : vector<16xf32>
    %194 = vector.multi_reduction <add>, %193, %cst_126 [1] : vector<16x64xf32> to vector<16xf32>
    %195 = vector.shape_cast %194 : vector<16xf32> to vector<16x1xf32>
    %cst_127 = arith.constant 6.400000e+01 : f32
    %196 = vector.broadcast %cst_127 : f32 to vector<16x1xf32>
    %197 = arith.divf %195, %196 : vector<16x1xf32>
    %198 = vector.broadcast %190 : vector<16x1xf32> to vector<16x64xf32>
    %199 = arith.subf %184, %198 : vector<16x64xf32>
    %cst_128 = arith.constant 9.99999974E-6 : f32
    %200 = vector.broadcast %cst_128 : f32 to vector<16x1xf32>
    %201 = arith.addf %197, %200 : vector<16x1xf32>
    %202 = math.rsqrt %201 : vector<16x1xf32>
    %203 = vector.broadcast %202 : vector<16x1xf32> to vector<16x64xf32>
    %204 = arith.mulf %199, %203 : vector<16x64xf32>
    %205 = vector.broadcast %185 : vector<1x64xf32> to vector<16x64xf32>
    %206 = arith.mulf %204, %205 : vector<16x64xf32>
    %207 = vector.broadcast %186 : vector<1x64xf32> to vector<16x64xf32>
    %208 = arith.addf %206, %207 : vector<16x64xf32>
    %c0_129 = arith.constant 0 : index
    %c0_130 = arith.constant 0 : index
    %c0_131 = arith.constant 0 : index
    %209 = vector.load %arg4[%c0_129, %c0_130, %c0_131] : memref<1x2x64xf32, #tpu.memory_space<vmem>>, vector<1x1x64xf32>
    %210 = vector.shape_cast %209 : vector<1x1x64xf32> to vector<1x64xf32>
    %211 = vector.broadcast %210 : vector<1x64xf32> to vector<16x64xf32>
    %212 = arith.addf %208, %211 : vector<16x64xf32>
    %213 = vector.extract_strided_slice %6 {offsets = [2, 0], sizes = [1, 64], strides = [1, 1]} : vector<6x64xf32> to vector<1x64xf32>
    %214 = vector.extract_strided_slice %6 {offsets = [3, 0], sizes = [1, 64], strides = [1, 1]} : vector<6x64xf32> to vector<1x64xf32>
    %cst_132 = arith.constant dense<0.000000e+00> : vector<16xf32>
    %215 = vector.multi_reduction <add>, %212, %cst_132 [1] : vector<16x64xf32> to vector<16xf32>
    %216 = vector.shape_cast %215 : vector<16xf32> to vector<16x1xf32>
    %cst_133 = arith.constant 6.400000e+01 : f32
    %217 = vector.broadcast %cst_133 : f32 to vector<16x1xf32>
    %218 = arith.divf %216, %217 : vector<16x1xf32>
    %219 = vector.broadcast %218 : vector<16x1xf32> to vector<16x64xf32>
    %220 = arith.subf %212, %219 : vector<16x64xf32>
    %221 = arith.mulf %220, %220 : vector<16x64xf32>
    %cst_134 = arith.constant dense<0.000000e+00> : vector<16xf32>
    %222 = vector.multi_reduction <add>, %221, %cst_134 [1] : vector<16x64xf32> to vector<16xf32>
    %223 = vector.shape_cast %222 : vector<16xf32> to vector<16x1xf32>
    %cst_135 = arith.constant 6.400000e+01 : f32
    %224 = vector.broadcast %cst_135 : f32 to vector<16x1xf32>
    %225 = arith.divf %223, %224 : vector<16x1xf32>
    %226 = vector.broadcast %218 : vector<16x1xf32> to vector<16x64xf32>
    %227 = arith.subf %212, %226 : vector<16x64xf32>
    %cst_136 = arith.constant 9.99999974E-6 : f32
    %228 = vector.broadcast %cst_136 : f32 to vector<16x1xf32>
    %229 = arith.addf %225, %228 : vector<16x1xf32>
    %230 = math.rsqrt %229 : vector<16x1xf32>
    %231 = vector.broadcast %230 : vector<16x1xf32> to vector<16x64xf32>
    %232 = arith.mulf %227, %231 : vector<16x64xf32>
    %233 = vector.broadcast %213 : vector<1x64xf32> to vector<16x64xf32>
    %234 = arith.mulf %232, %233 : vector<16x64xf32>
    %235 = vector.broadcast %214 : vector<1x64xf32> to vector<16x64xf32>
    %236 = arith.addf %234, %235 : vector<16x64xf32>
    %c0_137 = arith.constant 0 : index
    %c0_138 = arith.constant 0 : index
    %c0_139 = arith.constant 0 : index
    %237 = vector.load %arg10[%c0_137, %c0_138, %c0_139] : memref<2x64x128xf32, #tpu.memory_space<vmem>>, vector<1x64x128xf32>
    %238 = vector.shape_cast %237 : vector<1x64x128xf32> to vector<64x128xf32>
    %cst_140 = arith.constant dense<0.000000e+00> : vector<16x128xf32>
    %239 = tpu.matmul %236, %238, %cst_140 {dimension_numbers = #tpu.dot_dimension_numbers<[1], [0], [0], [1], [0, 0, 1, 1], [], []>} : vector<16x64xf32>, vector<64x128xf32>, vector<16x128xf32> -> vector<16x128xf32>
    %c0_141 = arith.constant 0 : index
    %c0_142 = arith.constant 0 : index
    %c0_143 = arith.constant 0 : index
    %240 = vector.load %arg11[%c0_141, %c0_142, %c0_143] : memref<2x1x128xf32, #tpu.memory_space<vmem>>, vector<1x1x128xf32>
    %241 = vector.shape_cast %240 : vector<1x1x128xf32> to vector<1x128xf32>
    %242 = vector.broadcast %241 : vector<1x128xf32> to vector<16x128xf32>
    %243 = arith.addf %239, %242 : vector<16x128xf32>
    %cst_144 = arith.constant 5.000000e-01 : f32
    %244 = vector.broadcast %cst_144 : f32 to vector<16x128xf32>
    %245 = arith.mulf %244, %243 : vector<16x128xf32>
    %cst_145 = arith.constant 0.707106769 : f32
    %246 = vector.broadcast %cst_145 : f32 to vector<16x128xf32>
    %247 = arith.mulf %243, %246 : vector<16x128xf32>
    %248 = math.absf %247 : vector<16x128xf32>
    %cst_146 = arith.constant 0.327591091 : f32
    %249 = vector.broadcast %cst_146 : f32 to vector<16x128xf32>
    %250 = arith.mulf %249, %248 : vector<16x128xf32>
    %cst_147 = arith.constant 1.000000e+00 : f32
    %251 = vector.broadcast %cst_147 : f32 to vector<16x128xf32>
    %252 = arith.addf %251, %250 : vector<16x128xf32>
    %cst_148 = arith.constant 1.000000e+00 : f32
    %253 = vector.broadcast %cst_148 : f32 to vector<16x128xf32>
    %254 = arith.divf %253, %252 : vector<16x128xf32>
    %cst_149 = arith.constant 1.06140542 : f32
    %255 = vector.broadcast %cst_149 : f32 to vector<16x128xf32>
    %256 = arith.mulf %255, %254 : vector<16x128xf32>
    %cst_150 = arith.constant -1.45315206 : f32
    %257 = vector.broadcast %cst_150 : f32 to vector<16x128xf32>
    %258 = arith.addf %256, %257 : vector<16x128xf32>
    %259 = arith.mulf %258, %254 : vector<16x128xf32>
    %cst_151 = arith.constant 1.42141378 : f32
    %260 = vector.broadcast %cst_151 : f32 to vector<16x128xf32>
    %261 = arith.addf %259, %260 : vector<16x128xf32>
    %262 = arith.mulf %261, %254 : vector<16x128xf32>
    %cst_152 = arith.constant -0.284496725 : f32
    %263 = vector.broadcast %cst_152 : f32 to vector<16x128xf32>
    %264 = arith.addf %262, %263 : vector<16x128xf32>
    %265 = arith.mulf %264, %254 : vector<16x128xf32>
    %cst_153 = arith.constant 0.254829586 : f32
    %266 = vector.broadcast %cst_153 : f32 to vector<16x128xf32>
    %267 = arith.addf %265, %266 : vector<16x128xf32>
    %268 = arith.mulf %267, %254 : vector<16x128xf32>
    %cst_154 = arith.constant 0.000000e+00 : f32
    %269 = vector.broadcast %cst_154 : f32 to vector<16x128xf32>
    %270 = arith.subf %269, %248 : vector<16x128xf32>
    %271 = arith.mulf %270, %248 : vector<16x128xf32>
    %272 = math.exp %271 : vector<16x128xf32>
    %273 = arith.mulf %268, %272 : vector<16x128xf32>
    %cst_155 = arith.constant 1.000000e+00 : f32
    %274 = vector.broadcast %cst_155 : f32 to vector<16x128xf32>
    %275 = arith.subf %274, %273 : vector<16x128xf32>
    %cst_156 = arith.constant 0.000000e+00 : f32
    %276 = vector.broadcast %cst_156 : f32 to vector<16x128xf32>
    %277 = arith.cmpf oge, %247, %276 : vector<16x128xf32>
    %cst_157 = arith.constant 0.000000e+00 : f32
    %278 = vector.broadcast %cst_157 : f32 to vector<16x128xf32>
    %279 = arith.subf %278, %275 : vector<16x128xf32>
    %280 = arith.select %277, %275, %279 : vector<16x128xi1>, vector<16x128xf32>
    %cst_158 = arith.constant 1.000000e+00 : f32
    %281 = vector.broadcast %cst_158 : f32 to vector<16x128xf32>
    %282 = arith.addf %281, %280 : vector<16x128xf32>
    %283 = arith.mulf %245, %282 : vector<16x128xf32>
    %c0_159 = arith.constant 0 : index
    %c0_160 = arith.constant 0 : index
    %c0_161 = arith.constant 0 : index
    %284 = vector.load %arg12[%c0_159, %c0_160, %c0_161] : memref<2x128x64xf32, #tpu.memory_space<vmem>>, vector<1x128x64xf32>
    %285 = vector.shape_cast %284 : vector<1x128x64xf32> to vector<128x64xf32>
    %cst_162 = arith.constant dense<0.000000e+00> : vector<16x64xf32>
    %286 = tpu.matmul %283, %285, %cst_162 {dimension_numbers = #tpu.dot_dimension_numbers<[1], [0], [0], [1], [0, 0, 1, 1], [], []>} : vector<16x128xf32>, vector<128x64xf32>, vector<16x64xf32> -> vector<16x64xf32>
    %c0_163 = arith.constant 0 : index
    %c0_164 = arith.constant 0 : index
    %c0_165 = arith.constant 0 : index
    %287 = vector.load %arg13[%c0_163, %c0_164, %c0_165] : memref<2x1x64xf32, #tpu.memory_space<vmem>>, vector<1x1x64xf32>
    %288 = vector.shape_cast %287 : vector<1x1x64xf32> to vector<1x64xf32>
    %289 = vector.broadcast %288 : vector<1x64xf32> to vector<16x64xf32>
    %290 = arith.addf %286, %289 : vector<16x64xf32>
    %291 = arith.addf %236, %290 : vector<16x64xf32>
    %292 = vector.extract_strided_slice %6 {offsets = [4, 0], sizes = [1, 64], strides = [1, 1]} : vector<6x64xf32> to vector<1x64xf32>
    %293 = vector.extract_strided_slice %6 {offsets = [5, 0], sizes = [1, 64], strides = [1, 1]} : vector<6x64xf32> to vector<1x64xf32>
    %cst_166 = arith.constant dense<0.000000e+00> : vector<16xf32>
    %294 = vector.multi_reduction <add>, %291, %cst_166 [1] : vector<16x64xf32> to vector<16xf32>
    %295 = vector.shape_cast %294 : vector<16xf32> to vector<16x1xf32>
    %cst_167 = arith.constant 6.400000e+01 : f32
    %296 = vector.broadcast %cst_167 : f32 to vector<16x1xf32>
    %297 = arith.divf %295, %296 : vector<16x1xf32>
    %298 = vector.broadcast %297 : vector<16x1xf32> to vector<16x64xf32>
    %299 = arith.subf %291, %298 : vector<16x64xf32>
    %300 = arith.mulf %299, %299 : vector<16x64xf32>
    %cst_168 = arith.constant dense<0.000000e+00> : vector<16xf32>
    %301 = vector.multi_reduction <add>, %300, %cst_168 [1] : vector<16x64xf32> to vector<16xf32>
    %302 = vector.shape_cast %301 : vector<16xf32> to vector<16x1xf32>
    %cst_169 = arith.constant 6.400000e+01 : f32
    %303 = vector.broadcast %cst_169 : f32 to vector<16x1xf32>
    %304 = arith.divf %302, %303 : vector<16x1xf32>
    %305 = vector.broadcast %297 : vector<16x1xf32> to vector<16x64xf32>
    %306 = arith.subf %291, %305 : vector<16x64xf32>
    %cst_170 = arith.constant 9.99999974E-6 : f32
    %307 = vector.broadcast %cst_170 : f32 to vector<16x1xf32>
    %308 = arith.addf %304, %307 : vector<16x1xf32>
    %309 = math.rsqrt %308 : vector<16x1xf32>
    %310 = vector.broadcast %309 : vector<16x1xf32> to vector<16x64xf32>
    %311 = arith.mulf %306, %310 : vector<16x64xf32>
    %312 = vector.broadcast %292 : vector<1x64xf32> to vector<16x64xf32>
    %313 = arith.mulf %311, %312 : vector<16x64xf32>
    %314 = vector.broadcast %293 : vector<1x64xf32> to vector<16x64xf32>
    %315 = arith.addf %313, %314 : vector<16x64xf32>
    %c1_171 = arith.constant 1 : index
    %c0_172 = arith.constant 0 : index
    %c0_173 = arith.constant 0 : index
    %316 = vector.load %arg9[%c1_171, %c0_172, %c0_173] : memref<2x6x64xf32, #tpu.memory_space<vmem>>, vector<1x6x64xf32>
    %317 = vector.shape_cast %316 : vector<1x6x64xf32> to vector<6x64xf32>
    %cst_174 = arith.constant 0.000000e+00 : f32
    %318 = vector.broadcast %cst_174 : f32 to vector<16x64xf32>
    %c12 = arith.constant 12 : index
    %c0_175 = arith.constant 0 : index
    %c0_176 = arith.constant 0 : index
    %319 = vector.load %arg5[%c12, %c0_175, %c0_176] : memref<24x64x16xf32, #tpu.memory_space<vmem>>, vector<1x64x16xf32>
    %320 = vector.shape_cast %319 : vector<1x64x16xf32> to vector<64x16xf32>
    %cst_177 = arith.constant dense<0.000000e+00> : vector<16x16xf32>
    %321 = tpu.matmul %315, %320, %cst_177 {dimension_numbers = #tpu.dot_dimension_numbers<[1], [0], [0], [1], [0, 0, 1, 1], [], []>} : vector<16x64xf32>, vector<64x16xf32>, vector<16x16xf32> -> vector<16x16xf32>
    %c12_178 = arith.constant 12 : index
    %c0_179 = arith.constant 0 : index
    %c0_180 = arith.constant 0 : index
    %322 = vector.load %arg6[%c12_178, %c0_179, %c0_180] : memref<24x1x16xf32, #tpu.memory_space<vmem>>, vector<1x1x16xf32>
    %323 = vector.shape_cast %322 : vector<1x1x16xf32> to vector<1x16xf32>
    %324 = vector.broadcast %323 : vector<1x16xf32> to vector<16x16xf32>
    %325 = arith.addf %321, %324 : vector<16x16xf32>
    %c16 = arith.constant 16 : index
    %c0_181 = arith.constant 0 : index
    %c0_182 = arith.constant 0 : index
    %326 = vector.load %arg5[%c16, %c0_181, %c0_182] : memref<24x64x16xf32, #tpu.memory_space<vmem>>, vector<1x64x16xf32>
    %327 = vector.shape_cast %326 : vector<1x64x16xf32> to vector<64x16xf32>
    %cst_183 = arith.constant dense<0.000000e+00> : vector<16x16xf32>
    %328 = tpu.matmul %315, %327, %cst_183 {dimension_numbers = #tpu.dot_dimension_numbers<[1], [0], [0], [1], [0, 0, 1, 1], [], []>} : vector<16x64xf32>, vector<64x16xf32>, vector<16x16xf32> -> vector<16x16xf32>
    %c16_184 = arith.constant 16 : index
    %c0_185 = arith.constant 0 : index
    %c0_186 = arith.constant 0 : index
    %329 = vector.load %arg6[%c16_184, %c0_185, %c0_186] : memref<24x1x16xf32, #tpu.memory_space<vmem>>, vector<1x1x16xf32>
    %330 = vector.shape_cast %329 : vector<1x1x16xf32> to vector<1x16xf32>
    %331 = vector.broadcast %330 : vector<1x16xf32> to vector<16x16xf32>
    %332 = arith.addf %328, %331 : vector<16x16xf32>
    %c20 = arith.constant 20 : index
    %c0_187 = arith.constant 0 : index
    %c0_188 = arith.constant 0 : index
    %333 = vector.load %arg5[%c20, %c0_187, %c0_188] : memref<24x64x16xf32, #tpu.memory_space<vmem>>, vector<1x64x16xf32>
    %334 = vector.shape_cast %333 : vector<1x64x16xf32> to vector<64x16xf32>
    %cst_189 = arith.constant dense<0.000000e+00> : vector<16x16xf32>
    %335 = tpu.matmul %315, %334, %cst_189 {dimension_numbers = #tpu.dot_dimension_numbers<[1], [0], [0], [1], [0, 0, 1, 1], [], []>} : vector<16x64xf32>, vector<64x16xf32>, vector<16x16xf32> -> vector<16x16xf32>
    %c20_190 = arith.constant 20 : index
    %c0_191 = arith.constant 0 : index
    %c0_192 = arith.constant 0 : index
    %336 = vector.load %arg6[%c20_190, %c0_191, %c0_192] : memref<24x1x16xf32, #tpu.memory_space<vmem>>, vector<1x1x16xf32>
    %337 = vector.shape_cast %336 : vector<1x1x16xf32> to vector<1x16xf32>
    %338 = vector.broadcast %337 : vector<1x16xf32> to vector<16x16xf32>
    %339 = arith.addf %335, %338 : vector<16x16xf32>
    "tpu.trace_start"() <{level = 10 : i32, message = "qd,kd->qk"}> : () -> ()
    %cst_193 = arith.constant dense<0.000000e+00> : vector<16x16xf32>
    %340 = tpu.matmul %325, %332, %cst_193 {dimension_numbers = #tpu.dot_dimension_numbers<[1], [1], [0], [0], [0, 0, 1, 0], [], []>} : vector<16x16xf32>, vector<16x16xf32>, vector<16x16xf32> -> vector<16x16xf32>
    "tpu.trace_stop"() : () -> ()
    %cst_194 = arith.constant 2.500000e-01 : f32
    %341 = vector.broadcast %cst_194 : f32 to vector<16x16xf32>
    %342 = arith.mulf %340, %341 : vector<16x16xf32>
    %cst_195 = arith.constant -1.000000e+30 : f32
    %343 = vector.shape_cast %4 : vector<1x16xi1> to vector<1x16xi1>
    %344 = vector.broadcast %343 : vector<1x16xi1> to vector<16x16xi1>
    %345 = vector.broadcast %cst_195 : f32 to vector<16x16xf32>
    %346 = arith.select %344, %342, %345 : vector<16x16xi1>, vector<16x16xf32>
    %cst_196 = arith.constant dense<0xFF800000> : vector<16xf32>
    %347 = vector.multi_reduction <maximumf>, %346, %cst_196 [1] : vector<16x16xf32> to vector<16xf32>
    %348 = vector.shape_cast %347 : vector<16xf32> to vector<16x1xf32>
    %349 = vector.broadcast %348 : vector<16x1xf32> to vector<16x16xf32>
    %350 = arith.subf %346, %349 : vector<16x16xf32>
    %351 = math.exp %350 : vector<16x16xf32>
    %cst_197 = arith.constant dense<0.000000e+00> : vector<16xf32>
    %352 = vector.multi_reduction <add>, %351, %cst_197 [1] : vector<16x16xf32> to vector<16xf32>
    %353 = vector.shape_cast %352 : vector<16xf32> to vector<16x1xf32>
    %354 = tpu.reciprocal %353 {approx = true} : vector<16x1xf32> -> vector<16x1xf32>
    %355 = vector.broadcast %354 : vector<16x1xf32> to vector<16x16xf32>
    %356 = arith.mulf %351, %355 : vector<16x16xf32>
    %cst_198 = arith.constant dense<0.000000e+00> : vector<16x16xf32>
    %357 = tpu.matmul %356, %339, %cst_198 {dimension_numbers = #tpu.dot_dimension_numbers<[1], [0], [0], [1], [0, 0, 1, 1], [], []>} : vector<16x16xf32>, vector<16x16xf32>, vector<16x16xf32> -> vector<16x16xf32>
    %c4_199 = arith.constant 4 : index
    %c0_200 = arith.constant 0 : index
    %c0_201 = arith.constant 0 : index
    %358 = vector.load %arg7[%c4_199, %c0_200, %c0_201] : memref<8x16x64xf32, #tpu.memory_space<vmem>>, vector<1x16x64xf32>
    %359 = vector.shape_cast %358 : vector<1x16x64xf32> to vector<16x64xf32>
    %cst_202 = arith.constant dense<0.000000e+00> : vector<16x64xf32>
    %360 = tpu.matmul %357, %359, %cst_202 {dimension_numbers = #tpu.dot_dimension_numbers<[1], [0], [0], [1], [0, 0, 1, 1], [], []>} : vector<16x16xf32>, vector<16x64xf32>, vector<16x64xf32> -> vector<16x64xf32>
    %361 = arith.addf %318, %360 : vector<16x64xf32>
    %c13 = arith.constant 13 : index
    %c0_203 = arith.constant 0 : index
    %c0_204 = arith.constant 0 : index
    %362 = vector.load %arg5[%c13, %c0_203, %c0_204] : memref<24x64x16xf32, #tpu.memory_space<vmem>>, vector<1x64x16xf32>
    %363 = vector.shape_cast %362 : vector<1x64x16xf32> to vector<64x16xf32>
    %cst_205 = arith.constant dense<0.000000e+00> : vector<16x16xf32>
    %364 = tpu.matmul %315, %363, %cst_205 {dimension_numbers = #tpu.dot_dimension_numbers<[1], [0], [0], [1], [0, 0, 1, 1], [], []>} : vector<16x64xf32>, vector<64x16xf32>, vector<16x16xf32> -> vector<16x16xf32>
    %c13_206 = arith.constant 13 : index
    %c0_207 = arith.constant 0 : index
    %c0_208 = arith.constant 0 : index
    %365 = vector.load %arg6[%c13_206, %c0_207, %c0_208] : memref<24x1x16xf32, #tpu.memory_space<vmem>>, vector<1x1x16xf32>
    %366 = vector.shape_cast %365 : vector<1x1x16xf32> to vector<1x16xf32>
    %367 = vector.broadcast %366 : vector<1x16xf32> to vector<16x16xf32>
    %368 = arith.addf %364, %367 : vector<16x16xf32>
    %c17 = arith.constant 17 : index
    %c0_209 = arith.constant 0 : index
    %c0_210 = arith.constant 0 : index
    %369 = vector.load %arg5[%c17, %c0_209, %c0_210] : memref<24x64x16xf32, #tpu.memory_space<vmem>>, vector<1x64x16xf32>
    %370 = vector.shape_cast %369 : vector<1x64x16xf32> to vector<64x16xf32>
    %cst_211 = arith.constant dense<0.000000e+00> : vector<16x16xf32>
    %371 = tpu.matmul %315, %370, %cst_211 {dimension_numbers = #tpu.dot_dimension_numbers<[1], [0], [0], [1], [0, 0, 1, 1], [], []>} : vector<16x64xf32>, vector<64x16xf32>, vector<16x16xf32> -> vector<16x16xf32>
    %c17_212 = arith.constant 17 : index
    %c0_213 = arith.constant 0 : index
    %c0_214 = arith.constant 0 : index
    %372 = vector.load %arg6[%c17_212, %c0_213, %c0_214] : memref<24x1x16xf32, #tpu.memory_space<vmem>>, vector<1x1x16xf32>
    %373 = vector.shape_cast %372 : vector<1x1x16xf32> to vector<1x16xf32>
    %374 = vector.broadcast %373 : vector<1x16xf32> to vector<16x16xf32>
    %375 = arith.addf %371, %374 : vector<16x16xf32>
    %c21 = arith.constant 21 : index
    %c0_215 = arith.constant 0 : index
    %c0_216 = arith.constant 0 : index
    %376 = vector.load %arg5[%c21, %c0_215, %c0_216] : memref<24x64x16xf32, #tpu.memory_space<vmem>>, vector<1x64x16xf32>
    %377 = vector.shape_cast %376 : vector<1x64x16xf32> to vector<64x16xf32>
    %cst_217 = arith.constant dense<0.000000e+00> : vector<16x16xf32>
    %378 = tpu.matmul %315, %377, %cst_217 {dimension_numbers = #tpu.dot_dimension_numbers<[1], [0], [0], [1], [0, 0, 1, 1], [], []>} : vector<16x64xf32>, vector<64x16xf32>, vector<16x16xf32> -> vector<16x16xf32>
    %c21_218 = arith.constant 21 : index
    %c0_219 = arith.constant 0 : index
    %c0_220 = arith.constant 0 : index
    %379 = vector.load %arg6[%c21_218, %c0_219, %c0_220] : memref<24x1x16xf32, #tpu.memory_space<vmem>>, vector<1x1x16xf32>
    %380 = vector.shape_cast %379 : vector<1x1x16xf32> to vector<1x16xf32>
    %381 = vector.broadcast %380 : vector<1x16xf32> to vector<16x16xf32>
    %382 = arith.addf %378, %381 : vector<16x16xf32>
    "tpu.trace_start"() <{level = 10 : i32, message = "qd,kd->qk"}> : () -> ()
    %cst_221 = arith.constant dense<0.000000e+00> : vector<16x16xf32>
    %383 = tpu.matmul %368, %375, %cst_221 {dimension_numbers = #tpu.dot_dimension_numbers<[1], [1], [0], [0], [0, 0, 1, 0], [], []>} : vector<16x16xf32>, vector<16x16xf32>, vector<16x16xf32> -> vector<16x16xf32>
    "tpu.trace_stop"() : () -> ()
    %cst_222 = arith.constant 2.500000e-01 : f32
    %384 = vector.broadcast %cst_222 : f32 to vector<16x16xf32>
    %385 = arith.mulf %383, %384 : vector<16x16xf32>
    %cst_223 = arith.constant -1.000000e+30 : f32
    %386 = vector.shape_cast %4 : vector<1x16xi1> to vector<1x16xi1>
    %387 = vector.broadcast %386 : vector<1x16xi1> to vector<16x16xi1>
    %388 = vector.broadcast %cst_223 : f32 to vector<16x16xf32>
    %389 = arith.select %387, %385, %388 : vector<16x16xi1>, vector<16x16xf32>
    %cst_224 = arith.constant dense<0xFF800000> : vector<16xf32>
    %390 = vector.multi_reduction <maximumf>, %389, %cst_224 [1] : vector<16x16xf32> to vector<16xf32>
    %391 = vector.shape_cast %390 : vector<16xf32> to vector<16x1xf32>
    %392 = vector.broadcast %391 : vector<16x1xf32> to vector<16x16xf32>
    %393 = arith.subf %389, %392 : vector<16x16xf32>
    %394 = math.exp %393 : vector<16x16xf32>
    %cst_225 = arith.constant dense<0.000000e+00> : vector<16xf32>
    %395 = vector.multi_reduction <add>, %394, %cst_225 [1] : vector<16x16xf32> to vector<16xf32>
    %396 = vector.shape_cast %395 : vector<16xf32> to vector<16x1xf32>
    %397 = tpu.reciprocal %396 {approx = true} : vector<16x1xf32> -> vector<16x1xf32>
    %398 = vector.broadcast %397 : vector<16x1xf32> to vector<16x16xf32>
    %399 = arith.mulf %394, %398 : vector<16x16xf32>
    %cst_226 = arith.constant dense<0.000000e+00> : vector<16x16xf32>
    %400 = tpu.matmul %399, %382, %cst_226 {dimension_numbers = #tpu.dot_dimension_numbers<[1], [0], [0], [1], [0, 0, 1, 1], [], []>} : vector<16x16xf32>, vector<16x16xf32>, vector<16x16xf32> -> vector<16x16xf32>
    %c5_227 = arith.constant 5 : index
    %c0_228 = arith.constant 0 : index
    %c0_229 = arith.constant 0 : index
    %401 = vector.load %arg7[%c5_227, %c0_228, %c0_229] : memref<8x16x64xf32, #tpu.memory_space<vmem>>, vector<1x16x64xf32>
    %402 = vector.shape_cast %401 : vector<1x16x64xf32> to vector<16x64xf32>
    %cst_230 = arith.constant dense<0.000000e+00> : vector<16x64xf32>
    %403 = tpu.matmul %400, %402, %cst_230 {dimension_numbers = #tpu.dot_dimension_numbers<[1], [0], [0], [1], [0, 0, 1, 1], [], []>} : vector<16x16xf32>, vector<16x64xf32>, vector<16x64xf32> -> vector<16x64xf32>
    %404 = arith.addf %361, %403 : vector<16x64xf32>
    %c14 = arith.constant 14 : index
    %c0_231 = arith.constant 0 : index
    %c0_232 = arith.constant 0 : index
    %405 = vector.load %arg5[%c14, %c0_231, %c0_232] : memref<24x64x16xf32, #tpu.memory_space<vmem>>, vector<1x64x16xf32>
    %406 = vector.shape_cast %405 : vector<1x64x16xf32> to vector<64x16xf32>
    %cst_233 = arith.constant dense<0.000000e+00> : vector<16x16xf32>
    %407 = tpu.matmul %315, %406, %cst_233 {dimension_numbers = #tpu.dot_dimension_numbers<[1], [0], [0], [1], [0, 0, 1, 1], [], []>} : vector<16x64xf32>, vector<64x16xf32>, vector<16x16xf32> -> vector<16x16xf32>
    %c14_234 = arith.constant 14 : index
    %c0_235 = arith.constant 0 : index
    %c0_236 = arith.constant 0 : index
    %408 = vector.load %arg6[%c14_234, %c0_235, %c0_236] : memref<24x1x16xf32, #tpu.memory_space<vmem>>, vector<1x1x16xf32>
    %409 = vector.shape_cast %408 : vector<1x1x16xf32> to vector<1x16xf32>
    %410 = vector.broadcast %409 : vector<1x16xf32> to vector<16x16xf32>
    %411 = arith.addf %407, %410 : vector<16x16xf32>
    %c18 = arith.constant 18 : index
    %c0_237 = arith.constant 0 : index
    %c0_238 = arith.constant 0 : index
    %412 = vector.load %arg5[%c18, %c0_237, %c0_238] : memref<24x64x16xf32, #tpu.memory_space<vmem>>, vector<1x64x16xf32>
    %413 = vector.shape_cast %412 : vector<1x64x16xf32> to vector<64x16xf32>
    %cst_239 = arith.constant dense<0.000000e+00> : vector<16x16xf32>
    %414 = tpu.matmul %315, %413, %cst_239 {dimension_numbers = #tpu.dot_dimension_numbers<[1], [0], [0], [1], [0, 0, 1, 1], [], []>} : vector<16x64xf32>, vector<64x16xf32>, vector<16x16xf32> -> vector<16x16xf32>
    %c18_240 = arith.constant 18 : index
    %c0_241 = arith.constant 0 : index
    %c0_242 = arith.constant 0 : index
    %415 = vector.load %arg6[%c18_240, %c0_241, %c0_242] : memref<24x1x16xf32, #tpu.memory_space<vmem>>, vector<1x1x16xf32>
    %416 = vector.shape_cast %415 : vector<1x1x16xf32> to vector<1x16xf32>
    %417 = vector.broadcast %416 : vector<1x16xf32> to vector<16x16xf32>
    %418 = arith.addf %414, %417 : vector<16x16xf32>
    %c22 = arith.constant 22 : index
    %c0_243 = arith.constant 0 : index
    %c0_244 = arith.constant 0 : index
    %419 = vector.load %arg5[%c22, %c0_243, %c0_244] : memref<24x64x16xf32, #tpu.memory_space<vmem>>, vector<1x64x16xf32>
    %420 = vector.shape_cast %419 : vector<1x64x16xf32> to vector<64x16xf32>
    %cst_245 = arith.constant dense<0.000000e+00> : vector<16x16xf32>
    %421 = tpu.matmul %315, %420, %cst_245 {dimension_numbers = #tpu.dot_dimension_numbers<[1], [0], [0], [1], [0, 0, 1, 1], [], []>} : vector<16x64xf32>, vector<64x16xf32>, vector<16x16xf32> -> vector<16x16xf32>
    %c22_246 = arith.constant 22 : index
    %c0_247 = arith.constant 0 : index
    %c0_248 = arith.constant 0 : index
    %422 = vector.load %arg6[%c22_246, %c0_247, %c0_248] : memref<24x1x16xf32, #tpu.memory_space<vmem>>, vector<1x1x16xf32>
    %423 = vector.shape_cast %422 : vector<1x1x16xf32> to vector<1x16xf32>
    %424 = vector.broadcast %423 : vector<1x16xf32> to vector<16x16xf32>
    %425 = arith.addf %421, %424 : vector<16x16xf32>
    "tpu.trace_start"() <{level = 10 : i32, message = "qd,kd->qk"}> : () -> ()
    %cst_249 = arith.constant dense<0.000000e+00> : vector<16x16xf32>
    %426 = tpu.matmul %411, %418, %cst_249 {dimension_numbers = #tpu.dot_dimension_numbers<[1], [1], [0], [0], [0, 0, 1, 0], [], []>} : vector<16x16xf32>, vector<16x16xf32>, vector<16x16xf32> -> vector<16x16xf32>
    "tpu.trace_stop"() : () -> ()
    %cst_250 = arith.constant 2.500000e-01 : f32
    %427 = vector.broadcast %cst_250 : f32 to vector<16x16xf32>
    %428 = arith.mulf %426, %427 : vector<16x16xf32>
    %cst_251 = arith.constant -1.000000e+30 : f32
    %429 = vector.shape_cast %4 : vector<1x16xi1> to vector<1x16xi1>
    %430 = vector.broadcast %429 : vector<1x16xi1> to vector<16x16xi1>
    %431 = vector.broadcast %cst_251 : f32 to vector<16x16xf32>
    %432 = arith.select %430, %428, %431 : vector<16x16xi1>, vector<16x16xf32>
    %cst_252 = arith.constant dense<0xFF800000> : vector<16xf32>
    %433 = vector.multi_reduction <maximumf>, %432, %cst_252 [1] : vector<16x16xf32> to vector<16xf32>
    %434 = vector.shape_cast %433 : vector<16xf32> to vector<16x1xf32>
    %435 = vector.broadcast %434 : vector<16x1xf32> to vector<16x16xf32>
    %436 = arith.subf %432, %435 : vector<16x16xf32>
    %437 = math.exp %436 : vector<16x16xf32>
    %cst_253 = arith.constant dense<0.000000e+00> : vector<16xf32>
    %438 = vector.multi_reduction <add>, %437, %cst_253 [1] : vector<16x16xf32> to vector<16xf32>
    %439 = vector.shape_cast %438 : vector<16xf32> to vector<16x1xf32>
    %440 = tpu.reciprocal %439 {approx = true} : vector<16x1xf32> -> vector<16x1xf32>
    %441 = vector.broadcast %440 : vector<16x1xf32> to vector<16x16xf32>
    %442 = arith.mulf %437, %441 : vector<16x16xf32>
    %cst_254 = arith.constant dense<0.000000e+00> : vector<16x16xf32>
    %443 = tpu.matmul %442, %425, %cst_254 {dimension_numbers = #tpu.dot_dimension_numbers<[1], [0], [0], [1], [0, 0, 1, 1], [], []>} : vector<16x16xf32>, vector<16x16xf32>, vector<16x16xf32> -> vector<16x16xf32>
    %c6_255 = arith.constant 6 : index
    %c0_256 = arith.constant 0 : index
    %c0_257 = arith.constant 0 : index
    %444 = vector.load %arg7[%c6_255, %c0_256, %c0_257] : memref<8x16x64xf32, #tpu.memory_space<vmem>>, vector<1x16x64xf32>
    %445 = vector.shape_cast %444 : vector<1x16x64xf32> to vector<16x64xf32>
    %cst_258 = arith.constant dense<0.000000e+00> : vector<16x64xf32>
    %446 = tpu.matmul %443, %445, %cst_258 {dimension_numbers = #tpu.dot_dimension_numbers<[1], [0], [0], [1], [0, 0, 1, 1], [], []>} : vector<16x16xf32>, vector<16x64xf32>, vector<16x64xf32> -> vector<16x64xf32>
    %447 = arith.addf %404, %446 : vector<16x64xf32>
    %c15 = arith.constant 15 : index
    %c0_259 = arith.constant 0 : index
    %c0_260 = arith.constant 0 : index
    %448 = vector.load %arg5[%c15, %c0_259, %c0_260] : memref<24x64x16xf32, #tpu.memory_space<vmem>>, vector<1x64x16xf32>
    %449 = vector.shape_cast %448 : vector<1x64x16xf32> to vector<64x16xf32>
    %cst_261 = arith.constant dense<0.000000e+00> : vector<16x16xf32>
    %450 = tpu.matmul %315, %449, %cst_261 {dimension_numbers = #tpu.dot_dimension_numbers<[1], [0], [0], [1], [0, 0, 1, 1], [], []>} : vector<16x64xf32>, vector<64x16xf32>, vector<16x16xf32> -> vector<16x16xf32>
    %c15_262 = arith.constant 15 : index
    %c0_263 = arith.constant 0 : index
    %c0_264 = arith.constant 0 : index
    %451 = vector.load %arg6[%c15_262, %c0_263, %c0_264] : memref<24x1x16xf32, #tpu.memory_space<vmem>>, vector<1x1x16xf32>
    %452 = vector.shape_cast %451 : vector<1x1x16xf32> to vector<1x16xf32>
    %453 = vector.broadcast %452 : vector<1x16xf32> to vector<16x16xf32>
    %454 = arith.addf %450, %453 : vector<16x16xf32>
    %c19 = arith.constant 19 : index
    %c0_265 = arith.constant 0 : index
    %c0_266 = arith.constant 0 : index
    %455 = vector.load %arg5[%c19, %c0_265, %c0_266] : memref<24x64x16xf32, #tpu.memory_space<vmem>>, vector<1x64x16xf32>
    %456 = vector.shape_cast %455 : vector<1x64x16xf32> to vector<64x16xf32>
    %cst_267 = arith.constant dense<0.000000e+00> : vector<16x16xf32>
    %457 = tpu.matmul %315, %456, %cst_267 {dimension_numbers = #tpu.dot_dimension_numbers<[1], [0], [0], [1], [0, 0, 1, 1], [], []>} : vector<16x64xf32>, vector<64x16xf32>, vector<16x16xf32> -> vector<16x16xf32>
    %c19_268 = arith.constant 19 : index
    %c0_269 = arith.constant 0 : index
    %c0_270 = arith.constant 0 : index
    %458 = vector.load %arg6[%c19_268, %c0_269, %c0_270] : memref<24x1x16xf32, #tpu.memory_space<vmem>>, vector<1x1x16xf32>
    %459 = vector.shape_cast %458 : vector<1x1x16xf32> to vector<1x16xf32>
    %460 = vector.broadcast %459 : vector<1x16xf32> to vector<16x16xf32>
    %461 = arith.addf %457, %460 : vector<16x16xf32>
    %c23 = arith.constant 23 : index
    %c0_271 = arith.constant 0 : index
    %c0_272 = arith.constant 0 : index
    %462 = vector.load %arg5[%c23, %c0_271, %c0_272] : memref<24x64x16xf32, #tpu.memory_space<vmem>>, vector<1x64x16xf32>
    %463 = vector.shape_cast %462 : vector<1x64x16xf32> to vector<64x16xf32>
    %cst_273 = arith.constant dense<0.000000e+00> : vector<16x16xf32>
    %464 = tpu.matmul %315, %463, %cst_273 {dimension_numbers = #tpu.dot_dimension_numbers<[1], [0], [0], [1], [0, 0, 1, 1], [], []>} : vector<16x64xf32>, vector<64x16xf32>, vector<16x16xf32> -> vector<16x16xf32>
    %c23_274 = arith.constant 23 : index
    %c0_275 = arith.constant 0 : index
    %c0_276 = arith.constant 0 : index
    %465 = vector.load %arg6[%c23_274, %c0_275, %c0_276] : memref<24x1x16xf32, #tpu.memory_space<vmem>>, vector<1x1x16xf32>
    %466 = vector.shape_cast %465 : vector<1x1x16xf32> to vector<1x16xf32>
    %467 = vector.broadcast %466 : vector<1x16xf32> to vector<16x16xf32>
    %468 = arith.addf %464, %467 : vector<16x16xf32>
    "tpu.trace_start"() <{level = 10 : i32, message = "qd,kd->qk"}> : () -> ()
    %cst_277 = arith.constant dense<0.000000e+00> : vector<16x16xf32>
    %469 = tpu.matmul %454, %461, %cst_277 {dimension_numbers = #tpu.dot_dimension_numbers<[1], [1], [0], [0], [0, 0, 1, 0], [], []>} : vector<16x16xf32>, vector<16x16xf32>, vector<16x16xf32> -> vector<16x16xf32>
    "tpu.trace_stop"() : () -> ()
    %cst_278 = arith.constant 2.500000e-01 : f32
    %470 = vector.broadcast %cst_278 : f32 to vector<16x16xf32>
    %471 = arith.mulf %469, %470 : vector<16x16xf32>
    %cst_279 = arith.constant -1.000000e+30 : f32
    %472 = vector.shape_cast %4 : vector<1x16xi1> to vector<1x16xi1>
    %473 = vector.broadcast %472 : vector<1x16xi1> to vector<16x16xi1>
    %474 = vector.broadcast %cst_279 : f32 to vector<16x16xf32>
    %475 = arith.select %473, %471, %474 : vector<16x16xi1>, vector<16x16xf32>
    %cst_280 = arith.constant dense<0xFF800000> : vector<16xf32>
    %476 = vector.multi_reduction <maximumf>, %475, %cst_280 [1] : vector<16x16xf32> to vector<16xf32>
    %477 = vector.shape_cast %476 : vector<16xf32> to vector<16x1xf32>
    %478 = vector.broadcast %477 : vector<16x1xf32> to vector<16x16xf32>
    %479 = arith.subf %475, %478 : vector<16x16xf32>
    %480 = math.exp %479 : vector<16x16xf32>
    %cst_281 = arith.constant dense<0.000000e+00> : vector<16xf32>
    %481 = vector.multi_reduction <add>, %480, %cst_281 [1] : vector<16x16xf32> to vector<16xf32>
    %482 = vector.shape_cast %481 : vector<16xf32> to vector<16x1xf32>
    %483 = tpu.reciprocal %482 {approx = true} : vector<16x1xf32> -> vector<16x1xf32>
    %484 = vector.broadcast %483 : vector<16x1xf32> to vector<16x16xf32>
    %485 = arith.mulf %480, %484 : vector<16x16xf32>
    %cst_282 = arith.constant dense<0.000000e+00> : vector<16x16xf32>
    %486 = tpu.matmul %485, %468, %cst_282 {dimension_numbers = #tpu.dot_dimension_numbers<[1], [0], [0], [1], [0, 0, 1, 1], [], []>} : vector<16x16xf32>, vector<16x16xf32>, vector<16x16xf32> -> vector<16x16xf32>
    %c7_283 = arith.constant 7 : index
    %c0_284 = arith.constant 0 : index
    %c0_285 = arith.constant 0 : index
    %487 = vector.load %arg7[%c7_283, %c0_284, %c0_285] : memref<8x16x64xf32, #tpu.memory_space<vmem>>, vector<1x16x64xf32>
    %488 = vector.shape_cast %487 : vector<1x16x64xf32> to vector<16x64xf32>
    %cst_286 = arith.constant dense<0.000000e+00> : vector<16x64xf32>
    %489 = tpu.matmul %486, %488, %cst_286 {dimension_numbers = #tpu.dot_dimension_numbers<[1], [0], [0], [1], [0, 0, 1, 1], [], []>} : vector<16x16xf32>, vector<16x64xf32>, vector<16x64xf32> -> vector<16x64xf32>
    %490 = arith.addf %447, %489 : vector<16x64xf32>
    %c1_287 = arith.constant 1 : index
    %c0_288 = arith.constant 0 : index
    %c0_289 = arith.constant 0 : index
    %491 = vector.load %arg8[%c1_287, %c0_288, %c0_289] : memref<2x1x64xf32, #tpu.memory_space<vmem>>, vector<1x1x64xf32>
    %492 = vector.shape_cast %491 : vector<1x1x64xf32> to vector<1x64xf32>
    %493 = vector.broadcast %492 : vector<1x64xf32> to vector<16x64xf32>
    %494 = arith.addf %490, %493 : vector<16x64xf32>
    %495 = arith.addf %315, %494 : vector<16x64xf32>
    %496 = vector.extract_strided_slice %317 {offsets = [0, 0], sizes = [1, 64], strides = [1, 1]} : vector<6x64xf32> to vector<1x64xf32>
    %497 = vector.extract_strided_slice %317 {offsets = [1, 0], sizes = [1, 64], strides = [1, 1]} : vector<6x64xf32> to vector<1x64xf32>
    %cst_290 = arith.constant dense<0.000000e+00> : vector<16xf32>
    %498 = vector.multi_reduction <add>, %495, %cst_290 [1] : vector<16x64xf32> to vector<16xf32>
    %499 = vector.shape_cast %498 : vector<16xf32> to vector<16x1xf32>
    %cst_291 = arith.constant 6.400000e+01 : f32
    %500 = vector.broadcast %cst_291 : f32 to vector<16x1xf32>
    %501 = arith.divf %499, %500 : vector<16x1xf32>
    %502 = vector.broadcast %501 : vector<16x1xf32> to vector<16x64xf32>
    %503 = arith.subf %495, %502 : vector<16x64xf32>
    %504 = arith.mulf %503, %503 : vector<16x64xf32>
    %cst_292 = arith.constant dense<0.000000e+00> : vector<16xf32>
    %505 = vector.multi_reduction <add>, %504, %cst_292 [1] : vector<16x64xf32> to vector<16xf32>
    %506 = vector.shape_cast %505 : vector<16xf32> to vector<16x1xf32>
    %cst_293 = arith.constant 6.400000e+01 : f32
    %507 = vector.broadcast %cst_293 : f32 to vector<16x1xf32>
    %508 = arith.divf %506, %507 : vector<16x1xf32>
    %509 = vector.broadcast %501 : vector<16x1xf32> to vector<16x64xf32>
    %510 = arith.subf %495, %509 : vector<16x64xf32>
    %cst_294 = arith.constant 9.99999974E-6 : f32
    %511 = vector.broadcast %cst_294 : f32 to vector<16x1xf32>
    %512 = arith.addf %508, %511 : vector<16x1xf32>
    %513 = math.rsqrt %512 : vector<16x1xf32>
    %514 = vector.broadcast %513 : vector<16x1xf32> to vector<16x64xf32>
    %515 = arith.mulf %510, %514 : vector<16x64xf32>
    %516 = vector.broadcast %496 : vector<1x64xf32> to vector<16x64xf32>
    %517 = arith.mulf %515, %516 : vector<16x64xf32>
    %518 = vector.broadcast %497 : vector<1x64xf32> to vector<16x64xf32>
    %519 = arith.addf %517, %518 : vector<16x64xf32>
    %c0_295 = arith.constant 0 : index
    %c1_296 = arith.constant 1 : index
    %c0_297 = arith.constant 0 : index
    %520 = vector.load %arg4[%c0_295, %c1_296, %c0_297] : memref<1x2x64xf32, #tpu.memory_space<vmem>>, vector<1x1x64xf32>
    %521 = vector.shape_cast %520 : vector<1x1x64xf32> to vector<1x64xf32>
    %522 = vector.broadcast %521 : vector<1x64xf32> to vector<16x64xf32>
    %523 = arith.addf %519, %522 : vector<16x64xf32>
    %524 = vector.extract_strided_slice %317 {offsets = [2, 0], sizes = [1, 64], strides = [1, 1]} : vector<6x64xf32> to vector<1x64xf32>
    %525 = vector.extract_strided_slice %317 {offsets = [3, 0], sizes = [1, 64], strides = [1, 1]} : vector<6x64xf32> to vector<1x64xf32>
    %cst_298 = arith.constant dense<0.000000e+00> : vector<16xf32>
    %526 = vector.multi_reduction <add>, %523, %cst_298 [1] : vector<16x64xf32> to vector<16xf32>
    %527 = vector.shape_cast %526 : vector<16xf32> to vector<16x1xf32>
    %cst_299 = arith.constant 6.400000e+01 : f32
    %528 = vector.broadcast %cst_299 : f32 to vector<16x1xf32>
    %529 = arith.divf %527, %528 : vector<16x1xf32>
    %530 = vector.broadcast %529 : vector<16x1xf32> to vector<16x64xf32>
    %531 = arith.subf %523, %530 : vector<16x64xf32>
    %532 = arith.mulf %531, %531 : vector<16x64xf32>
    %cst_300 = arith.constant dense<0.000000e+00> : vector<16xf32>
    %533 = vector.multi_reduction <add>, %532, %cst_300 [1] : vector<16x64xf32> to vector<16xf32>
    %534 = vector.shape_cast %533 : vector<16xf32> to vector<16x1xf32>
    %cst_301 = arith.constant 6.400000e+01 : f32
    %535 = vector.broadcast %cst_301 : f32 to vector<16x1xf32>
    %536 = arith.divf %534, %535 : vector<16x1xf32>
    %537 = vector.broadcast %529 : vector<16x1xf32> to vector<16x64xf32>
    %538 = arith.subf %523, %537 : vector<16x64xf32>
    %cst_302 = arith.constant 9.99999974E-6 : f32
    %539 = vector.broadcast %cst_302 : f32 to vector<16x1xf32>
    %540 = arith.addf %536, %539 : vector<16x1xf32>
    %541 = math.rsqrt %540 : vector<16x1xf32>
    %542 = vector.broadcast %541 : vector<16x1xf32> to vector<16x64xf32>
    %543 = arith.mulf %538, %542 : vector<16x64xf32>
    %544 = vector.broadcast %524 : vector<1x64xf32> to vector<16x64xf32>
    %545 = arith.mulf %543, %544 : vector<16x64xf32>
    %546 = vector.broadcast %525 : vector<1x64xf32> to vector<16x64xf32>
    %547 = arith.addf %545, %546 : vector<16x64xf32>
    %c1_303 = arith.constant 1 : index
    %c0_304 = arith.constant 0 : index
    %c0_305 = arith.constant 0 : index
    %548 = vector.load %arg10[%c1_303, %c0_304, %c0_305] : memref<2x64x128xf32, #tpu.memory_space<vmem>>, vector<1x64x128xf32>
    %549 = vector.shape_cast %548 : vector<1x64x128xf32> to vector<64x128xf32>
    %cst_306 = arith.constant dense<0.000000e+00> : vector<16x128xf32>
    %550 = tpu.matmul %547, %549, %cst_306 {dimension_numbers = #tpu.dot_dimension_numbers<[1], [0], [0], [1], [0, 0, 1, 1], [], []>} : vector<16x64xf32>, vector<64x128xf32>, vector<16x128xf32> -> vector<16x128xf32>
    %c1_307 = arith.constant 1 : index
    %c0_308 = arith.constant 0 : index
    %c0_309 = arith.constant 0 : index
    %551 = vector.load %arg11[%c1_307, %c0_308, %c0_309] : memref<2x1x128xf32, #tpu.memory_space<vmem>>, vector<1x1x128xf32>
    %552 = vector.shape_cast %551 : vector<1x1x128xf32> to vector<1x128xf32>
    %553 = vector.broadcast %552 : vector<1x128xf32> to vector<16x128xf32>
    %554 = arith.addf %550, %553 : vector<16x128xf32>
    %cst_310 = arith.constant 5.000000e-01 : f32
    %555 = vector.broadcast %cst_310 : f32 to vector<16x128xf32>
    %556 = arith.mulf %555, %554 : vector<16x128xf32>
    %cst_311 = arith.constant 0.707106769 : f32
    %557 = vector.broadcast %cst_311 : f32 to vector<16x128xf32>
    %558 = arith.mulf %554, %557 : vector<16x128xf32>
    %559 = math.absf %558 : vector<16x128xf32>
    %cst_312 = arith.constant 0.327591091 : f32
    %560 = vector.broadcast %cst_312 : f32 to vector<16x128xf32>
    %561 = arith.mulf %560, %559 : vector<16x128xf32>
    %cst_313 = arith.constant 1.000000e+00 : f32
    %562 = vector.broadcast %cst_313 : f32 to vector<16x128xf32>
    %563 = arith.addf %562, %561 : vector<16x128xf32>
    %cst_314 = arith.constant 1.000000e+00 : f32
    %564 = vector.broadcast %cst_314 : f32 to vector<16x128xf32>
    %565 = arith.divf %564, %563 : vector<16x128xf32>
    %cst_315 = arith.constant 1.06140542 : f32
    %566 = vector.broadcast %cst_315 : f32 to vector<16x128xf32>
    %567 = arith.mulf %566, %565 : vector<16x128xf32>
    %cst_316 = arith.constant -1.45315206 : f32
    %568 = vector.broadcast %cst_316 : f32 to vector<16x128xf32>
    %569 = arith.addf %567, %568 : vector<16x128xf32>
    %570 = arith.mulf %569, %565 : vector<16x128xf32>
    %cst_317 = arith.constant 1.42141378 : f32
    %571 = vector.broadcast %cst_317 : f32 to vector<16x128xf32>
    %572 = arith.addf %570, %571 : vector<16x128xf32>
    %573 = arith.mulf %572, %565 : vector<16x128xf32>
    %cst_318 = arith.constant -0.284496725 : f32
    %574 = vector.broadcast %cst_318 : f32 to vector<16x128xf32>
    %575 = arith.addf %573, %574 : vector<16x128xf32>
    %576 = arith.mulf %575, %565 : vector<16x128xf32>
    %cst_319 = arith.constant 0.254829586 : f32
    %577 = vector.broadcast %cst_319 : f32 to vector<16x128xf32>
    %578 = arith.addf %576, %577 : vector<16x128xf32>
    %579 = arith.mulf %578, %565 : vector<16x128xf32>
    %cst_320 = arith.constant 0.000000e+00 : f32
    %580 = vector.broadcast %cst_320 : f32 to vector<16x128xf32>
    %581 = arith.subf %580, %559 : vector<16x128xf32>
    %582 = arith.mulf %581, %559 : vector<16x128xf32>
    %583 = math.exp %582 : vector<16x128xf32>
    %584 = arith.mulf %579, %583 : vector<16x128xf32>
    %cst_321 = arith.constant 1.000000e+00 : f32
    %585 = vector.broadcast %cst_321 : f32 to vector<16x128xf32>
    %586 = arith.subf %585, %584 : vector<16x128xf32>
    %cst_322 = arith.constant 0.000000e+00 : f32
    %587 = vector.broadcast %cst_322 : f32 to vector<16x128xf32>
    %588 = arith.cmpf oge, %558, %587 : vector<16x128xf32>
    %cst_323 = arith.constant 0.000000e+00 : f32
    %589 = vector.broadcast %cst_323 : f32 to vector<16x128xf32>
    %590 = arith.subf %589, %586 : vector<16x128xf32>
    %591 = arith.select %588, %586, %590 : vector<16x128xi1>, vector<16x128xf32>
    %cst_324 = arith.constant 1.000000e+00 : f32
    %592 = vector.broadcast %cst_324 : f32 to vector<16x128xf32>
    %593 = arith.addf %592, %591 : vector<16x128xf32>
    %594 = arith.mulf %556, %593 : vector<16x128xf32>
    %c1_325 = arith.constant 1 : index
    %c0_326 = arith.constant 0 : index
    %c0_327 = arith.constant 0 : index
    %595 = vector.load %arg12[%c1_325, %c0_326, %c0_327] : memref<2x128x64xf32, #tpu.memory_space<vmem>>, vector<1x128x64xf32>
    %596 = vector.shape_cast %595 : vector<1x128x64xf32> to vector<128x64xf32>
    %cst_328 = arith.constant dense<0.000000e+00> : vector<16x64xf32>
    %597 = tpu.matmul %594, %596, %cst_328 {dimension_numbers = #tpu.dot_dimension_numbers<[1], [0], [0], [1], [0, 0, 1, 1], [], []>} : vector<16x128xf32>, vector<128x64xf32>, vector<16x64xf32> -> vector<16x64xf32>
    %c1_329 = arith.constant 1 : index
    %c0_330 = arith.constant 0 : index
    %c0_331 = arith.constant 0 : index
    %598 = vector.load %arg13[%c1_329, %c0_330, %c0_331] : memref<2x1x64xf32, #tpu.memory_space<vmem>>, vector<1x1x64xf32>
    %599 = vector.shape_cast %598 : vector<1x1x64xf32> to vector<1x64xf32>
    %600 = vector.broadcast %599 : vector<1x64xf32> to vector<16x64xf32>
    %601 = arith.addf %597, %600 : vector<16x64xf32>
    %602 = arith.addf %547, %601 : vector<16x64xf32>
    %603 = vector.extract_strided_slice %317 {offsets = [4, 0], sizes = [1, 64], strides = [1, 1]} : vector<6x64xf32> to vector<1x64xf32>
    %604 = vector.extract_strided_slice %317 {offsets = [5, 0], sizes = [1, 64], strides = [1, 1]} : vector<6x64xf32> to vector<1x64xf32>
    %cst_332 = arith.constant dense<0.000000e+00> : vector<16xf32>
    %605 = vector.multi_reduction <add>, %602, %cst_332 [1] : vector<16x64xf32> to vector<16xf32>
    %606 = vector.shape_cast %605 : vector<16xf32> to vector<16x1xf32>
    %cst_333 = arith.constant 6.400000e+01 : f32
    %607 = vector.broadcast %cst_333 : f32 to vector<16x1xf32>
    %608 = arith.divf %606, %607 : vector<16x1xf32>
    %609 = vector.broadcast %608 : vector<16x1xf32> to vector<16x64xf32>
    %610 = arith.subf %602, %609 : vector<16x64xf32>
    %611 = arith.mulf %610, %610 : vector<16x64xf32>
    %cst_334 = arith.constant dense<0.000000e+00> : vector<16xf32>
    %612 = vector.multi_reduction <add>, %611, %cst_334 [1] : vector<16x64xf32> to vector<16xf32>
    %613 = vector.shape_cast %612 : vector<16xf32> to vector<16x1xf32>
    %cst_335 = arith.constant 6.400000e+01 : f32
    %614 = vector.broadcast %cst_335 : f32 to vector<16x1xf32>
    %615 = arith.divf %613, %614 : vector<16x1xf32>
    %616 = vector.broadcast %608 : vector<16x1xf32> to vector<16x64xf32>
    %617 = arith.subf %602, %616 : vector<16x64xf32>
    %cst_336 = arith.constant 9.99999974E-6 : f32
    %618 = vector.broadcast %cst_336 : f32 to vector<16x1xf32>
    %619 = arith.addf %615, %618 : vector<16x1xf32>
    %620 = math.rsqrt %619 : vector<16x1xf32>
    %621 = vector.broadcast %620 : vector<16x1xf32> to vector<16x64xf32>
    %622 = arith.mulf %617, %621 : vector<16x64xf32>
    %623 = vector.broadcast %603 : vector<1x64xf32> to vector<16x64xf32>
    %624 = arith.mulf %622, %623 : vector<16x64xf32>
    %625 = vector.broadcast %604 : vector<1x64xf32> to vector<16x64xf32>
    %626 = arith.addf %624, %625 : vector<16x64xf32>
    %c0_337 = arith.constant 0 : index
    %c0_338 = arith.constant 0 : index
    %627 = vector.load %arg14[%c0_337, %c0_338] : memref<64x128xf32, #tpu.memory_space<vmem>>, vector<64x128xf32>
    %cst_339 = arith.constant dense<0.000000e+00> : vector<16x128xf32>
    %628 = tpu.matmul %626, %627, %cst_339 {dimension_numbers = #tpu.dot_dimension_numbers<[1], [0], [0], [1], [0, 0, 1, 1], [], []>} : vector<16x64xf32>, vector<64x128xf32>, vector<16x128xf32> -> vector<16x128xf32>
    %c0_340 = arith.constant 0 : index
    %c0_341 = arith.constant 0 : index
    %629 = vector.load %arg15[%c0_340, %c0_341] : memref<1x128xf32, #tpu.memory_space<vmem>>, vector<1x128xf32>
    %630 = vector.broadcast %629 : vector<1x128xf32> to vector<16x128xf32>
    %631 = arith.addf %628, %630 : vector<16x128xf32>
    %c0_342 = arith.constant 0 : index
    %c0_343 = arith.constant 0 : index
    %c0_344 = arith.constant 0 : index
    %632 = vector.load %arg3[%c0_342, %c0_343, %c0_344] : memref<1x16x1xf32, #tpu.memory_space<vmem>>, vector<1x16x1xf32>
    %633 = vector.shape_cast %632 : vector<1x16x1xf32> to vector<16x1xf32>
    %634 = vector.broadcast %633 : vector<16x1xf32> to vector<16x128xf32>
    %635 = arith.mulf %631, %634 : vector<16x128xf32>
    %c0_345 = arith.constant 0 : index
    %c0_346 = arith.constant 0 : index
    %c0_347 = arith.constant 0 : index
    %636 = vector.load %arg16[%c0_345, %c0_346, %c0_347] : memref<1x16x128xf32, #tpu.memory_space<vmem>>, vector<1x16x128xf32>
    %637 = vector.shape_cast %636 : vector<1x16x128xf32> to vector<16x128xf32>
    %638 = vector.shape_cast %635 : vector<16x128xf32> to vector<1x16x128xf32>
    tpu.vector_store %arg16[%c0_345, %c0_346, %c0_347], %638 {strides = array<i32>} : memref<1x16x128xf32, #tpu.memory_space<vmem>>, vector<1x16x128xf32>,
    return
  }
  func.func @transform_0(%arg0: i32) -> (i32, i32) {
    %c0_i32 = arith.constant 0 : i32
    %c0_i32_0 = arith.constant 0 : i32
    %c0_i32_1 = arith.constant 0 : i32
    return %c0_i32, %c0_i32_0 : i32, i32
  }
  func.func @transform_1(%arg0: i32) -> (i32, i32, i32) {
    %c0_i32 = arith.constant 0 : i32
    %c0_i32_0 = arith.constant 0 : i32
    %c0_i32_1 = arith.constant 0 : i32
    return %arg0, %c0_i32, %c0_i32_0 : i32, i32, i32
  }
  func.func @transform_2(%arg0: i32) -> (i32, i32, i32) {
    %c0_i32 = arith.constant 0 : i32
    %c0_i32_0 = arith.constant 0 : i32
    %c0_i32_1 = arith.constant 0 : i32
    return %arg0, %c0_i32, %c0_i32_0 : i32, i32, i32
  }
  func.func @transform_3(%arg0: i32) -> (i32, i32, i32) {
    %c0_i32 = arith.constant 0 : i32
    %c0_i32_0 = arith.constant 0 : i32
    %c0_i32_1 = arith.constant 0 : i32
    return %arg0, %c0_i32, %c0_i32_0 : i32, i32, i32
  }
  func.func @transform_4(%arg0: i32) -> (i32, i32, i32) {
    %c0_i32 = arith.constant 0 : i32
    %c0_i32_0 = arith.constant 0 : i32
    %c0_i32_1 = arith.constant 0 : i32
    %c0_i32_2 = arith.constant 0 : i32
    return %c0_i32, %c0_i32_0, %c0_i32_1 : i32, i32, i32
  }
  func.func @transform_5(%arg0: i32) -> (i32, i32, i32) {
    %c0_i32 = arith.constant 0 : i32
    %c0_i32_0 = arith.constant 0 : i32
    %c0_i32_1 = arith.constant 0 : i32
    %c0_i32_2 = arith.constant 0 : i32
    return %c0_i32, %c0_i32_0, %c0_i32_1 : i32, i32, i32
  }
  func.func @transform_6(%arg0: i32) -> (i32, i32, i32) {
    %c0_i32 = arith.constant 0 : i32
    %c0_i32_0 = arith.constant 0 : i32
    %c0_i32_1 = arith.constant 0 : i32
    %c0_i32_2 = arith.constant 0 : i32
    return %c0_i32, %c0_i32_0, %c0_i32_1 : i32, i32, i32
  }
  func.func @transform_7(%arg0: i32) -> (i32, i32, i32) {
    %c0_i32 = arith.constant 0 : i32
    %c0_i32_0 = arith.constant 0 : i32
    %c0_i32_1 = arith.constant 0 : i32
    %c0_i32_2 = arith.constant 0 : i32
    return %c0_i32, %c0_i32_0, %c0_i32_1 : i32, i32, i32
  }
  func.func @transform_8(%arg0: i32) -> (i32, i32, i32) {
    %c0_i32 = arith.constant 0 : i32
    %c0_i32_0 = arith.constant 0 : i32
    %c0_i32_1 = arith.constant 0 : i32
    %c0_i32_2 = arith.constant 0 : i32
    return %c0_i32, %c0_i32_0, %c0_i32_1 : i32, i32, i32
  }
  func.func @transform_9(%arg0: i32) -> (i32, i32, i32) {
    %c0_i32 = arith.constant 0 : i32
    %c0_i32_0 = arith.constant 0 : i32
    %c0_i32_1 = arith.constant 0 : i32
    %c0_i32_2 = arith.constant 0 : i32
    return %c0_i32, %c0_i32_0, %c0_i32_1 : i32, i32, i32
  }
  func.func @transform_10(%arg0: i32) -> (i32, i32, i32) {
    %c0_i32 = arith.constant 0 : i32
    %c0_i32_0 = arith.constant 0 : i32
    %c0_i32_1 = arith.constant 0 : i32
    %c0_i32_2 = arith.constant 0 : i32
    return %c0_i32, %c0_i32_0, %c0_i32_1 : i32, i32, i32
  }
  func.func @transform_11(%arg0: i32) -> (i32, i32, i32) {
    %c0_i32 = arith.constant 0 : i32
    %c0_i32_0 = arith.constant 0 : i32
    %c0_i32_1 = arith.constant 0 : i32
    %c0_i32_2 = arith.constant 0 : i32
    return %c0_i32, %c0_i32_0, %c0_i32_1 : i32, i32, i32
  }
  func.func @transform_12(%arg0: i32) -> (i32, i32, i32) {
    %c0_i32 = arith.constant 0 : i32
    %c0_i32_0 = arith.constant 0 : i32
    %c0_i32_1 = arith.constant 0 : i32
    %c0_i32_2 = arith.constant 0 : i32
    return %c0_i32, %c0_i32_0, %c0_i32_1 : i32, i32, i32
  }
  func.func @transform_13(%arg0: i32) -> (i32, i32) {
    %c0_i32 = arith.constant 0 : i32
    %c0_i32_0 = arith.constant 0 : i32
    %c0_i32_1 = arith.constant 0 : i32
    return %c0_i32, %c0_i32_0 : i32, i32
  }
  func.func @transform_14(%arg0: i32) -> (i32, i32) {
    %c0_i32 = arith.constant 0 : i32
    %c0_i32_0 = arith.constant 0 : i32
    %c0_i32_1 = arith.constant 0 : i32
    return %c0_i32, %c0_i32_0 : i32, i32
  }
  func.func @transform_15(%arg0: i32) -> (i32, i32, i32) {
    %c0_i32 = arith.constant 0 : i32
    %c0_i32_0 = arith.constant 0 : i32
    %c0_i32_1 = arith.constant 0 : i32
    return %arg0, %c0_i32, %c0_i32_0 : i32, i32, i32
  }
}

</mosaic_0001>

<llo_original>
// kernel: tpu_custom_call.1
$region0: #{tpu_custom_call.1}
  #allocation0 [shape = 'u32[]', space=smem, size = 0x4, offset = 0x4, fixed_abs, tag = 'smem constant byte address 0x4 - core index']
  #allocation1 [shape = 'u32[144,128]{1,0:T(1,128)}', space=vmem, size = 0x12000, scoped, tag = 'internal scratch']
  %s0 = inlined_call_operand.vmem [shape: f32[16,64], index: 0, kind: input, shape index: {}]
  %s1 = inlined_call_operand.vmem [shape: f32[2,1,16], index: 1, kind: input, shape index: {}]
  %s2 = inlined_call_operand.vmem [shape: f32[2,16,1], index: 2, kind: input, shape index: {}]
  %s3 = inlined_call_operand.vmem [shape: f32[2,2,64], index: 3, kind: input, shape index: {}]
  %s4 = inlined_call_operand.vmem [shape: f32[24,64,16], index: 4, kind: input, shape index: {}]
  %s5 = inlined_call_operand.vmem [shape: f32[24,1,16], index: 5, kind: input, shape index: {}]
  %s6 = inlined_call_operand.vmem [shape: f32[8,16,64], index: 6, kind: input, shape index: {}]
  %s7 = inlined_call_operand.vmem [shape: f32[2,1,64], index: 7, kind: input, shape index: {}]
  %s8 = inlined_call_operand.vmem [shape: f32[2,6,64], index: 8, kind: input, shape index: {}]
  %s9 = inlined_call_operand.vmem [shape: f32[2,64,128], index: 9, kind: input, shape index: {}]
  %s10 = inlined_call_operand.vmem [shape: f32[2,1,128], index: 10, kind: input, shape index: {}]
  %s11 = inlined_call_operand.vmem [shape: f32[2,128,64], index: 11, kind: input, shape index: {}]
  %s12 = inlined_call_operand.vmem [shape: f32[2,1,64], index: 12, kind: input, shape index: {}]
  %s13 = inlined_call_operand.vmem [shape: f32[64,128], index: 13, kind: input, shape index: {}]
  %s14 = inlined_call_operand.vmem [shape: f32[1,128], index: 14, kind: input, shape index: {}]
  %s15 = inlined_call_operand.hbm [shape: f32[2,16,128], index: 15, kind: output, shape index: {}]
  %s16 = sld [smem:[#allocation0]]
  $region93: #{tpu_custom_call.1} parent=0
    _
  %s18 = ssub.s32 1, %s16
  %s19 = scalar_select 0, %s18, %s16
  $region1: #{tpu_custom_call.1} parent=0
    #allocation2 [shape = 'u8[16384]{0}', space=vmem, size = 0x4000, scoped, tag = 'output window, operand 0']
    #allocation3 [shape = 's32[2]{0}', space=sflag, size = 0x8, scoped, tag = 'scoped memory for tpu_custom_call.1']
    %20 = vsyncpa [#allocation3], 0
    %s21 = scalar_lea.sflag [#allocation3], 1
    %22 = vsyncpa %s21, 0
    loop: start=0, step=1, limit=4
    $region2: #{tpu_custom_call.1} parent=1 // loop_pre_header
      _
    $region3: #{tpu_custom_call.1} parent=1 // loop_header
      %s24 = sphi 0, %s28
      %p25 = scmp.ge.s32.totalorder %s24, 4
      %s32 = sphi 0, %s32
      %s34 = sphi 0, %s32
      %s35 = sphi 0, %s34
      %s49 = sphi 0, %s35
      %s55 = sphi 0, %s57
      %s58 = sphi 0, %s55
      %s59 = sphi 0, %s58
      %s75 = sphi 0, %s59
      %s81 = sphi 0, %s83
      %s84 = sphi 0, %s81
      %s85 = sphi 0, %s84
      %s101 = sphi 0, %s85
      %s107 = sphi 0, %s109
      %s110 = sphi 0, %s107
      %s111 = sphi 0, %s110
      %s127 = sphi 0, %s111
      %s131 = sphi 0, %s131
      %s133 = sphi 0, %s131
      %s134 = sphi 0, %s133
      %s148 = sphi 0, %s134
      %s152 = sphi 0, %s152
      %s154 = sphi 0, %s152
      %s155 = sphi 0, %s154
      %s169 = sphi 0, %s155
      %s173 = sphi 0, %s173
      %s175 = sphi 0, %s173
      %s176 = sphi 0, %s175
      %s190 = sphi 0, %s176
      %s194 = sphi 0, %s194
      %s196 = sphi 0, %s194
      %s197 = sphi 0, %s196
      %s211 = sphi 0, %s197
      %s215 = sphi 0, %s215
      %s217 = sphi 0, %s215
      %s218 = sphi 0, %s217
      %s232 = sphi 0, %s218
      %s236 = sphi 0, %s236
      %s238 = sphi 0, %s236
      %s239 = sphi 0, %s238
      %s253 = sphi 0, %s239
      %s257 = sphi 0, %s257
      %s259 = sphi 0, %s257
      %s260 = sphi 0, %s259
      %s274 = sphi 0, %s260
      %s278 = sphi 0, %s278
      %s280 = sphi 0, %s278
      %s281 = sphi 0, %s280
      %s295 = sphi 0, %s281
      %s299 = sphi 0, %s299
      %s301 = sphi 0, %s299
      %s302 = sphi 0, %s301
      %s316 = sphi 0, %s302
      %s320 = sphi 0, %s320
      %s322 = sphi 0, %s320
      %s323 = sphi 0, %s322
      %s337 = sphi 0, %s323
      %s341 = sphi 0, %s341
      %s343 = sphi 0, %s341
      %s344 = sphi 0, %s343
      %s358 = sphi 0, %s344
      %s364 = sphi 0, %s366
      %s367 = sphi 0, %s364
      %s368 = sphi 0, %s367
      %s384 = sphi 0, %s368
    $region4: #{tpu_custom_call.1} parent=1 // loop_header_branch
      %27 = sbr.rel (%p25) target = $region8
    $region5: #{tpu_custom_call.1} parent=1 // loop_body
      %s29 = ssub.s32 %s24, 1
      %s30 = ssub.s32 %s24, 2
      %s31 = sadd.s32 %s24, 1
      %s33 = sadd.s32 %s32, 1
      %p36 = scmp.eq.s32.totalorder %s24, 1
      %p37 = scmp.ne.s32.totalorder %s32, %s34
      %p38 = scmp.eq.s32.totalorder %s24, 0
      %p39 = por %p37, %p38
      %p40 = scmp.ne.s32.totalorder %s32, %s34
      %p41 = scmp.eq.s32.totalorder %s29, 1
      %p42 = por %p40, %p41
      %p43 = scmp.ne.s32.totalorder %s34, %s35
      %p44 = scmp.eq.s32.totalorder %s29, 0
      %p45 = por %p43, %p44
      %p46 = scmp.ne.s32.totalorder %s34, %s35
      %p47 = scmp.eq.s32.totalorder %s30, 1
      %p48 = por %p46, %p47
      %p50 = scmp.ne.s32.totalorder %s35, %s49
      %p51 = scmp.eq.s32.totalorder %s30, 0
      %p52 = por %p50, %p51
      %s53 = ssub.s32 %s24, %s31
      %p54 = scmp.eq.s32.totalorder %s53, 0
      %s56 = sadd.s32 %s55, 1
      %s57 = scalar_select %p54, %s55, %s56
      %p60 = pneg %p54
      %p61 = scmp.eq.s32.totalorder %s24, 1
      %p62 = por %p60, %p61
      %p63 = scmp.ne.s32.totalorder %s55, %s58
      %p64 = scmp.eq.s32.totalorder %s24, 0
      %p65 = por %p63, %p64
      %p66 = scmp.ne.s32.totalorder %s55, %s58
      %p67 = scmp.eq.s32.totalorder %s29, 1
      %p68 = por %p66, %p67
      %p69 = scmp.ne.s32.totalorder %s58, %s59
      %p70 = scmp.eq.s32.totalorder %s29, 0
      %p71 = por %p69, %p70
      %p72 = scmp.ne.s32.totalorder %s58, %s59
      %p73 = scmp.eq.s32.totalorder %s30, 1
      %p74 = por %p72, %p73
      %p76 = scmp.ne.s32.totalorder %s59, %s75
      %p77 = scmp.eq.s32.totalorder %s30, 0
      %p78 = por %p76, %p77
      %s79 = ssub.s32 %s24, %s31
      %p80 = scmp.eq.s32.totalorder %s79, 0
      %s82 = sadd.s32 %s81, 1
      %s83 = scalar_select %p80, %s81, %s82
      %p86 = pneg %p80
      %p87 = scmp.eq.s32.totalorder %s24, 1
      %p88 = por %p86, %p87
      %p89 = scmp.ne.s32.totalorder %s81, %s84
      %p90 = scmp.eq.s32.totalorder %s24, 0
      %p91 = por %p89, %p90
      %p92 = scmp.ne.s32.totalorder %s81, %s84
      %p93 = scmp.eq.s32.totalorder %s29, 1
      %p94 = por %p92, %p93
      %p95 = scmp.ne.s32.totalorder %s84, %s85
      %p96 = scmp.eq.s32.totalorder %s29, 0
      %p97 = por %p95, %p96
      %p98 = scmp.ne.s32.totalorder %s84, %s85
      %p99 = scmp.eq.s32.totalorder %s30, 1
      %p100 = por %p98, %p99
      %p102 = scmp.ne.s32.totalorder %s85, %s101
      %p103 = scmp.eq.s32.totalorder %s30, 0
      %p104 = por %p102, %p103
      %s105 = ssub.s32 %s24, %s31
      %p106 = scmp.eq.s32.totalorder %s105, 0
      %s108 = sadd.s32 %s107, 1
      %s109 = scalar_select %p106, %s107, %s108
      %p112 = pneg %p106
      %p113 = scmp.eq.s32.totalorder %s24, 1
      %p114 = por %p112, %p113
      %p115 = scmp.ne.s32.totalorder %s107, %s110
      %p116 = scmp.eq.s32.totalorder %s24, 0
      %p117 = por %p115, %p116
      %p118 = scmp.ne.s32.totalorder %s107, %s110
      %p119 = scmp.eq.s32.totalorder %s29, 1
      %p120 = por %p118, %p119
      %p121 = scmp.ne.s32.totalorder %s110, %s111
      %p122 = scmp.eq.s32.totalorder %s29, 0
      %p123 = por %p121, %p122
      %p124 = scmp.ne.s32.totalorder %s110, %s111
      %p125 = scmp.eq.s32.totalorder %s30, 1
      %p126 = por %p124, %p125
      %p128 = scmp.ne.s32.totalorder %s111, %s127
      %p129 = scmp.eq.s32.totalorder %s30, 0
      %p130 = por %p128, %p129
      %s132 = sadd.s32 %s131, 1
      %p135 = scmp.eq.s32.totalorder %s24, 1
      %p136 = scmp.ne.s32.totalorder %s131, %s133
      %p137 = scmp.eq.s32.totalorder %s24, 0
      %p138 = por %p136, %p137
      %p139 = scmp.ne.s32.totalorder %s131, %s133
      %p140 = scmp.eq.s32.totalorder %s29, 1
      %p141 = por %p139, %p140
      %p142 = scmp.ne.s32.totalorder %s133, %s134
      %p143 = scmp.eq.s32.totalorder %s29, 0
      %p144 = por %p142, %p143
      %p145 = scmp.ne.s32.totalorder %s133, %s134
      %p146 = scmp.eq.s32.totalorder %s30, 1
      %p147 = por %p145, %p146
      %p149 = scmp.ne.s32.totalorder %s134, %s148
      %p150 = scmp.eq.s32.totalorder %s30, 0
      %p151 = por %p149, %p150
      %s153 = sadd.s32 %s152, 1
      %p156 = scmp.eq.s32.totalorder %s24, 1
      %p157 = scmp.ne.s32.totalorder %s152, %s154
      %p158 = scmp.eq.s32.totalorder %s24, 0
      %p159 = por %p157, %p158
      %p160 = scmp.ne.s32.totalorder %s152, %s154
      %p161 = scmp.eq.s32.totalorder %s29, 1
      %p162 = por %p160, %p161
      %p163 = scmp.ne.s32.totalorder %s154, %s155
      %p164 = scmp.eq.s32.totalorder %s29, 0
      %p165 = por %p163, %p164
      %p166 = scmp.ne.s32.totalorder %s154, %s155
      %p167 = scmp.eq.s32.totalorder %s30, 1
      %p168 = por %p166, %p167
      %p170 = scmp.ne.s32.totalorder %s155, %s169
      %p171 = scmp.eq.s32.totalorder %s30, 0
      %p172 = por %p170, %p171
      %s174 = sadd.s32 %s173, 1
      %p177 = scmp.eq.s32.totalorder %s24, 1
      %p178 = scmp.ne.s32.totalorder %s173, %s175
      %p179 = scmp.eq.s32.totalorder %s24, 0
      %p180 = por %p178, %p179
      %p181 = scmp.ne.s32.totalorder %s173, %s175
      %p182 = scmp.eq.s32.totalorder %s29, 1
      %p183 = por %p181, %p182
      %p184 = scmp.ne.s32.totalorder %s175, %s176
      %p185 = scmp.eq.s32.totalorder %s29, 0
      %p186 = por %p184, %p185
      %p187 = scmp.ne.s32.totalorder %s175, %s176
      %p188 = scmp.eq.s32.totalorder %s30, 1
      %p189 = por %p187, %p188
      %p191 = scmp.ne.s32.totalorder %s176, %s190
      %p192 = scmp.eq.s32.totalorder %s30, 0
      %p193 = por %p191, %p192
      %s195 = sadd.s32 %s194, 1
      %p198 = scmp.eq.s32.totalorder %s24, 1
      %p199 = scmp.ne.s32.totalorder %s194, %s196
      %p200 = scmp.eq.s32.totalorder %s24, 0
      %p201 = por %p199, %p200
      %p202 = scmp.ne.s32.totalorder %s194, %s196
      %p203 = scmp.eq.s32.totalorder %s29, 1
      %p204 = por %p202, %p203
      %p205 = scmp.ne.s32.totalorder %s196, %s197
      %p206 = scmp.eq.s32.totalorder %s29, 0
      %p207 = por %p205, %p206
      %p208 = scmp.ne.s32.totalorder %s196, %s197
      %p209 = scmp.eq.s32.totalorder %s30, 1
      %p210 = por %p208, %p209
      %p212 = scmp.ne.s32.totalorder %s197, %s211
      %p213 = scmp.eq.s32.totalorder %s30, 0
      %p214 = por %p212, %p213
      %s216 = sadd.s32 %s215, 1
      %p219 = scmp.eq.s32.totalorder %s24, 1
      %p220 = scmp.ne.s32.totalorder %s215, %s217
      %p221 = scmp.eq.s32.totalorder %s24, 0
      %p222 = por %p220, %p221
      %p223 = scmp.ne.s32.totalorder %s215, %s217
      %p224 = scmp.eq.s32.totalorder %s29, 1
      %p225 = por %p223, %p224
      %p226 = scmp.ne.s32.totalorder %s217, %s218
      %p227 = scmp.eq.s32.totalorder %s29, 0
      %p228 = por %p226, %p227
      %p229 = scmp.ne.s32.totalorder %s217, %s218
      %p230 = scmp.eq.s32.totalorder %s30, 1
      %p231 = por %p229, %p230
      %p233 = scmp.ne.s32.totalorder %s218, %s232
      %p234 = scmp.eq.s32.totalorder %s30, 0
      %p235 = por %p233, %p234
      %s237 = sadd.s32 %s236, 1
      %p240 = scmp.eq.s32.totalorder %s24, 1
      %p241 = scmp.ne.s32.totalorder %s236, %s238
      %p242 = scmp.eq.s32.totalorder %s24, 0
      %p243 = por %p241, %p242
      %p244 = scmp.ne.s32.totalorder %s236, %s238
      %p245 = scmp.eq.s32.totalorder %s29, 1
      %p246 = por %p244, %p245
      %p247 = scmp.ne.s32.totalorder %s238, %s239
      %p248 = scmp.eq.s32.totalorder %s29, 0
      %p249 = por %p247, %p248
      %p250 = scmp.ne.s32.totalorder %s238, %s239
      %p251 = scmp.eq.s32.totalorder %s30, 1
      %p252 = por %p250, %p251
      %p254 = scmp.ne.s32.totalorder %s239, %s253
      %p255 = scmp.eq.s32.totalorder %s30, 0
      %p256 = por %p254, %p255
      %s258 = sadd.s32 %s257, 1
      %p261 = scmp.eq.s32.totalorder %s24, 1
      %p262 = scmp.ne.s32.totalorder %s257, %s259
      %p263 = scmp.eq.s32.totalorder %s24, 0
      %p264 = por %p262, %p263
      %p265 = scmp.ne.s32.totalorder %s257, %s259
      %p266 = scmp.eq.s32.totalorder %s29, 1
      %p267 = por %p265, %p266
      %p268 = scmp.ne.s32.totalorder %s259, %s260
      %p269 = scmp.eq.s32.totalorder %s29, 0
      %p270 = por %p268, %p269
      %p271 = scmp.ne.s32.totalorder %s259, %s260
      %p272 = scmp.eq.s32.totalorder %s30, 1
      %p273 = por %p271, %p272
      %p275 = scmp.ne.s32.totalorder %s260, %s274
      %p276 = scmp.eq.s32.totalorder %s30, 0
      %p277 = por %p275, %p276
      %s279 = sadd.s32 %s278, 1
      %p282 = scmp.eq.s32.totalorder %s24, 1
      %p283 = scmp.ne.s32.totalorder %s278, %s280
      %p284 = scmp.eq.s32.totalorder %s24, 0
      %p285 = por %p283, %p284
      %p286 = scmp.ne.s32.totalorder %s278, %s280
      %p287 = scmp.eq.s32.totalorder %s29, 1
      %p288 = por %p286, %p287
      %p289 = scmp.ne.s32.totalorder %s280, %s281
      %p290 = scmp.eq.s32.totalorder %s29, 0
      %p291 = por %p289, %p290
      %p292 = scmp.ne.s32.totalorder %s280, %s281
      %p293 = scmp.eq.s32.totalorder %s30, 1
      %p294 = por %p292, %p293
      %p296 = scmp.ne.s32.totalorder %s281, %s295
      %p297 = scmp.eq.s32.totalorder %s30, 0
      %p298 = por %p296, %p297
      %s300 = sadd.s32 %s299, 1
      %p303 = scmp.eq.s32.totalorder %s24, 1
      %p304 = scmp.ne.s32.totalorder %s299, %s301
      %p305 = scmp.eq.s32.totalorder %s24, 0
      %p306 = por %p304, %p305
      %p307 = scmp.ne.s32.totalorder %s299, %s301
      %p308 = scmp.eq.s32.totalorder %s29, 1
      %p309 = por %p307, %p308
      %p310 = scmp.ne.s32.totalorder %s301, %s302
      %p311 = scmp.eq.s32.totalorder %s29, 0
      %p312 = por %p310, %p311
      %p313 = scmp.ne.s32.totalorder %s301, %s302
      %p314 = scmp.eq.s32.totalorder %s30, 1
      %p315 = por %p313, %p314
      %p317 = scmp.ne.s32.totalorder %s302, %s316
      %p318 = scmp.eq.s32.totalorder %s30, 0
      %p319 = por %p317, %p318
      %s321 = sadd.s32 %s320, 1
      %p324 = scmp.eq.s32.totalorder %s24, 1
      %p325 = scmp.ne.s32.totalorder %s320, %s322
      %p326 = scmp.eq.s32.totalorder %s24, 0
      %p327 = por %p325, %p326
      %p328 = scmp.ne.s32.totalorder %s320, %s322
      %p329 = scmp.eq.s32.totalorder %s29, 1
      %p330 = por %p328, %p329
      %p331 = scmp.ne.s32.totalorder %s322, %s323
      %p332 = scmp.eq.s32.totalorder %s29, 0
      %p333 = por %p331, %p332
      %p334 = scmp.ne.s32.totalorder %s322, %s323
      %p335 = scmp.eq.s32.totalorder %s30, 1
      %p336 = por %p334, %p335
      %p338 = scmp.ne.s32.totalorder %s323, %s337
      %p339 = scmp.eq.s32.totalorder %s30, 0
      %p340 = por %p338, %p339
      %s342 = sadd.s32 %s341, 1
      %p345 = scmp.eq.s32.totalorder %s24, 1
      %p346 = scmp.ne.s32.totalorder %s341, %s343
      %p347 = scmp.eq.s32.totalorder %s24, 0
      %p348 = por %p346, %p347
      %p349 = scmp.ne.s32.totalorder %s341, %s343
      %p350 = scmp.eq.s32.totalorder %s29, 1
      %p351 = por %p349, %p350
      %p352 = scmp.ne.s32.totalorder %s343, %s344
      %p353 = scmp.eq.s32.totalorder %s29, 0
      %p354 = por %p352, %p353
      %p355 = scmp.ne.s32.totalorder %s343, %s344
      %p356 = scmp.eq.s32.totalorder %s30, 1
      %p357 = por %p355, %p356
      %p359 = scmp.ne.s32.totalorder %s344, %s358
      %p360 = scmp.eq.s32.totalorder %s30, 0
      %p361 = por %p359, %p360
      %s362 = ssub.s32 %s24, %s31
      %p363 = scmp.eq.s32.totalorder %s362, 0
      %s365 = sadd.s32 %s364, 1
      %s366 = scalar_select %p363, %s364, %s365
      %p369 = pneg %p363
      %p370 = scmp.eq.s32.totalorder %s24, 1
      %p371 = por %p369, %p370
      %p372 = scmp.ne.s32.totalorder %s364, %s367
      %p373 = scmp.eq.s32.totalorder %s24, 0
      %p374 = por %p372, %p373
      %p375 = scmp.ne.s32.totalorder %s364, %s367
      %p376 = scmp.eq.s32.totalorder %s29, 1
      %p377 = por %p375, %p376
      %p378 = scmp.ne.s32.totalorder %s367, %s368
      %p379 = scmp.eq.s32.totalorder %s29, 0
      %p380 = por %p378, %p379
      %p381 = scmp.ne.s32.totalorder %s367, %s368
      %p382 = scmp.eq.s32.totalorder %s30, 1
      %p383 = por %p381, %p382
      %p385 = scmp.ne.s32.totalorder %s368, %s384
      %p386 = scmp.eq.s32.totalorder %s30, 0
      %p387 = por %p385, %p386
      %p388 = scmp.le.s32.totalorder 1, %s24
      %p389 = scmp.lt.s32.totalorder %s24, 3
      %p390 = pnand %p388, %p389
      %p391 = pneg %p390
      // Predicated region
      $region9: #{tpu_custom_call.1} parent=5 // pred_check
        _
      $region10: #{tpu_custom_call.1} parent=5 // pred_check_branch
        %393 = sbr.rel (%p390) target = $region12
      $region11: #{tpu_custom_call.1} parent=5 // pred_region
        %s394 = ssub.s32 %s24, 1
        // Predicated region
        $region13: #{tpu_custom_call.1} parent=11 // pred_check
          %p395 = pneg %p45
        $region14: #{tpu_custom_call.1} parent=11 // pred_check_branch
          %397 = sbr.rel (%p395) target = $region16
        $region15: #{tpu_custom_call.1} parent=11 // pred_region
          _
        $region16: #{tpu_custom_call.1} parent=11 // pred_fallthru
          _
        // Predicated region
        $region17: #{tpu_custom_call.1} parent=11 // pred_check
          %p398 = pneg %p144
        $region18: #{tpu_custom_call.1} parent=11 // pred_check_branch
          %400 = sbr.rel (%p398) target = $region20
        $region19: #{tpu_custom_call.1} parent=11 // pred_region
          _
        $region20: #{tpu_custom_call.1} parent=11 // pred_fallthru
          _
        // Predicated region
        $region21: #{tpu_custom_call.1} parent=11 // pred_check
          %p401 = pneg %p165
        $region22: #{tpu_custom_call.1} parent=11 // pred_check_branch
          %403 = sbr.rel (%p401) target = $region24
        $region23: #{tpu_custom_call.1} parent=11 // pred_region
          _
        $region24: #{tpu_custom_call.1} parent=11 // pred_fallthru
          _
        // Predicated region
        $region25: #{tpu_custom_call.1} parent=11 // pred_check
          %p404 = pneg %p186
        $region26: #{tpu_custom_call.1} parent=11 // pred_check_branch
          %406 = sbr.rel (%p404) target = $region28
        $region27: #{tpu_custom_call.1} parent=11 // pred_region
          _
        $region28: #{tpu_custom_call.1} parent=11 // pred_fallthru
          _
        // Predicated region
        $region29: #{tpu_custom_call.1} parent=11 // pred_check
          %p407 = pneg %p207
        $region30: #{tpu_custom_call.1} parent=11 // pred_check_branch
          %409 = sbr.rel (%p407) target = $region32
        $region31: #{tpu_custom_call.1} parent=11 // pred_region
          _
        $region32: #{tpu_custom_call.1} parent=11 // pred_fallthru
          _
        // Predicated region
        $region33: #{tpu_custom_call.1} parent=11 // pred_check
          %p410 = pneg %p228
        $region34: #{tpu_custom_call.1} parent=11 // pred_check_branch
          %412 = sbr.rel (%p410) target = $region36
        $region35: #{tpu_custom_call.1} parent=11 // pred_region
          _
        $region36: #{tpu_custom_call.1} parent=11 // pred_fallthru
          _
        // Predicated region
        $region37: #{tpu_custom_call.1} parent=11 // pred_check
          %p413 = pneg %p249
        $region38: #{tpu_custom_call.1} parent=11 // pred_check_branch
          %415 = sbr.rel (%p413) target = $region40
        $region39: #{tpu_custom_call.1} parent=11 // pred_region
          _
        $region40: #{tpu_custom_call.1} parent=11 // pred_fallthru
          _
        // Predicated region
        $region41: #{tpu_custom_call.1} parent=11 // pred_check
          %p416 = pneg %p270
        $region42: #{tpu_custom_call.1} parent=11 // pred_check_branch
          %418 = sbr.rel (%p416) target = $region44
        $region43: #{tpu_custom_call.1} parent=11 // pred_region
          _
        $region44: #{tpu_custom_call.1} parent=11 // pred_fallthru
          _
        // Predicated region
        $region45: #{tpu_custom_call.1} parent=11 // pred_check
          %p419 = pneg %p291
        $region46: #{tpu_custom_call.1} parent=11 // pred_check_branch
          %421 = sbr.rel (%p419) target = $region48
        $region47: #{tpu_custom_call.1} parent=11 // pred_region
          _
        $region48: #{tpu_custom_call.1} parent=11 // pred_fallthru
          _
        // Predicated region
        $region49: #{tpu_custom_call.1} parent=11 // pred_check
          %p422 = pneg %p312
        $region50: #{tpu_custom_call.1} parent=11 // pred_check_branch
          %424 = sbr.rel (%p422) target = $region52
        $region51: #{tpu_custom_call.1} parent=11 // pred_region
          _
        $region52: #{tpu_custom_call.1} parent=11 // pred_fallthru
          _
        // Predicated region
        $region53: #{tpu_custom_call.1} parent=11 // pred_check
          %p425 = pneg %p333
        $region54: #{tpu_custom_call.1} parent=11 // pred_check_branch
          %427 = sbr.rel (%p425) target = $region56
        $region55: #{tpu_custom_call.1} parent=11 // pred_region
          _
        $region56: #{tpu_custom_call.1} parent=11 // pred_fallthru
          _
        // Predicated region
        $region57: #{tpu_custom_call.1} parent=11 // pred_check
          %p428 = pneg %p354
        $region58: #{tpu_custom_call.1} parent=11 // pred_check_branch
          %430 = sbr.rel (%p428) target = $region60
        $region59: #{tpu_custom_call.1} parent=11 // pred_region
          _
        $region60: #{tpu_custom_call.1} parent=11 // pred_fallthru
          _
      $region12: #{tpu_custom_call.1} parent=5 // pred_fallthru
        _
      %p431 = scmp.lt.s32.totalorder %s24, 2
      // Predicated region
      $region61: #{tpu_custom_call.1} parent=5 // pred_check
        %p432 = pneg %p431
      $region62: #{tpu_custom_call.1} parent=5 // pred_check_branch
        %434 = sbr.rel (%p432) target = $region64
      $region63: #{tpu_custom_call.1} parent=5 // pred_region
        // Predicated region
        $region65: #{tpu_custom_call.1} parent=63 // pred_check
          %p435 = pneg %p65
        $region66: #{tpu_custom_call.1} parent=63 // pred_check_branch
          %437 = sbr.rel (%p435) target = $region68
        $region67: #{tpu_custom_call.1} parent=63 // pred_region
          %p438 = scmp.lt.s32.totalorder %s24, 1
          %s439 = scalar_select %p438, %s24, 1
          %s440 = scalar_lea.vmem %s1, %s439
        $region68: #{tpu_custom_call.1} parent=63 // pred_fallthru
          _
        // Predicated region
        $region69: #{tpu_custom_call.1} parent=63 // pred_check
          %p441 = pneg %p91
        $region70: #{tpu_custom_call.1} parent=63 // pred_check_branch
          %443 = sbr.rel (%p441) target = $region72
        $region71: #{tpu_custom_call.1} parent=63 // pred_region
          %p444 = scmp.lt.s32.totalorder %s24, 1
          %s445 = scalar_select %p444, %s24, 1
          %s446 = smul.addr %s445, 2
          %s447 = smul.addr %s446, 8
          %s448 = scalar_lea.vmem %s2, %s447
        $region72: #{tpu_custom_call.1} parent=63 // pred_fallthru
          _
        // Predicated region
        $region73: #{tpu_custom_call.1} parent=63 // pred_check
          %p449 = pneg %p117
        $region74: #{tpu_custom_call.1} parent=63 // pred_check_branch
          %451 = sbr.rel (%p449) target = $region76
        $region75: #{tpu_custom_call.1} parent=63 // pred_region
          %p452 = scmp.lt.s32.totalorder %s24, 1
          %s453 = scalar_select %p452, %s24, 1
          %s454 = smul.addr %s453, 2
          %s455 = scalar_lea.vmem %s3, %s454
        $region76: #{tpu_custom_call.1} parent=63 // pred_fallthru
          _
      $region64: #{tpu_custom_call.1} parent=5 // pred_fallthru
        _
      %p456 = scmp.le.s32.totalorder 1, %s24
      %p457 = scmp.lt.s32.totalorder %s24, 3
      %p458 = pnand %p456, %p457
      %p459 = pneg %p458
      // Predicated region
      $region77: #{tpu_custom_call.1} parent=5 // pred_check
        _
      $region78: #{tpu_custom_call.1} parent=5 // pred_check_branch
        %461 = sbr.rel (%p458) target = $region80
      $region79: #{tpu_custom_call.1} parent=5 // pred_region
        %s462 = ssub.s32 %s24, 1
        %p463 = pneg %p45
        %p464 = pneg %p42
        %p465 = scmp.lt.s32.totalorder %s29, 1
        %s466 = scalar_select %p465, %s29, 1
        %s467 = scalar_lea.vmem %s1, %s466
        %p468 = pneg %p71
        %p469 = pneg %p68
        %p470 = scmp.lt.s32.totalorder %s29, 1
        %s471 = scalar_select %p470, %s29, 1
        %s472 = smul.addr %s471, 2
        %s473 = smul.addr %s472, 8
        %s474 = scalar_lea.vmem %s2, %s473
        %p475 = pneg %p97
        %p476 = pneg %p94
        %p477 = scmp.lt.s32.totalorder %s29, 1
        %s478 = scalar_select %p477, %s29, 1
        %s479 = smul.addr %s478, 2
        %s480 = scalar_lea.vmem %s3, %s479
        %p481 = pneg %p123
        %p482 = pneg %p120
        %p483 = pneg %p144
        %p484 = pneg %p141
        %p485 = pneg %p165
        %p486 = pneg %p162
        %p487 = pneg %p186
        %p488 = pneg %p183
        %p489 = pneg %p207
        %p490 = pneg %p204
        %p491 = pneg %p228
        %p492 = pneg %p225
        %p493 = pneg %p249
        %p494 = pneg %p246
        %p495 = pneg %p270
        %p496 = pneg %p267
        %p497 = pneg %p291
        %p498 = pneg %p288
        %p499 = pneg %p312
        %p500 = pneg %p309
        %p501 = pneg %p333
        %p502 = pneg %p330
        %p503 = pneg %p354
        %p504 = pneg %p351
        %p505 = pneg %p380
        %p506 = pneg %p377
        %s507 = sand.u32 %s367, 1
        %s508 = scalar_lea.sflag [#allocation3], %s507
        %s509 = sand.u32 %s367, 1
        %s510 = smul.addr %s509, 16
        %s511 = scalar_lea.vmem [#allocation2], %s510
        %p512 = scmp.lt.s32.totalorder %s29, 1
        %s513 = scalar_select %p512, %s29, 1
        %s514 = scalar_lea.vmem %s1, %s513
        %p515 = scmp.lt.s32.totalorder %s29, 1
        %s516 = scalar_select %p515, %s29, 1
        %s517 = smul.addr %s516, 2
        %s518 = smul.addr %s517, 8
        %s519 = scalar_lea.vmem %s2, %s518
        %p520 = scmp.lt.s32.totalorder %s29, 1
        %s521 = scalar_select %p520, %s29, 1
        %s522 = smul.addr %s521, 2
        %s523 = scalar_lea.vmem %s3, %s522
        %v524 = vld [vmem:[%s0] sm:$0xff]
        %v525 = vld [vmem:[%s0 + $0x8] sm:$0xff]
        %v526 = vld [vmem:[%s514] sm:$0x1]
        %vm527 = vcmp.gt.f32.partialorder %v526, 0.5
        %v528 = vld [vmem:[%s8] sm:$0x3f]
        %v529 = vld [vmem:[%s4] sm:$0xff]
        %v530 = vld [vmem:[%s4 + $0x8] sm:$0xff]
        %v531 = vld [vmem:[%s4 + $0x10] sm:$0xff]
        %v532 = vld [vmem:[%s4 + $0x18] sm:$0xff]
        %v533 = vld [vmem:[%s4 + $0x20] sm:$0xff]
        %v534 = vld [vmem:[%s4 + $0x28] sm:$0xff]
        %v535 = vld [vmem:[%s4 + $0x30] sm:$0xff]
        %v536 = vld [vmem:[%s4 + $0x38] sm:$0xff]
        %v537 = vld [vmem:[%s5] sm:$0x1]
        %v539 = vlaneseq
        %v540 = vshrl.u32 %v539, 7
        %v541 = vsub.s32 0, %v540
        %v542 = vrot.slane %v537, %v541
        %vm544 = vcmask 523264
        %v546 = vsel %vm544, %v524, 0
        %v549 = vsel %vm544, %v525, 0
        %551 = vmatprep.subr.mxu0 0.0
        %552 = vmatpush1.msra.mxu0 %v529
        %553 = vmatprep.subr.mxu0 0.0
        %554 = vmatpush1.msra.mxu0 %v530
        %555 = vmatprep.subr.mxu0 0.0
        %556 = vmatpush1.msra.mxu0 %v531
        %557 = vmatprep.subr.mxu0 0.0
        %558 = vmatpush1.msra.mxu0 %v532
        %559 = vmatprep.subr.mxu0 0.0
        %560 = vmatpush1.msra.mxu0 %v533
        %561 = vmatprep.subr.mxu0 0.0
        %562 = vmatpush1.msra.mxu0 %v534
        %563 = vmatprep.subr.mxu0 0.0
        %564 = vmatpush1.msra.mxu0 %v535
        %565 = vmatprep.subr.mxu0 0.0
        %566 = vmatpush1.msra.mxu0 %v536
        %567 = vmatprep.subr.mxu0 0.0
        %568 = vmatpush1.msra.mxu0 0.0
        %569 = vmatprep.subr.mxu0 0.0
        %570 = vmatpush1.msra.mxu0 0.0
        %571 = vmatprep.subr.mxu0 0.0
        %572 = vmatpush1.msra.mxu0 0.0
        %573 = vmatprep.subr.mxu0 0.0
        %574 = vmatpush1.msra.mxu0 0.0
        %575 = vmatprep.subr.mxu0 0.0
        %576 = vmatpush1.msra.mxu0 0.0
        %577 = vmatprep.subr.mxu0 0.0
        %578 = vmatpush1.msra.mxu0 0.0
        %579 = vmatprep.subr.mxu0 0.0
        %580 = vmatpush1.msra.mxu0 0.0
        %581 = vmatprep.subr.mxu0 0.0
        %582 = vmatpush1.msra.mxu0 0.0
        %583 = vmatprep.subr.mxu0 0.0
        %584 = vmatpush1.msra.mxu0 0.0
        %585 = vmatprep.subr.mxu0 0.0
        %586 = vmatpush1.msra.mxu0 0.0
        %587 = vmatprep.subr.mxu0 0.0
        %588 = vmatpush1.msra.mxu0 0.0
        %589 = vmatprep.subr.mxu0 0.0
        %590 = vmatpush1.msra.mxu0 0.0
        %591 = vmatprep.subr.mxu0 0.0
        %592 = vmatpush1.msra.mxu0 0.0
        %593 = vmatprep.subr.mxu0 0.0
        %594 = vmatpush1.msra.mxu0 0.0
        %595 = vmatprep.subr.mxu0 0.0
        %596 = vmatpush1.msra.mxu0 0.0
        %597 = vmatprep.subr.mxu0 0.0
        %598 = vmatpush1.msra.mxu0 0.0
        %599 = vmatprep.subr.mxu0 0.0
        %600 = vmatpush1.msra.mxu0 0.0
        %601 = vmatprep.subr.mxu0 0.0
        %602 = vmatpush1.msra.mxu0 0.0
        %603 = vmatprep.subr.mxu0 0.0
        %604 = vmatpush1.msra.mxu0 0.0
        %605 = vmatprep.subr.mxu0 0.0
        %606 = vmatpush1.msra.mxu0 0.0
        %607 = vmatprep.subr.mxu0 0.0
        %608 = vmatpush1.msra.mxu0 0.0
        %609 = vmatprep.subr.mxu0 0.0
        %610 = vmatpush1.msra.mxu0 0.0
        %611 = vmatprep.subr.mxu0 0.0
        %612 = vmatpush1.msra.mxu0 0.0
        %613 = vmatprep.subr.mxu0 0.0
        %614 = vmatpush1.msra.mxu0 0.0
        %615 = vmatprep.mubr.f32.mxu0 0.0
        %616 = vmatmul.mubr.f32.gmra.mrb[0].mxu0 %v546
        %v617 = vpop.f32.mrb[0].mxu0
        %v618 = vadd.f32 %v542, %v617
        %v619 = vpop.f32.mrb[0].mxu0
        %620 = vmatprep.mubr.f32.mxu0 0.0
        %621 = vmatmul.mubr.f32.gmra.mrb[0].mxu0 %v549
        %v622 = vpop.f32.mrb[0].mxu0
        %v623 = vadd.f32 %v542, %v622
        %v624 = vpop.f32.mrb[0].mxu0
        %625 = vdwg.mxu0
        %s626 = scalar_lea.vmem %s4, 256
        %v627 = vld [vmem:[%s626] sm:$0xff]
        %v628 = vld [vmem:[%s626 + $0x8] sm:$0xff]
        %v629 = vld [vmem:[%s626 + $0x10] sm:$0xff]
        %v630 = vld [vmem:[%s626 + $0x18] sm:$0xff]
        %v631 = vld [vmem:[%s626 + $0x20] sm:$0xff]
        %v632 = vld [vmem:[%s626 + $0x28] sm:$0xff]
        %v633 = vld [vmem:[%s626 + $0x30] sm:$0xff]
        %v634 = vld [vmem:[%s626 + $0x38] sm:$0xff]
        %s635 = scalar_lea.vmem %s5, 4
        %v636 = vld [vmem:[%s635] sm:$0x1]
        %v638 = vlaneseq
        %v639 = vshrl.u32 %v638, 7
        %v640 = vsub.s32 0, %v639
        %v641 = vrot.slane %v636, %v640
        %643 = vmatprep.subr.mxu0 0.0
        %644 = vmatpush1.msra.mxu0 %v627
        %645 = vmatprep.subr.mxu0 0.0
        %646 = vmatpush1.msra.mxu0 %v628
        %647 = vmatprep.subr.mxu0 0.0
        %648 = vmatpush1.msra.mxu0 %v629
        %649 = vmatprep.subr.mxu0 0.0
        %650 = vmatpush1.msra.mxu0 %v630
        %651 = vmatprep.subr.mxu0 0.0
        %652 = vmatpush1.msra.mxu0 %v631
        %653 = vmatprep.subr.mxu0 0.0
        %654 = vmatpush1.msra.mxu0 %v632
        %655 = vmatprep.subr.mxu0 0.0
        %656 = vmatpush1.msra.mxu0 %v633
        %657 = vmatprep.subr.mxu0 0.0
        %658 = vmatpush1.msra.mxu0 %v634
        %659 = vmatprep.subr.mxu0 0.0
        %660 = vmatpush1.msra.mxu0 0.0
        %661 = vmatprep.subr.mxu0 0.0
        %662 = vmatpush1.msra.mxu0 0.0
        %663 = vmatprep.subr.mxu0 0.0
        %664 = vmatpush1.msra.mxu0 0.0
        %665 = vmatprep.subr.mxu0 0.0
        %666 = vmatpush1.msra.mxu0 0.0
        %667 = vmatprep.subr.mxu0 0.0
        %668 = vmatpush1.msra.mxu0 0.0
        %669 = vmatprep.subr.mxu0 0.0
        %670 = vmatpush1.msra.mxu0 0.0
        %671 = vmatprep.subr.mxu0 0.0
        %672 = vmatpush1.msra.mxu0 0.0
        %673 = vmatprep.subr.mxu0 0.0
        %674 = vmatpush1.msra.mxu0 0.0
        %675 = vmatprep.subr.mxu0 0.0
        %676 = vmatpush1.msra.mxu0 0.0
        %677 = vmatprep.subr.mxu0 0.0
        %678 = vmatpush1.msra.mxu0 0.0
        %679 = vmatprep.subr.mxu0 0.0
        %680 = vmatpush1.msra.mxu0 0.0
        %681 = vmatprep.subr.mxu0 0.0
        %682 = vmatpush1.msra.mxu0 0.0
        %683 = vmatprep.subr.mxu0 0.0
        %684 = vmatpush1.msra.mxu0 0.0
        %685 = vmatprep.subr.mxu0 0.0
        %686 = vmatpush1.msra.mxu0 0.0
        %687 = vmatprep.subr.mxu0 0.0
        %688 = vmatpush1.msra.mxu0 0.0
        %689 = vmatprep.subr.mxu0 0.0
        %690 = vmatpush1.msra.mxu0 0.0
        %691 = vmatprep.subr.mxu0 0.0
        %692 = vmatpush1.msra.mxu0 0.0
        %693 = vmatprep.subr.mxu0 0.0
        %694 = vmatpush1.msra.mxu0 0.0
        %695 = vmatprep.subr.mxu0 0.0
        %696 = vmatpush1.msra.mxu0 0.0
        %697 = vmatprep.subr.mxu0 0.0
        %698 = vmatpush1.msra.mxu0 0.0
        %699 = vmatprep.subr.mxu0 0.0
        %700 = vmatpush1.msra.mxu0 0.0
        %701 = vmatprep.subr.mxu0 0.0
        %702 = vmatpush1.msra.mxu0 0.0
        %703 = vmatprep.subr.mxu0 0.0
        %704 = vmatpush1.msra.mxu0 0.0
        %705 = vmatprep.subr.mxu0 0.0
        %706 = vmatpush1.msra.mxu0 0.0
        %707 = vmatprep.mubr.f32.mxu0 0.0
        %708 = vmatmul.mubr.f32.gmra.mrb[0].mxu0 %v546
        %v709 = vpop.f32.mrb[0].mxu0
        %v710 = vadd.f32 %v641, %v709
        %v711 = vpop.f32.mrb[0].mxu0
        %712 = vmatprep.mubr.f32.mxu0 0.0
        %713 = vmatmul.mubr.f32.gmra.mrb[0].mxu0 %v549
        %v714 = vpop.f32.mrb[0].mxu0
        %v715 = vadd.f32 %v641, %v714
        %v716 = vpop.f32.mrb[0].mxu0
        %717 = vdwg.mxu0
        %s718 = scalar_lea.vmem %s4, 512
        %v719 = vld [vmem:[%s718] sm:$0xff]
        %v720 = vld [vmem:[%s718 + $0x8] sm:$0xff]
        %v721 = vld [vmem:[%s718 + $0x10] sm:$0xff]
        %v722 = vld [vmem:[%s718 + $0x18] sm:$0xff]
        %v723 = vld [vmem:[%s718 + $0x20] sm:$0xff]
        %v724 = vld [vmem:[%s718 + $0x28] sm:$0xff]
        %v725 = vld [vmem:[%s718 + $0x30] sm:$0xff]
        %v726 = vld [vmem:[%s718 + $0x38] sm:$0xff]
        %s727 = scalar_lea.vmem %s5, 8
        %v728 = vld [vmem:[%s727] sm:$0x1]
        %v730 = vlaneseq
        %v731 = vshrl.u32 %v730, 7
        %v732 = vsub.s32 0, %v731
        %v733 = vrot.slane %v728, %v732
        %735 = vmatprep.subr.mxu0 0.0
        %736 = vmatpush1.msra.mxu0 %v719
        %737 = vmatprep.subr.mxu0 0.0
        %738 = vmatpush1.msra.mxu0 %v720
        %739 = vmatprep.subr.mxu0 0.0
        %740 = vmatpush1.msra.mxu0 %v721
        %741 = vmatprep.subr.mxu0 0.0
        %742 = vmatpush1.msra.mxu0 %v722
        %743 = vmatprep.subr.mxu0 0.0
        %744 = vmatpush1.msra.mxu0 %v723
        %745 = vmatprep.subr.mxu0 0.0
        %746 = vmatpush1.msra.mxu0 %v724
        %747 = vmatprep.subr.mxu0 0.0
        %748 = vmatpush1.msra.mxu0 %v725
        %749 = vmatprep.subr.mxu0 0.0
        %750 = vmatpush1.msra.mxu0 %v726
        %751 = vmatprep.subr.mxu0 0.0
        %752 = vmatpush1.msra.mxu0 0.0
        %753 = vmatprep.subr.mxu0 0.0
        %754 = vmatpush1.msra.mxu0 0.0
        %755 = vmatprep.subr.mxu0 0.0
        %756 = vmatpush1.msra.mxu0 0.0
        %757 = vmatprep.subr.mxu0 0.0
        %758 = vmatpush1.msra.mxu0 0.0
        %759 = vmatprep.subr.mxu0 0.0
        %760 = vmatpush1.msra.mxu0 0.0
        %761 = vmatprep.subr.mxu0 0.0
        %762 = vmatpush1.msra.mxu0 0.0
        %763 = vmatprep.subr.mxu0 0.0
        %764 = vmatpush1.msra.mxu0 0.0
        %765 = vmatprep.subr.mxu0 0.0
        %766 = vmatpush1.msra.mxu0 0.0
        %767 = vmatprep.subr.mxu0 0.0
        %768 = vmatpush1.msra.mxu0 0.0
        %769 = vmatprep.subr.mxu0 0.0
        %770 = vmatpush1.msra.mxu0 0.0
        %771 = vmatprep.subr.mxu0 0.0
        %772 = vmatpush1.msra.mxu0 0.0
        %773 = vmatprep.subr.mxu0 0.0
        %774 = vmatpush1.msra.mxu0 0.0
        %775 = vmatprep.subr.mxu0 0.0
        %776 = vmatpush1.msra.mxu0 0.0
        %777 = vmatprep.subr.mxu0 0.0
        %778 = vmatpush1.msra.mxu0 0.0
        %779 = vmatprep.subr.mxu0 0.0
        %780 = vmatpush1.msra.mxu0 0.0
        %781 = vmatprep.subr.mxu0 0.0
        %782 = vmatpush1.msra.mxu0 0.0
        %783 = vmatprep.subr.mxu0 0.0
        %784 = vmatpush1.msra.mxu0 0.0
        %785 = vmatprep.subr.mxu0 0.0
        %786 = vmatpush1.msra.mxu0 0.0
        %787 = vmatprep.subr.mxu0 0.0
        %788 = vmatpush1.msra.mxu0 0.0
        %789 = vmatprep.subr.mxu0 0.0
        %790 = vmatpush1.msra.mxu0 0.0
        %791 = vmatprep.subr.mxu0 0.0
        %792 = vmatpush1.msra.mxu0 0.0
        %793 = vmatprep.subr.mxu0 0.0
        %794 = vmatpush1.msra.mxu0 0.0
        %795 = vmatprep.subr.mxu0 0.0
        %796 = vmatpush1.msra.mxu0 0.0
        %797 = vmatprep.subr.mxu0 0.0
        %798 = vmatpush1.msra.mxu0 0.0
        %799 = vmatprep.mubr.f32.mxu0 0.0
        %800 = vmatmul.mubr.f32.gmra.mrb[0].mxu0 %v546
        %v801 = vpop.f32.mrb[0].mxu0
        %v802 = vadd.f32 %v733, %v801
        %v803 = vpop.f32.mrb[0].mxu0
        %804 = vmatprep.mubr.f32.mxu0 0.0
        %805 = vmatmul.mubr.f32.gmra.mrb[0].mxu0 %v549
        %v806 = vpop.f32.mrb[0].mxu0
        %v807 = vadd.f32 %v733, %v806
        %v808 = vpop.f32.mrb[0].mxu0
        %809 = vdwg.mxu0
        %vm810 = vcmask 130048
        %v812 = vsel %vm810, %v618, 0
        %v815 = vsel %vm810, %v623, 0
        %v818 = vsel %vm810, %v710, 0
        %v821 = vsel %vm810, %v715, 0
        %823 = vmatprep.subr.mxu0 0.0
        %824 = vmatpush1.xpose.msra.mxu0 %v818
        %825 = vmatprep.subr.mxu0 0.0
        %826 = vmatpush1.xpose.msra.mxu0 %v821
        %827 = vmatprep.subr.mxu0 0.0
        %828 = vmatpush1.xpose.msra.mxu0 0.0
        %829 = vmatprep.subr.mxu0 0.0
        %830 = vmatpush1.xpose.msra.mxu0 0.0
        %831 = vmatprep.subr.mxu0 0.0
        %832 = vmatpush1.xpose.msra.mxu0 0.0
        %833 = vmatprep.subr.mxu0 0.0
        %834 = vmatpush1.xpose.msra.mxu0 0.0
        %835 = vmatprep.subr.mxu0 0.0
        %836 = vmatpush1.xpose.msra.mxu0 0.0
        %837 = vmatprep.subr.mxu0 0.0
        %838 = vmatpush1.xpose.msra.mxu0 0.0
        %839 = vmatprep.subr.mxu0 0.0
        %840 = vmatpush1.xpose.msra.mxu0 0.0
        %841 = vmatprep.subr.mxu0 0.0
        %842 = vmatpush1.xpose.msra.mxu0 0.0
        %843 = vmatprep.subr.mxu0 0.0
        %844 = vmatpush1.xpose.msra.mxu0 0.0
        %845 = vmatprep.subr.mxu0 0.0
        %846 = vmatpush1.xpose.msra.mxu0 0.0
        %847 = vmatprep.subr.mxu0 0.0
        %848 = vmatpush1.xpose.msra.mxu0 0.0
        %849 = vmatprep.subr.mxu0 0.0
        %850 = vmatpush1.xpose.msra.mxu0 0.0
        %851 = vmatprep.subr.mxu0 0.0
        %852 = vmatpush1.xpose.msra.mxu0 0.0
        %853 = vmatprep.subr.mxu0 0.0
        %854 = vmatpush1.xpose.msra.mxu0 0.0
        %855 = vmatprep.subr.mxu0 0.0
        %856 = vmatpush1.xpose.msra.mxu0 0.0
        %857 = vmatprep.subr.mxu0 0.0
        %858 = vmatpush1.xpose.msra.mxu0 0.0
        %859 = vmatprep.subr.mxu0 0.0
        %860 = vmatpush1.xpose.msra.mxu0 0.0
        %861 = vmatprep.subr.mxu0 0.0
        %862 = vmatpush1.xpose.msra.mxu0 0.0
        %863 = vmatprep.subr.mxu0 0.0
        %864 = vmatpush1.xpose.msra.mxu0 0.0
        %865 = vmatprep.subr.mxu0 0.0
        %866 = vmatpush1.xpose.msra.mxu0 0.0
        %867 = vmatprep.subr.mxu0 0.0
        %868 = vmatpush1.xpose.msra.mxu0 0.0
        %869 = vmatprep.subr.mxu0 0.0
        %870 = vmatpush1.xpose.msra.mxu0 0.0
        %871 = vmatprep.subr.mxu0 0.0
        %872 = vmatpush1.xpose.msra.mxu0 0.0
        %873 = vmatprep.subr.mxu0 0.0
        %874 = vmatpush1.xpose.msra.mxu0 0.0
        %875 = vmatprep.subr.mxu0 0.0
        %876 = vmatpush1.xpose.msra.mxu0 0.0
        %877 = vmatprep.subr.mxu0 0.0
        %878 = vmatpush1.xpose.msra.mxu0 0.0
        %879 = vmatprep.subr.mxu0 0.0
        %880 = vmatpush1.xpose.msra.mxu0 0.0
        %881 = vmatprep.subr.mxu0 0.0
        %882 = vmatpush1.xpose.msra.mxu0 0.0
        %883 = vmatprep.subr.mxu0 0.0
        %884 = vmatpush1.xpose.msra.mxu0 0.0
        %885 = vmatprep.subr.mxu0 0.0
        %886 = vmatpush1.xpose.msra.mxu0 0.0
        %887 = vmatprep.mubr.f32.mxu0 0.0
        %888 = vmatmul.mubr.f32.gmra.mrb[0].mxu0 %v812
        %v889 = vpop.f32.mrb[0].mxu0
        %v890 = vadd.f32 0.0, %v889
        %v891 = vpop.f32.mrb[0].mxu0
        %892 = vmatprep.mubr.f32.mxu0 0.0
        %893 = vmatmul.mubr.f32.gmra.mrb[0].mxu0 %v815
        %v894 = vpop.f32.mrb[0].mxu0
        %v895 = vadd.f32 0.0, %v894
        %v896 = vpop.f32.mrb[0].mxu0
        %897 = vdwg.mxu0
        %v898 = vmul.f32 %v890, 0.25
        %v899 = vmul.f32 %v895, 0.25
        %v900 = vsel %vm527, 1, 0
        %v901 = vlaneseq
        %v902 = vshrl.u32 %v901, 7
        %v903 = vsub.s32 0, %v902
        %v904 = vrot.slane %v900, %v903
        %vm905 = vcmp.eq.s32.totalorder %v904, 1
        %v906 = vsel %vm905, %v898, -1e+30
        %v907 = vsel %vm905, %v899, -1e+30
        %v908 = vsel %vm810, %v906, -inf
        %909 = vmax.xlane.f32.xlu0 %v908
        %v910 = vpop.xlane.xlu0 %909
        %v911 = vsel %vm810, %v907, -inf
        %912 = vmax.xlane.f32.xlu0 %v911
        %v913 = vpop.xlane.xlu0 %912
        %v914 = vsub.f32 %v906, %v910
        %v915 = vsub.f32 %v907, %v913
        %v916 = vmul.f32 %v914, 1.442695
        %v917 = vpow.pop %v916
        %v918 = vmul.f32 %v915, 1.442695
        %v919 = vpow.pop %v918
        %v920 = vsel %vm810, %v917, 0.0
        %921 = vadd.xlane.f32.xlu0 %v920
        %v922 = vpop.xlane.xlu0 %921
        %v923 = vsel %vm810, %v919, 0.0
        %924 = vadd.xlane.f32.xlu0 %v923
        %v925 = vpop.xlane.xlu0 %924
        %v926 = vrcp.pop %v922
        %v927 = vrcp.pop %v925
        %v928 = vmul.f32 %v917, %v926
        %v929 = vmul.f32 %v919, %v927
        %v931 = vsel %vm810, %v928, 0
        %v934 = vsel %vm810, %v929, 0
        %936 = vmatprep.subr.mxu0 0.0
        %937 = vmatpush1.msra.mxu0 %v802
        %938 = vmatprep.subr.mxu0 0.0
        %939 = vmatpush1.msra.mxu0 %v807
        %940 = vmatprep.subr.mxu0 0.0
        %941 = vmatpush1.msra.mxu0 0.0
        %942 = vmatprep.subr.mxu0 0.0
        %943 = vmatpush1.msra.mxu0 0.0
        %944 = vmatprep.subr.mxu0 0.0
        %945 = vmatpush1.msra.mxu0 0.0
        %946 = vmatprep.subr.mxu0 0.0
        %947 = vmatpush1.msra.mxu0 0.0
        %948 = vmatprep.subr.mxu0 0.0
        %949 = vmatpush1.msra.mxu0 0.0
        %950 = vmatprep.subr.mxu0 0.0
        %951 = vmatpush1.msra.mxu0 0.0
        %952 = vmatprep.subr.mxu0 0.0
        %953 = vmatpush1.msra.mxu0 0.0
        %954 = vmatprep.subr.mxu0 0.0
        %955 = vmatpush1.msra.mxu0 0.0
        %956 = vmatprep.subr.mxu0 0.0
        %957 = vmatpush1.msra.mxu0 0.0
        %958 = vmatprep.subr.mxu0 0.0
        %959 = vmatpush1.msra.mxu0 0.0
        %960 = vmatprep.subr.mxu0 0.0
        %961 = vmatpush1.msra.mxu0 0.0
        %962 = vmatprep.subr.mxu0 0.0
        %963 = vmatpush1.msra.mxu0 0.0
        %964 = vmatprep.subr.mxu0 0.0
        %965 = vmatpush1.msra.mxu0 0.0
        %966 = vmatprep.subr.mxu0 0.0
        %967 = vmatpush1.msra.mxu0 0.0
        %968 = vmatprep.subr.mxu0 0.0
        %969 = vmatpush1.msra.mxu0 0.0
        %970 = vmatprep.subr.mxu0 0.0
        %971 = vmatpush1.msra.mxu0 0.0
        %972 = vmatprep.subr.mxu0 0.0
        %973 = vmatpush1.msra.mxu0 0.0
        %974 = vmatprep.subr.mxu0 0.0
        %975 = vmatpush1.msra.mxu0 0.0
        %976 = vmatprep.subr.mxu0 0.0
        %977 = vmatpush1.msra.mxu0 0.0
        %978 = vmatprep.subr.mxu0 0.0
        %979 = vmatpush1.msra.mxu0 0.0
        %980 = vmatprep.subr.mxu0 0.0
        %981 = vmatpush1.msra.mxu0 0.0
        %982 = vmatprep.subr.mxu0 0.0
        %983 = vmatpush1.msra.mxu0 0.0
        %984 = vmatprep.subr.mxu0 0.0
        %985 = vmatpush1.msra.mxu0 0.0
        %986 = vmatprep.subr.mxu0 0.0
        %987 = vmatpush1.msra.mxu0 0.0
        %988 = vmatprep.subr.mxu0 0.0
        %989 = vmatpush1.msra.mxu0 0.0
        %990 = vmatprep.subr.mxu0 0.0
        %991 = vmatpush1.msra.mxu0 0.0
        %992 = vmatprep.subr.mxu0 0.0
        %993 = vmatpush1.msra.mxu0 0.0
        %994 = vmatprep.subr.mxu0 0.0
        %995 = vmatpush1.msra.mxu0 0.0
        %996 = vmatprep.subr.mxu0 0.0
        %997 = vmatpush1.msra.mxu0 0.0
        %998 = vmatprep.subr.mxu0 0.0
        %999 = vmatpush1.msra.mxu0 0.0
        %1000 = vmatprep.mubr.f32.mxu0 0.0
        %1001 = vmatmul.mubr.f32.gmra.mrb[0].mxu0 %v931
        %v1002 = vpop.f32.mrb[0].mxu0
        %v1003 = vadd.f32 0.0, %v1002
        %v1004 = vpop.f32.mrb[0].mxu0
        %1005 = vmatprep.mubr.f32.mxu0 0.0
        %1006 = vmatmul.mubr.f32.gmra.mrb[0].mxu0 %v934
        %v1007 = vpop.f32.mrb[0].mxu0
        %v1008 = vadd.f32 0.0, %v1007
        %v1009 = vpop.f32.mrb[0].mxu0
        %1010 = vdwg.mxu0
        %v1011 = vld [vmem:[%s6] sm:$0xff]
        %v1012 = vld [vmem:[%s6 + $0x8] sm:$0xff]
        %s1013 = scalar_lea.vmem %s4, 64
        %v1014 = vld [vmem:[%s1013] sm:$0xff]
        %v1015 = vld [vmem:[%s1013 + $0x8] sm:$0xff]
        %v1016 = vld [vmem:[%s1013 + $0x10] sm:$0xff]
        %v1017 = vld [vmem:[%s1013 + $0x18] sm:$0xff]
        %v1018 = vld [vmem:[%s1013 + $0x20] sm:$0xff]
        %v1019 = vld [vmem:[%s1013 + $0x28] sm:$0xff]
        %v1020 = vld [vmem:[%s1013 + $0x30] sm:$0xff]
        %v1021 = vld [vmem:[%s1013 + $0x38] sm:$0xff]
        %s1022 = scalar_lea.vmem %s5, 1
        %v1023 = vld [vmem:[%s1022] sm:$0x1]
        %v1025 = vlaneseq
        %v1026 = vshrl.u32 %v1025, 7
        %v1027 = vsub.s32 0, %v1026
        %v1028 = vrot.slane %v1023, %v1027
        %1030 = vmatprep.subr.mxu0 0.0
        %1031 = vmatpush1.msra.mxu0 %v1014
        %1032 = vmatprep.subr.mxu0 0.0
        %1033 = vmatpush1.msra.mxu0 %v1015
        %1034 = vmatprep.subr.mxu0 0.0
        %1035 = vmatpush1.msra.mxu0 %v1016
        %1036 = vmatprep.subr.mxu0 0.0
        %1037 = vmatpush1.msra.mxu0 %v1017
        %1038 = vmatprep.subr.mxu0 0.0
        %1039 = vmatpush1.msra.mxu0 %v1018
        %1040 = vmatprep.subr.mxu0 0.0
        %1041 = vmatpush1.msra.mxu0 %v1019
        %1042 = vmatprep.subr.mxu0 0.0
        %1043 = vmatpush1.msra.mxu0 %v1020
        %1044 = vmatprep.subr.mxu0 0.0
        %1045 = vmatpush1.msra.mxu0 %v1021
        %1046 = vmatprep.subr.mxu0 0.0
        %1047 = vmatpush1.msra.mxu0 0.0
        %1048 = vmatprep.subr.mxu0 0.0
        %1049 = vmatpush1.msra.mxu0 0.0
        %1050 = vmatprep.subr.mxu0 0.0
        %1051 = vmatpush1.msra.mxu0 0.0
        %1052 = vmatprep.subr.mxu0 0.0
        %1053 = vmatpush1.msra.mxu0 0.0
        %1054 = vmatprep.subr.mxu0 0.0
        %1055 = vmatpush1.msra.mxu0 0.0
        %1056 = vmatprep.subr.mxu0 0.0
        %1057 = vmatpush1.msra.mxu0 0.0
        %1058 = vmatprep.subr.mxu0 0.0
        %1059 = vmatpush1.msra.mxu0 0.0
        %1060 = vmatprep.subr.mxu0 0.0
        %1061 = vmatpush1.msra.mxu0 0.0
        %1062 = vmatprep.subr.mxu0 0.0
        %1063 = vmatpush1.msra.mxu0 0.0
        %1064 = vmatprep.subr.mxu0 0.0
        %1065 = vmatpush1.msra.mxu0 0.0
        %1066 = vmatprep.subr.mxu0 0.0
        %1067 = vmatpush1.msra.mxu0 0.0
        %1068 = vmatprep.subr.mxu0 0.0
        %1069 = vmatpush1.msra.mxu0 0.0
        %1070 = vmatprep.subr.mxu0 0.0
        %1071 = vmatpush1.msra.mxu0 0.0
        %1072 = vmatprep.subr.mxu0 0.0
        %1073 = vmatpush1.msra.mxu0 0.0
        %1074 = vmatprep.subr.mxu0 0.0
        %1075 = vmatpush1.msra.mxu0 0.0
        %1076 = vmatprep.subr.mxu0 0.0
        %1077 = vmatpush1.msra.mxu0 0.0
        %1078 = vmatprep.subr.mxu0 0.0
        %1079 = vmatpush1.msra.mxu0 0.0
        %1080 = vmatprep.subr.mxu0 0.0
        %1081 = vmatpush1.msra.mxu0 0.0
        %1082 = vmatprep.subr.mxu0 0.0
        %1083 = vmatpush1.msra.mxu0 0.0
        %1084 = vmatprep.subr.mxu0 0.0
        %1085 = vmatpush1.msra.mxu0 0.0
        %1086 = vmatprep.subr.mxu0 0.0
        %1087 = vmatpush1.msra.mxu0 0.0
        %1088 = vmatprep.subr.mxu0 0.0
        %1089 = vmatpush1.msra.mxu0 0.0
        %1090 = vmatprep.subr.mxu0 0.0
        %1091 = vmatpush1.msra.mxu0 0.0
        %1092 = vmatprep.subr.mxu0 0.0
        %1093 = vmatpush1.msra.mxu0 0.0
        %1094 = vmatprep.mubr.f32.mxu0 0.0
        %1095 = vmatmul.mubr.f32.gmra.mrb[0].mxu0 %v546
        %v1096 = vpop.f32.mrb[0].mxu0
        %v1097 = vadd.f32 %v1028, %v1096
        %v1098 = vpop.f32.mrb[0].mxu0
        %1099 = vmatprep.mubr.f32.mxu0 0.0
        %1100 = vmatmul.mubr.f32.gmra.mrb[0].mxu0 %v549
        %v1101 = vpop.f32.mrb[0].mxu0
        %v1102 = vadd.f32 %v1028, %v1101
        %v1103 = vpop.f32.mrb[0].mxu0
        %1104 = vdwg.mxu0
        %s1105 = scalar_lea.vmem %s4, 320
        %v1106 = vld [vmem:[%s1105] sm:$0xff]
        %v1107 = vld [vmem:[%s1105 + $0x8] sm:$0xff]
        %v1108 = vld [vmem:[%s1105 + $0x10] sm:$0xff]
        %v1109 = vld [vmem:[%s1105 + $0x18] sm:$0xff]
        %v1110 = vld [vmem:[%s1105 + $0x20] sm:$0xff]
        %v1111 = vld [vmem:[%s1105 + $0x28] sm:$0xff]
        %v1112 = vld [vmem:[%s1105 + $0x30] sm:$0xff]
        %v1113 = vld [vmem:[%s1105 + $0x38] sm:$0xff]
        %s1114 = scalar_lea.vmem %s5, 5
        %v1115 = vld [vmem:[%s1114] sm:$0x1]
        %v1117 = vlaneseq
        %v1118 = vshrl.u32 %v1117, 7
        %v1119 = vsub.s32 0, %v1118
        %v1120 = vrot.slane %v1115, %v1119
        %1122 = vmatprep.subr.mxu0 0.0
        %1123 = vmatpush1.msra.mxu0 %v1106
        %1124 = vmatprep.subr.mxu0 0.0
        %1125 = vmatpush1.msra.mxu0 %v1107
        %1126 = vmatprep.subr.mxu0 0.0
        %1127 = vmatpush1.msra.mxu0 %v1108
        %1128 = vmatprep.subr.mxu0 0.0
        %1129 = vmatpush1.msra.mxu0 %v1109
        %1130 = vmatprep.subr.mxu0 0.0
        %1131 = vmatpush1.msra.mxu0 %v1110
        %1132 = vmatprep.subr.mxu0 0.0
        %1133 = vmatpush1.msra.mxu0 %v1111
        %1134 = vmatprep.subr.mxu0 0.0
        %1135 = vmatpush1.msra.mxu0 %v1112
        %1136 = vmatprep.subr.mxu0 0.0
        %1137 = vmatpush1.msra.mxu0 %v1113
        %1138 = vmatprep.subr.mxu0 0.0
        %1139 = vmatpush1.msra.mxu0 0.0
        %1140 = vmatprep.subr.mxu0 0.0
        %1141 = vmatpush1.msra.mxu0 0.0
        %1142 = vmatprep.subr.mxu0 0.0
        %1143 = vmatpush1.msra.mxu0 0.0
        %1144 = vmatprep.subr.mxu0 0.0
        %1145 = vmatpush1.msra.mxu0 0.0
        %1146 = vmatprep.subr.mxu0 0.0
        %1147 = vmatpush1.msra.mxu0 0.0
        %1148 = vmatprep.subr.mxu0 0.0
        %1149 = vmatpush1.msra.mxu0 0.0
        %1150 = vmatprep.subr.mxu0 0.0
        %1151 = vmatpush1.msra.mxu0 0.0
        %1152 = vmatprep.subr.mxu0 0.0
        %1153 = vmatpush1.msra.mxu0 0.0
        %1154 = vmatprep.subr.mxu0 0.0
        %1155 = vmatpush1.msra.mxu0 0.0
        %1156 = vmatprep.subr.mxu0 0.0
        %1157 = vmatpush1.msra.mxu0 0.0
        %1158 = vmatprep.subr.mxu0 0.0
        %1159 = vmatpush1.msra.mxu0 0.0
        %1160 = vmatprep.subr.mxu0 0.0
        %1161 = vmatpush1.msra.mxu0 0.0
        %1162 = vmatprep.subr.mxu0 0.0
        %1163 = vmatpush1.msra.mxu0 0.0
        %1164 = vmatprep.subr.mxu0 0.0
        %1165 = vmatpush1.msra.mxu0 0.0
        %1166 = vmatprep.subr.mxu0 0.0
        %1167 = vmatpush1.msra.mxu0 0.0
        %1168 = vmatprep.subr.mxu0 0.0
        %1169 = vmatpush1.msra.mxu0 0.0
        %1170 = vmatprep.subr.mxu0 0.0
        %1171 = vmatpush1.msra.mxu0 0.0
        %1172 = vmatprep.subr.mxu0 0.0
        %1173 = vmatpush1.msra.mxu0 0.0
        %1174 = vmatprep.subr.mxu0 0.0
        %1175 = vmatpush1.msra.mxu0 0.0
        %1176 = vmatprep.subr.mxu0 0.0
        %1177 = vmatpush1.msra.mxu0 0.0
        %1178 = vmatprep.subr.mxu0 0.0
        %1179 = vmatpush1.msra.mxu0 0.0
        %1180 = vmatprep.subr.mxu0 0.0
        %1181 = vmatpush1.msra.mxu0 0.0
        %1182 = vmatprep.subr.mxu0 0.0
        %1183 = vmatpush1.msra.mxu0 0.0
        %1184 = vmatprep.subr.mxu0 0.0
        %1185 = vmatpush1.msra.mxu0 0.0
        %1186 = vmatprep.mubr.f32.mxu0 0.0
        %1187 = vmatmul.mubr.f32.gmra.mrb[0].mxu0 %v546
        %v1188 = vpop.f32.mrb[0].mxu0
        %v1189 = vadd.f32 %v1120, %v1188
        %v1190 = vpop.f32.mrb[0].mxu0
        %1191 = vmatprep.mubr.f32.mxu0 0.0
        %1192 = vmatmul.mubr.f32.gmra.mrb[0].mxu0 %v549
        %v1193 = vpop.f32.mrb[0].mxu0
        %v1194 = vadd.f32 %v1120, %v1193
        %v1195 = vpop.f32.mrb[0].mxu0
        %1196 = vdwg.mxu0
        %s1197 = scalar_lea.vmem %s4, 576
        %v1198 = vld [vmem:[%s1197] sm:$0xff]
        %v1199 = vld [vmem:[%s1197 + $0x8] sm:$0xff]
        %v1200 = vld [vmem:[%s1197 + $0x10] sm:$0xff]
        %v1201 = vld [vmem:[%s1197 + $0x18] sm:$0xff]
        %v1202 = vld [vmem:[%s1197 + $0x20] sm:$0xff]
        %v1203 = vld [vmem:[%s1197 + $0x28] sm:$0xff]
        %v1204 = vld [vmem:[%s1197 + $0x30] sm:$0xff]
        %v1205 = vld [vmem:[%s1197 + $0x38] sm:$0xff]
        %s1206 = scalar_lea.vmem %s5, 9
        %v1207 = vld [vmem:[%s1206] sm:$0x1]
        %v1209 = vlaneseq
        %v1210 = vshrl.u32 %v1209, 7
        %v1211 = vsub.s32 0, %v1210
        %v1212 = vrot.slane %v1207, %v1211
        %1214 = vmatprep.subr.mxu0 0.0
        %1215 = vmatpush1.msra.mxu0 %v1198
        %1216 = vmatprep.subr.mxu0 0.0
        %1217 = vmatpush1.msra.mxu0 %v1199
        %1218 = vmatprep.subr.mxu0 0.0
        %1219 = vmatpush1.msra.mxu0 %v1200
        %1220 = vmatprep.subr.mxu0 0.0
        %1221 = vmatpush1.msra.mxu0 %v1201
        %1222 = vmatprep.subr.mxu0 0.0
        %1223 = vmatpush1.msra.mxu0 %v1202
        %1224 = vmatprep.subr.mxu0 0.0
        %1225 = vmatpush1.msra.mxu0 %v1203
        %1226 = vmatprep.subr.mxu0 0.0
        %1227 = vmatpush1.msra.mxu0 %v1204
        %1228 = vmatprep.subr.mxu0 0.0
        %1229 = vmatpush1.msra.mxu0 %v1205
        %1230 = vmatprep.subr.mxu0 0.0
        %1231 = vmatpush1.msra.mxu0 0.0
        %1232 = vmatprep.subr.mxu0 0.0
        %1233 = vmatpush1.msra.mxu0 0.0
        %1234 = vmatprep.subr.mxu0 0.0
        %1235 = vmatpush1.msra.mxu0 0.0
        %1236 = vmatprep.subr.mxu0 0.0
        %1237 = vmatpush1.msra.mxu0 0.0
        %1238 = vmatprep.subr.mxu0 0.0
        %1239 = vmatpush1.msra.mxu0 0.0
        %1240 = vmatprep.subr.mxu0 0.0
        %1241 = vmatpush1.msra.mxu0 0.0
        %1242 = vmatprep.subr.mxu0 0.0
        %1243 = vmatpush1.msra.mxu0 0.0
        %1244 = vmatprep.subr.mxu0 0.0
        %1245 = vmatpush1.msra.mxu0 0.0
        %1246 = vmatprep.subr.mxu0 0.0
        %1247 = vmatpush1.msra.mxu0 0.0
        %1248 = vmatprep.subr.mxu0 0.0
        %1249 = vmatpush1.msra.mxu0 0.0
        %1250 = vmatprep.subr.mxu0 0.0
        %1251 = vmatpush1.msra.mxu0 0.0
        %1252 = vmatprep.subr.mxu0 0.0
        %1253 = vmatpush1.msra.mxu0 0.0
        %1254 = vmatprep.subr.mxu0 0.0
        %1255 = vmatpush1.msra.mxu0 0.0
        %1256 = vmatprep.subr.mxu0 0.0
        %1257 = vmatpush1.msra.mxu0 0.0
        %1258 = vmatprep.subr.mxu0 0.0
        %1259 = vmatpush1.msra.mxu0 0.0
        %1260 = vmatprep.subr.mxu0 0.0
        %1261 = vmatpush1.msra.mxu0 0.0
        %1262 = vmatprep.subr.mxu0 0.0
        %1263 = vmatpush1.msra.mxu0 0.0
        %1264 = vmatprep.subr.mxu0 0.0
        %1265 = vmatpush1.msra.mxu0 0.0
        %1266 = vmatprep.subr.mxu0 0.0
        %1267 = vmatpush1.msra.mxu0 0.0
        %1268 = vmatprep.subr.mxu0 0.0
        %1269 = vmatpush1.msra.mxu0 0.0
        %1270 = vmatprep.subr.mxu0 0.0
        %1271 = vmatpush1.msra.mxu0 0.0
        %1272 = vmatprep.subr.mxu0 0.0
        %1273 = vmatpush1.msra.mxu0 0.0
        %1274 = vmatprep.subr.mxu0 0.0
        %1275 = vmatpush1.msra.mxu0 0.0
        %1276 = vmatprep.subr.mxu0 0.0
        %1277 = vmatpush1.msra.mxu0 0.0
        %1278 = vmatprep.mubr.f32.mxu0 0.0
        %1279 = vmatmul.mubr.f32.gmra.mrb[0].mxu0 %v546
        %v1280 = vpop.f32.mrb[0].mxu0
        %v1281 = vadd.f32 %v1212, %v1280
        %v1282 = vpop.f32.mrb[0].mxu0
        %1283 = vmatprep.mubr.f32.mxu0 0.0
        %1284 = vmatmul.mubr.f32.gmra.mrb[0].mxu0 %v549
        %v1285 = vpop.f32.mrb[0].mxu0
        %v1286 = vadd.f32 %v1212, %v1285
        %v1287 = vpop.f32.mrb[0].mxu0
        %1288 = vdwg.mxu0
        %v1290 = vsel %vm810, %v1097, 0
        %v1293 = vsel %vm810, %v1102, 0
        %v1296 = vsel %vm810, %v1189, 0
        %v1299 = vsel %vm810, %v1194, 0
        %1301 = vmatprep.subr.mxu0 0.0
        %1302 = vmatpush1.xpose.msra.mxu0 %v1296
        %1303 = vmatprep.subr.mxu0 0.0
        %1304 = vmatpush1.xpose.msra.mxu0 %v1299
        %1305 = vmatprep.subr.mxu0 0.0
        %1306 = vmatpush1.xpose.msra.mxu0 0.0
        %1307 = vmatprep.subr.mxu0 0.0
        %1308 = vmatpush1.xpose.msra.mxu0 0.0
        %1309 = vmatprep.subr.mxu0 0.0
        %1310 = vmatpush1.xpose.msra.mxu0 0.0
        %1311 = vmatprep.subr.mxu0 0.0
        %1312 = vmatpush1.xpose.msra.mxu0 0.0
        %1313 = vmatprep.subr.mxu0 0.0
        %1314 = vmatpush1.xpose.msra.mxu0 0.0
        %1315 = vmatprep.subr.mxu0 0.0
        %1316 = vmatpush1.xpose.msra.mxu0 0.0
        %1317 = vmatprep.subr.mxu0 0.0
        %1318 = vmatpush1.xpose.msra.mxu0 0.0
        %1319 = vmatprep.subr.mxu0 0.0
        %1320 = vmatpush1.xpose.msra.mxu0 0.0
        %1321 = vmatprep.subr.mxu0 0.0
        %1322 = vmatpush1.xpose.msra.mxu0 0.0
        %1323 = vmatprep.subr.mxu0 0.0
        %1324 = vmatpush1.xpose.msra.mxu0 0.0
        %1325 = vmatprep.subr.mxu0 0.0
        %1326 = vmatpush1.xpose.msra.mxu0 0.0
        %1327 = vmatprep.subr.mxu0 0.0
        %1328 = vmatpush1.xpose.msra.mxu0 0.0
        %1329 = vmatprep.subr.mxu0 0.0
        %1330 = vmatpush1.xpose.msra.mxu0 0.0
        %1331 = vmatprep.subr.mxu0 0.0
        %1332 = vmatpush1.xpose.msra.mxu0 0.0
        %1333 = vmatprep.subr.mxu0 0.0
        %1334 = vmatpush1.xpose.msra.mxu0 0.0
        %1335 = vmatprep.subr.mxu0 0.0
        %1336 = vmatpush1.xpose.msra.mxu0 0.0
        %1337 = vmatprep.subr.mxu0 0.0
        %1338 = vmatpush1.xpose.msra.mxu0 0.0
        %1339 = vmatprep.subr.mxu0 0.0
        %1340 = vmatpush1.xpose.msra.mxu0 0.0
        %1341 = vmatprep.subr.mxu0 0.0
        %1342 = vmatpush1.xpose.msra.mxu0 0.0
        %1343 = vmatprep.subr.mxu0 0.0
        %1344 = vmatpush1.xpose.msra.mxu0 0.0
        %1345 = vmatprep.subr.mxu0 0.0
        %1346 = vmatpush1.xpose.msra.mxu0 0.0
        %1347 = vmatprep.subr.mxu0 0.0
        %1348 = vmatpush1.xpose.msra.mxu0 0.0
        %1349 = vmatprep.subr.mxu0 0.0
        %1350 = vmatpush1.xpose.msra.mxu0 0.0
        %1351 = vmatprep.subr.mxu0 0.0
        %1352 = vmatpush1.xpose.msra.mxu0 0.0
        %1353 = vmatprep.subr.mxu0 0.0
        %1354 = vmatpush1.xpose.msra.mxu0 0.0
        %1355 = vmatprep.subr.mxu0 0.0
        %1356 = vmatpush1.xpose.msra.mxu0 0.0
        %1357 = vmatprep.subr.mxu0 0.0
        %1358 = vmatpush1.xpose.msra.mxu0 0.0
        %1359 = vmatprep.subr.mxu0 0.0
        %1360 = vmatpush1.xpose.msra.mxu0 0.0
        %1361 = vmatprep.subr.mxu0 0.0
        %1362 = vmatpush1.xpose.msra.mxu0 0.0
        %1363 = vmatprep.subr.mxu0 0.0
        %1364 = vmatpush1.xpose.msra.mxu0 0.0
        %1365 = vmatprep.mubr.f32.mxu0 0.0
        %1366 = vmatmul.mubr.f32.gmra.mrb[0].mxu0 %v1290
        %v1367 = vpop.f32.mrb[0].mxu0
        %v1368 = vadd.f32 0.0, %v1367
        %v1369 = vpop.f32.mrb[0].mxu0
        %1370 = vmatprep.mubr.f32.mxu0 0.0
        %1371 = vmatmul.mubr.f32.gmra.mrb[0].mxu0 %v1293
        %v1372 = vpop.f32.mrb[0].mxu0
        %v1373 = vadd.f32 0.0, %v1372
        %v1374 = vpop.f32.mrb[0].mxu0
        %1375 = vdwg.mxu0
        %v1376 = vmul.f32 %v1368, 0.25
        %v1377 = vmul.f32 %v1373, 0.25
        %v1378 = vsel %vm905, %v1376, -1e+30
        %v1379 = vsel %vm905, %v1377, -1e+30
        %v1380 = vsel %vm810, %v1378, -inf
        %1381 = vmax.xlane.f32.xlu0 %v1380
        %v1382 = vpop.xlane.xlu0 %1381
        %v1383 = vsel %vm810, %v1379, -inf
        %1384 = vmax.xlane.f32.xlu0 %v1383
        %v1385 = vpop.xlane.xlu0 %1384
        %v1386 = vsub.f32 %v1378, %v1382
        %v1387 = vsub.f32 %v1379, %v1385
        %v1388 = vmul.f32 %v1386, 1.442695
        %v1389 = vpow.pop %v1388
        %v1390 = vmul.f32 %v1387, 1.442695
        %v1391 = vpow.pop %v1390
        %v1392 = vsel %vm810, %v1389, 0.0
        %1393 = vadd.xlane.f32.xlu0 %v1392
        %v1394 = vpop.xlane.xlu0 %1393
        %v1395 = vsel %vm810, %v1391, 0.0
        %1396 = vadd.xlane.f32.xlu0 %v1395
        %v1397 = vpop.xlane.xlu0 %1396
        %v1398 = vrcp.pop %v1394
        %v1399 = vrcp.pop %v1397
        %v1400 = vmul.f32 %v1389, %v1398
        %v1401 = vmul.f32 %v1391, %v1399
        %v1403 = vsel %vm810, %v1400, 0
        %v1406 = vsel %vm810, %v1401, 0
        %1408 = vmatprep.subr.mxu0 0.0
        %1409 = vmatpush1.msra.mxu0 %v1281
        %1410 = vmatprep.subr.mxu0 0.0
        %1411 = vmatpush1.msra.mxu0 %v1286
        %1412 = vmatprep.subr.mxu0 0.0
        %1413 = vmatpush1.msra.mxu0 0.0
        %1414 = vmatprep.subr.mxu0 0.0
        %1415 = vmatpush1.msra.mxu0 0.0
        %1416 = vmatprep.subr.mxu0 0.0
        %1417 = vmatpush1.msra.mxu0 0.0
        %1418 = vmatprep.subr.mxu0 0.0
        %1419 = vmatpush1.msra.mxu0 0.0
        %1420 = vmatprep.subr.mxu0 0.0
        %1421 = vmatpush1.msra.mxu0 0.0
        %1422 = vmatprep.subr.mxu0 0.0
        %1423 = vmatpush1.msra.mxu0 0.0
        %1424 = vmatprep.subr.mxu0 0.0
        %1425 = vmatpush1.msra.mxu0 0.0
        %1426 = vmatprep.subr.mxu0 0.0
        %1427 = vmatpush1.msra.mxu0 0.0
        %1428 = vmatprep.subr.mxu0 0.0
        %1429 = vmatpush1.msra.mxu0 0.0
        %1430 = vmatprep.subr.mxu0 0.0
        %1431 = vmatpush1.msra.mxu0 0.0
        %1432 = vmatprep.subr.mxu0 0.0
        %1433 = vmatpush1.msra.mxu0 0.0
        %1434 = vmatprep.subr.mxu0 0.0
        %1435 = vmatpush1.msra.mxu0 0.0
        %1436 = vmatprep.subr.mxu0 0.0
        %1437 = vmatpush1.msra.mxu0 0.0
        %1438 = vmatprep.subr.mxu0 0.0
        %1439 = vmatpush1.msra.mxu0 0.0
        %1440 = vmatprep.subr.mxu0 0.0
        %1441 = vmatpush1.msra.mxu0 0.0
        %1442 = vmatprep.subr.mxu0 0.0
        %1443 = vmatpush1.msra.mxu0 0.0
        %1444 = vmatprep.subr.mxu0 0.0
        %1445 = vmatpush1.msra.mxu0 0.0
        %1446 = vmatprep.subr.mxu0 0.0
        %1447 = vmatpush1.msra.mxu0 0.0
        %1448 = vmatprep.subr.mxu0 0.0
        %1449 = vmatpush1.msra.mxu0 0.0
        %1450 = vmatprep.subr.mxu0 0.0
        %1451 = vmatpush1.msra.mxu0 0.0
        %1452 = vmatprep.subr.mxu0 0.0
        %1453 = vmatpush1.msra.mxu0 0.0
        %1454 = vmatprep.subr.mxu0 0.0
        %1455 = vmatpush1.msra.mxu0 0.0
        %1456 = vmatprep.subr.mxu0 0.0
        %1457 = vmatpush1.msra.mxu0 0.0
        %1458 = vmatprep.subr.mxu0 0.0
        %1459 = vmatpush1.msra.mxu0 0.0
        %1460 = vmatprep.subr.mxu0 0.0
        %1461 = vmatpush1.msra.mxu0 0.0
        %1462 = vmatprep.subr.mxu0 0.0
        %1463 = vmatpush1.msra.mxu0 0.0
        %1464 = vmatprep.subr.mxu0 0.0
        %1465 = vmatpush1.msra.mxu0 0.0
        %1466 = vmatprep.subr.mxu0 0.0
        %1467 = vmatpush1.msra.mxu0 0.0
        %1468 = vmatprep.subr.mxu0 0.0
        %1469 = vmatpush1.msra.mxu0 0.0
        %1470 = vmatprep.subr.mxu0 0.0
        %1471 = vmatpush1.msra.mxu0 0.0
        %1472 = vmatprep.mubr.f32.mxu0 0.0
        %1473 = vmatmul.mubr.f32.gmra.mrb[0].mxu0 %v1403
        %v1474 = vpop.f32.mrb[0].mxu0
        %v1475 = vadd.f32 0.0, %v1474
        %v1476 = vpop.f32.mrb[0].mxu0
        %1477 = vmatprep.mubr.f32.mxu0 0.0
        %1478 = vmatmul.mubr.f32.gmra.mrb[0].mxu0 %v1406
        %v1479 = vpop.f32.mrb[0].mxu0
        %v1480 = vadd.f32 0.0, %v1479
        %v1481 = vpop.f32.mrb[0].mxu0
        %1482 = vdwg.mxu0
        %s1483 = scalar_lea.vmem %s6, 16
        %v1484 = vld [vmem:[%s1483] sm:$0xff]
        %v1485 = vld [vmem:[%s1483 + $0x8] sm:$0xff]
        %v1487 = vsel %vm810, %v1475, 0
        %v1490 = vsel %vm810, %v1480, 0
        %1492 = vmatprep.subr.mxu0 0.0
        %1493 = vmatpush1.msra.mxu0 %v1484
        %1494 = vmatprep.subr.mxu0 0.0
        %1495 = vmatpush1.msra.mxu0 %v1485
        %1496 = vmatprep.subr.mxu0 0.0
        %1497 = vmatpush1.msra.mxu0 0.0
        %1498 = vmatprep.subr.mxu0 0.0
        %1499 = vmatpush1.msra.mxu0 0.0
        %1500 = vmatprep.subr.mxu0 0.0
        %1501 = vmatpush1.msra.mxu0 0.0
        %1502 = vmatprep.subr.mxu0 0.0
        %1503 = vmatpush1.msra.mxu0 0.0
        %1504 = vmatprep.subr.mxu0 0.0
        %1505 = vmatpush1.msra.mxu0 0.0
        %1506 = vmatprep.subr.mxu0 0.0
        %1507 = vmatpush1.msra.mxu0 0.0
        %1508 = vmatprep.subr.mxu0 0.0
        %1509 = vmatpush1.msra.mxu0 0.0
        %1510 = vmatprep.subr.mxu0 0.0
        %1511 = vmatpush1.msra.mxu0 0.0
        %1512 = vmatprep.subr.mxu0 0.0
        %1513 = vmatpush1.msra.mxu0 0.0
        %1514 = vmatprep.subr.mxu0 0.0
        %1515 = vmatpush1.msra.mxu0 0.0
        %1516 = vmatprep.subr.mxu0 0.0
        %1517 = vmatpush1.msra.mxu0 0.0
        %1518 = vmatprep.subr.mxu0 0.0
        %1519 = vmatpush1.msra.mxu0 0.0
        %1520 = vmatprep.subr.mxu0 0.0
        %1521 = vmatpush1.msra.mxu0 0.0
        %1522 = vmatprep.subr.mxu0 0.0
        %1523 = vmatpush1.msra.mxu0 0.0
        %1524 = vmatprep.subr.mxu0 0.0
        %1525 = vmatpush1.msra.mxu0 0.0
        %1526 = vmatprep.subr.mxu0 0.0
        %1527 = vmatpush1.msra.mxu0 0.0
        %1528 = vmatprep.subr.mxu0 0.0
        %1529 = vmatpush1.msra.mxu0 0.0
        %1530 = vmatprep.subr.mxu0 0.0
        %1531 = vmatpush1.msra.mxu0 0.0
        %1532 = vmatprep.subr.mxu0 0.0
        %1533 = vmatpush1.msra.mxu0 0.0
        %1534 = vmatprep.subr.mxu0 0.0
        %1535 = vmatpush1.msra.mxu0 0.0
        %1536 = vmatprep.subr.mxu0 0.0
        %1537 = vmatpush1.msra.mxu0 0.0
        %1538 = vmatprep.subr.mxu0 0.0
        %1539 = vmatpush1.msra.mxu0 0.0
        %1540 = vmatprep.subr.mxu0 0.0
        %1541 = vmatpush1.msra.mxu0 0.0
        %1542 = vmatprep.subr.mxu0 0.0
        %1543 = vmatpush1.msra.mxu0 0.0
        %1544 = vmatprep.subr.mxu0 0.0
        %1545 = vmatpush1.msra.mxu0 0.0
        %1546 = vmatprep.subr.mxu0 0.0
        %1547 = vmatpush1.msra.mxu0 0.0
        %1548 = vmatprep.subr.mxu0 0.0
        %1549 = vmatpush1.msra.mxu0 0.0
        %1550 = vmatprep.subr.mxu0 0.0
        %1551 = vmatpush1.msra.mxu0 0.0
        %1552 = vmatprep.subr.mxu0 0.0
        %1553 = vmatpush1.msra.mxu0 0.0
        %1554 = vmatprep.subr.mxu0 0.0
        %1555 = vmatpush1.msra.mxu0 0.0
        %1556 = vmatprep.mubr.f32.mxu0 0.0
        %1557 = vmatmul.mubr.f32.gmra.mrb[0].mxu0 %v1487
        %v1558 = vpop.f32.mrb[0].mxu0
        %v1559 = vadd.f32 0.0, %v1558
        %v1560 = vpop.f32.mrb[0].mxu0
        %1561 = vmatprep.mubr.f32.mxu0 0.0
        %1562 = vmatmul.mubr.f32.gmra.mrb[0].mxu0 %v1490
        %v1563 = vpop.f32.mrb[0].mxu0
        %v1564 = vadd.f32 0.0, %v1563
        %v1565 = vpop.f32.mrb[0].mxu0
        %1566 = vdwg.mxu0
        %v1568 = vsel %vm810, %v1003, 0
        %v1571 = vsel %vm810, %v1008, 0
        %1573 = vmatprep.subr.mxu0 0.0
        %1574 = vmatpush1.msra.mxu0 %v1011
        %1575 = vmatprep.subr.mxu0 0.0
        %1576 = vmatpush1.msra.mxu0 %v1012
        %1577 = vmatprep.subr.mxu0 0.0
        %1578 = vmatpush1.msra.mxu0 0.0
        %1579 = vmatprep.subr.mxu0 0.0
        %1580 = vmatpush1.msra.mxu0 0.0
        %1581 = vmatprep.subr.mxu0 0.0
        %1582 = vmatpush1.msra.mxu0 0.0
        %1583 = vmatprep.subr.mxu0 0.0
        %1584 = vmatpush1.msra.mxu0 0.0
        %1585 = vmatprep.subr.mxu0 0.0
        %1586 = vmatpush1.msra.mxu0 0.0
        %1587 = vmatprep.subr.mxu0 0.0
        %1588 = vmatpush1.msra.mxu0 0.0
        %1589 = vmatprep.subr.mxu0 0.0
        %1590 = vmatpush1.msra.mxu0 0.0
        %1591 = vmatprep.subr.mxu0 0.0
        %1592 = vmatpush1.msra.mxu0 0.0
        %1593 = vmatprep.subr.mxu0 0.0
        %1594 = vmatpush1.msra.mxu0 0.0
        %1595 = vmatprep.subr.mxu0 0.0
        %1596 = vmatpush1.msra.mxu0 0.0
        %1597 = vmatprep.subr.mxu0 0.0
        %1598 = vmatpush1.msra.mxu0 0.0
        %1599 = vmatprep.subr.mxu0 0.0
        %1600 = vmatpush1.msra.mxu0 0.0
        %1601 = vmatprep.subr.mxu0 0.0
        %1602 = vmatpush1.msra.mxu0 0.0
        %1603 = vmatprep.subr.mxu0 0.0
        %1604 = vmatpush1.msra.mxu0 0.0
        %1605 = vmatprep.subr.mxu0 0.0
        %1606 = vmatpush1.msra.mxu0 0.0
        %1607 = vmatprep.subr.mxu0 0.0
        %1608 = vmatpush1.msra.mxu0 0.0
        %1609 = vmatprep.subr.mxu0 0.0
        %1610 = vmatpush1.msra.mxu0 0.0
        %1611 = vmatprep.subr.mxu0 0.0
        %1612 = vmatpush1.msra.mxu0 0.0
        %1613 = vmatprep.subr.mxu0 0.0
        %1614 = vmatpush1.msra.mxu0 0.0
        %1615 = vmatprep.subr.mxu0 0.0
        %1616 = vmatpush1.msra.mxu0 0.0
        %1617 = vmatprep.subr.mxu0 0.0
        %1618 = vmatpush1.msra.mxu0 0.0
        %1619 = vmatprep.subr.mxu0 0.0
        %1620 = vmatpush1.msra.mxu0 0.0
        %1621 = vmatprep.subr.mxu0 0.0
        %1622 = vmatpush1.msra.mxu0 0.0
        %1623 = vmatprep.subr.mxu0 0.0
        %1624 = vmatpush1.msra.mxu0 0.0
        %1625 = vmatprep.subr.mxu0 0.0
        %1626 = vmatpush1.msra.mxu0 0.0
        %1627 = vmatprep.subr.mxu0 0.0
        %1628 = vmatpush1.msra.mxu0 0.0
        %1629 = vmatprep.subr.mxu0 0.0
        %1630 = vmatpush1.msra.mxu0 0.0
        %1631 = vmatprep.subr.mxu0 0.0
        %1632 = vmatpush1.msra.mxu0 0.0
        %1633 = vmatprep.subr.mxu0 0.0
        %1634 = vmatpush1.msra.mxu0 0.0
        %1635 = vmatprep.subr.mxu0 0.0
        %1636 = vmatpush1.msra.mxu0 0.0
        %1637 = vmatprep.mubr.f32.mxu0 0.0
        %1638 = vmatmul.mubr.f32.gmra.mrb[0].mxu0 %v1568
        %v1639 = vpop.f32.mrb[0].mxu0
        %v1640 = vadd.f32 %v1559, %v1639
        %v1641 = vpop.f32.mrb[0].mxu0
        %1642 = vmatprep.mubr.f32.mxu0 0.0
        %1643 = vmatmul.mubr.f32.gmra.mrb[0].mxu0 %v1571
        %v1644 = vpop.f32.mrb[0].mxu0
        %v1645 = vadd.f32 %v1564, %v1644
        %v1646 = vpop.f32.mrb[0].mxu0
        %1647 = vdwg.mxu0
        %s1648 = scalar_lea.vmem %s4, 128
        %v1649 = vld [vmem:[%s1648] sm:$0xff]
        %v1650 = vld [vmem:[%s1648 + $0x8] sm:$0xff]
        %v1651 = vld [vmem:[%s1648 + $0x10] sm:$0xff]
        %v1652 = vld [vmem:[%s1648 + $0x18] sm:$0xff]
        %v1653 = vld [vmem:[%s1648 + $0x20] sm:$0xff]
        %v1654 = vld [vmem:[%s1648 + $0x28] sm:$0xff]
        %v1655 = vld [vmem:[%s1648 + $0x30] sm:$0xff]
        %v1656 = vld [vmem:[%s1648 + $0x38] sm:$0xff]
        %s1657 = scalar_lea.vmem %s5, 2
        %v1658 = vld [vmem:[%s1657] sm:$0x1]
        %v1660 = vlaneseq
        %v1661 = vshrl.u32 %v1660, 7
        %v1662 = vsub.s32 0, %v1661
        %v1663 = vrot.slane %v1658, %v1662
        %1665 = vmatprep.subr.mxu0 0.0
        %1666 = vmatpush1.msra.mxu0 %v1649
        %1667 = vmatprep.subr.mxu0 0.0
        %1668 = vmatpush1.msra.mxu0 %v1650
        %1669 = vmatprep.subr.mxu0 0.0
        %1670 = vmatpush1.msra.mxu0 %v1651
        %1671 = vmatprep.subr.mxu0 0.0
        %1672 = vmatpush1.msra.mxu0 %v1652
        %1673 = vmatprep.subr.mxu0 0.0
        %1674 = vmatpush1.msra.mxu0 %v1653
        %1675 = vmatprep.subr.mxu0 0.0
        %1676 = vmatpush1.msra.mxu0 %v1654
        %1677 = vmatprep.subr.mxu0 0.0
        %1678 = vmatpush1.msra.mxu0 %v1655
        %1679 = vmatprep.subr.mxu0 0.0
        %1680 = vmatpush1.msra.mxu0 %v1656
        %1681 = vmatprep.subr.mxu0 0.0
        %1682 = vmatpush1.msra.mxu0 0.0
        %1683 = vmatprep.subr.mxu0 0.0
        %1684 = vmatpush1.msra.mxu0 0.0
        %1685 = vmatprep.subr.mxu0 0.0
        %1686 = vmatpush1.msra.mxu0 0.0
        %1687 = vmatprep.subr.mxu0 0.0
        %1688 = vmatpush1.msra.mxu0 0.0
        %1689 = vmatprep.subr.mxu0 0.0
        %1690 = vmatpush1.msra.mxu0 0.0
        %1691 = vmatprep.subr.mxu0 0.0
        %1692 = vmatpush1.msra.mxu0 0.0
        %1693 = vmatprep.subr.mxu0 0.0
        %1694 = vmatpush1.msra.mxu0 0.0
        %1695 = vmatprep.subr.mxu0 0.0
        %1696 = vmatpush1.msra.mxu0 0.0
        %1697 = vmatprep.subr.mxu0 0.0
        %1698 = vmatpush1.msra.mxu0 0.0
        %1699 = vmatprep.subr.mxu0 0.0
        %1700 = vmatpush1.msra.mxu0 0.0
        %1701 = vmatprep.subr.mxu0 0.0
        %1702 = vmatpush1.msra.mxu0 0.0
        %1703 = vmatprep.subr.mxu0 0.0
        %1704 = vmatpush1.msra.mxu0 0.0
        %1705 = vmatprep.subr.mxu0 0.0
        %1706 = vmatpush1.msra.mxu0 0.0
        %1707 = vmatprep.subr.mxu0 0.0
        %1708 = vmatpush1.msra.mxu0 0.0
        %1709 = vmatprep.subr.mxu0 0.0
        %1710 = vmatpush1.msra.mxu0 0.0
        %1711 = vmatprep.subr.mxu0 0.0
        %1712 = vmatpush1.msra.mxu0 0.0
        %1713 = vmatprep.subr.mxu0 0.0
        %1714 = vmatpush1.msra.mxu0 0.0
        %1715 = vmatprep.subr.mxu0 0.0
        %1716 = vmatpush1.msra.mxu0 0.0
        %1717 = vmatprep.subr.mxu0 0.0
        %1718 = vmatpush1.msra.mxu0 0.0
        %1719 = vmatprep.subr.mxu0 0.0
        %1720 = vmatpush1.msra.mxu0 0.0
        %1721 = vmatprep.subr.mxu0 0.0
        %1722 = vmatpush1.msra.mxu0 0.0
        %1723 = vmatprep.subr.mxu0 0.0
        %1724 = vmatpush1.msra.mxu0 0.0
        %1725 = vmatprep.subr.mxu0 0.0
        %1726 = vmatpush1.msra.mxu0 0.0
        %1727 = vmatprep.subr.mxu0 0.0
        %1728 = vmatpush1.msra.mxu0 0.0
        %1729 = vmatprep.mubr.f32.mxu0 0.0
        %1730 = vmatmul.mubr.f32.gmra.mrb[0].mxu0 %v546
        %v1731 = vpop.f32.mrb[0].mxu0
        %v1732 = vadd.f32 %v1663, %v1731
        %v1733 = vpop.f32.mrb[0].mxu0
        %1734 = vmatprep.mubr.f32.mxu0 0.0
        %1735 = vmatmul.mubr.f32.gmra.mrb[0].mxu0 %v549
        %v1736 = vpop.f32.mrb[0].mxu0
        %v1737 = vadd.f32 %v1663, %v1736
        %v1738 = vpop.f32.mrb[0].mxu0
        %1739 = vdwg.mxu0
        %s1740 = scalar_lea.vmem %s4, 384
        %v1741 = vld [vmem:[%s1740] sm:$0xff]
        %v1742 = vld [vmem:[%s1740 + $0x8] sm:$0xff]
        %v1743 = vld [vmem:[%s1740 + $0x10] sm:$0xff]
        %v1744 = vld [vmem:[%s1740 + $0x18] sm:$0xff]
        %v1745 = vld [vmem:[%s1740 + $0x20] sm:$0xff]
        %v1746 = vld [vmem:[%s1740 + $0x28] sm:$0xff]
        %v1747 = vld [vmem:[%s1740 + $0x30] sm:$0xff]
        %v1748 = vld [vmem:[%s1740 + $0x38] sm:$0xff]
        %s1749 = scalar_lea.vmem %s5, 6
        %v1750 = vld [vmem:[%s1749] sm:$0x1]
        %v1752 = vlaneseq
        %v1753 = vshrl.u32 %v1752, 7
        %v1754 = vsub.s32 0, %v1753
        %v1755 = vrot.slane %v1750, %v1754
        %1757 = vmatprep.subr.mxu0 0.0
        %1758 = vmatpush1.msra.mxu0 %v1741
        %1759 = vmatprep.subr.mxu0 0.0
        %1760 = vmatpush1.msra.mxu0 %v1742
        %1761 = vmatprep.subr.mxu0 0.0
        %1762 = vmatpush1.msra.mxu0 %v1743
        %1763 = vmatprep.subr.mxu0 0.0
        %1764 = vmatpush1.msra.mxu0 %v1744
        %1765 = vmatprep.subr.mxu0 0.0
        %1766 = vmatpush1.msra.mxu0 %v1745
        %1767 = vmatprep.subr.mxu0 0.0
        %1768 = vmatpush1.msra.mxu0 %v1746
        %1769 = vmatprep.subr.mxu0 0.0
        %1770 = vmatpush1.msra.mxu0 %v1747
        %1771 = vmatprep.subr.mxu0 0.0
        %1772 = vmatpush1.msra.mxu0 %v1748
        %1773 = vmatprep.subr.mxu0 0.0
        %1774 = vmatpush1.msra.mxu0 0.0
        %1775 = vmatprep.subr.mxu0 0.0
        %1776 = vmatpush1.msra.mxu0 0.0
        %1777 = vmatprep.subr.mxu0 0.0
        %1778 = vmatpush1.msra.mxu0 0.0
        %1779 = vmatprep.subr.mxu0 0.0
        %1780 = vmatpush1.msra.mxu0 0.0
        %1781 = vmatprep.subr.mxu0 0.0
        %1782 = vmatpush1.msra.mxu0 0.0
        %1783 = vmatprep.subr.mxu0 0.0
        %1784 = vmatpush1.msra.mxu0 0.0
        %1785 = vmatprep.subr.mxu0 0.0
        %1786 = vmatpush1.msra.mxu0 0.0
        %1787 = vmatprep.subr.mxu0 0.0
        %1788 = vmatpush1.msra.mxu0 0.0
        %1789 = vmatprep.subr.mxu0 0.0
        %1790 = vmatpush1.msra.mxu0 0.0
        %1791 = vmatprep.subr.mxu0 0.0
        %1792 = vmatpush1.msra.mxu0 0.0
        %1793 = vmatprep.subr.mxu0 0.0
        %1794 = vmatpush1.msra.mxu0 0.0
        %1795 = vmatprep.subr.mxu0 0.0
        %1796 = vmatpush1.msra.mxu0 0.0
        %1797 = vmatprep.subr.mxu0 0.0
        %1798 = vmatpush1.msra.mxu0 0.0
        %1799 = vmatprep.subr.mxu0 0.0
        %1800 = vmatpush1.msra.mxu0 0.0
        %1801 = vmatprep.subr.mxu0 0.0
        %1802 = vmatpush1.msra.mxu0 0.0
        %1803 = vmatprep.subr.mxu0 0.0
        %1804 = vmatpush1.msra.mxu0 0.0
        %1805 = vmatprep.subr.mxu0 0.0
        %1806 = vmatpush1.msra.mxu0 0.0
        %1807 = vmatprep.subr.mxu0 0.0
        %1808 = vmatpush1.msra.mxu0 0.0
        %1809 = vmatprep.subr.mxu0 0.0
        %1810 = vmatpush1.msra.mxu0 0.0
        %1811 = vmatprep.subr.mxu0 0.0
        %1812 = vmatpush1.msra.mxu0 0.0
        %1813 = vmatprep.subr.mxu0 0.0
        %1814 = vmatpush1.msra.mxu0 0.0
        %1815 = vmatprep.subr.mxu0 0.0
        %1816 = vmatpush1.msra.mxu0 0.0
        %1817 = vmatprep.subr.mxu0 0.0
        %1818 = vmatpush1.msra.mxu0 0.0
        %1819 = vmatprep.subr.mxu0 0.0
        %1820 = vmatpush1.msra.mxu0 0.0
        %1821 = vmatprep.mubr.f32.mxu0 0.0
        %1822 = vmatmul.mubr.f32.gmra.mrb[0].mxu0 %v546
        %v1823 = vpop.f32.mrb[0].mxu0
        %v1824 = vadd.f32 %v1755, %v1823
        %v1825 = vpop.f32.mrb[0].mxu0
        %1826 = vmatprep.mubr.f32.mxu0 0.0
        %1827 = vmatmul.mubr.f32.gmra.mrb[0].mxu0 %v549
        %v1828 = vpop.f32.mrb[0].mxu0
        %v1829 = vadd.f32 %v1755, %v1828
        %v1830 = vpop.f32.mrb[0].mxu0
        %1831 = vdwg.mxu0
        %s1832 = scalar_lea.vmem %s4, 640
        %v1833 = vld [vmem:[%s1832] sm:$0xff]
        %v1834 = vld [vmem:[%s1832 + $0x8] sm:$0xff]
        %v1835 = vld [vmem:[%s1832 + $0x10] sm:$0xff]
        %v1836 = vld [vmem:[%s1832 + $0x18] sm:$0xff]
        %v1837 = vld [vmem:[%s1832 + $0x20] sm:$0xff]
        %v1838 = vld [vmem:[%s1832 + $0x28] sm:$0xff]
        %v1839 = vld [vmem:[%s1832 + $0x30] sm:$0xff]
        %v1840 = vld [vmem:[%s1832 + $0x38] sm:$0xff]
        %s1841 = scalar_lea.vmem %s5, 10
        %v1842 = vld [vmem:[%s1841] sm:$0x1]
        %v1844 = vlaneseq
        %v1845 = vshrl.u32 %v1844, 7
        %v1846 = vsub.s32 0, %v1845
        %v1847 = vrot.slane %v1842, %v1846
        %1849 = vmatprep.subr.mxu0 0.0
        %1850 = vmatpush1.msra.mxu0 %v1833
        %1851 = vmatprep.subr.mxu0 0.0
        %1852 = vmatpush1.msra.mxu0 %v1834
        %1853 = vmatprep.subr.mxu0 0.0
        %1854 = vmatpush1.msra.mxu0 %v1835
        %1855 = vmatprep.subr.mxu0 0.0
        %1856 = vmatpush1.msra.mxu0 %v1836
        %1857 = vmatprep.subr.mxu0 0.0
        %1858 = vmatpush1.msra.mxu0 %v1837
        %1859 = vmatprep.subr.mxu0 0.0
        %1860 = vmatpush1.msra.mxu0 %v1838
        %1861 = vmatprep.subr.mxu0 0.0
        %1862 = vmatpush1.msra.mxu0 %v1839
        %1863 = vmatprep.subr.mxu0 0.0
        %1864 = vmatpush1.msra.mxu0 %v1840
        %1865 = vmatprep.subr.mxu0 0.0
        %1866 = vmatpush1.msra.mxu0 0.0
        %1867 = vmatprep.subr.mxu0 0.0
        %1868 = vmatpush1.msra.mxu0 0.0
        %1869 = vmatprep.subr.mxu0 0.0
        %1870 = vmatpush1.msra.mxu0 0.0
        %1871 = vmatprep.subr.mxu0 0.0
        %1872 = vmatpush1.msra.mxu0 0.0
        %1873 = vmatprep.subr.mxu0 0.0
        %1874 = vmatpush1.msra.mxu0 0.0
        %1875 = vmatprep.subr.mxu0 0.0
        %1876 = vmatpush1.msra.mxu0 0.0
        %1877 = vmatprep.subr.mxu0 0.0
        %1878 = vmatpush1.msra.mxu0 0.0
        %1879 = vmatprep.subr.mxu0 0.0
        %1880 = vmatpush1.msra.mxu0 0.0
        %1881 = vmatprep.subr.mxu0 0.0
        %1882 = vmatpush1.msra.mxu0 0.0
        %1883 = vmatprep.subr.mxu0 0.0
        %1884 = vmatpush1.msra.mxu0 0.0
        %1885 = vmatprep.subr.mxu0 0.0
        %1886 = vmatpush1.msra.mxu0 0.0
        %1887 = vmatprep.subr.mxu0 0.0
        %1888 = vmatpush1.msra.mxu0 0.0
        %1889 = vmatprep.subr.mxu0 0.0
        %1890 = vmatpush1.msra.mxu0 0.0
        %1891 = vmatprep.subr.mxu0 0.0
        %1892 = vmatpush1.msra.mxu0 0.0
        %1893 = vmatprep.subr.mxu0 0.0
        %1894 = vmatpush1.msra.mxu0 0.0
        %1895 = vmatprep.subr.mxu0 0.0
        %1896 = vmatpush1.msra.mxu0 0.0
        %1897 = vmatprep.subr.mxu0 0.0
        %1898 = vmatpush1.msra.mxu0 0.0
        %1899 = vmatprep.subr.mxu0 0.0
        %1900 = vmatpush1.msra.mxu0 0.0
        %1901 = vmatprep.subr.mxu0 0.0
        %1902 = vmatpush1.msra.mxu0 0.0
        %1903 = vmatprep.subr.mxu0 0.0
        %1904 = vmatpush1.msra.mxu0 0.0
        %1905 = vmatprep.subr.mxu0 0.0
        %1906 = vmatpush1.msra.mxu0 0.0
        %1907 = vmatprep.subr.mxu0 0.0
        %1908 = vmatpush1.msra.mxu0 0.0
        %1909 = vmatprep.subr.mxu0 0.0
        %1910 = vmatpush1.msra.mxu0 0.0
        %1911 = vmatprep.subr.mxu0 0.0
        %1912 = vmatpush1.msra.mxu0 0.0
        %1913 = vmatprep.mubr.f32.mxu0 0.0
        %1914 = vmatmul.mubr.f32.gmra.mrb[0].mxu0 %v546
        %v1915 = vpop.f32.mrb[0].mxu0
        %v1916 = vadd.f32 %v1847, %v1915
        %v1917 = vpop.f32.mrb[0].mxu0
        %1918 = vmatprep.mubr.f32.mxu0 0.0
        %1919 = vmatmul.mubr.f32.gmra.mrb[0].mxu0 %v549
        %v1920 = vpop.f32.mrb[0].mxu0
        %v1921 = vadd.f32 %v1847, %v1920
        %v1922 = vpop.f32.mrb[0].mxu0
        %1923 = vdwg.mxu0
        %v1925 = vsel %vm810, %v1732, 0
        %v1928 = vsel %vm810, %v1737, 0
        %v1931 = vsel %vm810, %v1824, 0
        %v1934 = vsel %vm810, %v1829, 0
        %1936 = vmatprep.subr.mxu0 0.0
        %1937 = vmatpush1.xpose.msra.mxu0 %v1931
        %1938 = vmatprep.subr.mxu0 0.0
        %1939 = vmatpush1.xpose.msra.mxu0 %v1934
        %1940 = vmatprep.subr.mxu0 0.0
        %1941 = vmatpush1.xpose.msra.mxu0 0.0
        %1942 = vmatprep.subr.mxu0 0.0
        %1943 = vmatpush1.xpose.msra.mxu0 0.0
        %1944 = vmatprep.subr.mxu0 0.0
        %1945 = vmatpush1.xpose.msra.mxu0 0.0
        %1946 = vmatprep.subr.mxu0 0.0
        %1947 = vmatpush1.xpose.msra.mxu0 0.0
        %1948 = vmatprep.subr.mxu0 0.0
        %1949 = vmatpush1.xpose.msra.mxu0 0.0
        %1950 = vmatprep.subr.mxu0 0.0
        %1951 = vmatpush1.xpose.msra.mxu0 0.0
        %1952 = vmatprep.subr.mxu0 0.0
        %1953 = vmatpush1.xpose.msra.mxu0 0.0
        %1954 = vmatprep.subr.mxu0 0.0
        %1955 = vmatpush1.xpose.msra.mxu0 0.0
        %1956 = vmatprep.subr.mxu0 0.0
        %1957 = vmatpush1.xpose.msra.mxu0 0.0
        %1958 = vmatprep.subr.mxu0 0.0
        %1959 = vmatpush1.xpose.msra.mxu0 0.0
        %1960 = vmatprep.subr.mxu0 0.0
        %1961 = vmatpush1.xpose.msra.mxu0 0.0
        %1962 = vmatprep.subr.mxu0 0.0
        %1963 = vmatpush1.xpose.msra.mxu0 0.0
        %1964 = vmatprep.subr.mxu0 0.0
        %1965 = vmatpush1.xpose.msra.mxu0 0.0
        %1966 = vmatprep.subr.mxu0 0.0
        %1967 = vmatpush1.xpose.msra.mxu0 0.0
        %1968 = vmatprep.subr.mxu0 0.0
        %1969 = vmatpush1.xpose.msra.mxu0 0.0
        %1970 = vmatprep.subr.mxu0 0.0
        %1971 = vmatpush1.xpose.msra.mxu0 0.0
        %1972 = vmatprep.subr.mxu0 0.0
        %1973 = vmatpush1.xpose.msra.mxu0 0.0
        %1974 = vmatprep.subr.mxu0 0.0
        %1975 = vmatpush1.xpose.msra.mxu0 0.0
        %1976 = vmatprep.subr.mxu0 0.0
        %1977 = vmatpush1.xpose.msra.mxu0 0.0
        %1978 = vmatprep.subr.mxu0 0.0
        %1979 = vmatpush1.xpose.msra.mxu0 0.0
        %1980 = vmatprep.subr.mxu0 0.0
        %1981 = vmatpush1.xpose.msra.mxu0 0.0
        %1982 = vmatprep.subr.mxu0 0.0
        %1983 = vmatpush1.xpose.msra.mxu0 0.0
        %1984 = vmatprep.subr.mxu0 0.0
        %1985 = vmatpush1.xpose.msra.mxu0 0.0
        %1986 = vmatprep.subr.mxu0 0.0
        %1987 = vmatpush1.xpose.msra.mxu0 0.0
        %1988 = vmatprep.subr.mxu0 0.0
        %1989 = vmatpush1.xpose.msra.mxu0 0.0
        %1990 = vmatprep.subr.mxu0 0.0
        %1991 = vmatpush1.xpose.msra.mxu0 0.0
        %1992 = vmatprep.subr.mxu0 0.0
        %1993 = vmatpush1.xpose.msra.mxu0 0.0
        %1994 = vmatprep.subr.mxu0 0.0
        %1995 = vmatpush1.xpose.msra.mxu0 0.0
        %1996 = vmatprep.subr.mxu0 0.0
        %1997 = vmatpush1.xpose.msra.mxu0 0.0
        %1998 = vmatprep.subr.mxu0 0.0
        %1999 = vmatpush1.xpose.msra.mxu0 0.0
        %2000 = vmatprep.mubr.f32.mxu0 0.0
        %2001 = vmatmul.mubr.f32.gmra.mrb[0].mxu0 %v1925
        %v2002 = vpop.f32.mrb[0].mxu0
        %v2003 = vadd.f32 0.0, %v2002
        %v2004 = vpop.f32.mrb[0].mxu0
        %2005 = vmatprep.mubr.f32.mxu0 0.0
        %2006 = vmatmul.mubr.f32.gmra.mrb[0].mxu0 %v1928
        %v2007 = vpop.f32.mrb[0].mxu0
        %v2008 = vadd.f32 0.0, %v2007
        %v2009 = vpop.f32.mrb[0].mxu0
        %2010 = vdwg.mxu0
        %v2011 = vmul.f32 %v2003, 0.25
        %v2012 = vmul.f32 %v2008, 0.25
        %v2013 = vsel %vm905, %v2011, -1e+30
        %v2014 = vsel %vm905, %v2012, -1e+30
        %v2015 = vsel %vm810, %v2013, -inf
        %2016 = vmax.xlane.f32.xlu0 %v2015
        %v2017 = vpop.xlane.xlu0 %2016
        %v2018 = vsel %vm810, %v2014, -inf
        %2019 = vmax.xlane.f32.xlu0 %v2018
        %v2020 = vpop.xlane.xlu0 %2019
        %v2021 = vsub.f32 %v2013, %v2017
        %v2022 = vsub.f32 %v2014, %v2020
        %v2023 = vmul.f32 %v2021, 1.442695
        %v2024 = vpow.pop %v2023
        %v2025 = vmul.f32 %v2022, 1.442695
        %v2026 = vpow.pop %v2025
        %v2027 = vsel %vm810, %v2024, 0.0
        %2028 = vadd.xlane.f32.xlu0 %v2027
        %v2029 = vpop.xlane.xlu0 %2028
        %v2030 = vsel %vm810, %v2026, 0.0
        %2031 = vadd.xlane.f32.xlu0 %v2030
        %v2032 = vpop.xlane.xlu0 %2031
        %v2033 = vrcp.pop %v2029
        %v2034 = vrcp.pop %v2032
        %v2035 = vmul.f32 %v2024, %v2033
        %v2036 = vmul.f32 %v2026, %v2034
        %v2038 = vsel %vm810, %v2035, 0
        %v2041 = vsel %vm810, %v2036, 0
        %2043 = vmatprep.subr.mxu0 0.0
        %2044 = vmatpush1.msra.mxu0 %v1916
        %2045 = vmatprep.subr.mxu0 0.0
        %2046 = vmatpush1.msra.mxu0 %v1921
        %2047 = vmatprep.subr.mxu0 0.0
        %2048 = vmatpush1.msra.mxu0 0.0
        %2049 = vmatprep.subr.mxu0 0.0
        %2050 = vmatpush1.msra.mxu0 0.0
        %2051 = vmatprep.subr.mxu0 0.0
        %2052 = vmatpush1.msra.mxu0 0.0
        %2053 = vmatprep.subr.mxu0 0.0
        %2054 = vmatpush1.msra.mxu0 0.0
        %2055 = vmatprep.subr.mxu0 0.0
        %2056 = vmatpush1.msra.mxu0 0.0
        %2057 = vmatprep.subr.mxu0 0.0
        %2058 = vmatpush1.msra.mxu0 0.0
        %2059 = vmatprep.subr.mxu0 0.0
        %2060 = vmatpush1.msra.mxu0 0.0
        %2061 = vmatprep.subr.mxu0 0.0
        %2062 = vmatpush1.msra.mxu0 0.0
        %2063 = vmatprep.subr.mxu0 0.0
        %2064 = vmatpush1.msra.mxu0 0.0
        %2065 = vmatprep.subr.mxu0 0.0
        %2066 = vmatpush1.msra.mxu0 0.0
        %2067 = vmatprep.subr.mxu0 0.0
        %2068 = vmatpush1.msra.mxu0 0.0
        %2069 = vmatprep.subr.mxu0 0.0
        %2070 = vmatpush1.msra.mxu0 0.0
        %2071 = vmatprep.subr.mxu0 0.0
        %2072 = vmatpush1.msra.mxu0 0.0
        %2073 = vmatprep.subr.mxu0 0.0
        %2074 = vmatpush1.msra.mxu0 0.0
        %2075 = vmatprep.subr.mxu0 0.0
        %2076 = vmatpush1.msra.mxu0 0.0
        %2077 = vmatprep.subr.mxu0 0.0
        %2078 = vmatpush1.msra.mxu0 0.0
        %2079 = vmatprep.subr.mxu0 0.0
        %2080 = vmatpush1.msra.mxu0 0.0
        %2081 = vmatprep.subr.mxu0 0.0
        %2082 = vmatpush1.msra.mxu0 0.0
        %2083 = vmatprep.subr.mxu0 0.0
        %2084 = vmatpush1.msra.mxu0 0.0
        %2085 = vmatprep.subr.mxu0 0.0
        %2086 = vmatpush1.msra.mxu0 0.0
        %2087 = vmatprep.subr.mxu0 0.0
        %2088 = vmatpush1.msra.mxu0 0.0
        %2089 = vmatprep.subr.mxu0 0.0
        %2090 = vmatpush1.msra.mxu0 0.0
        %2091 = vmatprep.subr.mxu0 0.0
        %2092 = vmatpush1.msra.mxu0 0.0
        %2093 = vmatprep.subr.mxu0 0.0
        %2094 = vmatpush1.msra.mxu0 0.0
        %2095 = vmatprep.subr.mxu0 0.0
        %2096 = vmatpush1.msra.mxu0 0.0
        %2097 = vmatprep.subr.mxu0 0.0
        %2098 = vmatpush1.msra.mxu0 0.0
        %2099 = vmatprep.subr.mxu0 0.0
        %2100 = vmatpush1.msra.mxu0 0.0
        %2101 = vmatprep.subr.mxu0 0.0
        %2102 = vmatpush1.msra.mxu0 0.0
        %2103 = vmatprep.subr.mxu0 0.0
        %2104 = vmatpush1.msra.mxu0 0.0
        %2105 = vmatprep.subr.mxu0 0.0
        %2106 = vmatpush1.msra.mxu0 0.0
        %2107 = vmatprep.mubr.f32.mxu0 0.0
        %2108 = vmatmul.mubr.f32.gmra.mrb[0].mxu0 %v2038
        %v2109 = vpop.f32.mrb[0].mxu0
        %v2110 = vadd.f32 0.0, %v2109
        %v2111 = vpop.f32.mrb[0].mxu0
        %2112 = vmatprep.mubr.f32.mxu0 0.0
        %2113 = vmatmul.mubr.f32.gmra.mrb[0].mxu0 %v2041
        %v2114 = vpop.f32.mrb[0].mxu0
        %v2115 = vadd.f32 0.0, %v2114
        %v2116 = vpop.f32.mrb[0].mxu0
        %2117 = vdwg.mxu0
        %s2118 = scalar_lea.vmem %s6, 32
        %v2119 = vld [vmem:[%s2118] sm:$0xff]
        %v2120 = vld [vmem:[%s2118 + $0x8] sm:$0xff]
        %v2122 = vsel %vm810, %v2110, 0
        %v2125 = vsel %vm810, %v2115, 0
        %2127 = vmatprep.subr.mxu0 0.0
        %2128 = vmatpush1.msra.mxu0 %v2119
        %2129 = vmatprep.subr.mxu0 0.0
        %2130 = vmatpush1.msra.mxu0 %v2120
        %2131 = vmatprep.subr.mxu0 0.0
        %2132 = vmatpush1.msra.mxu0 0.0
        %2133 = vmatprep.subr.mxu0 0.0
        %2134 = vmatpush1.msra.mxu0 0.0
        %2135 = vmatprep.subr.mxu0 0.0
        %2136 = vmatpush1.msra.mxu0 0.0
        %2137 = vmatprep.subr.mxu0 0.0
        %2138 = vmatpush1.msra.mxu0 0.0
        %2139 = vmatprep.subr.mxu0 0.0
        %2140 = vmatpush1.msra.mxu0 0.0
        %2141 = vmatprep.subr.mxu0 0.0
        %2142 = vmatpush1.msra.mxu0 0.0
        %2143 = vmatprep.subr.mxu0 0.0
        %2144 = vmatpush1.msra.mxu0 0.0
        %2145 = vmatprep.subr.mxu0 0.0
        %2146 = vmatpush1.msra.mxu0 0.0
        %2147 = vmatprep.subr.mxu0 0.0
        %2148 = vmatpush1.msra.mxu0 0.0
        %2149 = vmatprep.subr.mxu0 0.0
        %2150 = vmatpush1.msra.mxu0 0.0
        %2151 = vmatprep.subr.mxu0 0.0
        %2152 = vmatpush1.msra.mxu0 0.0
        %2153 = vmatprep.subr.mxu0 0.0
        %2154 = vmatpush1.msra.mxu0 0.0
        %2155 = vmatprep.subr.mxu0 0.0
        %2156 = vmatpush1.msra.mxu0 0.0
        %2157 = vmatprep.subr.mxu0 0.0
        %2158 = vmatpush1.msra.mxu0 0.0
        %2159 = vmatprep.subr.mxu0 0.0
        %2160 = vmatpush1.msra.mxu0 0.0
        %2161 = vmatprep.subr.mxu0 0.0
        %2162 = vmatpush1.msra.mxu0 0.0
        %2163 = vmatprep.subr.mxu0 0.0
        %2164 = vmatpush1.msra.mxu0 0.0
        %2165 = vmatprep.subr.mxu0 0.0
        %2166 = vmatpush1.msra.mxu0 0.0
        %2167 = vmatprep.subr.mxu0 0.0
        %2168 = vmatpush1.msra.mxu0 0.0
        %2169 = vmatprep.subr.mxu0 0.0
        %2170 = vmatpush1.msra.mxu0 0.0
        %2171 = vmatprep.subr.mxu0 0.0
        %2172 = vmatpush1.msra.mxu0 0.0
        %2173 = vmatprep.subr.mxu0 0.0
        %2174 = vmatpush1.msra.mxu0 0.0
        %2175 = vmatprep.subr.mxu0 0.0
        %2176 = vmatpush1.msra.mxu0 0.0
        %2177 = vmatprep.subr.mxu0 0.0
        %2178 = vmatpush1.msra.mxu0 0.0
        %2179 = vmatprep.subr.mxu0 0.0
        %2180 = vmatpush1.msra.mxu0 0.0
        %2181 = vmatprep.subr.mxu0 0.0
        %2182 = vmatpush1.msra.mxu0 0.0
        %2183 = vmatprep.subr.mxu0 0.0
        %2184 = vmatpush1.msra.mxu0 0.0
        %2185 = vmatprep.subr.mxu0 0.0
        %2186 = vmatpush1.msra.mxu0 0.0
        %2187 = vmatprep.subr.mxu0 0.0
        %2188 = vmatpush1.msra.mxu0 0.0
        %2189 = vmatprep.subr.mxu0 0.0
        %2190 = vmatpush1.msra.mxu0 0.0
        %2191 = vmatprep.mubr.f32.mxu0 0.0
        %2192 = vmatmul.mubr.f32.gmra.mrb[0].mxu0 %v2122
        %v2193 = vpop.f32.mrb[0].mxu0
        %v2194 = vadd.f32 0.0, %v2193
        %v2195 = vpop.f32.mrb[0].mxu0
        %2196 = vmatprep.mubr.f32.mxu0 0.0
        %2197 = vmatmul.mubr.f32.gmra.mrb[0].mxu0 %v2125
        %v2198 = vpop.f32.mrb[0].mxu0
        %v2199 = vadd.f32 0.0, %v2198
        %v2200 = vpop.f32.mrb[0].mxu0
        %2201 = vdwg.mxu0
        %v2202 = vadd.f32 %v1640, %v2194
        %v2203 = vadd.f32 %v1645, %v2199
        %s2204 = scalar_lea.vmem %s4, 192
        %v2205 = vld [vmem:[%s2204] sm:$0xff]
        %v2206 = vld [vmem:[%s2204 + $0x8] sm:$0xff]
        %v2207 = vld [vmem:[%s2204 + $0x10] sm:$0xff]
        %v2208 = vld [vmem:[%s2204 + $0x18] sm:$0xff]
        %v2209 = vld [vmem:[%s2204 + $0x20] sm:$0xff]
        %v2210 = vld [vmem:[%s2204 + $0x28] sm:$0xff]
        %v2211 = vld [vmem:[%s2204 + $0x30] sm:$0xff]
        %v2212 = vld [vmem:[%s2204 + $0x38] sm:$0xff]
        %s2213 = scalar_lea.vmem %s5, 3
        %v2214 = vld [vmem:[%s2213] sm:$0x1]
        %v2216 = vlaneseq
        %v2217 = vshrl.u32 %v2216, 7
        %v2218 = vsub.s32 0, %v2217
        %v2219 = vrot.slane %v2214, %v2218
        %2221 = vmatprep.subr.mxu0 0.0
        %2222 = vmatpush1.msra.mxu0 %v2205
        %2223 = vmatprep.subr.mxu0 0.0
        %2224 = vmatpush1.msra.mxu0 %v2206
        %2225 = vmatprep.subr.mxu0 0.0
        %2226 = vmatpush1.msra.mxu0 %v2207
        %2227 = vmatprep.subr.mxu0 0.0
        %2228 = vmatpush1.msra.mxu0 %v2208
        %2229 = vmatprep.subr.mxu0 0.0
        %2230 = vmatpush1.msra.mxu0 %v2209
        %2231 = vmatprep.subr.mxu0 0.0
        %2232 = vmatpush1.msra.mxu0 %v2210
        %2233 = vmatprep.subr.mxu0 0.0
        %2234 = vmatpush1.msra.mxu0 %v2211
        %2235 = vmatprep.subr.mxu0 0.0
        %2236 = vmatpush1.msra.mxu0 %v2212
        %2237 = vmatprep.subr.mxu0 0.0
        %2238 = vmatpush1.msra.mxu0 0.0
        %2239 = vmatprep.subr.mxu0 0.0
        %2240 = vmatpush1.msra.mxu0 0.0
        %2241 = vmatprep.subr.mxu0 0.0
        %2242 = vmatpush1.msra.mxu0 0.0
        %2243 = vmatprep.subr.mxu0 0.0
        %2244 = vmatpush1.msra.mxu0 0.0
        %2245 = vmatprep.subr.mxu0 0.0
        %2246 = vmatpush1.msra.mxu0 0.0
        %2247 = vmatprep.subr.mxu0 0.0
        %2248 = vmatpush1.msra.mxu0 0.0
        %2249 = vmatprep.subr.mxu0 0.0
        %2250 = vmatpush1.msra.mxu0 0.0
        %2251 = vmatprep.subr.mxu0 0.0
        %2252 = vmatpush1.msra.mxu0 0.0
        %2253 = vmatprep.subr.mxu0 0.0
        %2254 = vmatpush1.msra.mxu0 0.0
        %2255 = vmatprep.subr.mxu0 0.0
        %2256 = vmatpush1.msra.mxu0 0.0
        %2257 = vmatprep.subr.mxu0 0.0
        %2258 = vmatpush1.msra.mxu0 0.0
        %2259 = vmatprep.subr.mxu0 0.0
        %2260 = vmatpush1.msra.mxu0 0.0
        %2261 = vmatprep.subr.mxu0 0.0
        %2262 = vmatpush1.msra.mxu0 0.0
        %2263 = vmatprep.subr.mxu0 0.0
        %2264 = vmatpush1.msra.mxu0 0.0
        %2265 = vmatprep.subr.mxu0 0.0
        %2266 = vmatpush1.msra.mxu0 0.0
        %2267 = vmatprep.subr.mxu0 0.0
        %2268 = vmatpush1.msra.mxu0 0.0
        %2269 = vmatprep.subr.mxu0 0.0
        %2270 = vmatpush1.msra.mxu0 0.0
        %2271 = vmatprep.subr.mxu0 0.0
        %2272 = vmatpush1.msra.mxu0 0.0
        %2273 = vmatprep.subr.mxu0 0.0
        %2274 = vmatpush1.msra.mxu0 0.0
        %2275 = vmatprep.subr.mxu0 0.0
        %2276 = vmatpush1.msra.mxu0 0.0
        %2277 = vmatprep.subr.mxu0 0.0
        %2278 = vmatpush1.msra.mxu0 0.0
        %2279 = vmatprep.subr.mxu0 0.0
        %2280 = vmatpush1.msra.mxu0 0.0
        %2281 = vmatprep.subr.mxu0 0.0
        %2282 = vmatpush1.msra.mxu0 0.0
        %2283 = vmatprep.subr.mxu0 0.0
        %2284 = vmatpush1.msra.mxu0 0.0
        %2285 = vmatprep.mubr.f32.mxu0 0.0
        %2286 = vmatmul.mubr.f32.gmra.mrb[0].mxu0 %v546
        %v2287 = vpop.f32.mrb[0].mxu0
        %v2288 = vadd.f32 %v2219, %v2287
        %v2289 = vpop.f32.mrb[0].mxu0
        %2290 = vmatprep.mubr.f32.mxu0 0.0
        %2291 = vmatmul.mubr.f32.gmra.mrb[0].mxu0 %v549
        %v2292 = vpop.f32.mrb[0].mxu0
        %v2293 = vadd.f32 %v2219, %v2292
        %v2294 = vpop.f32.mrb[0].mxu0
        %2295 = vdwg.mxu0
        %s2296 = scalar_lea.vmem %s4, 448
        %v2297 = vld [vmem:[%s2296] sm:$0xff]
        %v2298 = vld [vmem:[%s2296 + $0x8] sm:$0xff]
        %v2299 = vld [vmem:[%s2296 + $0x10] sm:$0xff]
        %v2300 = vld [vmem:[%s2296 + $0x18] sm:$0xff]
        %v2301 = vld [vmem:[%s2296 + $0x20] sm:$0xff]
        %v2302 = vld [vmem:[%s2296 + $0x28] sm:$0xff]
        %v2303 = vld [vmem:[%s2296 + $0x30] sm:$0xff]
        %v2304 = vld [vmem:[%s2296 + $0x38] sm:$0xff]
        %s2305 = scalar_lea.vmem %s5, 7
        %v2306 = vld [vmem:[%s2305] sm:$0x1]
        %v2308 = vlaneseq
        %v2309 = vshrl.u32 %v2308, 7
        %v2310 = vsub.s32 0, %v2309
        %v2311 = vrot.slane %v2306, %v2310
        %2313 = vmatprep.subr.mxu0 0.0
        %2314 = vmatpush1.msra.mxu0 %v2297
        %2315 = vmatprep.subr.mxu0 0.0
        %2316 = vmatpush1.msra.mxu0 %v2298
        %2317 = vmatprep.subr.mxu0 0.0
        %2318 = vmatpush1.msra.mxu0 %v2299
        %2319 = vmatprep.subr.mxu0 0.0
        %2320 = vmatpush1.msra.mxu0 %v2300
        %2321 = vmatprep.subr.mxu0 0.0
        %2322 = vmatpush1.msra.mxu0 %v2301
        %2323 = vmatprep.subr.mxu0 0.0
        %2324 = vmatpush1.msra.mxu0 %v2302
        %2325 = vmatprep.subr.mxu0 0.0
        %2326 = vmatpush1.msra.mxu0 %v2303
        %2327 = vmatprep.subr.mxu0 0.0
        %2328 = vmatpush1.msra.mxu0 %v2304
        %2329 = vmatprep.subr.mxu0 0.0
        %2330 = vmatpush1.msra.mxu0 0.0
        %2331 = vmatprep.subr.mxu0 0.0
        %2332 = vmatpush1.msra.mxu0 0.0
        %2333 = vmatprep.subr.mxu0 0.0
        %2334 = vmatpush1.msra.mxu0 0.0
        %2335 = vmatprep.subr.mxu0 0.0
        %2336 = vmatpush1.msra.mxu0 0.0
        %2337 = vmatprep.subr.mxu0 0.0
        %2338 = vmatpush1.msra.mxu0 0.0
        %2339 = vmatprep.subr.mxu0 0.0
        %2340 = vmatpush1.msra.mxu0 0.0
        %2341 = vmatprep.subr.mxu0 0.0
        %2342 = vmatpush1.msra.mxu0 0.0
        %2343 = vmatprep.subr.mxu0 0.0
        %2344 = vmatpush1.msra.mxu0 0.0
        %2345 = vmatprep.subr.mxu0 0.0
        %2346 = vmatpush1.msra.mxu0 0.0
        %2347 = vmatprep.subr.mxu0 0.0
        %2348 = vmatpush1.msra.mxu0 0.0
        %2349 = vmatprep.subr.mxu0 0.0
        %2350 = vmatpush1.msra.mxu0 0.0
        %2351 = vmatprep.subr.mxu0 0.0
        %2352 = vmatpush1.msra.mxu0 0.0
        %2353 = vmatprep.subr.mxu0 0.0
        %2354 = vmatpush1.msra.mxu0 0.0
        %2355 = vmatprep.subr.mxu0 0.0
        %2356 = vmatpush1.msra.mxu0 0.0
        %2357 = vmatprep.subr.mxu0 0.0
        %2358 = vmatpush1.msra.mxu0 0.0
        %2359 = vmatprep.subr.mxu0 0.0
        %2360 = vmatpush1.msra.mxu0 0.0
        %2361 = vmatprep.subr.mxu0 0.0
        %2362 = vmatpush1.msra.mxu0 0.0
        %2363 = vmatprep.subr.mxu0 0.0
        %2364 = vmatpush1.msra.mxu0 0.0
        %2365 = vmatprep.subr.mxu0 0.0
        %2366 = vmatpush1.msra.mxu0 0.0
        %2367 = vmatprep.subr.mxu0 0.0
        %2368 = vmatpush1.msra.mxu0 0.0
        %2369 = vmatprep.subr.mxu0 0.0
        %2370 = vmatpush1.msra.mxu0 0.0
        %2371 = vmatprep.subr.mxu0 0.0
        %2372 = vmatpush1.msra.mxu0 0.0
        %2373 = vmatprep.subr.mxu0 0.0
        %2374 = vmatpush1.msra.mxu0 0.0
        %2375 = vmatprep.subr.mxu0 0.0
        %2376 = vmatpush1.msra.mxu0 0.0
        %2377 = vmatprep.mubr.f32.mxu0 0.0
        %2378 = vmatmul.mubr.f32.gmra.mrb[0].mxu0 %v546
        %v2379 = vpop.f32.mrb[0].mxu0
        %v2380 = vadd.f32 %v2311, %v2379
        %v2381 = vpop.f32.mrb[0].mxu0
        %2382 = vmatprep.mubr.f32.mxu0 0.0
        %2383 = vmatmul.mubr.f32.gmra.mrb[0].mxu0 %v549
        %v2384 = vpop.f32.mrb[0].mxu0
        %v2385 = vadd.f32 %v2311, %v2384
        %v2386 = vpop.f32.mrb[0].mxu0
        %2387 = vdwg.mxu0
        %s2388 = scalar_lea.vmem %s4, 704
        %v2389 = vld [vmem:[%s2388] sm:$0xff]
        %v2390 = vld [vmem:[%s2388 + $0x8] sm:$0xff]
        %v2391 = vld [vmem:[%s2388 + $0x10] sm:$0xff]
        %v2392 = vld [vmem:[%s2388 + $0x18] sm:$0xff]
        %v2393 = vld [vmem:[%s2388 + $0x20] sm:$0xff]
        %v2394 = vld [vmem:[%s2388 + $0x28] sm:$0xff]
        %v2395 = vld [vmem:[%s2388 + $0x30] sm:$0xff]
        %v2396 = vld [vmem:[%s2388 + $0x38] sm:$0xff]
        %s2397 = scalar_lea.vmem %s5, 11
        %v2398 = vld [vmem:[%s2397] sm:$0x1]
        %v2400 = vlaneseq
        %v2401 = vshrl.u32 %v2400, 7
        %v2402 = vsub.s32 0, %v2401
        %v2403 = vrot.slane %v2398, %v2402
        %2405 = vmatprep.subr.mxu0 0.0
        %2406 = vmatpush1.msra.mxu0 %v2389
        %2407 = vmatprep.subr.mxu0 0.0
        %2408 = vmatpush1.msra.mxu0 %v2390
        %2409 = vmatprep.subr.mxu0 0.0
        %2410 = vmatpush1.msra.mxu0 %v2391
        %2411 = vmatprep.subr.mxu0 0.0
        %2412 = vmatpush1.msra.mxu0 %v2392
        %2413 = vmatprep.subr.mxu0 0.0
        %2414 = vmatpush1.msra.mxu0 %v2393
        %2415 = vmatprep.subr.mxu0 0.0
        %2416 = vmatpush1.msra.mxu0 %v2394
        %2417 = vmatprep.subr.mxu0 0.0
        %2418 = vmatpush1.msra.mxu0 %v2395
        %2419 = vmatprep.subr.mxu0 0.0
        %2420 = vmatpush1.msra.mxu0 %v2396
        %2421 = vmatprep.subr.mxu0 0.0
        %2422 = vmatpush1.msra.mxu0 0.0
        %2423 = vmatprep.subr.mxu0 0.0
        %2424 = vmatpush1.msra.mxu0 0.0
        %2425 = vmatprep.subr.mxu0 0.0
        %2426 = vmatpush1.msra.mxu0 0.0
        %2427 = vmatprep.subr.mxu0 0.0
        %2428 = vmatpush1.msra.mxu0 0.0
        %2429 = vmatprep.subr.mxu0 0.0
        %2430 = vmatpush1.msra.mxu0 0.0
        %2431 = vmatprep.subr.mxu0 0.0
        %2432 = vmatpush1.msra.mxu0 0.0
        %2433 = vmatprep.subr.mxu0 0.0
        %2434 = vmatpush1.msra.mxu0 0.0
        %2435 = vmatprep.subr.mxu0 0.0
        %2436 = vmatpush1.msra.mxu0 0.0
        %2437 = vmatprep.subr.mxu0 0.0
        %2438 = vmatpush1.msra.mxu0 0.0
        %2439 = vmatprep.subr.mxu0 0.0
        %2440 = vmatpush1.msra.mxu0 0.0
        %2441 = vmatprep.subr.mxu0 0.0
        %2442 = vmatpush1.msra.mxu0 0.0
        %2443 = vmatprep.subr.mxu0 0.0
        %2444 = vmatpush1.msra.mxu0 0.0
        %2445 = vmatprep.subr.mxu0 0.0
        %2446 = vmatpush1.msra.mxu0 0.0
        %2447 = vmatprep.subr.mxu0 0.0
        %2448 = vmatpush1.msra.mxu0 0.0
        %2449 = vmatprep.subr.mxu0 0.0
        %2450 = vmatpush1.msra.mxu0 0.0
        %2451 = vmatprep.subr.mxu0 0.0
        %2452 = vmatpush1.msra.mxu0 0.0
        %2453 = vmatprep.subr.mxu0 0.0
        %2454 = vmatpush1.msra.mxu0 0.0
        %2455 = vmatprep.subr.mxu0 0.0
        %2456 = vmatpush1.msra.mxu0 0.0
        %2457 = vmatprep.subr.mxu0 0.0
        %2458 = vmatpush1.msra.mxu0 0.0
        %2459 = vmatprep.subr.mxu0 0.0
        %2460 = vmatpush1.msra.mxu0 0.0
        %2461 = vmatprep.subr.mxu0 0.0
        %2462 = vmatpush1.msra.mxu0 0.0
        %2463 = vmatprep.subr.mxu0 0.0
        %2464 = vmatpush1.msra.mxu0 0.0
        %2465 = vmatprep.subr.mxu0 0.0
        %2466 = vmatpush1.msra.mxu0 0.0
        %2467 = vmatprep.subr.mxu0 0.0
        %2468 = vmatpush1.msra.mxu0 0.0
        %2469 = vmatprep.mubr.f32.mxu0 0.0
        %2470 = vmatmul.mubr.f32.gmra.mrb[0].mxu0 %v546
        %v2471 = vpop.f32.mrb[0].mxu0
        %v2472 = vadd.f32 %v2403, %v2471
        %v2473 = vpop.f32.mrb[0].mxu0
        %2474 = vmatprep.mubr.f32.mxu0 0.0
        %2475 = vmatmul.mubr.f32.gmra.mrb[0].mxu0 %v549
        %v2476 = vpop.f32.mrb[0].mxu0
        %v2477 = vadd.f32 %v2403, %v2476
        %v2478 = vpop.f32.mrb[0].mxu0
        %2479 = vdwg.mxu0
        %v2481 = vsel %vm810, %v2288, 0
        %v2484 = vsel %vm810, %v2293, 0
        %v2487 = vsel %vm810, %v2380, 0
        %v2490 = vsel %vm810, %v2385, 0
        %2492 = vmatprep.subr.mxu0 0.0
        %2493 = vmatpush1.xpose.msra.mxu0 %v2487
        %2494 = vmatprep.subr.mxu0 0.0
        %2495 = vmatpush1.xpose.msra.mxu0 %v2490
        %2496 = vmatprep.subr.mxu0 0.0
        %2497 = vmatpush1.xpose.msra.mxu0 0.0
        %2498 = vmatprep.subr.mxu0 0.0
        %2499 = vmatpush1.xpose.msra.mxu0 0.0
        %2500 = vmatprep.subr.mxu0 0.0
        %2501 = vmatpush1.xpose.msra.mxu0 0.0
        %2502 = vmatprep.subr.mxu0 0.0
        %2503 = vmatpush1.xpose.msra.mxu0 0.0
        %2504 = vmatprep.subr.mxu0 0.0
        %2505 = vmatpush1.xpose.msra.mxu0 0.0
        %2506 = vmatprep.subr.mxu0 0.0
        %2507 = vmatpush1.xpose.msra.mxu0 0.0
        %2508 = vmatprep.subr.mxu0 0.0
        %2509 = vmatpush1.xpose.msra.mxu0 0.0
        %2510 = vmatprep.subr.mxu0 0.0
        %2511 = vmatpush1.xpose.msra.mxu0 0.0
        %2512 = vmatprep.subr.mxu0 0.0
        %2513 = vmatpush1.xpose.msra.mxu0 0.0
        %2514 = vmatprep.subr.mxu0 0.0
        %2515 = vmatpush1.xpose.msra.mxu0 0.0
        %2516 = vmatprep.subr.mxu0 0.0
        %2517 = vmatpush1.xpose.msra.mxu0 0.0
        %2518 = vmatprep.subr.mxu0 0.0
        %2519 = vmatpush1.xpose.msra.mxu0 0.0
        %2520 = vmatprep.subr.mxu0 0.0
        %2521 = vmatpush1.xpose.msra.mxu0 0.0
        %2522 = vmatprep.subr.mxu0 0.0
        %2523 = vmatpush1.xpose.msra.mxu0 0.0
        %2524 = vmatprep.subr.mxu0 0.0
        %2525 = vmatpush1.xpose.msra.mxu0 0.0
        %2526 = vmatprep.subr.mxu0 0.0
        %2527 = vmatpush1.xpose.msra.mxu0 0.0
        %2528 = vmatprep.subr.mxu0 0.0
        %2529 = vmatpush1.xpose.msra.mxu0 0.0
        %2530 = vmatprep.subr.mxu0 0.0
        %2531 = vmatpush1.xpose.msra.mxu0 0.0
        %2532 = vmatprep.subr.mxu0 0.0
        %2533 = vmatpush1.xpose.msra.mxu0 0.0
        %2534 = vmatprep.subr.mxu0 0.0
        %2535 = vmatpush1.xpose.msra.mxu0 0.0
        %2536 = vmatprep.subr.mxu0 0.0
        %2537 = vmatpush1.xpose.msra.mxu0 0.0
        %2538 = vmatprep.subr.mxu0 0.0
        %2539 = vmatpush1.xpose.msra.mxu0 0.0
        %2540 = vmatprep.subr.mxu0 0.0
        %2541 = vmatpush1.xpose.msra.mxu0 0.0
        %2542 = vmatprep.subr.mxu0 0.0
        %2543 = vmatpush1.xpose.msra.mxu0 0.0
        %2544 = vmatprep.subr.mxu0 0.0
        %2545 = vmatpush1.xpose.msra.mxu0 0.0
        %2546 = vmatprep.subr.mxu0 0.0
        %2547 = vmatpush1.xpose.msra.mxu0 0.0
        %2548 = vmatprep.subr.mxu0 0.0
        %2549 = vmatpush1.xpose.msra.mxu0 0.0
        %2550 = vmatprep.subr.mxu0 0.0
        %2551 = vmatpush1.xpose.msra.mxu0 0.0
        %2552 = vmatprep.subr.mxu0 0.0
        %2553 = vmatpush1.xpose.msra.mxu0 0.0
        %2554 = vmatprep.subr.mxu0 0.0
        %2555 = vmatpush1.xpose.msra.mxu0 0.0
        %2556 = vmatprep.mubr.f32.mxu0 0.0
        %2557 = vmatmul.mubr.f32.gmra.mrb[0].mxu0 %v2481
        %v2558 = vpop.f32.mrb[0].mxu0
        %v2559 = vadd.f32 0.0, %v2558
        %v2560 = vpop.f32.mrb[0].mxu0
        %2561 = vmatprep.mubr.f32.mxu0 0.0
        %2562 = vmatmul.mubr.f32.gmra.mrb[0].mxu0 %v2484
        %v2563 = vpop.f32.mrb[0].mxu0
        %v2564 = vadd.f32 0.0, %v2563
        %v2565 = vpop.f32.mrb[0].mxu0
        %2566 = vdwg.mxu0
        %v2567 = vmul.f32 %v2559, 0.25
        %v2568 = vmul.f32 %v2564, 0.25
        %v2569 = vsel %vm905, %v2567, -1e+30
        %v2570 = vsel %vm905, %v2568, -1e+30
        %v2571 = vsel %vm810, %v2569, -inf
        %2572 = vmax.xlane.f32.xlu0 %v2571
        %v2573 = vpop.xlane.xlu0 %2572
        %v2574 = vsel %vm810, %v2570, -inf
        %2575 = vmax.xlane.f32.xlu0 %v2574
        %v2576 = vpop.xlane.xlu0 %2575
        %v2577 = vsub.f32 %v2569, %v2573
        %v2578 = vsub.f32 %v2570, %v2576
        %v2579 = vmul.f32 %v2577, 1.442695
        %v2580 = vpow.pop %v2579
        %v2581 = vmul.f32 %v2578, 1.442695
        %v2582 = vpow.pop %v2581
        %v2583 = vsel %vm810, %v2580, 0.0
        %2584 = vadd.xlane.f32.xlu0 %v2583
        %v2585 = vpop.xlane.xlu0 %2584
        %v2586 = vsel %vm810, %v2582, 0.0
        %2587 = vadd.xlane.f32.xlu0 %v2586
        %v2588 = vpop.xlane.xlu0 %2587
        %v2589 = vrcp.pop %v2585
        %v2590 = vrcp.pop %v2588
        %v2591 = vmul.f32 %v2580, %v2589
        %v2592 = vmul.f32 %v2582, %v2590
        %v2594 = vsel %vm810, %v2591, 0
        %v2597 = vsel %vm810, %v2592, 0
        %2599 = vmatprep.subr.mxu0 0.0
        %2600 = vmatpush1.msra.mxu0 %v2472
        %2601 = vmatprep.subr.mxu0 0.0
        %2602 = vmatpush1.msra.mxu0 %v2477
        %2603 = vmatprep.subr.mxu0 0.0
        %2604 = vmatpush1.msra.mxu0 0.0
        %2605 = vmatprep.subr.mxu0 0.0
        %2606 = vmatpush1.msra.mxu0 0.0
        %2607 = vmatprep.subr.mxu0 0.0
        %2608 = vmatpush1.msra.mxu0 0.0
        %2609 = vmatprep.subr.mxu0 0.0
        %2610 = vmatpush1.msra.mxu0 0.0
        %2611 = vmatprep.subr.mxu0 0.0
        %2612 = vmatpush1.msra.mxu0 0.0
        %2613 = vmatprep.subr.mxu0 0.0
        %2614 = vmatpush1.msra.mxu0 0.0
        %2615 = vmatprep.subr.mxu0 0.0
        %2616 = vmatpush1.msra.mxu0 0.0
        %2617 = vmatprep.subr.mxu0 0.0
        %2618 = vmatpush1.msra.mxu0 0.0
        %2619 = vmatprep.subr.mxu0 0.0
        %2620 = vmatpush1.msra.mxu0 0.0
        %2621 = vmatprep.subr.mxu0 0.0
        %2622 = vmatpush1.msra.mxu0 0.0
        %2623 = vmatprep.subr.mxu0 0.0
        %2624 = vmatpush1.msra.mxu0 0.0
        %2625 = vmatprep.subr.mxu0 0.0
        %2626 = vmatpush1.msra.mxu0 0.0
        %2627 = vmatprep.subr.mxu0 0.0
        %2628 = vmatpush1.msra.mxu0 0.0
        %2629 = vmatprep.subr.mxu0 0.0
        %2630 = vmatpush1.msra.mxu0 0.0
        %2631 = vmatprep.subr.mxu0 0.0
        %2632 = vmatpush1.msra.mxu0 0.0
        %2633 = vmatprep.subr.mxu0 0.0
        %2634 = vmatpush1.msra.mxu0 0.0
        %2635 = vmatprep.subr.mxu0 0.0
        %2636 = vmatpush1.msra.mxu0 0.0
        %2637 = vmatprep.subr.mxu0 0.0
        %2638 = vmatpush1.msra.mxu0 0.0
        %2639 = vmatprep.subr.mxu0 0.0
        %2640 = vmatpush1.msra.mxu0 0.0
        %2641 = vmatprep.subr.mxu0 0.0
        %2642 = vmatpush1.msra.mxu0 0.0
        %2643 = vmatprep.subr.mxu0 0.0
        %2644 = vmatpush1.msra.mxu0 0.0
        %2645 = vmatprep.subr.mxu0 0.0
        %2646 = vmatpush1.msra.mxu0 0.0
        %2647 = vmatprep.subr.mxu0 0.0
        %2648 = vmatpush1.msra.mxu0 0.0
        %2649 = vmatprep.subr.mxu0 0.0
        %2650 = vmatpush1.msra.mxu0 0.0
        %2651 = vmatprep.subr.mxu0 0.0
        %2652 = vmatpush1.msra.mxu0 0.0
        %2653 = vmatprep.subr.mxu0 0.0
        %2654 = vmatpush1.msra.mxu0 0.0
        %2655 = vmatprep.subr.mxu0 0.0
        %2656 = vmatpush1.msra.mxu0 0.0
        %2657 = vmatprep.subr.mxu0 0.0
        %2658 = vmatpush1.msra.mxu0 0.0
        %2659 = vmatprep.subr.mxu0 0.0
        %2660 = vmatpush1.msra.mxu0 0.0
        %2661 = vmatprep.subr.mxu0 0.0
        %2662 = vmatpush1.msra.mxu0 0.0
        %2663 = vmatprep.mubr.f32.mxu0 0.0
        %2664 = vmatmul.mubr.f32.gmra.mrb[0].mxu0 %v2594
        %v2665 = vpop.f32.mrb[0].mxu0
        %v2666 = vadd.f32 0.0, %v2665
        %v2667 = vpop.f32.mrb[0].mxu0
        %2668 = vmatprep.mubr.f32.mxu0 0.0
        %2669 = vmatmul.mubr.f32.gmra.mrb[0].mxu0 %v2597
        %v2670 = vpop.f32.mrb[0].mxu0
        %v2671 = vadd.f32 0.0, %v2670
        %v2672 = vpop.f32.mrb[0].mxu0
        %2673 = vdwg.mxu0
        %s2674 = scalar_lea.vmem %s6, 48
        %v2675 = vld [vmem:[%s2674] sm:$0xff]
        %v2676 = vld [vmem:[%s2674 + $0x8] sm:$0xff]
        %v2678 = vsel %vm810, %v2666, 0
        %v2681 = vsel %vm810, %v2671, 0
        %2683 = vmatprep.subr.mxu0 0.0
        %2684 = vmatpush1.msra.mxu0 %v2675
        %2685 = vmatprep.subr.mxu0 0.0
        %2686 = vmatpush1.msra.mxu0 %v2676
        %2687 = vmatprep.subr.mxu0 0.0
        %2688 = vmatpush1.msra.mxu0 0.0
        %2689 = vmatprep.subr.mxu0 0.0
        %2690 = vmatpush1.msra.mxu0 0.0
        %2691 = vmatprep.subr.mxu0 0.0
        %2692 = vmatpush1.msra.mxu0 0.0
        %2693 = vmatprep.subr.mxu0 0.0
        %2694 = vmatpush1.msra.mxu0 0.0
        %2695 = vmatprep.subr.mxu0 0.0
        %2696 = vmatpush1.msra.mxu0 0.0
        %2697 = vmatprep.subr.mxu0 0.0
        %2698 = vmatpush1.msra.mxu0 0.0
        %2699 = vmatprep.subr.mxu0 0.0
        %2700 = vmatpush1.msra.mxu0 0.0
        %2701 = vmatprep.subr.mxu0 0.0
        %2702 = vmatpush1.msra.mxu0 0.0
        %2703 = vmatprep.subr.mxu0 0.0
        %2704 = vmatpush1.msra.mxu0 0.0
        %2705 = vmatprep.subr.mxu0 0.0
        %2706 = vmatpush1.msra.mxu0 0.0
        %2707 = vmatprep.subr.mxu0 0.0
        %2708 = vmatpush1.msra.mxu0 0.0
        %2709 = vmatprep.subr.mxu0 0.0
        %2710 = vmatpush1.msra.mxu0 0.0
        %2711 = vmatprep.subr.mxu0 0.0
        %2712 = vmatpush1.msra.mxu0 0.0
        %2713 = vmatprep.subr.mxu0 0.0
        %2714 = vmatpush1.msra.mxu0 0.0
        %2715 = vmatprep.subr.mxu0 0.0
        %2716 = vmatpush1.msra.mxu0 0.0
        %2717 = vmatprep.subr.mxu0 0.0
        %2718 = vmatpush1.msra.mxu0 0.0
        %2719 = vmatprep.subr.mxu0 0.0
        %2720 = vmatpush1.msra.mxu0 0.0
        %2721 = vmatprep.subr.mxu0 0.0
        %2722 = vmatpush1.msra.mxu0 0.0
        %2723 = vmatprep.subr.mxu0 0.0
        %2724 = vmatpush1.msra.mxu0 0.0
        %2725 = vmatprep.subr.mxu0 0.0
        %2726 = vmatpush1.msra.mxu0 0.0
        %2727 = vmatprep.subr.mxu0 0.0
        %2728 = vmatpush1.msra.mxu0 0.0
        %2729 = vmatprep.subr.mxu0 0.0
        %2730 = vmatpush1.msra.mxu0 0.0
        %2731 = vmatprep.subr.mxu0 0.0
        %2732 = vmatpush1.msra.mxu0 0.0
        %2733 = vmatprep.subr.mxu0 0.0
        %2734 = vmatpush1.msra.mxu0 0.0
        %2735 = vmatprep.subr.mxu0 0.0
        %2736 = vmatpush1.msra.mxu0 0.0
        %2737 = vmatprep.subr.mxu0 0.0
        %2738 = vmatpush1.msra.mxu0 0.0
        %2739 = vmatprep.subr.mxu0 0.0
        %2740 = vmatpush1.msra.mxu0 0.0
        %2741 = vmatprep.subr.mxu0 0.0
        %2742 = vmatpush1.msra.mxu0 0.0
        %2743 = vmatprep.subr.mxu0 0.0
        %2744 = vmatpush1.msra.mxu0 0.0
        %2745 = vmatprep.subr.mxu0 0.0
        %2746 = vmatpush1.msra.mxu0 0.0
        %2747 = vmatprep.mubr.f32.mxu0 0.0
        %2748 = vmatmul.mubr.f32.gmra.mrb[0].mxu0 %v2678
        %v2749 = vpop.f32.mrb[0].mxu0
        %v2750 = vadd.f32 0.0, %v2749
        %v2751 = vpop.f32.mrb[0].mxu0
        %2752 = vmatprep.mubr.f32.mxu0 0.0
        %2753 = vmatmul.mubr.f32.gmra.mrb[0].mxu0 %v2681
        %v2754 = vpop.f32.mrb[0].mxu0
        %v2755 = vadd.f32 0.0, %v2754
        %v2756 = vpop.f32.mrb[0].mxu0
        %2757 = vdwg.mxu0
        %v2758 = vadd.f32 %v2202, %v2750
        %v2759 = vadd.f32 %v2203, %v2755
        %v2760 = vld [vmem:[%s7] sm:$0x1]
        %v2762 = vlaneseq
        %v2763 = vshrl.u32 %v2762, 7
        %v2764 = vsub.s32 0, %v2763
        %v2765 = vrot.slane %v2760, %v2764
        %v2767 = vadd.f32 %v2758, %v2765
        %v2768 = vadd.f32 %v2759, %v2765
        %v2769 = vadd.f32 %v524, %v2767
        %v2770 = vadd.f32 %v525, %v2768
        %v2771 = vsel %vm544, %v2769, 0.0
        %2772 = vadd.xlane.f32.xlu0 %v2771
        %v2773 = vpop.xlane.xlu0 %2772
        %v2774 = vsel %vm544, %v2770, 0.0
        %2775 = vadd.xlane.f32.xlu0 %v2774
        %v2776 = vpop.xlane.xlu0 %2775
        %v2777 = vrcp.pop 64.0
        %v2778 = vmul.f32 %v2773, %v2777
        %v2779 = vmul.f32 %v2776, %v2777
        %v2780 = vsub.f32 %v2769, %v2778
        %v2781 = vsub.f32 %v2770, %v2779
        %v2782 = vmul.f32 %v2780, %v2780
        %v2783 = vmul.f32 %v2781, %v2781
        %v2784 = vsel %vm544, %v2782, 0.0
        %2785 = vadd.xlane.f32.xlu0 %v2784
        %v2786 = vpop.xlane.xlu0 %2785
        %v2787 = vsel %vm544, %v2783, 0.0
        %2788 = vadd.xlane.f32.xlu0 %v2787
        %v2789 = vpop.xlane.xlu0 %2788
        %v2790 = vmul.f32 %v2786, %v2777
        %v2791 = vmul.f32 %v2789, %v2777
        %v2792 = vadd.f32 %v2790, 1e-05
        %v2793 = vadd.f32 %v2791, 1e-05
        %v2794 = vrsqrt.pop %v2792
        %v2795 = vrsqrt.pop %v2793
        %v2796 = vmul.f32 %v2780, %v2794
        %v2797 = vmul.f32 %v2781, %v2795
        %v2798 = vlaneseq
        %v2799 = vshrl.u32 %v2798, 7
        %v2800 = vsub.s32 0, %v2799
        %v2801 = vrot.slane %v528, %v2800
        %v2802 = vmul.f32 %v2796, %v2801
        %v2803 = vmul.f32 %v2797, %v2801
        %v2804 = vlaneseq
        %v2805 = vshrl.u32 %v2804, 7
        %v2806 = vsub.s32 1, %v2805
        %v2807 = vrot.slane %v528, %v2806
        %v2808 = vadd.f32 %v2802, %v2807
        %v2809 = vadd.f32 %v2803, %v2807
        %v2810 = vld [vmem:[%s523] sm:$0x1]
        %v2811 = vlaneseq
        %v2812 = vshrl.u32 %v2811, 7
        %v2813 = vsub.s32 0, %v2812
        %v2814 = vrot.slane %v2810, %v2813
        %v2815 = vadd.f32 %v2808, %v2814
        %v2816 = vadd.f32 %v2809, %v2814
        %v2817 = vsel %vm544, %v2815, 0.0
        %2818 = vadd.xlane.f32.xlu0 %v2817
        %v2819 = vpop.xlane.xlu0 %2818
        %v2820 = vsel %vm544, %v2816, 0.0
        %2821 = vadd.xlane.f32.xlu0 %v2820
        %v2822 = vpop.xlane.xlu0 %2821
        %v2823 = vmul.f32 %v2819, %v2777
        %v2824 = vmul.f32 %v2822, %v2777
        %v2825 = vsub.f32 %v2815, %v2823
        %v2826 = vsub.f32 %v2816, %v2824
        %v2827 = vmul.f32 %v2825, %v2825
        %v2828 = vmul.f32 %v2826, %v2826
        %v2829 = vsel %vm544, %v2827, 0.0
        %2830 = vadd.xlane.f32.xlu0 %v2829
        %v2831 = vpop.xlane.xlu0 %2830
        %v2832 = vsel %vm544, %v2828, 0.0
        %2833 = vadd.xlane.f32.xlu0 %v2832
        %v2834 = vpop.xlane.xlu0 %2833
        %v2835 = vmul.f32 %v2831, %v2777
        %v2836 = vmul.f32 %v2834, %v2777
        %v2837 = vadd.f32 %v2835, 1e-05
        %v2838 = vadd.f32 %v2836, 1e-05
        %v2839 = vrsqrt.pop %v2837
        %v2840 = vrsqrt.pop %v2838
        %v2841 = vmul.f32 %v2825, %v2839
        %v2842 = vmul.f32 %v2826, %v2840
        %v2843 = vlaneseq
        %v2844 = vshrl.u32 %v2843, 7
        %v2845 = vsub.s32 2, %v2844
        %v2846 = vrot.slane %v528, %v2845
        %v2847 = vmul.f32 %v2841, %v2846
        %v2848 = vmul.f32 %v2842, %v2846
        %v2849 = vlaneseq
        %v2850 = vshrl.u32 %v2849, 7
        %v2851 = vsub.s32 3, %v2850
        %v2852 = vrot.slane %v528, %v2851
        %v2853 = vadd.f32 %v2847, %v2852
        %v2854 = vadd.f32 %v2848, %v2852
        %v2855 = vld [vmem:[%s9] sm:$0xff]
        %v2856 = vld [vmem:[%s9 + $0x8] sm:$0xff]
        %v2857 = vld [vmem:[%s9 + $0x10] sm:$0xff]
        %v2858 = vld [vmem:[%s9 + $0x18] sm:$0xff]
        %v2859 = vld [vmem:[%s9 + $0x20] sm:$0xff]
        %v2860 = vld [vmem:[%s9 + $0x28] sm:$0xff]
        %v2861 = vld [vmem:[%s9 + $0x30] sm:$0xff]
        %v2862 = vld [vmem:[%s9 + $0x38] sm:$0xff]
        %v2863 = vld [vmem:[%s10] sm:$0x1]
        %v2865 = vlaneseq
        %v2866 = vshrl.u32 %v2865, 7
        %v2867 = vsub.s32 0, %v2866
        %v2868 = vrot.slane %v2863, %v2867
        %v2871 = vsel %vm544, %v2853, 0
        %v2874 = vsel %vm544, %v2854, 0
        %2876 = vmatprep.subr.mxu0 0.0
        %2877 = vmatpush1.msra.mxu0 %v2855
        %2878 = vmatprep.subr.mxu0 0.0
        %2879 = vmatpush1.msra.mxu0 %v2856
        %2880 = vmatprep.subr.mxu0 0.0
        %2881 = vmatpush1.msra.mxu0 %v2857
        %2882 = vmatprep.subr.mxu0 0.0
        %2883 = vmatpush1.msra.mxu0 %v2858
        %2884 = vmatprep.subr.mxu0 0.0
        %2885 = vmatpush1.msra.mxu0 %v2859
        %2886 = vmatprep.subr.mxu0 0.0
        %2887 = vmatpush1.msra.mxu0 %v2860
        %2888 = vmatprep.subr.mxu0 0.0
        %2889 = vmatpush1.msra.mxu0 %v2861
        %2890 = vmatprep.subr.mxu0 0.0
        %2891 = vmatpush1.msra.mxu0 %v2862
        %2892 = vmatprep.subr.mxu0 0.0
        %2893 = vmatpush1.msra.mxu0 0.0
        %2894 = vmatprep.subr.mxu0 0.0
        %2895 = vmatpush1.msra.mxu0 0.0
        %2896 = vmatprep.subr.mxu0 0.0
        %2897 = vmatpush1.msra.mxu0 0.0
        %2898 = vmatprep.subr.mxu0 0.0
        %2899 = vmatpush1.msra.mxu0 0.0
        %2900 = vmatprep.subr.mxu0 0.0
        %2901 = vmatpush1.msra.mxu0 0.0
        %2902 = vmatprep.subr.mxu0 0.0
        %2903 = vmatpush1.msra.mxu0 0.0
        %2904 = vmatprep.subr.mxu0 0.0
        %2905 = vmatpush1.msra.mxu0 0.0
        %2906 = vmatprep.subr.mxu0 0.0
        %2907 = vmatpush1.msra.mxu0 0.0
        %2908 = vmatprep.subr.mxu0 0.0
        %2909 = vmatpush1.msra.mxu0 0.0
        %2910 = vmatprep.subr.mxu0 0.0
        %2911 = vmatpush1.msra.mxu0 0.0
        %2912 = vmatprep.subr.mxu0 0.0
        %2913 = vmatpush1.msra.mxu0 0.0
        %2914 = vmatprep.subr.mxu0 0.0
        %2915 = vmatpush1.msra.mxu0 0.0
        %2916 = vmatprep.subr.mxu0 0.0
        %2917 = vmatpush1.msra.mxu0 0.0
        %2918 = vmatprep.subr.mxu0 0.0
        %2919 = vmatpush1.msra.mxu0 0.0
        %2920 = vmatprep.subr.mxu0 0.0
        %2921 = vmatpush1.msra.mxu0 0.0
        %2922 = vmatprep.subr.mxu0 0.0
        %2923 = vmatpush1.msra.mxu0 0.0
        %2924 = vmatprep.subr.mxu0 0.0
        %2925 = vmatpush1.msra.mxu0 0.0
        %2926 = vmatprep.subr.mxu0 0.0
        %2927 = vmatpush1.msra.mxu0 0.0
        %2928 = vmatprep.subr.mxu0 0.0
        %2929 = vmatpush1.msra.mxu0 0.0
        %2930 = vmatprep.subr.mxu0 0.0
        %2931 = vmatpush1.msra.mxu0 0.0
        %2932 = vmatprep.subr.mxu0 0.0
        %2933 = vmatpush1.msra.mxu0 0.0
        %2934 = vmatprep.subr.mxu0 0.0
        %2935 = vmatpush1.msra.mxu0 0.0
        %2936 = vmatprep.subr.mxu0 0.0
        %2937 = vmatpush1.msra.mxu0 0.0
        %2938 = vmatprep.subr.mxu0 0.0
        %2939 = vmatpush1.msra.mxu0 0.0
        %2940 = vmatprep.mubr.f32.mxu0 0.0
        %2941 = vmatmul.mubr.f32.gmra.mrb[0].mxu0 %v2871
        %v2942 = vpop.f32.mrb[0].mxu0
        %v2943 = vadd.f32 %v2868, %v2942
        %v2944 = vpop.f32.mrb[0].mxu0
        %2945 = vmatprep.mubr.f32.mxu0 0.0
        %2946 = vmatmul.mubr.f32.gmra.mrb[0].mxu0 %v2874
        %v2947 = vpop.f32.mrb[0].mxu0
        %v2948 = vadd.f32 %v2868, %v2947
        %v2949 = vpop.f32.mrb[0].mxu0
        %2950 = vdwg.mxu0
        %v2951 = vmul.f32 %v2943, 0.5
        %v2952 = vmul.f32 %v2948, 0.5
        %v2953 = vmul.f32 %v2943, 0.70710677
        %v2954 = vmul.f32 %v2948, 0.70710677
        %v2955 = vand.u32 2147483647, %v2953
        %v2956 = vand.u32 2147483647, %v2954
        %v2957 = vmul.f32 %v2955, 0.3275911
        %v2958 = vmul.f32 %v2956, 0.3275911
        %v2959 = vadd.f32 %v2957, 1.0
        %v2960 = vadd.f32 %v2958, 1.0
        %v2961 = vrcp.pop %v2959
        %v2962 = vmul.f32 1.0, %v2961
        %v2963 = vrcp.pop %v2960
        %v2964 = vmul.f32 1.0, %v2963
        %v2965 = vmul.f32 %v2962, 1.0614054
        %v2966 = vmul.f32 %v2964, 1.0614054
        %v2967 = vadd.f32 %v2965, -1.4531521
        %v2968 = vadd.f32 %v2966, -1.4531521
        %v2969 = vmul.f32 %v2967, %v2962
        %v2970 = vmul.f32 %v2968, %v2964
        %v2971 = vadd.f32 %v2969, 1.4214138
        %v2972 = vadd.f32 %v2970, 1.4214138
        %v2973 = vmul.f32 %v2971, %v2962
        %v2974 = vmul.f32 %v2972, %v2964
        %v2975 = vadd.f32 %v2973, -0.28449672
        %v2976 = vadd.f32 %v2974, -0.28449672
        %v2977 = vmul.f32 %v2975, %v2962
        %v2978 = vmul.f32 %v2976, %v2964
        %v2979 = vadd.f32 %v2977, 0.2548296
        %v2980 = vadd.f32 %v2978, 0.2548296
        %v2981 = vmul.f32 %v2979, %v2962
        %v2982 = vmul.f32 %v2980, %v2964
        %v2983 = vsub.f32 0.0, %v2955
        %v2984 = vsub.f32 0.0, %v2956
        %v2985 = vmul.f32 %v2983, %v2955
        %v2986 = vmul.f32 %v2984, %v2956
        %v2987 = vmul.f32 %v2985, 1.442695
        %v2988 = vpow.pop %v2987
        %v2989 = vmul.f32 %v2986, 1.442695
        %v2990 = vpow.pop %v2989
        %v2991 = vmul.f32 %v2981, %v2988
        %v2992 = vmul.f32 %v2982, %v2990
        %v2993 = vsub.f32 1.0, %v2991
        %v2994 = vsub.f32 1.0, %v2992
        %vm2995 = vcmp.ge.f32.partialorder %v2953, 0.0
        %vm2996 = vcmp.ge.f32.partialorder %v2954, 0.0
        %v2997 = vsub.f32 0.0, %v2993
        %v2998 = vsub.f32 0.0, %v2994
        %v2999 = vsel %vm2995, %v2993, %v2997
        %v3000 = vsel %vm2996, %v2994, %v2998
        %v3001 = vadd.f32 %v2999, 1.0
        %v3002 = vadd.f32 %v3000, 1.0
        %v3003 = vmul.f32 %v2951, %v3001
        %v3004 = vmul.f32 %v2952, %v3002
        %v3005 = vld [vmem:[%s11] sm:$0xff]
        %v3006 = vld [vmem:[%s11 + $0x8] sm:$0xff]
        %v3007 = vld [vmem:[%s11 + $0x10] sm:$0xff]
        %v3008 = vld [vmem:[%s11 + $0x18] sm:$0xff]
        %v3009 = vld [vmem:[%s11 + $0x20] sm:$0xff]
        %v3010 = vld [vmem:[%s11 + $0x28] sm:$0xff]
        %v3011 = vld [vmem:[%s11 + $0x30] sm:$0xff]
        %v3012 = vld [vmem:[%s11 + $0x38] sm:$0xff]
        %v3013 = vld [vmem:[%s11 + $0x40] sm:$0xff]
        %v3014 = vld [vmem:[%s11 + $0x48] sm:$0xff]
        %v3015 = vld [vmem:[%s11 + $0x50] sm:$0xff]
        %v3016 = vld [vmem:[%s11 + $0x58] sm:$0xff]
        %v3017 = vld [vmem:[%s11 + $0x60] sm:$0xff]
        %v3018 = vld [vmem:[%s11 + $0x68] sm:$0xff]
        %v3019 = vld [vmem:[%s11 + $0x70] sm:$0xff]
        %v3020 = vld [vmem:[%s11 + $0x78] sm:$0xff]
        %v3021 = vld [vmem:[%s12] sm:$0x1]
        %v3023 = vlaneseq
        %v3024 = vshrl.u32 %v3023, 7
        %v3025 = vsub.s32 0, %v3024
        %v3026 = vrot.slane %v3021, %v3025
        %3028 = vmatprep.subr.mxu0 0.0
        %3029 = vmatpush1.msra.mxu0 %v3005
        %3030 = vmatprep.subr.mxu0 0.0
        %3031 = vmatpush1.msra.mxu0 %v3006
        %3032 = vmatprep.subr.mxu0 0.0
        %3033 = vmatpush1.msra.mxu0 %v3007
        %3034 = vmatprep.subr.mxu0 0.0
        %3035 = vmatpush1.msra.mxu0 %v3008
        %3036 = vmatprep.subr.mxu0 0.0
        %3037 = vmatpush1.msra.mxu0 %v3009
        %3038 = vmatprep.subr.mxu0 0.0
        %3039 = vmatpush1.msra.mxu0 %v3010
        %3040 = vmatprep.subr.mxu0 0.0
        %3041 = vmatpush1.msra.mxu0 %v3011
        %3042 = vmatprep.subr.mxu0 0.0
        %3043 = vmatpush1.msra.mxu0 %v3012
        %3044 = vmatprep.subr.mxu0 0.0
        %3045 = vmatpush1.msra.mxu0 %v3013
        %3046 = vmatprep.subr.mxu0 0.0
        %3047 = vmatpush1.msra.mxu0 %v3014
        %3048 = vmatprep.subr.mxu0 0.0
        %3049 = vmatpush1.msra.mxu0 %v3015
        %3050 = vmatprep.subr.mxu0 0.0
        %3051 = vmatpush1.msra.mxu0 %v3016
        %3052 = vmatprep.subr.mxu0 0.0
        %3053 = vmatpush1.msra.mxu0 %v3017
        %3054 = vmatprep.subr.mxu0 0.0
        %3055 = vmatpush1.msra.mxu0 %v3018
        %3056 = vmatprep.subr.mxu0 0.0
        %3057 = vmatpush1.msra.mxu0 %v3019
        %3058 = vmatprep.subr.mxu0 0.0
        %3059 = vmatpush1.msra.mxu0 %v3020
        %3060 = vmatprep.subr.mxu0 0.0
        %3061 = vmatpush1.msra.mxu0 0.0
        %3062 = vmatprep.subr.mxu0 0.0
        %3063 = vmatpush1.msra.mxu0 0.0
        %3064 = vmatprep.subr.mxu0 0.0
        %3065 = vmatpush1.msra.mxu0 0.0
        %3066 = vmatprep.subr.mxu0 0.0
        %3067 = vmatpush1.msra.mxu0 0.0
        %3068 = vmatprep.subr.mxu0 0.0
        %3069 = vmatpush1.msra.mxu0 0.0
        %3070 = vmatprep.subr.mxu0 0.0
        %3071 = vmatpush1.msra.mxu0 0.0
        %3072 = vmatprep.subr.mxu0 0.0
        %3073 = vmatpush1.msra.mxu0 0.0
        %3074 = vmatprep.subr.mxu0 0.0
        %3075 = vmatpush1.msra.mxu0 0.0
        %3076 = vmatprep.subr.mxu0 0.0
        %3077 = vmatpush1.msra.mxu0 0.0
        %3078 = vmatprep.subr.mxu0 0.0
        %3079 = vmatpush1.msra.mxu0 0.0
        %3080 = vmatprep.subr.mxu0 0.0
        %3081 = vmatpush1.msra.mxu0 0.0
        %3082 = vmatprep.subr.mxu0 0.0
        %3083 = vmatpush1.msra.mxu0 0.0
        %3084 = vmatprep.subr.mxu0 0.0
        %3085 = vmatpush1.msra.mxu0 0.0
        %3086 = vmatprep.subr.mxu0 0.0
        %3087 = vmatpush1.msra.mxu0 0.0
        %3088 = vmatprep.subr.mxu0 0.0
        %3089 = vmatpush1.msra.mxu0 0.0
        %3090 = vmatprep.subr.mxu0 0.0
        %3091 = vmatpush1.msra.mxu0 0.0
        %3092 = vmatprep.mubr.f32.mxu0 0.0
        %3093 = vmatmul.mubr.f32.gmra.mrb[0].mxu0 %v3003
        %v3094 = vpop.f32.mrb[0].mxu0
        %v3095 = vadd.f32 %v3026, %v3094
        %v3096 = vpop.f32.mrb[0].mxu0
        %3097 = vmatprep.mubr.f32.mxu0 0.0
        %3098 = vmatmul.mubr.f32.gmra.mrb[0].mxu0 %v3004
        %v3099 = vpop.f32.mrb[0].mxu0
        %v3100 = vadd.f32 %v3026, %v3099
        %v3101 = vpop.f32.mrb[0].mxu0
        %3102 = vdwg.mxu0
        %v3103 = vadd.f32 %v2853, %v3095
        %v3104 = vadd.f32 %v2854, %v3100
        %v3105 = vsel %vm544, %v3103, 0.0
        %3106 = vadd.xlane.f32.xlu0 %v3105
        %v3107 = vpop.xlane.xlu0 %3106
        %v3108 = vsel %vm544, %v3104, 0.0
        %3109 = vadd.xlane.f32.xlu0 %v3108
        %v3110 = vpop.xlane.xlu0 %3109
        %v3111 = vmul.f32 %v3107, %v2777
        %v3112 = vmul.f32 %v3110, %v2777
        %v3113 = vsub.f32 %v3103, %v3111
        %v3114 = vsub.f32 %v3104, %v3112
        %v3115 = vmul.f32 %v3113, %v3113
        %v3116 = vmul.f32 %v3114, %v3114
        %v3117 = vsel %vm544, %v3115, 0.0
        %3118 = vadd.xlane.f32.xlu0 %v3117
        %v3119 = vpop.xlane.xlu0 %3118
        %v3120 = vsel %vm544, %v3116, 0.0
        %3121 = vadd.xlane.f32.xlu0 %v3120
        %v3122 = vpop.xlane.xlu0 %3121
        %v3123 = vmul.f32 %v3119, %v2777
        %v3124 = vmul.f32 %v3122, %v2777
        %v3125 = vadd.f32 %v3123, 1e-05
        %v3126 = vadd.f32 %v3124, 1e-05
        %v3127 = vrsqrt.pop %v3125
        %v3128 = vrsqrt.pop %v3126
        %v3129 = vmul.f32 %v3113, %v3127
        %v3130 = vmul.f32 %v3114, %v3128
        %v3131 = vlaneseq
        %v3132 = vshrl.u32 %v3131, 7
        %v3133 = vsub.s32 4, %v3132
        %v3134 = vrot.slane %v528, %v3133
        %v3135 = vmul.f32 %v3129, %v3134
        %v3136 = vmul.f32 %v3130, %v3134
        %v3137 = vlaneseq
        %v3138 = vshrl.u32 %v3137, 7
        %v3139 = vsub.s32 5, %v3138
        %v3140 = vrot.slane %v528, %v3139
        %v3141 = vadd.f32 %v3135, %v3140
        %v3142 = vadd.f32 %v3136, %v3140
        %s3143 = scalar_lea.vmem %s8, 8
        %v3144 = vld [vmem:[%s3143] sm:$0x3f]
        %s3145 = scalar_lea.vmem %s4, 768
        %v3146 = vld [vmem:[%s3145] sm:$0xff]
        %v3147 = vld [vmem:[%s3145 + $0x8] sm:$0xff]
        %v3148 = vld [vmem:[%s3145 + $0x10] sm:$0xff]
        %v3149 = vld [vmem:[%s3145 + $0x18] sm:$0xff]
        %v3150 = vld [vmem:[%s3145 + $0x20] sm:$0xff]
        %v3151 = vld [vmem:[%s3145 + $0x28] sm:$0xff]
        %v3152 = vld [vmem:[%s3145 + $0x30] sm:$0xff]
        %v3153 = vld [vmem:[%s3145 + $0x38] sm:$0xff]
        %s3154 = scalar_lea.vmem %s5, 12
        %v3155 = vld [vmem:[%s3154] sm:$0x1]
        %v3157 = vlaneseq
        %v3158 = vshrl.u32 %v3157, 7
        %v3159 = vsub.s32 0, %v3158
        %v3160 = vrot.slane %v3155, %v3159
        %v3163 = vsel %vm544, %v3141, 0
        %v3166 = vsel %vm544, %v3142, 0
        %3168 = vmatprep.subr.mxu0 0.0
        %3169 = vmatpush1.msra.mxu0 %v3146
        %3170 = vmatprep.subr.mxu0 0.0
        %3171 = vmatpush1.msra.mxu0 %v3147
        %3172 = vmatprep.subr.mxu0 0.0
        %3173 = vmatpush1.msra.mxu0 %v3148
        %3174 = vmatprep.subr.mxu0 0.0
        %3175 = vmatpush1.msra.mxu0 %v3149
        %3176 = vmatprep.subr.mxu0 0.0
        %3177 = vmatpush1.msra.mxu0 %v3150
        %3178 = vmatprep.subr.mxu0 0.0
        %3179 = vmatpush1.msra.mxu0 %v3151
        %3180 = vmatprep.subr.mxu0 0.0
        %3181 = vmatpush1.msra.mxu0 %v3152
        %3182 = vmatprep.subr.mxu0 0.0
        %3183 = vmatpush1.msra.mxu0 %v3153
        %3184 = vmatprep.subr.mxu0 0.0
        %3185 = vmatpush1.msra.mxu0 0.0
        %3186 = vmatprep.subr.mxu0 0.0
        %3187 = vmatpush1.msra.mxu0 0.0
        %3188 = vmatprep.subr.mxu0 0.0
        %3189 = vmatpush1.msra.mxu0 0.0
        %3190 = vmatprep.subr.mxu0 0.0
        %3191 = vmatpush1.msra.mxu0 0.0
        %3192 = vmatprep.subr.mxu0 0.0
        %3193 = vmatpush1.msra.mxu0 0.0
        %3194 = vmatprep.subr.mxu0 0.0
        %3195 = vmatpush1.msra.mxu0 0.0
        %3196 = vmatprep.subr.mxu0 0.0
        %3197 = vmatpush1.msra.mxu0 0.0
        %3198 = vmatprep.subr.mxu0 0.0
        %3199 = vmatpush1.msra.mxu0 0.0
        %3200 = vmatprep.subr.mxu0 0.0
        %3201 = vmatpush1.msra.mxu0 0.0
        %3202 = vmatprep.subr.mxu0 0.0
        %3203 = vmatpush1.msra.mxu0 0.0
        %3204 = vmatprep.subr.mxu0 0.0
        %3205 = vmatpush1.msra.mxu0 0.0
        %3206 = vmatprep.subr.mxu0 0.0
        %3207 = vmatpush1.msra.mxu0 0.0
        %3208 = vmatprep.subr.mxu0 0.0
        %3209 = vmatpush1.msra.mxu0 0.0
        %3210 = vmatprep.subr.mxu0 0.0
        %3211 = vmatpush1.msra.mxu0 0.0
        %3212 = vmatprep.subr.mxu0 0.0
        %3213 = vmatpush1.msra.mxu0 0.0
        %3214 = vmatprep.subr.mxu0 0.0
        %3215 = vmatpush1.msra.mxu0 0.0
        %3216 = vmatprep.subr.mxu0 0.0
        %3217 = vmatpush1.msra.mxu0 0.0
        %3218 = vmatprep.subr.mxu0 0.0
        %3219 = vmatpush1.msra.mxu0 0.0
        %3220 = vmatprep.subr.mxu0 0.0
        %3221 = vmatpush1.msra.mxu0 0.0
        %3222 = vmatprep.subr.mxu0 0.0
        %3223 = vmatpush1.msra.mxu0 0.0
        %3224 = vmatprep.subr.mxu0 0.0
        %3225 = vmatpush1.msra.mxu0 0.0
        %3226 = vmatprep.subr.mxu0 0.0
        %3227 = vmatpush1.msra.mxu0 0.0
        %3228 = vmatprep.subr.mxu0 0.0
        %3229 = vmatpush1.msra.mxu0 0.0
        %3230 = vmatprep.subr.mxu0 0.0
        %3231 = vmatpush1.msra.mxu0 0.0
        %3232 = vmatprep.mubr.f32.mxu0 0.0
        %3233 = vmatmul.mubr.f32.gmra.mrb[0].mxu0 %v3163
        %v3234 = vpop.f32.mrb[0].mxu0
        %v3235 = vadd.f32 %v3160, %v3234
        %v3236 = vpop.f32.mrb[0].mxu0
        %3237 = vmatprep.mubr.f32.mxu0 0.0
        %3238 = vmatmul.mubr.f32.gmra.mrb[0].mxu0 %v3166
        %v3239 = vpop.f32.mrb[0].mxu0
        %v3240 = vadd.f32 %v3160, %v3239
        %v3241 = vpop.f32.mrb[0].mxu0
        %3242 = vdwg.mxu0
        %s3243 = scalar_lea.vmem %s4, 1024
        %v3244 = vld [vmem:[%s3243] sm:$0xff]
        %v3245 = vld [vmem:[%s3243 + $0x8] sm:$0xff]
        %v3246 = vld [vmem:[%s3243 + $0x10] sm:$0xff]
        %v3247 = vld [vmem:[%s3243 + $0x18] sm:$0xff]
        %v3248 = vld [vmem:[%s3243 + $0x20] sm:$0xff]
        %v3249 = vld [vmem:[%s3243 + $0x28] sm:$0xff]
        %v3250 = vld [vmem:[%s3243 + $0x30] sm:$0xff]
        %v3251 = vld [vmem:[%s3243 + $0x38] sm:$0xff]
        %s3252 = scalar_lea.vmem %s5, 16
        %v3253 = vld [vmem:[%s3252] sm:$0x1]
        %v3255 = vlaneseq
        %v3256 = vshrl.u32 %v3255, 7
        %v3257 = vsub.s32 0, %v3256
        %v3258 = vrot.slane %v3253, %v3257
        %3260 = vmatprep.subr.mxu0 0.0
        %3261 = vmatpush1.msra.mxu0 %v3244
        %3262 = vmatprep.subr.mxu0 0.0
        %3263 = vmatpush1.msra.mxu0 %v3245
        %3264 = vmatprep.subr.mxu0 0.0
        %3265 = vmatpush1.msra.mxu0 %v3246
        %3266 = vmatprep.subr.mxu0 0.0
        %3267 = vmatpush1.msra.mxu0 %v3247
        %3268 = vmatprep.subr.mxu0 0.0
        %3269 = vmatpush1.msra.mxu0 %v3248
        %3270 = vmatprep.subr.mxu0 0.0
        %3271 = vmatpush1.msra.mxu0 %v3249
        %3272 = vmatprep.subr.mxu0 0.0
        %3273 = vmatpush1.msra.mxu0 %v3250
        %3274 = vmatprep.subr.mxu0 0.0
        %3275 = vmatpush1.msra.mxu0 %v3251
        %3276 = vmatprep.subr.mxu0 0.0
        %3277 = vmatpush1.msra.mxu0 0.0
        %3278 = vmatprep.subr.mxu0 0.0
        %3279 = vmatpush1.msra.mxu0 0.0
        %3280 = vmatprep.subr.mxu0 0.0
        %3281 = vmatpush1.msra.mxu0 0.0
        %3282 = vmatprep.subr.mxu0 0.0
        %3283 = vmatpush1.msra.mxu0 0.0
        %3284 = vmatprep.subr.mxu0 0.0
        %3285 = vmatpush1.msra.mxu0 0.0
        %3286 = vmatprep.subr.mxu0 0.0
        %3287 = vmatpush1.msra.mxu0 0.0
        %3288 = vmatprep.subr.mxu0 0.0
        %3289 = vmatpush1.msra.mxu0 0.0
        %3290 = vmatprep.subr.mxu0 0.0
        %3291 = vmatpush1.msra.mxu0 0.0
        %3292 = vmatprep.subr.mxu0 0.0
        %3293 = vmatpush1.msra.mxu0 0.0
        %3294 = vmatprep.subr.mxu0 0.0
        %3295 = vmatpush1.msra.mxu0 0.0
        %3296 = vmatprep.subr.mxu0 0.0
        %3297 = vmatpush1.msra.mxu0 0.0
        %3298 = vmatprep.subr.mxu0 0.0
        %3299 = vmatpush1.msra.mxu0 0.0
        %3300 = vmatprep.subr.mxu0 0.0
        %3301 = vmatpush1.msra.mxu0 0.0
        %3302 = vmatprep.subr.mxu0 0.0
        %3303 = vmatpush1.msra.mxu0 0.0
        %3304 = vmatprep.subr.mxu0 0.0
        %3305 = vmatpush1.msra.mxu0 0.0
        %3306 = vmatprep.subr.mxu0 0.0
        %3307 = vmatpush1.msra.mxu0 0.0
        %3308 = vmatprep.subr.mxu0 0.0
        %3309 = vmatpush1.msra.mxu0 0.0
        %3310 = vmatprep.subr.mxu0 0.0
        %3311 = vmatpush1.msra.mxu0 0.0
        %3312 = vmatprep.subr.mxu0 0.0
        %3313 = vmatpush1.msra.mxu0 0.0
        %3314 = vmatprep.subr.mxu0 0.0
        %3315 = vmatpush1.msra.mxu0 0.0
        %3316 = vmatprep.subr.mxu0 0.0
        %3317 = vmatpush1.msra.mxu0 0.0
        %3318 = vmatprep.subr.mxu0 0.0
        %3319 = vmatpush1.msra.mxu0 0.0
        %3320 = vmatprep.subr.mxu0 0.0
        %3321 = vmatpush1.msra.mxu0 0.0
        %3322 = vmatprep.subr.mxu0 0.0
        %3323 = vmatpush1.msra.mxu0 0.0
        %3324 = vmatprep.mubr.f32.mxu0 0.0
        %3325 = vmatmul.mubr.f32.gmra.mrb[0].mxu0 %v3163
        %v3326 = vpop.f32.mrb[0].mxu0
        %v3327 = vadd.f32 %v3258, %v3326
        %v3328 = vpop.f32.mrb[0].mxu0
        %3329 = vmatprep.mubr.f32.mxu0 0.0
        %3330 = vmatmul.mubr.f32.gmra.mrb[0].mxu0 %v3166
        %v3331 = vpop.f32.mrb[0].mxu0
        %v3332 = vadd.f32 %v3258, %v3331
        %v3333 = vpop.f32.mrb[0].mxu0
        %3334 = vdwg.mxu0
        %s3335 = scalar_lea.vmem %s4, 1280
        %v3336 = vld [vmem:[%s3335] sm:$0xff]
        %v3337 = vld [vmem:[%s3335 + $0x8] sm:$0xff]
        %v3338 = vld [vmem:[%s3335 + $0x10] sm:$0xff]
        %v3339 = vld [vmem:[%s3335 + $0x18] sm:$0xff]
        %v3340 = vld [vmem:[%s3335 + $0x20] sm:$0xff]
        %v3341 = vld [vmem:[%s3335 + $0x28] sm:$0xff]
        %v3342 = vld [vmem:[%s3335 + $0x30] sm:$0xff]
        %v3343 = vld [vmem:[%s3335 + $0x38] sm:$0xff]
        %s3344 = scalar_lea.vmem %s5, 20
        %v3345 = vld [vmem:[%s3344] sm:$0x1]
        %v3347 = vlaneseq
        %v3348 = vshrl.u32 %v3347, 7
        %v3349 = vsub.s32 0, %v3348
        %v3350 = vrot.slane %v3345, %v3349
        %3352 = vmatprep.subr.mxu0 0.0
        %3353 = vmatpush1.msra.mxu0 %v3336
        %3354 = vmatprep.subr.mxu0 0.0
        %3355 = vmatpush1.msra.mxu0 %v3337
        %3356 = vmatprep.subr.mxu0 0.0
        %3357 = vmatpush1.msra.mxu0 %v3338
        %3358 = vmatprep.subr.mxu0 0.0
        %3359 = vmatpush1.msra.mxu0 %v3339
        %3360 = vmatprep.subr.mxu0 0.0
        %3361 = vmatpush1.msra.mxu0 %v3340
        %3362 = vmatprep.subr.mxu0 0.0
        %3363 = vmatpush1.msra.mxu0 %v3341
        %3364 = vmatprep.subr.mxu0 0.0
        %3365 = vmatpush1.msra.mxu0 %v3342
        %3366 = vmatprep.subr.mxu0 0.0
        %3367 = vmatpush1.msra.mxu0 %v3343
        %3368 = vmatprep.subr.mxu0 0.0
        %3369 = vmatpush1.msra.mxu0 0.0
        %3370 = vmatprep.subr.mxu0 0.0
        %3371 = vmatpush1.msra.mxu0 0.0
        %3372 = vmatprep.subr.mxu0 0.0
        %3373 = vmatpush1.msra.mxu0 0.0
        %3374 = vmatprep.subr.mxu0 0.0
        %3375 = vmatpush1.msra.mxu0 0.0
        %3376 = vmatprep.subr.mxu0 0.0
        %3377 = vmatpush1.msra.mxu0 0.0
        %3378 = vmatprep.subr.mxu0 0.0
        %3379 = vmatpush1.msra.mxu0 0.0
        %3380 = vmatprep.subr.mxu0 0.0
        %3381 = vmatpush1.msra.mxu0 0.0
        %3382 = vmatprep.subr.mxu0 0.0
        %3383 = vmatpush1.msra.mxu0 0.0
        %3384 = vmatprep.subr.mxu0 0.0
        %3385 = vmatpush1.msra.mxu0 0.0
        %3386 = vmatprep.subr.mxu0 0.0
        %3387 = vmatpush1.msra.mxu0 0.0
        %3388 = vmatprep.subr.mxu0 0.0
        %3389 = vmatpush1.msra.mxu0 0.0
        %3390 = vmatprep.subr.mxu0 0.0
        %3391 = vmatpush1.msra.mxu0 0.0
        %3392 = vmatprep.subr.mxu0 0.0
        %3393 = vmatpush1.msra.mxu0 0.0
        %3394 = vmatprep.subr.mxu0 0.0
        %3395 = vmatpush1.msra.mxu0 0.0
        %3396 = vmatprep.subr.mxu0 0.0
        %3397 = vmatpush1.msra.mxu0 0.0
        %3398 = vmatprep.subr.mxu0 0.0
        %3399 = vmatpush1.msra.mxu0 0.0
        %3400 = vmatprep.subr.mxu0 0.0
        %3401 = vmatpush1.msra.mxu0 0.0
        %3402 = vmatprep.subr.mxu0 0.0
        %3403 = vmatpush1.msra.mxu0 0.0
        %3404 = vmatprep.subr.mxu0 0.0
        %3405 = vmatpush1.msra.mxu0 0.0
        %3406 = vmatprep.subr.mxu0 0.0
        %3407 = vmatpush1.msra.mxu0 0.0
        %3408 = vmatprep.subr.mxu0 0.0
        %3409 = vmatpush1.msra.mxu0 0.0
        %3410 = vmatprep.subr.mxu0 0.0
        %3411 = vmatpush1.msra.mxu0 0.0
        %3412 = vmatprep.subr.mxu0 0.0
        %3413 = vmatpush1.msra.mxu0 0.0
        %3414 = vmatprep.subr.mxu0 0.0
        %3415 = vmatpush1.msra.mxu0 0.0
        %3416 = vmatprep.mubr.f32.mxu0 0.0
        %3417 = vmatmul.mubr.f32.gmra.mrb[0].mxu0 %v3163
        %v3418 = vpop.f32.mrb[0].mxu0
        %v3419 = vadd.f32 %v3350, %v3418
        %v3420 = vpop.f32.mrb[0].mxu0
        %3421 = vmatprep.mubr.f32.mxu0 0.0
        %3422 = vmatmul.mubr.f32.gmra.mrb[0].mxu0 %v3166
        %v3423 = vpop.f32.mrb[0].mxu0
        %v3424 = vadd.f32 %v3350, %v3423
        %v3425 = vpop.f32.mrb[0].mxu0
        %3426 = vdwg.mxu0
        %v3428 = vsel %vm810, %v3235, 0
        %v3431 = vsel %vm810, %v3240, 0
        %v3434 = vsel %vm810, %v3327, 0
        %v3437 = vsel %vm810, %v3332, 0
        %3439 = vmatprep.subr.mxu0 0.0
        %3440 = vmatpush1.xpose.msra.mxu0 %v3434
        %3441 = vmatprep.subr.mxu0 0.0
        %3442 = vmatpush1.xpose.msra.mxu0 %v3437
        %3443 = vmatprep.subr.mxu0 0.0
        %3444 = vmatpush1.xpose.msra.mxu0 0.0
        %3445 = vmatprep.subr.mxu0 0.0
        %3446 = vmatpush1.xpose.msra.mxu0 0.0
        %3447 = vmatprep.subr.mxu0 0.0
        %3448 = vmatpush1.xpose.msra.mxu0 0.0
        %3449 = vmatprep.subr.mxu0 0.0
        %3450 = vmatpush1.xpose.msra.mxu0 0.0
        %3451 = vmatprep.subr.mxu0 0.0
        %3452 = vmatpush1.xpose.msra.mxu0 0.0
        %3453 = vmatprep.subr.mxu0 0.0
        %3454 = vmatpush1.xpose.msra.mxu0 0.0
        %3455 = vmatprep.subr.mxu0 0.0
        %3456 = vmatpush1.xpose.msra.mxu0 0.0
        %3457 = vmatprep.subr.mxu0 0.0
        %3458 = vmatpush1.xpose.msra.mxu0 0.0
        %3459 = vmatprep.subr.mxu0 0.0
        %3460 = vmatpush1.xpose.msra.mxu0 0.0
        %3461 = vmatprep.subr.mxu0 0.0
        %3462 = vmatpush1.xpose.msra.mxu0 0.0
        %3463 = vmatprep.subr.mxu0 0.0
        %3464 = vmatpush1.xpose.msra.mxu0 0.0
        %3465 = vmatprep.subr.mxu0 0.0
        %3466 = vmatpush1.xpose.msra.mxu0 0.0
        %3467 = vmatprep.subr.mxu0 0.0
        %3468 = vmatpush1.xpose.msra.mxu0 0.0
        %3469 = vmatprep.subr.mxu0 0.0
        %3470 = vmatpush1.xpose.msra.mxu0 0.0
        %3471 = vmatprep.subr.mxu0 0.0
        %3472 = vmatpush1.xpose.msra.mxu0 0.0
        %3473 = vmatprep.subr.mxu0 0.0
        %3474 = vmatpush1.xpose.msra.mxu0 0.0
        %3475 = vmatprep.subr.mxu0 0.0
        %3476 = vmatpush1.xpose.msra.mxu0 0.0
        %3477 = vmatprep.subr.mxu0 0.0
        %3478 = vmatpush1.xpose.msra.mxu0 0.0
        %3479 = vmatprep.subr.mxu0 0.0
        %3480 = vmatpush1.xpose.msra.mxu0 0.0
        %3481 = vmatprep.subr.mxu0 0.0
        %3482 = vmatpush1.xpose.msra.mxu0 0.0
        %3483 = vmatprep.subr.mxu0 0.0
        %3484 = vmatpush1.xpose.msra.mxu0 0.0
        %3485 = vmatprep.subr.mxu0 0.0
        %3486 = vmatpush1.xpose.msra.mxu0 0.0
        %3487 = vmatprep.subr.mxu0 0.0
        %3488 = vmatpush1.xpose.msra.mxu0 0.0
        %3489 = vmatprep.subr.mxu0 0.0
        %3490 = vmatpush1.xpose.msra.mxu0 0.0
        %3491 = vmatprep.subr.mxu0 0.0
        %3492 = vmatpush1.xpose.msra.mxu0 0.0
        %3493 = vmatprep.subr.mxu0 0.0
        %3494 = vmatpush1.xpose.msra.mxu0 0.0
        %3495 = vmatprep.subr.mxu0 0.0
        %3496 = vmatpush1.xpose.msra.mxu0 0.0
        %3497 = vmatprep.subr.mxu0 0.0
        %3498 = vmatpush1.xpose.msra.mxu0 0.0
        %3499 = vmatprep.subr.mxu0 0.0
        %3500 = vmatpush1.xpose.msra.mxu0 0.0
        %3501 = vmatprep.subr.mxu0 0.0
        %3502 = vmatpush1.xpose.msra.mxu0 0.0
        %3503 = vmatprep.mubr.f32.mxu0 0.0
        %3504 = vmatmul.mubr.f32.gmra.mrb[0].mxu0 %v3428
        %v3505 = vpop.f32.mrb[0].mxu0
        %v3506 = vadd.f32 0.0, %v3505
        %v3507 = vpop.f32.mrb[0].mxu0
        %3508 = vmatprep.mubr.f32.mxu0 0.0
        %3509 = vmatmul.mubr.f32.gmra.mrb[0].mxu0 %v3431
        %v3510 = vpop.f32.mrb[0].mxu0
        %v3511 = vadd.f32 0.0, %v3510
        %v3512 = vpop.f32.mrb[0].mxu0
        %3513 = vdwg.mxu0
        %v3514 = vmul.f32 %v3506, 0.25
        %v3515 = vmul.f32 %v3511, 0.25
        %v3516 = vsel %vm905, %v3514, -1e+30
        %v3517 = vsel %vm905, %v3515, -1e+30
        %v3518 = vsel %vm810, %v3516, -inf
        %3519 = vmax.xlane.f32.xlu0 %v3518
        %v3520 = vpop.xlane.xlu0 %3519
        %v3521 = vsel %vm810, %v3517, -inf
        %3522 = vmax.xlane.f32.xlu0 %v3521
        %v3523 = vpop.xlane.xlu0 %3522
        %v3524 = vsub.f32 %v3516, %v3520
        %v3525 = vsub.f32 %v3517, %v3523
        %v3526 = vmul.f32 %v3524, 1.442695
        %v3527 = vpow.pop %v3526
        %v3528 = vmul.f32 %v3525, 1.442695
        %v3529 = vpow.pop %v3528
        %v3530 = vsel %vm810, %v3527, 0.0
        %3531 = vadd.xlane.f32.xlu0 %v3530
        %v3532 = vpop.xlane.xlu0 %3531
        %v3533 = vsel %vm810, %v3529, 0.0
        %3534 = vadd.xlane.f32.xlu0 %v3533
        %v3535 = vpop.xlane.xlu0 %3534
        %v3536 = vrcp.pop %v3532
        %v3537 = vrcp.pop %v3535
        %v3538 = vmul.f32 %v3527, %v3536
        %v3539 = vmul.f32 %v3529, %v3537
        %v3541 = vsel %vm810, %v3538, 0
        %v3544 = vsel %vm810, %v3539, 0
        %3546 = vmatprep.subr.mxu0 0.0
        %3547 = vmatpush1.msra.mxu0 %v3419
        %3548 = vmatprep.subr.mxu0 0.0
        %3549 = vmatpush1.msra.mxu0 %v3424
        %3550 = vmatprep.subr.mxu0 0.0
        %3551 = vmatpush1.msra.mxu0 0.0
        %3552 = vmatprep.subr.mxu0 0.0
        %3553 = vmatpush1.msra.mxu0 0.0
        %3554 = vmatprep.subr.mxu0 0.0
        %3555 = vmatpush1.msra.mxu0 0.0
        %3556 = vmatprep.subr.mxu0 0.0
        %3557 = vmatpush1.msra.mxu0 0.0
        %3558 = vmatprep.subr.mxu0 0.0
        %3559 = vmatpush1.msra.mxu0 0.0
        %3560 = vmatprep.subr.mxu0 0.0
        %3561 = vmatpush1.msra.mxu0 0.0
        %3562 = vmatprep.subr.mxu0 0.0
        %3563 = vmatpush1.msra.mxu0 0.0
        %3564 = vmatprep.subr.mxu0 0.0
        %3565 = vmatpush1.msra.mxu0 0.0
        %3566 = vmatprep.subr.mxu0 0.0
        %3567 = vmatpush1.msra.mxu0 0.0
        %3568 = vmatprep.subr.mxu0 0.0
        %3569 = vmatpush1.msra.mxu0 0.0
        %3570 = vmatprep.subr.mxu0 0.0
        %3571 = vmatpush1.msra.mxu0 0.0
        %3572 = vmatprep.subr.mxu0 0.0
        %3573 = vmatpush1.msra.mxu0 0.0
        %3574 = vmatprep.subr.mxu0 0.0
        %3575 = vmatpush1.msra.mxu0 0.0
        %3576 = vmatprep.subr.mxu0 0.0
        %3577 = vmatpush1.msra.mxu0 0.0
        %3578 = vmatprep.subr.mxu0 0.0
        %3579 = vmatpush1.msra.mxu0 0.0
        %3580 = vmatprep.subr.mxu0 0.0
        %3581 = vmatpush1.msra.mxu0 0.0
        %3582 = vmatprep.subr.mxu0 0.0
        %3583 = vmatpush1.msra.mxu0 0.0
        %3584 = vmatprep.subr.mxu0 0.0
        %3585 = vmatpush1.msra.mxu0 0.0
        %3586 = vmatprep.subr.mxu0 0.0
        %3587 = vmatpush1.msra.mxu0 0.0
        %3588 = vmatprep.subr.mxu0 0.0
        %3589 = vmatpush1.msra.mxu0 0.0
        %3590 = vmatprep.subr.mxu0 0.0
        %3591 = vmatpush1.msra.mxu0 0.0
        %3592 = vmatprep.subr.mxu0 0.0
        %3593 = vmatpush1.msra.mxu0 0.0
        %3594 = vmatprep.subr.mxu0 0.0
        %3595 = vmatpush1.msra.mxu0 0.0
        %3596 = vmatprep.subr.mxu0 0.0
        %3597 = vmatpush1.msra.mxu0 0.0
        %3598 = vmatprep.subr.mxu0 0.0
        %3599 = vmatpush1.msra.mxu0 0.0
        %3600 = vmatprep.subr.mxu0 0.0
        %3601 = vmatpush1.msra.mxu0 0.0
        %3602 = vmatprep.subr.mxu0 0.0
        %3603 = vmatpush1.msra.mxu0 0.0
        %3604 = vmatprep.subr.mxu0 0.0
        %3605 = vmatpush1.msra.mxu0 0.0
        %3606 = vmatprep.subr.mxu0 0.0
        %3607 = vmatpush1.msra.mxu0 0.0
        %3608 = vmatprep.subr.mxu0 0.0
        %3609 = vmatpush1.msra.mxu0 0.0
        %3610 = vmatprep.mubr.f32.mxu0 0.0
        %3611 = vmatmul.mubr.f32.gmra.mrb[0].mxu0 %v3541
        %v3612 = vpop.f32.mrb[0].mxu0
        %v3613 = vadd.f32 0.0, %v3612
        %v3614 = vpop.f32.mrb[0].mxu0
        %3615 = vmatprep.mubr.f32.mxu0 0.0
        %3616 = vmatmul.mubr.f32.gmra.mrb[0].mxu0 %v3544
        %v3617 = vpop.f32.mrb[0].mxu0
        %v3618 = vadd.f32 0.0, %v3617
        %v3619 = vpop.f32.mrb[0].mxu0
        %3620 = vdwg.mxu0
        %s3621 = scalar_lea.vmem %s6, 64
        %v3622 = vld [vmem:[%s3621] sm:$0xff]
        %v3623 = vld [vmem:[%s3621 + $0x8] sm:$0xff]
        %s3624 = scalar_lea.vmem %s4, 832
        %v3625 = vld [vmem:[%s3624] sm:$0xff]
        %v3626 = vld [vmem:[%s3624 + $0x8] sm:$0xff]
        %v3627 = vld [vmem:[%s3624 + $0x10] sm:$0xff]
        %v3628 = vld [vmem:[%s3624 + $0x18] sm:$0xff]
        %v3629 = vld [vmem:[%s3624 + $0x20] sm:$0xff]
        %v3630 = vld [vmem:[%s3624 + $0x28] sm:$0xff]
        %v3631 = vld [vmem:[%s3624 + $0x30] sm:$0xff]
        %v3632 = vld [vmem:[%s3624 + $0x38] sm:$0xff]
        %s3633 = scalar_lea.vmem %s5, 13
        %v3634 = vld [vmem:[%s3633] sm:$0x1]
        %v3636 = vlaneseq
        %v3637 = vshrl.u32 %v3636, 7
        %v3638 = vsub.s32 0, %v3637
        %v3639 = vrot.slane %v3634, %v3638
        %3641 = vmatprep.subr.mxu0 0.0
        %3642 = vmatpush1.msra.mxu0 %v3625
        %3643 = vmatprep.subr.mxu0 0.0
        %3644 = vmatpush1.msra.mxu0 %v3626
        %3645 = vmatprep.subr.mxu0 0.0
        %3646 = vmatpush1.msra.mxu0 %v3627
        %3647 = vmatprep.subr.mxu0 0.0
        %3648 = vmatpush1.msra.mxu0 %v3628
        %3649 = vmatprep.subr.mxu0 0.0
        %3650 = vmatpush1.msra.mxu0 %v3629
        %3651 = vmatprep.subr.mxu0 0.0
        %3652 = vmatpush1.msra.mxu0 %v3630
        %3653 = vmatprep.subr.mxu0 0.0
        %3654 = vmatpush1.msra.mxu0 %v3631
        %3655 = vmatprep.subr.mxu0 0.0
        %3656 = vmatpush1.msra.mxu0 %v3632
        %3657 = vmatprep.subr.mxu0 0.0
        %3658 = vmatpush1.msra.mxu0 0.0
        %3659 = vmatprep.subr.mxu0 0.0
        %3660 = vmatpush1.msra.mxu0 0.0
        %3661 = vmatprep.subr.mxu0 0.0
        %3662 = vmatpush1.msra.mxu0 0.0
        %3663 = vmatprep.subr.mxu0 0.0
        %3664 = vmatpush1.msra.mxu0 0.0
        %3665 = vmatprep.subr.mxu0 0.0
        %3666 = vmatpush1.msra.mxu0 0.0
        %3667 = vmatprep.subr.mxu0 0.0
        %3668 = vmatpush1.msra.mxu0 0.0
        %3669 = vmatprep.subr.mxu0 0.0
        %3670 = vmatpush1.msra.mxu0 0.0
        %3671 = vmatprep.subr.mxu0 0.0
        %3672 = vmatpush1.msra.mxu0 0.0
        %3673 = vmatprep.subr.mxu0 0.0
        %3674 = vmatpush1.msra.mxu0 0.0
        %3675 = vmatprep.subr.mxu0 0.0
        %3676 = vmatpush1.msra.mxu0 0.0
        %3677 = vmatprep.subr.mxu0 0.0
        %3678 = vmatpush1.msra.mxu0 0.0
        %3679 = vmatprep.subr.mxu0 0.0
        %3680 = vmatpush1.msra.mxu0 0.0
        %3681 = vmatprep.subr.mxu0 0.0
        %3682 = vmatpush1.msra.mxu0 0.0
        %3683 = vmatprep.subr.mxu0 0.0
        %3684 = vmatpush1.msra.mxu0 0.0
        %3685 = vmatprep.subr.mxu0 0.0
        %3686 = vmatpush1.msra.mxu0 0.0
        %3687 = vmatprep.subr.mxu0 0.0
        %3688 = vmatpush1.msra.mxu0 0.0
        %3689 = vmatprep.subr.mxu0 0.0
        %3690 = vmatpush1.msra.mxu0 0.0
        %3691 = vmatprep.subr.mxu0 0.0
        %3692 = vmatpush1.msra.mxu0 0.0
        %3693 = vmatprep.subr.mxu0 0.0
        %3694 = vmatpush1.msra.mxu0 0.0
        %3695 = vmatprep.subr.mxu0 0.0
        %3696 = vmatpush1.msra.mxu0 0.0
        %3697 = vmatprep.subr.mxu0 0.0
        %3698 = vmatpush1.msra.mxu0 0.0
        %3699 = vmatprep.subr.mxu0 0.0
        %3700 = vmatpush1.msra.mxu0 0.0
        %3701 = vmatprep.subr.mxu0 0.0
        %3702 = vmatpush1.msra.mxu0 0.0
        %3703 = vmatprep.subr.mxu0 0.0
        %3704 = vmatpush1.msra.mxu0 0.0
        %3705 = vmatprep.mubr.f32.mxu0 0.0
        %3706 = vmatmul.mubr.f32.gmra.mrb[0].mxu0 %v3163
        %v3707 = vpop.f32.mrb[0].mxu0
        %v3708 = vadd.f32 %v3639, %v3707
        %v3709 = vpop.f32.mrb[0].mxu0
        %3710 = vmatprep.mubr.f32.mxu0 0.0
        %3711 = vmatmul.mubr.f32.gmra.mrb[0].mxu0 %v3166
        %v3712 = vpop.f32.mrb[0].mxu0
        %v3713 = vadd.f32 %v3639, %v3712
        %v3714 = vpop.f32.mrb[0].mxu0
        %3715 = vdwg.mxu0
        %s3716 = scalar_lea.vmem %s4, 1088
        %v3717 = vld [vmem:[%s3716] sm:$0xff]
        %v3718 = vld [vmem:[%s3716 + $0x8] sm:$0xff]
        %v3719 = vld [vmem:[%s3716 + $0x10] sm:$0xff]
        %v3720 = vld [vmem:[%s3716 + $0x18] sm:$0xff]
        %v3721 = vld [vmem:[%s3716 + $0x20] sm:$0xff]
        %v3722 = vld [vmem:[%s3716 + $0x28] sm:$0xff]
        %v3723 = vld [vmem:[%s3716 + $0x30] sm:$0xff]
        %v3724 = vld [vmem:[%s3716 + $0x38] sm:$0xff]
        %s3725 = scalar_lea.vmem %s5, 17
        %v3726 = vld [vmem:[%s3725] sm:$0x1]
        %v3728 = vlaneseq
        %v3729 = vshrl.u32 %v3728, 7
        %v3730 = vsub.s32 0, %v3729
        %v3731 = vrot.slane %v3726, %v3730
        %3733 = vmatprep.subr.mxu0 0.0
        %3734 = vmatpush1.msra.mxu0 %v3717
        %3735 = vmatprep.subr.mxu0 0.0
        %3736 = vmatpush1.msra.mxu0 %v3718
        %3737 = vmatprep.subr.mxu0 0.0
        %3738 = vmatpush1.msra.mxu0 %v3719
        %3739 = vmatprep.subr.mxu0 0.0
        %3740 = vmatpush1.msra.mxu0 %v3720
        %3741 = vmatprep.subr.mxu0 0.0
        %3742 = vmatpush1.msra.mxu0 %v3721
        %3743 = vmatprep.subr.mxu0 0.0
        %3744 = vmatpush1.msra.mxu0 %v3722
        %3745 = vmatprep.subr.mxu0 0.0
        %3746 = vmatpush1.msra.mxu0 %v3723
        %3747 = vmatprep.subr.mxu0 0.0
        %3748 = vmatpush1.msra.mxu0 %v3724
        %3749 = vmatprep.subr.mxu0 0.0
        %3750 = vmatpush1.msra.mxu0 0.0
        %3751 = vmatprep.subr.mxu0 0.0
        %3752 = vmatpush1.msra.mxu0 0.0
        %3753 = vmatprep.subr.mxu0 0.0
        %3754 = vmatpush1.msra.mxu0 0.0
        %3755 = vmatprep.subr.mxu0 0.0
        %3756 = vmatpush1.msra.mxu0 0.0
        %3757 = vmatprep.subr.mxu0 0.0
        %3758 = vmatpush1.msra.mxu0 0.0
        %3759 = vmatprep.subr.mxu0 0.0
        %3760 = vmatpush1.msra.mxu0 0.0
        %3761 = vmatprep.subr.mxu0 0.0
        %3762 = vmatpush1.msra.mxu0 0.0
        %3763 = vmatprep.subr.mxu0 0.0
        %3764 = vmatpush1.msra.mxu0 0.0
        %3765 = vmatprep.subr.mxu0 0.0
        %3766 = vmatpush1.msra.mxu0 0.0
        %3767 = vmatprep.subr.mxu0 0.0
        %3768 = vmatpush1.msra.mxu0 0.0
        %3769 = vmatprep.subr.mxu0 0.0
        %3770 = vmatpush1.msra.mxu0 0.0
        %3771 = vmatprep.subr.mxu0 0.0
        %3772 = vmatpush1.msra.mxu0 0.0
        %3773 = vmatprep.subr.mxu0 0.0
        %3774 = vmatpush1.msra.mxu0 0.0
        %3775 = vmatprep.subr.mxu0 0.0
        %3776 = vmatpush1.msra.mxu0 0.0
        %3777 = vmatprep.subr.mxu0 0.0
        %3778 = vmatpush1.msra.mxu0 0.0
        %3779 = vmatprep.subr.mxu0 0.0
        %3780 = vmatpush1.msra.mxu0 0.0
        %3781 = vmatprep.subr.mxu0 0.0
        %3782 = vmatpush1.msra.mxu0 0.0
        %3783 = vmatprep.subr.mxu0 0.0
        %3784 = vmatpush1.msra.mxu0 0.0
        %3785 = vmatprep.subr.mxu0 0.0
        %3786 = vmatpush1.msra.mxu0 0.0
        %3787 = vmatprep.subr.mxu0 0.0
        %3788 = vmatpush1.msra.mxu0 0.0
        %3789 = vmatprep.subr.mxu0 0.0
        %3790 = vmatpush1.msra.mxu0 0.0
        %3791 = vmatprep.subr.mxu0 0.0
        %3792 = vmatpush1.msra.mxu0 0.0
        %3793 = vmatprep.subr.mxu0 0.0
        %3794 = vmatpush1.msra.mxu0 0.0
        %3795 = vmatprep.subr.mxu0 0.0
        %3796 = vmatpush1.msra.mxu0 0.0
        %3797 = vmatprep.mubr.f32.mxu0 0.0
        %3798 = vmatmul.mubr.f32.gmra.mrb[0].mxu0 %v3163
        %v3799 = vpop.f32.mrb[0].mxu0
        %v3800 = vadd.f32 %v3731, %v3799
        %v3801 = vpop.f32.mrb[0].mxu0
        %3802 = vmatprep.mubr.f32.mxu0 0.0
        %3803 = vmatmul.mubr.f32.gmra.mrb[0].mxu0 %v3166
        %v3804 = vpop.f32.mrb[0].mxu0
        %v3805 = vadd.f32 %v3731, %v3804
        %v3806 = vpop.f32.mrb[0].mxu0
        %3807 = vdwg.mxu0
        %s3808 = scalar_lea.vmem %s4, 1344
        %v3809 = vld [vmem:[%s3808] sm:$0xff]
        %v3810 = vld [vmem:[%s3808 + $0x8] sm:$0xff]
        %v3811 = vld [vmem:[%s3808 + $0x10] sm:$0xff]
        %v3812 = vld [vmem:[%s3808 + $0x18] sm:$0xff]
        %v3813 = vld [vmem:[%s3808 + $0x20] sm:$0xff]
        %v3814 = vld [vmem:[%s3808 + $0x28] sm:$0xff]
        %v3815 = vld [vmem:[%s3808 + $0x30] sm:$0xff]
        %v3816 = vld [vmem:[%s3808 + $0x38] sm:$0xff]
        %s3817 = scalar_lea.vmem %s5, 21
        %v3818 = vld [vmem:[%s3817] sm:$0x1]
        %v3820 = vlaneseq
        %v3821 = vshrl.u32 %v3820, 7
        %v3822 = vsub.s32 0, %v3821
        %v3823 = vrot.slane %v3818, %v3822
        %3825 = vmatprep.subr.mxu0 0.0
        %3826 = vmatpush1.msra.mxu0 %v3809
        %3827 = vmatprep.subr.mxu0 0.0
        %3828 = vmatpush1.msra.mxu0 %v3810
        %3829 = vmatprep.subr.mxu0 0.0
        %3830 = vmatpush1.msra.mxu0 %v3811
        %3831 = vmatprep.subr.mxu0 0.0
        %3832 = vmatpush1.msra.mxu0 %v3812
        %3833 = vmatprep.subr.mxu0 0.0
        %3834 = vmatpush1.msra.mxu0 %v3813
        %3835 = vmatprep.subr.mxu0 0.0
        %3836 = vmatpush1.msra.mxu0 %v3814
        %3837 = vmatprep.subr.mxu0 0.0
        %3838 = vmatpush1.msra.mxu0 %v3815
        %3839 = vmatprep.subr.mxu0 0.0
        %3840 = vmatpush1.msra.mxu0 %v3816
        %3841 = vmatprep.subr.mxu0 0.0
        %3842 = vmatpush1.msra.mxu0 0.0
        %3843 = vmatprep.subr.mxu0 0.0
        %3844 = vmatpush1.msra.mxu0 0.0
        %3845 = vmatprep.subr.mxu0 0.0
        %3846 = vmatpush1.msra.mxu0 0.0
        %3847 = vmatprep.subr.mxu0 0.0
        %3848 = vmatpush1.msra.mxu0 0.0
        %3849 = vmatprep.subr.mxu0 0.0
        %3850 = vmatpush1.msra.mxu0 0.0
        %3851 = vmatprep.subr.mxu0 0.0
        %3852 = vmatpush1.msra.mxu0 0.0
        %3853 = vmatprep.subr.mxu0 0.0
        %3854 = vmatpush1.msra.mxu0 0.0
        %3855 = vmatprep.subr.mxu0 0.0
        %3856 = vmatpush1.msra.mxu0 0.0
        %3857 = vmatprep.subr.mxu0 0.0
        %3858 = vmatpush1.msra.mxu0 0.0
        %3859 = vmatprep.subr.mxu0 0.0
        %3860 = vmatpush1.msra.mxu0 0.0
        %3861 = vmatprep.subr.mxu0 0.0
        %3862 = vmatpush1.msra.mxu0 0.0
        %3863 = vmatprep.subr.mxu0 0.0
        %3864 = vmatpush1.msra.mxu0 0.0
        %3865 = vmatprep.subr.mxu0 0.0
        %3866 = vmatpush1.msra.mxu0 0.0
        %3867 = vmatprep.subr.mxu0 0.0
        %3868 = vmatpush1.msra.mxu0 0.0
        %3869 = vmatprep.subr.mxu0 0.0
        %3870 = vmatpush1.msra.mxu0 0.0
        %3871 = vmatprep.subr.mxu0 0.0
        %3872 = vmatpush1.msra.mxu0 0.0
        %3873 = vmatprep.subr.mxu0 0.0
        %3874 = vmatpush1.msra.mxu0 0.0
        %3875 = vmatprep.subr.mxu0 0.0
        %3876 = vmatpush1.msra.mxu0 0.0
        %3877 = vmatprep.subr.mxu0 0.0
        %3878 = vmatpush1.msra.mxu0 0.0
        %3879 = vmatprep.subr.mxu0 0.0
        %3880 = vmatpush1.msra.mxu0 0.0
        %3881 = vmatprep.subr.mxu0 0.0
        %3882 = vmatpush1.msra.mxu0 0.0
        %3883 = vmatprep.subr.mxu0 0.0
        %3884 = vmatpush1.msra.mxu0 0.0
        %3885 = vmatprep.subr.mxu0 0.0
        %3886 = vmatpush1.msra.mxu0 0.0
        %3887 = vmatprep.subr.mxu0 0.0
        %3888 = vmatpush1.msra.mxu0 0.0
        %3889 = vmatprep.mubr.f32.mxu0 0.0
        %3890 = vmatmul.mubr.f32.gmra.mrb[0].mxu0 %v3163
        %v3891 = vpop.f32.mrb[0].mxu0
        %v3892 = vadd.f32 %v3823, %v3891
        %v3893 = vpop.f32.mrb[0].mxu0
        %3894 = vmatprep.mubr.f32.mxu0 0.0
        %3895 = vmatmul.mubr.f32.gmra.mrb[0].mxu0 %v3166
        %v3896 = vpop.f32.mrb[0].mxu0
        %v3897 = vadd.f32 %v3823, %v3896
        %v3898 = vpop.f32.mrb[0].mxu0
        %3899 = vdwg.mxu0
        %v3901 = vsel %vm810, %v3708, 0
        %v3904 = vsel %vm810, %v3713, 0
        %v3907 = vsel %vm810, %v3800, 0
        %v3910 = vsel %vm810, %v3805, 0
        %3912 = vmatprep.subr.mxu0 0.0
        %3913 = vmatpush1.xpose.msra.mxu0 %v3907
        %3914 = vmatprep.subr.mxu0 0.0
        %3915 = vmatpush1.xpose.msra.mxu0 %v3910
        %3916 = vmatprep.subr.mxu0 0.0
        %3917 = vmatpush1.xpose.msra.mxu0 0.0
        %3918 = vmatprep.subr.mxu0 0.0
        %3919 = vmatpush1.xpose.msra.mxu0 0.0
        %3920 = vmatprep.subr.mxu0 0.0
        %3921 = vmatpush1.xpose.msra.mxu0 0.0
        %3922 = vmatprep.subr.mxu0 0.0
        %3923 = vmatpush1.xpose.msra.mxu0 0.0
        %3924 = vmatprep.subr.mxu0 0.0
        %3925 = vmatpush1.xpose.msra.mxu0 0.0
        %3926 = vmatprep.subr.mxu0 0.0
        %3927 = vmatpush1.xpose.msra.mxu0 0.0
        %3928 = vmatprep.subr.mxu0 0.0
        %3929 = vmatpush1.xpose.msra.mxu0 0.0
        %3930 = vmatprep.subr.mxu0 0.0
        %3931 = vmatpush1.xpose.msra.mxu0 0.0
        %3932 = vmatprep.subr.mxu0 0.0
        %3933 = vmatpush1.xpose.msra.mxu0 0.0
        %3934 = vmatprep.subr.mxu0 0.0
        %3935 = vmatpush1.xpose.msra.mxu0 0.0
        %3936 = vmatprep.subr.mxu0 0.0
        %3937 = vmatpush1.xpose.msra.mxu0 0.0
        %3938 = vmatprep.subr.mxu0 0.0
        %3939 = vmatpush1.xpose.msra.mxu0 0.0
        %3940 = vmatprep.subr.mxu0 0.0
        %3941 = vmatpush1.xpose.msra.mxu0 0.0
        %3942 = vmatprep.subr.mxu0 0.0
        %3943 = vmatpush1.xpose.msra.mxu0 0.0
        %3944 = vmatprep.subr.mxu0 0.0
        %3945 = vmatpush1.xpose.msra.mxu0 0.0
        %3946 = vmatprep.subr.mxu0 0.0
        %3947 = vmatpush1.xpose.msra.mxu0 0.0
        %3948 = vmatprep.subr.mxu0 0.0
        %3949 = vmatpush1.xpose.msra.mxu0 0.0
        %3950 = vmatprep.subr.mxu0 0.0
        %3951 = vmatpush1.xpose.msra.mxu0 0.0
        %3952 = vmatprep.subr.mxu0 0.0
        %3953 = vmatpush1.xpose.msra.mxu0 0.0
        %3954 = vmatprep.subr.mxu0 0.0
        %3955 = vmatpush1.xpose.msra.mxu0 0.0
        %3956 = vmatprep.subr.mxu0 0.0
        %3957 = vmatpush1.xpose.msra.mxu0 0.0
        %3958 = vmatprep.subr.mxu0 0.0
        %3959 = vmatpush1.xpose.msra.mxu0 0.0
        %3960 = vmatprep.subr.mxu0 0.0
        %3961 = vmatpush1.xpose.msra.mxu0 0.0
        %3962 = vmatprep.subr.mxu0 0.0
        %3963 = vmatpush1.xpose.msra.mxu0 0.0
        %3964 = vmatprep.subr.mxu0 0.0
        %3965 = vmatpush1.xpose.msra.mxu0 0.0
        %3966 = vmatprep.subr.mxu0 0.0
        %3967 = vmatpush1.xpose.msra.mxu0 0.0
        %3968 = vmatprep.subr.mxu0 0.0
        %3969 = vmatpush1.xpose.msra.mxu0 0.0
        %3970 = vmatprep.subr.mxu0 0.0
        %3971 = vmatpush1.xpose.msra.mxu0 0.0
        %3972 = vmatprep.subr.mxu0 0.0
        %3973 = vmatpush1.xpose.msra.mxu0 0.0
        %3974 = vmatprep.subr.mxu0 0.0
        %3975 = vmatpush1.xpose.msra.mxu0 0.0
        %3976 = vmatprep.mubr.f32.mxu0 0.0
        %3977 = vmatmul.mubr.f32.gmra.mrb[0].mxu0 %v3901
        %v3978 = vpop.f32.mrb[0].mxu0
        %v3979 = vadd.f32 0.0, %v3978
        %v3980 = vpop.f32.mrb[0].mxu0
        %3981 = vmatprep.mubr.f32.mxu0 0.0
        %3982 = vmatmul.mubr.f32.gmra.mrb[0].mxu0 %v3904
        %v3983 = vpop.f32.mrb[0].mxu0
        %v3984 = vadd.f32 0.0, %v3983
        %v3985 = vpop.f32.mrb[0].mxu0
        %3986 = vdwg.mxu0
        %v3987 = vmul.f32 %v3979, 0.25
        %v3988 = vmul.f32 %v3984, 0.25
        %v3989 = vsel %vm905, %v3987, -1e+30
        %v3990 = vsel %vm905, %v3988, -1e+30
        %v3991 = vsel %vm810, %v3989, -inf
        %3992 = vmax.xlane.f32.xlu0 %v3991
        %v3993 = vpop.xlane.xlu0 %3992
        %v3994 = vsel %vm810, %v3990, -inf
        %3995 = vmax.xlane.f32.xlu0 %v3994
        %v3996 = vpop.xlane.xlu0 %3995
        %v3997 = vsub.f32 %v3989, %v3993
        %v3998 = vsub.f32 %v3990, %v3996
        %v3999 = vmul.f32 %v3997, 1.442695
        %v4000 = vpow.pop %v3999
        %v4001 = vmul.f32 %v3998, 1.442695
        %v4002 = vpow.pop %v4001
        %v4003 = vsel %vm810, %v4000, 0.0
        %4004 = vadd.xlane.f32.xlu0 %v4003
        %v4005 = vpop.xlane.xlu0 %4004
        %v4006 = vsel %vm810, %v4002, 0.0
        %4007 = vadd.xlane.f32.xlu0 %v4006
        %v4008 = vpop.xlane.xlu0 %4007
        %v4009 = vrcp.pop %v4005
        %v4010 = vrcp.pop %v4008
        %v4011 = vmul.f32 %v4000, %v4009
        %v4012 = vmul.f32 %v4002, %v4010
        %v4014 = vsel %vm810, %v4011, 0
        %v4017 = vsel %vm810, %v4012, 0
        %4019 = vmatprep.subr.mxu0 0.0
        %4020 = vmatpush1.msra.mxu0 %v3892
        %4021 = vmatprep.subr.mxu0 0.0
        %4022 = vmatpush1.msra.mxu0 %v3897
        %4023 = vmatprep.subr.mxu0 0.0
        %4024 = vmatpush1.msra.mxu0 0.0
        %4025 = vmatprep.subr.mxu0 0.0
        %4026 = vmatpush1.msra.mxu0 0.0
        %4027 = vmatprep.subr.mxu0 0.0
        %4028 = vmatpush1.msra.mxu0 0.0
        %4029 = vmatprep.subr.mxu0 0.0
        %4030 = vmatpush1.msra.mxu0 0.0
        %4031 = vmatprep.subr.mxu0 0.0
        %4032 = vmatpush1.msra.mxu0 0.0
        %4033 = vmatprep.subr.mxu0 0.0
        %4034 = vmatpush1.msra.mxu0 0.0
        %4035 = vmatprep.subr.mxu0 0.0
        %4036 = vmatpush1.msra.mxu0 0.0
        %4037 = vmatprep.subr.mxu0 0.0
        %4038 = vmatpush1.msra.mxu0 0.0
        %4039 = vmatprep.subr.mxu0 0.0
        %4040 = vmatpush1.msra.mxu0 0.0
        %4041 = vmatprep.subr.mxu0 0.0
        %4042 = vmatpush1.msra.mxu0 0.0
        %4043 = vmatprep.subr.mxu0 0.0
        %4044 = vmatpush1.msra.mxu0 0.0
        %4045 = vmatprep.subr.mxu0 0.0
        %4046 = vmatpush1.msra.mxu0 0.0
        %4047 = vmatprep.subr.mxu0 0.0
        %4048 = vmatpush1.msra.mxu0 0.0
        %4049 = vmatprep.subr.mxu0 0.0
        %4050 = vmatpush1.msra.mxu0 0.0
        %4051 = vmatprep.subr.mxu0 0.0
        %4052 = vmatpush1.msra.mxu0 0.0
        %4053 = vmatprep.subr.mxu0 0.0
        %4054 = vmatpush1.msra.mxu0 0.0
        %4055 = vmatprep.subr.mxu0 0.0
        %4056 = vmatpush1.msra.mxu0 0.0
        %4057 = vmatprep.subr.mxu0 0.0
        %4058 = vmatpush1.msra.mxu0 0.0
        %4059 = vmatprep.subr.mxu0 0.0
        %4060 = vmatpush1.msra.mxu0 0.0
        %4061 = vmatprep.subr.mxu0 0.0
        %4062 = vmatpush1.msra.mxu0 0.0
        %4063 = vmatprep.subr.mxu0 0.0
        %4064 = vmatpush1.msra.mxu0 0.0
        %4065 = vmatprep.subr.mxu0 0.0
        %4066 = vmatpush1.msra.mxu0 0.0
        %4067 = vmatprep.subr.mxu0 0.0
        %4068 = vmatpush1.msra.mxu0 0.0
        %4069 = vmatprep.subr.mxu0 0.0
        %4070 = vmatpush1.msra.mxu0 0.0
        %4071 = vmatprep.subr.mxu0 0.0
        %4072 = vmatpush1.msra.mxu0 0.0
        %4073 = vmatprep.subr.mxu0 0.0
        %4074 = vmatpush1.msra.mxu0 0.0
        %4075 = vmatprep.subr.mxu0 0.0
        %4076 = vmatpush1.msra.mxu0 0.0
        %4077 = vmatprep.subr.mxu0 0.0
        %4078 = vmatpush1.msra.mxu0 0.0
        %4079 = vmatprep.subr.mxu0 0.0
        %4080 = vmatpush1.msra.mxu0 0.0
        %4081 = vmatprep.subr.mxu0 0.0
        %4082 = vmatpush1.msra.mxu0 0.0
        %4083 = vmatprep.mubr.f32.mxu0 0.0
        %4084 = vmatmul.mubr.f32.gmra.mrb[0].mxu0 %v4014
        %v4085 = vpop.f32.mrb[0].mxu0
        %v4086 = vadd.f32 0.0, %v4085
        %v4087 = vpop.f32.mrb[0].mxu0
        %4088 = vmatprep.mubr.f32.mxu0 0.0
        %4089 = vmatmul.mubr.f32.gmra.mrb[0].mxu0 %v4017
        %v4090 = vpop.f32.mrb[0].mxu0
        %v4091 = vadd.f32 0.0, %v4090
        %v4092 = vpop.f32.mrb[0].mxu0
        %4093 = vdwg.mxu0
        %s4094 = scalar_lea.vmem %s6, 80
        %v4095 = vld [vmem:[%s4094] sm:$0xff]
        %v4096 = vld [vmem:[%s4094 + $0x8] sm:$0xff]
        %v4098 = vsel %vm810, %v4086, 0
        %v4101 = vsel %vm810, %v4091, 0
        %4103 = vmatprep.subr.mxu0 0.0
        %4104 = vmatpush1.msra.mxu0 %v4095
        %4105 = vmatprep.subr.mxu0 0.0
        %4106 = vmatpush1.msra.mxu0 %v4096
        %4107 = vmatprep.subr.mxu0 0.0
        %4108 = vmatpush1.msra.mxu0 0.0
        %4109 = vmatprep.subr.mxu0 0.0
        %4110 = vmatpush1.msra.mxu0 0.0
        %4111 = vmatprep.subr.mxu0 0.0
        %4112 = vmatpush1.msra.mxu0 0.0
        %4113 = vmatprep.subr.mxu0 0.0
        %4114 = vmatpush1.msra.mxu0 0.0
        %4115 = vmatprep.subr.mxu0 0.0
        %4116 = vmatpush1.msra.mxu0 0.0
        %4117 = vmatprep.subr.mxu0 0.0
        %4118 = vmatpush1.msra.mxu0 0.0
        %4119 = vmatprep.subr.mxu0 0.0
        %4120 = vmatpush1.msra.mxu0 0.0
        %4121 = vmatprep.subr.mxu0 0.0
        %4122 = vmatpush1.msra.mxu0 0.0
        %4123 = vmatprep.subr.mxu0 0.0
        %4124 = vmatpush1.msra.mxu0 0.0
        %4125 = vmatprep.subr.mxu0 0.0
        %4126 = vmatpush1.msra.mxu0 0.0
        %4127 = vmatprep.subr.mxu0 0.0
        %4128 = vmatpush1.msra.mxu0 0.0
        %4129 = vmatprep.subr.mxu0 0.0
        %4130 = vmatpush1.msra.mxu0 0.0
        %4131 = vmatprep.subr.mxu0 0.0
        %4132 = vmatpush1.msra.mxu0 0.0
        %4133 = vmatprep.subr.mxu0 0.0
        %4134 = vmatpush1.msra.mxu0 0.0
        %4135 = vmatprep.subr.mxu0 0.0
        %4136 = vmatpush1.msra.mxu0 0.0
        %4137 = vmatprep.subr.mxu0 0.0
        %4138 = vmatpush1.msra.mxu0 0.0
        %4139 = vmatprep.subr.mxu0 0.0
        %4140 = vmatpush1.msra.mxu0 0.0
        %4141 = vmatprep.subr.mxu0 0.0
        %4142 = vmatpush1.msra.mxu0 0.0
        %4143 = vmatprep.subr.mxu0 0.0
        %4144 = vmatpush1.msra.mxu0 0.0
        %4145 = vmatprep.subr.mxu0 0.0
        %4146 = vmatpush1.msra.mxu0 0.0
        %4147 = vmatprep.subr.mxu0 0.0
        %4148 = vmatpush1.msra.mxu0 0.0
        %4149 = vmatprep.subr.mxu0 0.0
        %4150 = vmatpush1.msra.mxu0 0.0
        %4151 = vmatprep.subr.mxu0 0.0
        %4152 = vmatpush1.msra.mxu0 0.0
        %4153 = vmatprep.subr.mxu0 0.0
        %4154 = vmatpush1.msra.mxu0 0.0
        %4155 = vmatprep.subr.mxu0 0.0
        %4156 = vmatpush1.msra.mxu0 0.0
        %4157 = vmatprep.subr.mxu0 0.0
        %4158 = vmatpush1.msra.mxu0 0.0
        %4159 = vmatprep.subr.mxu0 0.0
        %4160 = vmatpush1.msra.mxu0 0.0
        %4161 = vmatprep.subr.mxu0 0.0
        %4162 = vmatpush1.msra.mxu0 0.0
        %4163 = vmatprep.subr.mxu0 0.0
        %4164 = vmatpush1.msra.mxu0 0.0
        %4165 = vmatprep.subr.mxu0 0.0
        %4166 = vmatpush1.msra.mxu0 0.0
        %4167 = vmatprep.mubr.f32.mxu0 0.0
        %4168 = vmatmul.mubr.f32.gmra.mrb[0].mxu0 %v4098
        %v4169 = vpop.f32.mrb[0].mxu0
        %v4170 = vadd.f32 0.0, %v4169
        %v4171 = vpop.f32.mrb[0].mxu0
        %4172 = vmatprep.mubr.f32.mxu0 0.0
        %4173 = vmatmul.mubr.f32.gmra.mrb[0].mxu0 %v4101
        %v4174 = vpop.f32.mrb[0].mxu0
        %v4175 = vadd.f32 0.0, %v4174
        %v4176 = vpop.f32.mrb[0].mxu0
        %4177 = vdwg.mxu0
        %v4179 = vsel %vm810, %v3613, 0
        %v4182 = vsel %vm810, %v3618, 0
        %4184 = vmatprep.subr.mxu0 0.0
        %4185 = vmatpush1.msra.mxu0 %v3622
        %4186 = vmatprep.subr.mxu0 0.0
        %4187 = vmatpush1.msra.mxu0 %v3623
        %4188 = vmatprep.subr.mxu0 0.0
        %4189 = vmatpush1.msra.mxu0 0.0
        %4190 = vmatprep.subr.mxu0 0.0
        %4191 = vmatpush1.msra.mxu0 0.0
        %4192 = vmatprep.subr.mxu0 0.0
        %4193 = vmatpush1.msra.mxu0 0.0
        %4194 = vmatprep.subr.mxu0 0.0
        %4195 = vmatpush1.msra.mxu0 0.0
        %4196 = vmatprep.subr.mxu0 0.0
        %4197 = vmatpush1.msra.mxu0 0.0
        %4198 = vmatprep.subr.mxu0 0.0
        %4199 = vmatpush1.msra.mxu0 0.0
        %4200 = vmatprep.subr.mxu0 0.0
        %4201 = vmatpush1.msra.mxu0 0.0
        %4202 = vmatprep.subr.mxu0 0.0
        %4203 = vmatpush1.msra.mxu0 0.0
        %4204 = vmatprep.subr.mxu0 0.0
        %4205 = vmatpush1.msra.mxu0 0.0
        %4206 = vmatprep.subr.mxu0 0.0
        %4207 = vmatpush1.msra.mxu0 0.0
        %4208 = vmatprep.subr.mxu0 0.0
        %4209 = vmatpush1.msra.mxu0 0.0
        %4210 = vmatprep.subr.mxu0 0.0
        %4211 = vmatpush1.msra.mxu0 0.0
        %4212 = vmatprep.subr.mxu0 0.0
        %4213 = vmatpush1.msra.mxu0 0.0
        %4214 = vmatprep.subr.mxu0 0.0
        %4215 = vmatpush1.msra.mxu0 0.0
        %4216 = vmatprep.subr.mxu0 0.0
        %4217 = vmatpush1.msra.mxu0 0.0
        %4218 = vmatprep.subr.mxu0 0.0
        %4219 = vmatpush1.msra.mxu0 0.0
        %4220 = vmatprep.subr.mxu0 0.0
        %4221 = vmatpush1.msra.mxu0 0.0
        %4222 = vmatprep.subr.mxu0 0.0
        %4223 = vmatpush1.msra.mxu0 0.0
        %4224 = vmatprep.subr.mxu0 0.0
        %4225 = vmatpush1.msra.mxu0 0.0
        %4226 = vmatprep.subr.mxu0 0.0
        %4227 = vmatpush1.msra.mxu0 0.0
        %4228 = vmatprep.subr.mxu0 0.0
        %4229 = vmatpush1.msra.mxu0 0.0
        %4230 = vmatprep.subr.mxu0 0.0
        %4231 = vmatpush1.msra.mxu0 0.0
        %4232 = vmatprep.subr.mxu0 0.0
        %4233 = vmatpush1.msra.mxu0 0.0
        %4234 = vmatprep.subr.mxu0 0.0
        %4235 = vmatpush1.msra.mxu0 0.0
        %4236 = vmatprep.subr.mxu0 0.0
        %4237 = vmatpush1.msra.mxu0 0.0
        %4238 = vmatprep.subr.mxu0 0.0
        %4239 = vmatpush1.msra.mxu0 0.0
        %4240 = vmatprep.subr.mxu0 0.0
        %4241 = vmatpush1.msra.mxu0 0.0
        %4242 = vmatprep.subr.mxu0 0.0
        %4243 = vmatpush1.msra.mxu0 0.0
        %4244 = vmatprep.subr.mxu0 0.0
        %4245 = vmatpush1.msra.mxu0 0.0
        %4246 = vmatprep.subr.mxu0 0.0
        %4247 = vmatpush1.msra.mxu0 0.0
        %4248 = vmatprep.mubr.f32.mxu0 0.0
        %4249 = vmatmul.mubr.f32.gmra.mrb[0].mxu0 %v4179
        %v4250 = vpop.f32.mrb[0].mxu0
        %v4251 = vadd.f32 %v4170, %v4250
        %v4252 = vpop.f32.mrb[0].mxu0
        %4253 = vmatprep.mubr.f32.mxu0 0.0
        %4254 = vmatmul.mubr.f32.gmra.mrb[0].mxu0 %v4182
        %v4255 = vpop.f32.mrb[0].mxu0
        %v4256 = vadd.f32 %v4175, %v4255
        %v4257 = vpop.f32.mrb[0].mxu0
        %4258 = vdwg.mxu0
        %s4259 = scalar_lea.vmem %s4, 896
        %v4260 = vld [vmem:[%s4259] sm:$0xff]
        %v4261 = vld [vmem:[%s4259 + $0x8] sm:$0xff]
        %v4262 = vld [vmem:[%s4259 + $0x10] sm:$0xff]
        %v4263 = vld [vmem:[%s4259 + $0x18] sm:$0xff]
        %v4264 = vld [vmem:[%s4259 + $0x20] sm:$0xff]
        %v4265 = vld [vmem:[%s4259 + $0x28] sm:$0xff]
        %v4266 = vld [vmem:[%s4259 + $0x30] sm:$0xff]
        %v4267 = vld [vmem:[%s4259 + $0x38] sm:$0xff]
        %s4268 = scalar_lea.vmem %s5, 14
        %v4269 = vld [vmem:[%s4268] sm:$0x1]
        %v4271 = vlaneseq
        %v4272 = vshrl.u32 %v4271, 7
        %v4273 = vsub.s32 0, %v4272
        %v4274 = vrot.slane %v4269, %v4273
        %4276 = vmatprep.subr.mxu0 0.0
        %4277 = vmatpush1.msra.mxu0 %v4260
        %4278 = vmatprep.subr.mxu0 0.0
        %4279 = vmatpush1.msra.mxu0 %v4261
        %4280 = vmatprep.subr.mxu0 0.0
        %4281 = vmatpush1.msra.mxu0 %v4262
        %4282 = vmatprep.subr.mxu0 0.0
        %4283 = vmatpush1.msra.mxu0 %v4263
        %4284 = vmatprep.subr.mxu0 0.0
        %4285 = vmatpush1.msra.mxu0 %v4264
        %4286 = vmatprep.subr.mxu0 0.0
        %4287 = vmatpush1.msra.mxu0 %v4265
        %4288 = vmatprep.subr.mxu0 0.0
        %4289 = vmatpush1.msra.mxu0 %v4266
        %4290 = vmatprep.subr.mxu0 0.0
        %4291 = vmatpush1.msra.mxu0 %v4267
        %4292 = vmatprep.subr.mxu0 0.0
        %4293 = vmatpush1.msra.mxu0 0.0
        %4294 = vmatprep.subr.mxu0 0.0
        %4295 = vmatpush1.msra.mxu0 0.0
        %4296 = vmatprep.subr.mxu0 0.0
        %4297 = vmatpush1.msra.mxu0 0.0
        %4298 = vmatprep.subr.mxu0 0.0
        %4299 = vmatpush1.msra.mxu0 0.0
        %4300 = vmatprep.subr.mxu0 0.0
        %4301 = vmatpush1.msra.mxu0 0.0
        %4302 = vmatprep.subr.mxu0 0.0
        %4303 = vmatpush1.msra.mxu0 0.0
        %4304 = vmatprep.subr.mxu0 0.0
        %4305 = vmatpush1.msra.mxu0 0.0
        %4306 = vmatprep.subr.mxu0 0.0
        %4307 = vmatpush1.msra.mxu0 0.0
        %4308 = vmatprep.subr.mxu0 0.0
        %4309 = vmatpush1.msra.mxu0 0.0
        %4310 = vmatprep.subr.mxu0 0.0
        %4311 = vmatpush1.msra.mxu0 0.0
        %4312 = vmatprep.subr.mxu0 0.0
        %4313 = vmatpush1.msra.mxu0 0.0
        %4314 = vmatprep.subr.mxu0 0.0
        %4315 = vmatpush1.msra.mxu0 0.0
        %4316 = vmatprep.subr.mxu0 0.0
        %4317 = vmatpush1.msra.mxu0 0.0
        %4318 = vmatprep.subr.mxu0 0.0
        %4319 = vmatpush1.msra.mxu0 0.0
        %4320 = vmatprep.subr.mxu0 0.0
        %4321 = vmatpush1.msra.mxu0 0.0
        %4322 = vmatprep.subr.mxu0 0.0
        %4323 = vmatpush1.msra.mxu0 0.0
        %4324 = vmatprep.subr.mxu0 0.0
        %4325 = vmatpush1.msra.mxu0 0.0
        %4326 = vmatprep.subr.mxu0 0.0
        %4327 = vmatpush1.msra.mxu0 0.0
        %4328 = vmatprep.subr.mxu0 0.0
        %4329 = vmatpush1.msra.mxu0 0.0
        %4330 = vmatprep.subr.mxu0 0.0
        %4331 = vmatpush1.msra.mxu0 0.0
        %4332 = vmatprep.subr.mxu0 0.0
        %4333 = vmatpush1.msra.mxu0 0.0
        %4334 = vmatprep.subr.mxu0 0.0
        %4335 = vmatpush1.msra.mxu0 0.0
        %4336 = vmatprep.subr.mxu0 0.0
        %4337 = vmatpush1.msra.mxu0 0.0
        %4338 = vmatprep.subr.mxu0 0.0
        %4339 = vmatpush1.msra.mxu0 0.0
        %4340 = vmatprep.mubr.f32.mxu0 0.0
        %4341 = vmatmul.mubr.f32.gmra.mrb[0].mxu0 %v3163
        %v4342 = vpop.f32.mrb[0].mxu0
        %v4343 = vadd.f32 %v4274, %v4342
        %v4344 = vpop.f32.mrb[0].mxu0
        %4345 = vmatprep.mubr.f32.mxu0 0.0
        %4346 = vmatmul.mubr.f32.gmra.mrb[0].mxu0 %v3166
        %v4347 = vpop.f32.mrb[0].mxu0
        %v4348 = vadd.f32 %v4274, %v4347
        %v4349 = vpop.f32.mrb[0].mxu0
        %4350 = vdwg.mxu0
        %s4351 = scalar_lea.vmem %s4, 1152
        %v4352 = vld [vmem:[%s4351] sm:$0xff]
        %v4353 = vld [vmem:[%s4351 + $0x8] sm:$0xff]
        %v4354 = vld [vmem:[%s4351 + $0x10] sm:$0xff]
        %v4355 = vld [vmem:[%s4351 + $0x18] sm:$0xff]
        %v4356 = vld [vmem:[%s4351 + $0x20] sm:$0xff]
        %v4357 = vld [vmem:[%s4351 + $0x28] sm:$0xff]
        %v4358 = vld [vmem:[%s4351 + $0x30] sm:$0xff]
        %v4359 = vld [vmem:[%s4351 + $0x38] sm:$0xff]
        %s4360 = scalar_lea.vmem %s5, 18
        %v4361 = vld [vmem:[%s4360] sm:$0x1]
        %v4363 = vlaneseq
        %v4364 = vshrl.u32 %v4363, 7
        %v4365 = vsub.s32 0, %v4364
        %v4366 = vrot.slane %v4361, %v4365
        %4368 = vmatprep.subr.mxu0 0.0
        %4369 = vmatpush1.msra.mxu0 %v4352
        %4370 = vmatprep.subr.mxu0 0.0
        %4371 = vmatpush1.msra.mxu0 %v4353
        %4372 = vmatprep.subr.mxu0 0.0
        %4373 = vmatpush1.msra.mxu0 %v4354
        %4374 = vmatprep.subr.mxu0 0.0
        %4375 = vmatpush1.msra.mxu0 %v4355
        %4376 = vmatprep.subr.mxu0 0.0
        %4377 = vmatpush1.msra.mxu0 %v4356
        %4378 = vmatprep.subr.mxu0 0.0
        %4379 = vmatpush1.msra.mxu0 %v4357
        %4380 = vmatprep.subr.mxu0 0.0
        %4381 = vmatpush1.msra.mxu0 %v4358
        %4382 = vmatprep.subr.mxu0 0.0
        %4383 = vmatpush1.msra.mxu0 %v4359
        %4384 = vmatprep.subr.mxu0 0.0
        %4385 = vmatpush1.msra.mxu0 0.0
        %4386 = vmatprep.subr.mxu0 0.0
        %4387 = vmatpush1.msra.mxu0 0.0
        %4388 = vmatprep.subr.mxu0 0.0
        %4389 = vmatpush1.msra.mxu0 0.0
        %4390 = vmatprep.subr.mxu0 0.0
        %4391 = vmatpush1.msra.mxu0 0.0
        %4392 = vmatprep.subr.mxu0 0.0
        %4393 = vmatpush1.msra.mxu0 0.0
        %4394 = vmatprep.subr.mxu0 0.0
        %4395 = vmatpush1.msra.mxu0 0.0
        %4396 = vmatprep.subr.mxu0 0.0
        %4397 = vmatpush1.msra.mxu0 0.0
        %4398 = vmatprep.subr.mxu0 0.0
        %4399 = vmatpush1.msra.mxu0 0.0
        %4400 = vmatprep.subr.mxu0 0.0
        %4401 = vmatpush1.msra.mxu0 0.0
        %4402 = vmatprep.subr.mxu0 0.0
        %4403 = vmatpush1.msra.mxu0 0.0
        %4404 = vmatprep.subr.mxu0 0.0
        %4405 = vmatpush1.msra.mxu0 0.0
        %4406 = vmatprep.subr.mxu0 0.0
        %4407 = vmatpush1.msra.mxu0 0.0
        %4408 = vmatprep.subr.mxu0 0.0
        %4409 = vmatpush1.msra.mxu0 0.0
        %4410 = vmatprep.subr.mxu0 0.0
        %4411 = vmatpush1.msra.mxu0 0.0
        %4412 = vmatprep.subr.mxu0 0.0
        %4413 = vmatpush1.msra.mxu0 0.0
        %4414 = vmatprep.subr.mxu0 0.0
        %4415 = vmatpush1.msra.mxu0 0.0
        %4416 = vmatprep.subr.mxu0 0.0
        %4417 = vmatpush1.msra.mxu0 0.0
        %4418 = vmatprep.subr.mxu0 0.0
        %4419 = vmatpush1.msra.mxu0 0.0
        %4420 = vmatprep.subr.mxu0 0.0
        %4421 = vmatpush1.msra.mxu0 0.0
        %4422 = vmatprep.subr.mxu0 0.0
        %4423 = vmatpush1.msra.mxu0 0.0
        %4424 = vmatprep.subr.mxu0 0.0
        %4425 = vmatpush1.msra.mxu0 0.0
        %4426 = vmatprep.subr.mxu0 0.0
        %4427 = vmatpush1.msra.mxu0 0.0
        %4428 = vmatprep.subr.mxu0 0.0
        %4429 = vmatpush1.msra.mxu0 0.0
        %4430 = vmatprep.subr.mxu0 0.0
        %4431 = vmatpush1.msra.mxu0 0.0
        %4432 = vmatprep.mubr.f32.mxu0 0.0
        %4433 = vmatmul.mubr.f32.gmra.mrb[0].mxu0 %v3163
        %v4434 = vpop.f32.mrb[0].mxu0
        %v4435 = vadd.f32 %v4366, %v4434
        %v4436 = vpop.f32.mrb[0].mxu0
        %4437 = vmatprep.mubr.f32.mxu0 0.0
        %4438 = vmatmul.mubr.f32.gmra.mrb[0].mxu0 %v3166
        %v4439 = vpop.f32.mrb[0].mxu0
        %v4440 = vadd.f32 %v4366, %v4439
        %v4441 = vpop.f32.mrb[0].mxu0
        %4442 = vdwg.mxu0
        %s4443 = scalar_lea.vmem %s4, 1408
        %v4444 = vld [vmem:[%s4443] sm:$0xff]
        %v4445 = vld [vmem:[%s4443 + $0x8] sm:$0xff]
        %v4446 = vld [vmem:[%s4443 + $0x10] sm:$0xff]
        %v4447 = vld [vmem:[%s4443 + $0x18] sm:$0xff]
        %v4448 = vld [vmem:[%s4443 + $0x20] sm:$0xff]
        %v4449 = vld [vmem:[%s4443 + $0x28] sm:$0xff]
        %v4450 = vld [vmem:[%s4443 + $0x30] sm:$0xff]
        %v4451 = vld [vmem:[%s4443 + $0x38] sm:$0xff]
        %s4452 = scalar_lea.vmem %s5, 22
        %v4453 = vld [vmem:[%s4452] sm:$0x1]
        %v4455 = vlaneseq
        %v4456 = vshrl.u32 %v4455, 7
        %v4457 = vsub.s32 0, %v4456
        %v4458 = vrot.slane %v4453, %v4457
        %4460 = vmatprep.subr.mxu0 0.0
        %4461 = vmatpush1.msra.mxu0 %v4444
        %4462 = vmatprep.subr.mxu0 0.0
        %4463 = vmatpush1.msra.mxu0 %v4445
        %4464 = vmatprep.subr.mxu0 0.0
        %4465 = vmatpush1.msra.mxu0 %v4446
        %4466 = vmatprep.subr.mxu0 0.0
        %4467 = vmatpush1.msra.mxu0 %v4447
        %4468 = vmatprep.subr.mxu0 0.0
        %4469 = vmatpush1.msra.mxu0 %v4448
        %4470 = vmatprep.subr.mxu0 0.0
        %4471 = vmatpush1.msra.mxu0 %v4449
        %4472 = vmatprep.subr.mxu0 0.0
        %4473 = vmatpush1.msra.mxu0 %v4450
        %4474 = vmatprep.subr.mxu0 0.0
        %4475 = vmatpush1.msra.mxu0 %v4451
        %4476 = vmatprep.subr.mxu0 0.0
        %4477 = vmatpush1.msra.mxu0 0.0
        %4478 = vmatprep.subr.mxu0 0.0
        %4479 = vmatpush1.msra.mxu0 0.0
        %4480 = vmatprep.subr.mxu0 0.0
        %4481 = vmatpush1.msra.mxu0 0.0
        %4482 = vmatprep.subr.mxu0 0.0
        %4483 = vmatpush1.msra.mxu0 0.0
        %4484 = vmatprep.subr.mxu0 0.0
        %4485 = vmatpush1.msra.mxu0 0.0
        %4486 = vmatprep.subr.mxu0 0.0
        %4487 = vmatpush1.msra.mxu0 0.0
        %4488 = vmatprep.subr.mxu0 0.0
        %4489 = vmatpush1.msra.mxu0 0.0
        %4490 = vmatprep.subr.mxu0 0.0
        %4491 = vmatpush1.msra.mxu0 0.0
        %4492 = vmatprep.subr.mxu0 0.0
        %4493 = vmatpush1.msra.mxu0 0.0
        %4494 = vmatprep.subr.mxu0 0.0
        %4495 = vmatpush1.msra.mxu0 0.0
        %4496 = vmatprep.subr.mxu0 0.0
        %4497 = vmatpush1.msra.mxu0 0.0
        %4498 = vmatprep.subr.mxu0 0.0
        %4499 = vmatpush1.msra.mxu0 0.0
        %4500 = vmatprep.subr.mxu0 0.0
        %4501 = vmatpush1.msra.mxu0 0.0
        %4502 = vmatprep.subr.mxu0 0.0
        %4503 = vmatpush1.msra.mxu0 0.0
        %4504 = vmatprep.subr.mxu0 0.0
        %4505 = vmatpush1.msra.mxu0 0.0
        %4506 = vmatprep.subr.mxu0 0.0
        %4507 = vmatpush1.msra.mxu0 0.0
        %4508 = vmatprep.subr.mxu0 0.0
        %4509 = vmatpush1.msra.mxu0 0.0
        %4510 = vmatprep.subr.mxu0 0.0
        %4511 = vmatpush1.msra.mxu0 0.0
        %4512 = vmatprep.subr.mxu0 0.0
        %4513 = vmatpush1.msra.mxu0 0.0
        %4514 = vmatprep.subr.mxu0 0.0
        %4515 = vmatpush1.msra.mxu0 0.0
        %4516 = vmatprep.subr.mxu0 0.0
        %4517 = vmatpush1.msra.mxu0 0.0
        %4518 = vmatprep.subr.mxu0 0.0
        %4519 = vmatpush1.msra.mxu0 0.0
        %4520 = vmatprep.subr.mxu0 0.0
        %4521 = vmatpush1.msra.mxu0 0.0
        %4522 = vmatprep.subr.mxu0 0.0
        %4523 = vmatpush1.msra.mxu0 0.0
        %4524 = vmatprep.mubr.f32.mxu0 0.0
        %4525 = vmatmul.mubr.f32.gmra.mrb[0].mxu0 %v3163
        %v4526 = vpop.f32.mrb[0].mxu0
        %v4527 = vadd.f32 %v4458, %v4526
        %v4528 = vpop.f32.mrb[0].mxu0
        %4529 = vmatprep.mubr.f32.mxu0 0.0
        %4530 = vmatmul.mubr.f32.gmra.mrb[0].mxu0 %v3166
        %v4531 = vpop.f32.mrb[0].mxu0
        %v4532 = vadd.f32 %v4458, %v4531
        %v4533 = vpop.f32.mrb[0].mxu0
        %4534 = vdwg.mxu0
        %v4536 = vsel %vm810, %v4343, 0
        %v4539 = vsel %vm810, %v4348, 0
        %v4542 = vsel %vm810, %v4435, 0
        %v4545 = vsel %vm810, %v4440, 0
        %4547 = vmatprep.subr.mxu0 0.0
        %4548 = vmatpush1.xpose.msra.mxu0 %v4542
        %4549 = vmatprep.subr.mxu0 0.0
        %4550 = vmatpush1.xpose.msra.mxu0 %v4545
        %4551 = vmatprep.subr.mxu0 0.0
        %4552 = vmatpush1.xpose.msra.mxu0 0.0
        %4553 = vmatprep.subr.mxu0 0.0
        %4554 = vmatpush1.xpose.msra.mxu0 0.0
        %4555 = vmatprep.subr.mxu0 0.0
        %4556 = vmatpush1.xpose.msra.mxu0 0.0
        %4557 = vmatprep.subr.mxu0 0.0
        %4558 = vmatpush1.xpose.msra.mxu0 0.0
        %4559 = vmatprep.subr.mxu0 0.0
        %4560 = vmatpush1.xpose.msra.mxu0 0.0
        %4561 = vmatprep.subr.mxu0 0.0
        %4562 = vmatpush1.xpose.msra.mxu0 0.0
        %4563 = vmatprep.subr.mxu0 0.0
        %4564 = vmatpush1.xpose.msra.mxu0 0.0
        %4565 = vmatprep.subr.mxu0 0.0
        %4566 = vmatpush1.xpose.msra.mxu0 0.0
        %4567 = vmatprep.subr.mxu0 0.0
        %4568 = vmatpush1.xpose.msra.mxu0 0.0
        %4569 = vmatprep.subr.mxu0 0.0
        %4570 = vmatpush1.xpose.msra.mxu0 0.0
        %4571 = vmatprep.subr.mxu0 0.0
        %4572 = vmatpush1.xpose.msra.mxu0 0.0
        %4573 = vmatprep.subr.mxu0 0.0
        %4574 = vmatpush1.xpose.msra.mxu0 0.0
        %4575 = vmatprep.subr.mxu0 0.0
        %4576 = vmatpush1.xpose.msra.mxu0 0.0
        %4577 = vmatprep.subr.mxu0 0.0
        %4578 = vmatpush1.xpose.msra.mxu0 0.0
        %4579 = vmatprep.subr.mxu0 0.0
        %4580 = vmatpush1.xpose.msra.mxu0 0.0
        %4581 = vmatprep.subr.mxu0 0.0
        %4582 = vmatpush1.xpose.msra.mxu0 0.0
        %4583 = vmatprep.subr.mxu0 0.0
        %4584 = vmatpush1.xpose.msra.mxu0 0.0
        %4585 = vmatprep.subr.mxu0 0.0
        %4586 = vmatpush1.xpose.msra.mxu0 0.0
        %4587 = vmatprep.subr.mxu0 0.0
        %4588 = vmatpush1.xpose.msra.mxu0 0.0
        %4589 = vmatprep.subr.mxu0 0.0
        %4590 = vmatpush1.xpose.msra.mxu0 0.0
        %4591 = vmatprep.subr.mxu0 0.0
        %4592 = vmatpush1.xpose.msra.mxu0 0.0
        %4593 = vmatprep.subr.mxu0 0.0
        %4594 = vmatpush1.xpose.msra.mxu0 0.0
        %4595 = vmatprep.subr.mxu0 0.0
        %4596 = vmatpush1.xpose.msra.mxu0 0.0
        %4597 = vmatprep.subr.mxu0 0.0
        %4598 = vmatpush1.xpose.msra.mxu0 0.0
        %4599 = vmatprep.subr.mxu0 0.0
        %4600 = vmatpush1.xpose.msra.mxu0 0.0
        %4601 = vmatprep.subr.mxu0 0.0
        %4602 = vmatpush1.xpose.msra.mxu0 0.0
        %4603 = vmatprep.subr.mxu0 0.0
        %4604 = vmatpush1.xpose.msra.mxu0 0.0
        %4605 = vmatprep.subr.mxu0 0.0
        %4606 = vmatpush1.xpose.msra.mxu0 0.0
        %4607 = vmatprep.subr.mxu0 0.0
        %4608 = vmatpush1.xpose.msra.mxu0 0.0
        %4609 = vmatprep.subr.mxu0 0.0
        %4610 = vmatpush1.xpose.msra.mxu0 0.0
        %4611 = vmatprep.mubr.f32.mxu0 0.0
        %4612 = vmatmul.mubr.f32.gmra.mrb[0].mxu0 %v4536
        %v4613 = vpop.f32.mrb[0].mxu0
        %v4614 = vadd.f32 0.0, %v4613
        %v4615 = vpop.f32.mrb[0].mxu0
        %4616 = vmatprep.mubr.f32.mxu0 0.0
        %4617 = vmatmul.mubr.f32.gmra.mrb[0].mxu0 %v4539
        %v4618 = vpop.f32.mrb[0].mxu0
        %v4619 = vadd.f32 0.0, %v4618
        %v4620 = vpop.f32.mrb[0].mxu0
        %4621 = vdwg.mxu0
        %v4622 = vmul.f32 %v4614, 0.25
        %v4623 = vmul.f32 %v4619, 0.25
        %v4624 = vsel %vm905, %v4622, -1e+30
        %v4625 = vsel %vm905, %v4623, -1e+30
        %v4626 = vsel %vm810, %v4624, -inf
        %4627 = vmax.xlane.f32.xlu0 %v4626
        %v4628 = vpop.xlane.xlu0 %4627
        %v4629 = vsel %vm810, %v4625, -inf
        %4630 = vmax.xlane.f32.xlu0 %v4629
        %v4631 = vpop.xlane.xlu0 %4630
        %v4632 = vsub.f32 %v4624, %v4628
        %v4633 = vsub.f32 %v4625, %v4631
        %v4634 = vmul.f32 %v4632, 1.442695
        %v4635 = vpow.pop %v4634
        %v4636 = vmul.f32 %v4633, 1.442695
        %v4637 = vpow.pop %v4636
        %v4638 = vsel %vm810, %v4635, 0.0
        %4639 = vadd.xlane.f32.xlu0 %v4638
        %v4640 = vpop.xlane.xlu0 %4639
        %v4641 = vsel %vm810, %v4637, 0.0
        %4642 = vadd.xlane.f32.xlu0 %v4641
        %v4643 = vpop.xlane.xlu0 %4642
        %v4644 = vrcp.pop %v4640
        %v4645 = vrcp.pop %v4643
        %v4646 = vmul.f32 %v4635, %v4644
        %v4647 = vmul.f32 %v4637, %v4645
        %v4649 = vsel %vm810, %v4646, 0
        %v4652 = vsel %vm810, %v4647, 0
        %4654 = vmatprep.subr.mxu0 0.0
        %4655 = vmatpush1.msra.mxu0 %v4527
        %4656 = vmatprep.subr.mxu0 0.0
        %4657 = vmatpush1.msra.mxu0 %v4532
        %4658 = vmatprep.subr.mxu0 0.0
        %4659 = vmatpush1.msra.mxu0 0.0
        %4660 = vmatprep.subr.mxu0 0.0
        %4661 = vmatpush1.msra.mxu0 0.0
        %4662 = vmatprep.subr.mxu0 0.0
        %4663 = vmatpush1.msra.mxu0 0.0
        %4664 = vmatprep.subr.mxu0 0.0
        %4665 = vmatpush1.msra.mxu0 0.0
        %4666 = vmatprep.subr.mxu0 0.0
        %4667 = vmatpush1.msra.mxu0 0.0
        %4668 = vmatprep.subr.mxu0 0.0
        %4669 = vmatpush1.msra.mxu0 0.0
        %4670 = vmatprep.subr.mxu0 0.0
        %4671 = vmatpush1.msra.mxu0 0.0
        %4672 = vmatprep.subr.mxu0 0.0
        %4673 = vmatpush1.msra.mxu0 0.0
        %4674 = vmatprep.subr.mxu0 0.0
        %4675 = vmatpush1.msra.mxu0 0.0
        %4676 = vmatprep.subr.mxu0 0.0
        %4677 = vmatpush1.msra.mxu0 0.0
        %4678 = vmatprep.subr.mxu0 0.0
        %4679 = vmatpush1.msra.mxu0 0.0
        %4680 = vmatprep.subr.mxu0 0.0
        %4681 = vmatpush1.msra.mxu0 0.0
        %4682 = vmatprep.subr.mxu0 0.0
        %4683 = vmatpush1.msra.mxu0 0.0
        %4684 = vmatprep.subr.mxu0 0.0
        %4685 = vmatpush1.msra.mxu0 0.0
        %4686 = vmatprep.subr.mxu0 0.0
        %4687 = vmatpush1.msra.mxu0 0.0
        %4688 = vmatprep.subr.mxu0 0.0
        %4689 = vmatpush1.msra.mxu0 0.0
        %4690 = vmatprep.subr.mxu0 0.0
        %4691 = vmatpush1.msra.mxu0 0.0
        %4692 = vmatprep.subr.mxu0 0.0
        %4693 = vmatpush1.msra.mxu0 0.0
        %4694 = vmatprep.subr.mxu0 0.0
        %4695 = vmatpush1.msra.mxu0 0.0
        %4696 = vmatprep.subr.mxu0 0.0
        %4697 = vmatpush1.msra.mxu0 0.0
        %4698 = vmatprep.subr.mxu0 0.0
        %4699 = vmatpush1.msra.mxu0 0.0
        %4700 = vmatprep.subr.mxu0 0.0
        %4701 = vmatpush1.msra.mxu0 0.0
        %4702 = vmatprep.subr.mxu0 0.0
        %4703 = vmatpush1.msra.mxu0 0.0
        %4704 = vmatprep.subr.mxu0 0.0
        %4705 = vmatpush1.msra.mxu0 0.0
        %4706 = vmatprep.subr.mxu0 0.0
        %4707 = vmatpush1.msra.mxu0 0.0
        %4708 = vmatprep.subr.mxu0 0.0
        %4709 = vmatpush1.msra.mxu0 0.0
        %4710 = vmatprep.subr.mxu0 0.0
        %4711 = vmatpush1.msra.mxu0 0.0
        %4712 = vmatprep.subr.mxu0 0.0
        %4713 = vmatpush1.msra.mxu0 0.0
        %4714 = vmatprep.subr.mxu0 0.0
        %4715 = vmatpush1.msra.mxu0 0.0
        %4716 = vmatprep.subr.mxu0 0.0
        %4717 = vmatpush1.msra.mxu0 0.0
        %4718 = vmatprep.mubr.f32.mxu0 0.0
        %4719 = vmatmul.mubr.f32.gmra.mrb[0].mxu0 %v4649
        %v4720 = vpop.f32.mrb[0].mxu0
        %v4721 = vadd.f32 0.0, %v4720
        %v4722 = vpop.f32.mrb[0].mxu0
        %4723 = vmatprep.mubr.f32.mxu0 0.0
        %4724 = vmatmul.mubr.f32.gmra.mrb[0].mxu0 %v4652
        %v4725 = vpop.f32.mrb[0].mxu0
        %v4726 = vadd.f32 0.0, %v4725
        %v4727 = vpop.f32.mrb[0].mxu0
        %4728 = vdwg.mxu0
        %s4729 = scalar_lea.vmem %s6, 96
        %v4730 = vld [vmem:[%s4729] sm:$0xff]
        %v4731 = vld [vmem:[%s4729 + $0x8] sm:$0xff]
        %v4733 = vsel %vm810, %v4721, 0
        %v4736 = vsel %vm810, %v4726, 0
        %4738 = vmatprep.subr.mxu0 0.0
        %4739 = vmatpush1.msra.mxu0 %v4730
        %4740 = vmatprep.subr.mxu0 0.0
        %4741 = vmatpush1.msra.mxu0 %v4731
        %4742 = vmatprep.subr.mxu0 0.0
        %4743 = vmatpush1.msra.mxu0 0.0
        %4744 = vmatprep.subr.mxu0 0.0
        %4745 = vmatpush1.msra.mxu0 0.0
        %4746 = vmatprep.subr.mxu0 0.0
        %4747 = vmatpush1.msra.mxu0 0.0
        %4748 = vmatprep.subr.mxu0 0.0
        %4749 = vmatpush1.msra.mxu0 0.0
        %4750 = vmatprep.subr.mxu0 0.0
        %4751 = vmatpush1.msra.mxu0 0.0
        %4752 = vmatprep.subr.mxu0 0.0
        %4753 = vmatpush1.msra.mxu0 0.0
        %4754 = vmatprep.subr.mxu0 0.0
        %4755 = vmatpush1.msra.mxu0 0.0
        %4756 = vmatprep.subr.mxu0 0.0
        %4757 = vmatpush1.msra.mxu0 0.0
        %4758 = vmatprep.subr.mxu0 0.0
        %4759 = vmatpush1.msra.mxu0 0.0
        %4760 = vmatprep.subr.mxu0 0.0
        %4761 = vmatpush1.msra.mxu0 0.0
        %4762 = vmatprep.subr.mxu0 0.0
        %4763 = vmatpush1.msra.mxu0 0.0
        %4764 = vmatprep.subr.mxu0 0.0
        %4765 = vmatpush1.msra.mxu0 0.0
        %4766 = vmatprep.subr.mxu0 0.0
        %4767 = vmatpush1.msra.mxu0 0.0
        %4768 = vmatprep.subr.mxu0 0.0
        %4769 = vmatpush1.msra.mxu0 0.0
        %4770 = vmatprep.subr.mxu0 0.0
        %4771 = vmatpush1.msra.mxu0 0.0
        %4772 = vmatprep.subr.mxu0 0.0
        %4773 = vmatpush1.msra.mxu0 0.0
        %4774 = vmatprep.subr.mxu0 0.0
        %4775 = vmatpush1.msra.mxu0 0.0
        %4776 = vmatprep.subr.mxu0 0.0
        %4777 = vmatpush1.msra.mxu0 0.0
        %4778 = vmatprep.subr.mxu0 0.0
        %4779 = vmatpush1.msra.mxu0 0.0
        %4780 = vmatprep.subr.mxu0 0.0
        %4781 = vmatpush1.msra.mxu0 0.0
        %4782 = vmatprep.subr.mxu0 0.0
        %4783 = vmatpush1.msra.mxu0 0.0
        %4784 = vmatprep.subr.mxu0 0.0
        %4785 = vmatpush1.msra.mxu0 0.0
        %4786 = vmatprep.subr.mxu0 0.0
        %4787 = vmatpush1.msra.mxu0 0.0
        %4788 = vmatprep.subr.mxu0 0.0
        %4789 = vmatpush1.msra.mxu0 0.0
        %4790 = vmatprep.subr.mxu0 0.0
        %4791 = vmatpush1.msra.mxu0 0.0
        %4792 = vmatprep.subr.mxu0 0.0
        %4793 = vmatpush1.msra.mxu0 0.0
        %4794 = vmatprep.subr.mxu0 0.0
        %4795 = vmatpush1.msra.mxu0 0.0
        %4796 = vmatprep.subr.mxu0 0.0
        %4797 = vmatpush1.msra.mxu0 0.0
        %4798 = vmatprep.subr.mxu0 0.0
        %4799 = vmatpush1.msra.mxu0 0.0
        %4800 = vmatprep.subr.mxu0 0.0
        %4801 = vmatpush1.msra.mxu0 0.0
        %4802 = vmatprep.mubr.f32.mxu0 0.0
        %4803 = vmatmul.mubr.f32.gmra.mrb[0].mxu0 %v4733
        %v4804 = vpop.f32.mrb[0].mxu0
        %v4805 = vadd.f32 0.0, %v4804
        %v4806 = vpop.f32.mrb[0].mxu0
        %4807 = vmatprep.mubr.f32.mxu0 0.0
        %4808 = vmatmul.mubr.f32.gmra.mrb[0].mxu0 %v4736
        %v4809 = vpop.f32.mrb[0].mxu0
        %v4810 = vadd.f32 0.0, %v4809
        %v4811 = vpop.f32.mrb[0].mxu0
        %4812 = vdwg.mxu0
        %v4813 = vadd.f32 %v4251, %v4805
        %v4814 = vadd.f32 %v4256, %v4810
        %s4815 = scalar_lea.vmem %s4, 960
        %v4816 = vld [vmem:[%s4815] sm:$0xff]
        %v4817 = vld [vmem:[%s4815 + $0x8] sm:$0xff]
        %v4818 = vld [vmem:[%s4815 + $0x10] sm:$0xff]
        %v4819 = vld [vmem:[%s4815 + $0x18] sm:$0xff]
        %v4820 = vld [vmem:[%s4815 + $0x20] sm:$0xff]
        %v4821 = vld [vmem:[%s4815 + $0x28] sm:$0xff]
        %v4822 = vld [vmem:[%s4815 + $0x30] sm:$0xff]
        %v4823 = vld [vmem:[%s4815 + $0x38] sm:$0xff]
        %s4824 = scalar_lea.vmem %s5, 15
        %v4825 = vld [vmem:[%s4824] sm:$0x1]
        %v4827 = vlaneseq
        %v4828 = vshrl.u32 %v4827, 7
        %v4829 = vsub.s32 0, %v4828
        %v4830 = vrot.slane %v4825, %v4829
        %4832 = vmatprep.subr.mxu0 0.0
        %4833 = vmatpush1.msra.mxu0 %v4816
        %4834 = vmatprep.subr.mxu0 0.0
        %4835 = vmatpush1.msra.mxu0 %v4817
        %4836 = vmatprep.subr.mxu0 0.0
        %4837 = vmatpush1.msra.mxu0 %v4818
        %4838 = vmatprep.subr.mxu0 0.0
        %4839 = vmatpush1.msra.mxu0 %v4819
        %4840 = vmatprep.subr.mxu0 0.0
        %4841 = vmatpush1.msra.mxu0 %v4820
        %4842 = vmatprep.subr.mxu0 0.0
        %4843 = vmatpush1.msra.mxu0 %v4821
        %4844 = vmatprep.subr.mxu0 0.0
        %4845 = vmatpush1.msra.mxu0 %v4822
        %4846 = vmatprep.subr.mxu0 0.0
        %4847 = vmatpush1.msra.mxu0 %v4823
        %4848 = vmatprep.subr.mxu0 0.0
        %4849 = vmatpush1.msra.mxu0 0.0
        %4850 = vmatprep.subr.mxu0 0.0
        %4851 = vmatpush1.msra.mxu0 0.0
        %4852 = vmatprep.subr.mxu0 0.0
        %4853 = vmatpush1.msra.mxu0 0.0
        %4854 = vmatprep.subr.mxu0 0.0
        %4855 = vmatpush1.msra.mxu0 0.0
        %4856 = vmatprep.subr.mxu0 0.0
        %4857 = vmatpush1.msra.mxu0 0.0
        %4858 = vmatprep.subr.mxu0 0.0
        %4859 = vmatpush1.msra.mxu0 0.0
        %4860 = vmatprep.subr.mxu0 0.0
        %4861 = vmatpush1.msra.mxu0 0.0
        %4862 = vmatprep.subr.mxu0 0.0
        %4863 = vmatpush1.msra.mxu0 0.0
        %4864 = vmatprep.subr.mxu0 0.0
        %4865 = vmatpush1.msra.mxu0 0.0
        %4866 = vmatprep.subr.mxu0 0.0
        %4867 = vmatpush1.msra.mxu0 0.0
        %4868 = vmatprep.subr.mxu0 0.0
        %4869 = vmatpush1.msra.mxu0 0.0
        %4870 = vmatprep.subr.mxu0 0.0
        %4871 = vmatpush1.msra.mxu0 0.0
        %4872 = vmatprep.subr.mxu0 0.0
        %4873 = vmatpush1.msra.mxu0 0.0
        %4874 = vmatprep.subr.mxu0 0.0
        %4875 = vmatpush1.msra.mxu0 0.0
        %4876 = vmatprep.subr.mxu0 0.0
        %4877 = vmatpush1.msra.mxu0 0.0
        %4878 = vmatprep.subr.mxu0 0.0
        %4879 = vmatpush1.msra.mxu0 0.0
        %4880 = vmatprep.subr.mxu0 0.0
        %4881 = vmatpush1.msra.mxu0 0.0
        %4882 = vmatprep.subr.mxu0 0.0
        %4883 = vmatpush1.msra.mxu0 0.0
        %4884 = vmatprep.subr.mxu0 0.0
        %4885 = vmatpush1.msra.mxu0 0.0
        %4886 = vmatprep.subr.mxu0 0.0
        %4887 = vmatpush1.msra.mxu0 0.0
        %4888 = vmatprep.subr.mxu0 0.0
        %4889 = vmatpush1.msra.mxu0 0.0
        %4890 = vmatprep.subr.mxu0 0.0
        %4891 = vmatpush1.msra.mxu0 0.0
        %4892 = vmatprep.subr.mxu0 0.0
        %4893 = vmatpush1.msra.mxu0 0.0
        %4894 = vmatprep.subr.mxu0 0.0
        %4895 = vmatpush1.msra.mxu0 0.0
        %4896 = vmatprep.mubr.f32.mxu0 0.0
        %4897 = vmatmul.mubr.f32.gmra.mrb[0].mxu0 %v3163
        %v4898 = vpop.f32.mrb[0].mxu0
        %v4899 = vadd.f32 %v4830, %v4898
        %v4900 = vpop.f32.mrb[0].mxu0
        %4901 = vmatprep.mubr.f32.mxu0 0.0
        %4902 = vmatmul.mubr.f32.gmra.mrb[0].mxu0 %v3166
        %v4903 = vpop.f32.mrb[0].mxu0
        %v4904 = vadd.f32 %v4830, %v4903
        %v4905 = vpop.f32.mrb[0].mxu0
        %4906 = vdwg.mxu0
        %s4907 = scalar_lea.vmem %s4, 1216
        %v4908 = vld [vmem:[%s4907] sm:$0xff]
        %v4909 = vld [vmem:[%s4907 + $0x8] sm:$0xff]
        %v4910 = vld [vmem:[%s4907 + $0x10] sm:$0xff]
        %v4911 = vld [vmem:[%s4907 + $0x18] sm:$0xff]
        %v4912 = vld [vmem:[%s4907 + $0x20] sm:$0xff]
        %v4913 = vld [vmem:[%s4907 + $0x28] sm:$0xff]
        %v4914 = vld [vmem:[%s4907 + $0x30] sm:$0xff]
        %v4915 = vld [vmem:[%s4907 + $0x38] sm:$0xff]
        %s4916 = scalar_lea.vmem %s5, 19
        %v4917 = vld [vmem:[%s4916] sm:$0x1]
        %v4919 = vlaneseq
        %v4920 = vshrl.u32 %v4919, 7
        %v4921 = vsub.s32 0, %v4920
        %v4922 = vrot.slane %v4917, %v4921
        %4924 = vmatprep.subr.mxu0 0.0
        %4925 = vmatpush1.msra.mxu0 %v4908
        %4926 = vmatprep.subr.mxu0 0.0
        %4927 = vmatpush1.msra.mxu0 %v4909
        %4928 = vmatprep.subr.mxu0 0.0
        %4929 = vmatpush1.msra.mxu0 %v4910
        %4930 = vmatprep.subr.mxu0 0.0
        %4931 = vmatpush1.msra.mxu0 %v4911
        %4932 = vmatprep.subr.mxu0 0.0
        %4933 = vmatpush1.msra.mxu0 %v4912
        %4934 = vmatprep.subr.mxu0 0.0
        %4935 = vmatpush1.msra.mxu0 %v4913
        %4936 = vmatprep.subr.mxu0 0.0
        %4937 = vmatpush1.msra.mxu0 %v4914
        %4938 = vmatprep.subr.mxu0 0.0
        %4939 = vmatpush1.msra.mxu0 %v4915
        %4940 = vmatprep.subr.mxu0 0.0
        %4941 = vmatpush1.msra.mxu0 0.0
        %4942 = vmatprep.subr.mxu0 0.0
        %4943 = vmatpush1.msra.mxu0 0.0
        %4944 = vmatprep.subr.mxu0 0.0
        %4945 = vmatpush1.msra.mxu0 0.0
        %4946 = vmatprep.subr.mxu0 0.0
        %4947 = vmatpush1.msra.mxu0 0.0
        %4948 = vmatprep.subr.mxu0 0.0
        %4949 = vmatpush1.msra.mxu0 0.0
        %4950 = vmatprep.subr.mxu0 0.0
        %4951 = vmatpush1.msra.mxu0 0.0
        %4952 = vmatprep.subr.mxu0 0.0
        %4953 = vmatpush1.msra.mxu0 0.0
        %4954 = vmatprep.subr.mxu0 0.0
        %4955 = vmatpush1.msra.mxu0 0.0
        %4956 = vmatprep.subr.mxu0 0.0
        %4957 = vmatpush1.msra.mxu0 0.0
        %4958 = vmatprep.subr.mxu0 0.0
        %4959 = vmatpush1.msra.mxu0 0.0
        %4960 = vmatprep.subr.mxu0 0.0
        %4961 = vmatpush1.msra.mxu0 0.0
        %4962 = vmatprep.subr.mxu0 0.0
        %4963 = vmatpush1.msra.mxu0 0.0
        %4964 = vmatprep.subr.mxu0 0.0
        %4965 = vmatpush1.msra.mxu0 0.0
        %4966 = vmatprep.subr.mxu0 0.0
        %4967 = vmatpush1.msra.mxu0 0.0
        %4968 = vmatprep.subr.mxu0 0.0
        %4969 = vmatpush1.msra.mxu0 0.0
        %4970 = vmatprep.subr.mxu0 0.0
        %4971 = vmatpush1.msra.mxu0 0.0
        %4972 = vmatprep.subr.mxu0 0.0
        %4973 = vmatpush1.msra.mxu0 0.0
        %4974 = vmatprep.subr.mxu0 0.0
        %4975 = vmatpush1.msra.mxu0 0.0
        %4976 = vmatprep.subr.mxu0 0.0
        %4977 = vmatpush1.msra.mxu0 0.0
        %4978 = vmatprep.subr.mxu0 0.0
        %4979 = vmatpush1.msra.mxu0 0.0
        %4980 = vmatprep.subr.mxu0 0.0
        %4981 = vmatpush1.msra.mxu0 0.0
        %4982 = vmatprep.subr.mxu0 0.0
        %4983 = vmatpush1.msra.mxu0 0.0
        %4984 = vmatprep.subr.mxu0 0.0
        %4985 = vmatpush1.msra.mxu0 0.0
        %4986 = vmatprep.subr.mxu0 0.0
        %4987 = vmatpush1.msra.mxu0 0.0
        %4988 = vmatprep.mubr.f32.mxu0 0.0
        %4989 = vmatmul.mubr.f32.gmra.mrb[0].mxu0 %v3163
        %v4990 = vpop.f32.mrb[0].mxu0
        %v4991 = vadd.f32 %v4922, %v4990
        %v4992 = vpop.f32.mrb[0].mxu0
        %4993 = vmatprep.mubr.f32.mxu0 0.0
        %4994 = vmatmul.mubr.f32.gmra.mrb[0].mxu0 %v3166
        %v4995 = vpop.f32.mrb[0].mxu0
        %v4996 = vadd.f32 %v4922, %v4995
        %v4997 = vpop.f32.mrb[0].mxu0
        %4998 = vdwg.mxu0
        %s4999 = scalar_lea.vmem %s4, 1472
        %v5000 = vld [vmem:[%s4999] sm:$0xff]
        %v5001 = vld [vmem:[%s4999 + $0x8] sm:$0xff]
        %v5002 = vld [vmem:[%s4999 + $0x10] sm:$0xff]
        %v5003 = vld [vmem:[%s4999 + $0x18] sm:$0xff]
        %v5004 = vld [vmem:[%s4999 + $0x20] sm:$0xff]
        %v5005 = vld [vmem:[%s4999 + $0x28] sm:$0xff]
        %v5006 = vld [vmem:[%s4999 + $0x30] sm:$0xff]
        %v5007 = vld [vmem:[%s4999 + $0x38] sm:$0xff]
        %s5008 = scalar_lea.vmem %s5, 23
        %v5009 = vld [vmem:[%s5008] sm:$0x1]
        %v5011 = vlaneseq
        %v5012 = vshrl.u32 %v5011, 7
        %v5013 = vsub.s32 0, %v5012
        %v5014 = vrot.slane %v5009, %v5013
        %5016 = vmatprep.subr.mxu0 0.0
        %5017 = vmatpush1.msra.mxu0 %v5000
        %5018 = vmatprep.subr.mxu0 0.0
        %5019 = vmatpush1.msra.mxu0 %v5001
        %5020 = vmatprep.subr.mxu0 0.0
        %5021 = vmatpush1.msra.mxu0 %v5002
        %5022 = vmatprep.subr.mxu0 0.0
        %5023 = vmatpush1.msra.mxu0 %v5003
        %5024 = vmatprep.subr.mxu0 0.0
        %5025 = vmatpush1.msra.mxu0 %v5004
        %5026 = vmatprep.subr.mxu0 0.0
        %5027 = vmatpush1.msra.mxu0 %v5005
        %5028 = vmatprep.subr.mxu0 0.0
        %5029 = vmatpush1.msra.mxu0 %v5006
        %5030 = vmatprep.subr.mxu0 0.0
        %5031 = vmatpush1.msra.mxu0 %v5007
        %5032 = vmatprep.subr.mxu0 0.0
        %5033 = vmatpush1.msra.mxu0 0.0
        %5034 = vmatprep.subr.mxu0 0.0
        %5035 = vmatpush1.msra.mxu0 0.0
        %5036 = vmatprep.subr.mxu0 0.0
        %5037 = vmatpush1.msra.mxu0 0.0
        %5038 = vmatprep.subr.mxu0 0.0
        %5039 = vmatpush1.msra.mxu0 0.0
        %5040 = vmatprep.subr.mxu0 0.0
        %5041 = vmatpush1.msra.mxu0 0.0
        %5042 = vmatprep.subr.mxu0 0.0
        %5043 = vmatpush1.msra.mxu0 0.0
        %5044 = vmatprep.subr.mxu0 0.0
        %5045 = vmatpush1.msra.mxu0 0.0
        %5046 = vmatprep.subr.mxu0 0.0
        %5047 = vmatpush1.msra.mxu0 0.0
        %5048 = vmatprep.subr.mxu0 0.0
        %5049 = vmatpush1.msra.mxu0 0.0
        %5050 = vmatprep.subr.mxu0 0.0
        %5051 = vmatpush1.msra.mxu0 0.0
        %5052 = vmatprep.subr.mxu0 0.0
        %5053 = vmatpush1.msra.mxu0 0.0
        %5054 = vmatprep.subr.mxu0 0.0
        %5055 = vmatpush1.msra.mxu0 0.0
        %5056 = vmatprep.subr.mxu0 0.0
        %5057 = vmatpush1.msra.mxu0 0.0
        %5058 = vmatprep.subr.mxu0 0.0
        %5059 = vmatpush1.msra.mxu0 0.0
        %5060 = vmatprep.subr.mxu0 0.0
        %5061 = vmatpush1.msra.mxu0 0.0
        %5062 = vmatprep.subr.mxu0 0.0
        %5063 = vmatpush1.msra.mxu0 0.0
        %5064 = vmatprep.subr.mxu0 0.0
        %5065 = vmatpush1.msra.mxu0 0.0
        %5066 = vmatprep.subr.mxu0 0.0
        %5067 = vmatpush1.msra.mxu0 0.0
        %5068 = vmatprep.subr.mxu0 0.0
        %5069 = vmatpush1.msra.mxu0 0.0
        %5070 = vmatprep.subr.mxu0 0.0
        %5071 = vmatpush1.msra.mxu0 0.0
        %5072 = vmatprep.subr.mxu0 0.0
        %5073 = vmatpush1.msra.mxu0 0.0
        %5074 = vmatprep.subr.mxu0 0.0
        %5075 = vmatpush1.msra.mxu0 0.0
        %5076 = vmatprep.subr.mxu0 0.0
        %5077 = vmatpush1.msra.mxu0 0.0
        %5078 = vmatprep.subr.mxu0 0.0
        %5079 = vmatpush1.msra.mxu0 0.0
        %5080 = vmatprep.mubr.f32.mxu0 0.0
        %5081 = vmatmul.mubr.f32.gmra.mrb[0].mxu0 %v3163
        %v5082 = vpop.f32.mrb[0].mxu0
        %v5083 = vadd.f32 %v5014, %v5082
        %v5084 = vpop.f32.mrb[0].mxu0
        %5085 = vmatprep.mubr.f32.mxu0 0.0
        %5086 = vmatmul.mubr.f32.gmra.mrb[0].mxu0 %v3166
        %v5087 = vpop.f32.mrb[0].mxu0
        %v5088 = vadd.f32 %v5014, %v5087
        %v5089 = vpop.f32.mrb[0].mxu0
        %5090 = vdwg.mxu0
        %v5092 = vsel %vm810, %v4899, 0
        %v5095 = vsel %vm810, %v4904, 0
        %v5098 = vsel %vm810, %v4991, 0
        %v5101 = vsel %vm810, %v4996, 0
        %5103 = vmatprep.subr.mxu0 0.0
        %5104 = vmatpush1.xpose.msra.mxu0 %v5098
        %5105 = vmatprep.subr.mxu0 0.0
        %5106 = vmatpush1.xpose.msra.mxu0 %v5101
        %5107 = vmatprep.subr.mxu0 0.0
        %5108 = vmatpush1.xpose.msra.mxu0 0.0
        %5109 = vmatprep.subr.mxu0 0.0
        %5110 = vmatpush1.xpose.msra.mxu0 0.0
        %5111 = vmatprep.subr.mxu0 0.0
        %5112 = vmatpush1.xpose.msra.mxu0 0.0
        %5113 = vmatprep.subr.mxu0 0.0
        %5114 = vmatpush1.xpose.msra.mxu0 0.0
        %5115 = vmatprep.subr.mxu0 0.0
        %5116 = vmatpush1.xpose.msra.mxu0 0.0
        %5117 = vmatprep.subr.mxu0 0.0
        %5118 = vmatpush1.xpose.msra.mxu0 0.0
        %5119 = vmatprep.subr.mxu0 0.0
        %5120 = vmatpush1.xpose.msra.mxu0 0.0
        %5121 = vmatprep.subr.mxu0 0.0
        %5122 = vmatpush1.xpose.msra.mxu0 0.0
        %5123 = vmatprep.subr.mxu0 0.0
        %5124 = vmatpush1.xpose.msra.mxu0 0.0
        %5125 = vmatprep.subr.mxu0 0.0
        %5126 = vmatpush1.xpose.msra.mxu0 0.0
        %5127 = vmatprep.subr.mxu0 0.0
        %5128 = vmatpush1.xpose.msra.mxu0 0.0
        %5129 = vmatprep.subr.mxu0 0.0
        %5130 = vmatpush1.xpose.msra.mxu0 0.0
        %5131 = vmatprep.subr.mxu0 0.0
        %5132 = vmatpush1.xpose.msra.mxu0 0.0
        %5133 = vmatprep.subr.mxu0 0.0
        %5134 = vmatpush1.xpose.msra.mxu0 0.0
        %5135 = vmatprep.subr.mxu0 0.0
        %5136 = vmatpush1.xpose.msra.mxu0 0.0
        %5137 = vmatprep.subr.mxu0 0.0
        %5138 = vmatpush1.xpose.msra.mxu0 0.0
        %5139 = vmatprep.subr.mxu0 0.0
        %5140 = vmatpush1.xpose.msra.mxu0 0.0
        %5141 = vmatprep.subr.mxu0 0.0
        %5142 = vmatpush1.xpose.msra.mxu0 0.0
        %5143 = vmatprep.subr.mxu0 0.0
        %5144 = vmatpush1.xpose.msra.mxu0 0.0
        %5145 = vmatprep.subr.mxu0 0.0
        %5146 = vmatpush1.xpose.msra.mxu0 0.0
        %5147 = vmatprep.subr.mxu0 0.0
        %5148 = vmatpush1.xpose.msra.mxu0 0.0
        %5149 = vmatprep.subr.mxu0 0.0
        %5150 = vmatpush1.xpose.msra.mxu0 0.0
        %5151 = vmatprep.subr.mxu0 0.0
        %5152 = vmatpush1.xpose.msra.mxu0 0.0
        %5153 = vmatprep.subr.mxu0 0.0
        %5154 = vmatpush1.xpose.msra.mxu0 0.0
        %5155 = vmatprep.subr.mxu0 0.0
        %5156 = vmatpush1.xpose.msra.mxu0 0.0
        %5157 = vmatprep.subr.mxu0 0.0
        %5158 = vmatpush1.xpose.msra.mxu0 0.0
        %5159 = vmatprep.subr.mxu0 0.0
        %5160 = vmatpush1.xpose.msra.mxu0 0.0
        %5161 = vmatprep.subr.mxu0 0.0
        %5162 = vmatpush1.xpose.msra.mxu0 0.0
        %5163 = vmatprep.subr.mxu0 0.0
        %5164 = vmatpush1.xpose.msra.mxu0 0.0
        %5165 = vmatprep.subr.mxu0 0.0
        %5166 = vmatpush1.xpose.msra.mxu0 0.0
        %5167 = vmatprep.mubr.f32.mxu0 0.0
        %5168 = vmatmul.mubr.f32.gmra.mrb[0].mxu0 %v5092
        %v5169 = vpop.f32.mrb[0].mxu0
        %v5170 = vadd.f32 0.0, %v5169
        %v5171 = vpop.f32.mrb[0].mxu0
        %5172 = vmatprep.mubr.f32.mxu0 0.0
        %5173 = vmatmul.mubr.f32.gmra.mrb[0].mxu0 %v5095
        %v5174 = vpop.f32.mrb[0].mxu0
        %v5175 = vadd.f32 0.0, %v5174
        %v5176 = vpop.f32.mrb[0].mxu0
        %5177 = vdwg.mxu0
        %v5178 = vmul.f32 %v5170, 0.25
        %v5179 = vmul.f32 %v5175, 0.25
        %v5180 = vsel %vm905, %v5178, -1e+30
        %v5181 = vsel %vm905, %v5179, -1e+30
        %v5182 = vsel %vm810, %v5180, -inf
        %5183 = vmax.xlane.f32.xlu0 %v5182
        %v5184 = vpop.xlane.xlu0 %5183
        %v5185 = vsel %vm810, %v5181, -inf
        %5186 = vmax.xlane.f32.xlu0 %v5185
        %v5187 = vpop.xlane.xlu0 %5186
        %v5188 = vsub.f32 %v5180, %v5184
        %v5189 = vsub.f32 %v5181, %v5187
        %v5190 = vmul.f32 %v5188, 1.442695
        %v5191 = vpow.pop %v5190
        %v5192 = vmul.f32 %v5189, 1.442695
        %v5193 = vpow.pop %v5192
        %v5194 = vsel %vm810, %v5191, 0.0
        %5195 = vadd.xlane.f32.xlu0 %v5194
        %v5196 = vpop.xlane.xlu0 %5195
        %v5197 = vsel %vm810, %v5193, 0.0
        %5198 = vadd.xlane.f32.xlu0 %v5197
        %v5199 = vpop.xlane.xlu0 %5198
        %v5200 = vrcp.pop %v5196
        %v5201 = vrcp.pop %v5199
        %v5202 = vmul.f32 %v5191, %v5200
        %v5203 = vmul.f32 %v5193, %v5201
        %v5205 = vsel %vm810, %v5202, 0
        %v5208 = vsel %vm810, %v5203, 0
        %5210 = vmatprep.subr.mxu0 0.0
        %5211 = vmatpush1.msra.mxu0 %v5083
        %5212 = vmatprep.subr.mxu0 0.0
        %5213 = vmatpush1.msra.mxu0 %v5088
        %5214 = vmatprep.subr.mxu0 0.0
        %5215 = vmatpush1.msra.mxu0 0.0
        %5216 = vmatprep.subr.mxu0 0.0
        %5217 = vmatpush1.msra.mxu0 0.0
        %5218 = vmatprep.subr.mxu0 0.0
        %5219 = vmatpush1.msra.mxu0 0.0
        %5220 = vmatprep.subr.mxu0 0.0
        %5221 = vmatpush1.msra.mxu0 0.0
        %5222 = vmatprep.subr.mxu0 0.0
        %5223 = vmatpush1.msra.mxu0 0.0
        %5224 = vmatprep.subr.mxu0 0.0
        %5225 = vmatpush1.msra.mxu0 0.0
        %5226 = vmatprep.subr.mxu0 0.0
        %5227 = vmatpush1.msra.mxu0 0.0
        %5228 = vmatprep.subr.mxu0 0.0
        %5229 = vmatpush1.msra.mxu0 0.0
        %5230 = vmatprep.subr.mxu0 0.0
        %5231 = vmatpush1.msra.mxu0 0.0
        %5232 = vmatprep.subr.mxu0 0.0
        %5233 = vmatpush1.msra.mxu0 0.0
        %5234 = vmatprep.subr.mxu0 0.0
        %5235 = vmatpush1.msra.mxu0 0.0
        %5236 = vmatprep.subr.mxu0 0.0
        %5237 = vmatpush1.msra.mxu0 0.0
        %5238 = vmatprep.subr.mxu0 0.0
        %5239 = vmatpush1.msra.mxu0 0.0
        %5240 = vmatprep.subr.mxu0 0.0
        %5241 = vmatpush1.msra.mxu0 0.0
        %5242 = vmatprep.subr.mxu0 0.0
        %5243 = vmatpush1.msra.mxu0 0.0
        %5244 = vmatprep.subr.mxu0 0.0
        %5245 = vmatpush1.msra.mxu0 0.0
        %5246 = vmatprep.subr.mxu0 0.0
        %5247 = vmatpush1.msra.mxu0 0.0
        %5248 = vmatprep.subr.mxu0 0.0
        %5249 = vmatpush1.msra.mxu0 0.0
        %5250 = vmatprep.subr.mxu0 0.0
        %5251 = vmatpush1.msra.mxu0 0.0
        %5252 = vmatprep.subr.mxu0 0.0
        %5253 = vmatpush1.msra.mxu0 0.0
        %5254 = vmatprep.subr.mxu0 0.0
        %5255 = vmatpush1.msra.mxu0 0.0
        %5256 = vmatprep.subr.mxu0 0.0
        %5257 = vmatpush1.msra.mxu0 0.0
        %5258 = vmatprep.subr.mxu0 0.0
        %5259 = vmatpush1.msra.mxu0 0.0
        %5260 = vmatprep.subr.mxu0 0.0
        %5261 = vmatpush1.msra.mxu0 0.0
        %5262 = vmatprep.subr.mxu0 0.0
        %5263 = vmatpush1.msra.mxu0 0.0
        %5264 = vmatprep.subr.mxu0 0.0
        %5265 = vmatpush1.msra.mxu0 0.0
        %5266 = vmatprep.subr.mxu0 0.0
        %5267 = vmatpush1.msra.mxu0 0.0
        %5268 = vmatprep.subr.mxu0 0.0
        %5269 = vmatpush1.msra.mxu0 0.0
        %5270 = vmatprep.subr.mxu0 0.0
        %5271 = vmatpush1.msra.mxu0 0.0
        %5272 = vmatprep.subr.mxu0 0.0
        %5273 = vmatpush1.msra.mxu0 0.0
        %5274 = vmatprep.mubr.f32.mxu0 0.0
        %5275 = vmatmul.mubr.f32.gmra.mrb[0].mxu0 %v5205
        %v5276 = vpop.f32.mrb[0].mxu0
        %v5277 = vadd.f32 0.0, %v5276
        %v5278 = vpop.f32.mrb[0].mxu0
        %5279 = vmatprep.mubr.f32.mxu0 0.0
        %5280 = vmatmul.mubr.f32.gmra.mrb[0].mxu0 %v5208
        %v5281 = vpop.f32.mrb[0].mxu0
        %v5282 = vadd.f32 0.0, %v5281
        %v5283 = vpop.f32.mrb[0].mxu0
        %5284 = vdwg.mxu0
        %s5285 = scalar_lea.vmem %s6, 112
        %v5286 = vld [vmem:[%s5285] sm:$0xff]
        %v5287 = vld [vmem:[%s5285 + $0x8] sm:$0xff]
        %v5289 = vsel %vm810, %v5277, 0
        %v5292 = vsel %vm810, %v5282, 0
        %5294 = vmatprep.subr.mxu0 0.0
        %5295 = vmatpush1.msra.mxu0 %v5286
        %5296 = vmatprep.subr.mxu0 0.0
        %5297 = vmatpush1.msra.mxu0 %v5287
        %5298 = vmatprep.subr.mxu0 0.0
        %5299 = vmatpush1.msra.mxu0 0.0
        %5300 = vmatprep.subr.mxu0 0.0
        %5301 = vmatpush1.msra.mxu0 0.0
        %5302 = vmatprep.subr.mxu0 0.0
        %5303 = vmatpush1.msra.mxu0 0.0
        %5304 = vmatprep.subr.mxu0 0.0
        %5305 = vmatpush1.msra.mxu0 0.0
        %5306 = vmatprep.subr.mxu0 0.0
        %5307 = vmatpush1.msra.mxu0 0.0
        %5308 = vmatprep.subr.mxu0 0.0
        %5309 = vmatpush1.msra.mxu0 0.0
        %5310 = vmatprep.subr.mxu0 0.0
        %5311 = vmatpush1.msra.mxu0 0.0
        %5312 = vmatprep.subr.mxu0 0.0
        %5313 = vmatpush1.msra.mxu0 0.0
        %5314 = vmatprep.subr.mxu0 0.0
        %5315 = vmatpush1.msra.mxu0 0.0
        %5316 = vmatprep.subr.mxu0 0.0
        %5317 = vmatpush1.msra.mxu0 0.0
        %5318 = vmatprep.subr.mxu0 0.0
        %5319 = vmatpush1.msra.mxu0 0.0
        %5320 = vmatprep.subr.mxu0 0.0
        %5321 = vmatpush1.msra.mxu0 0.0
        %5322 = vmatprep.subr.mxu0 0.0
        %5323 = vmatpush1.msra.mxu0 0.0
        %5324 = vmatprep.subr.mxu0 0.0
        %5325 = vmatpush1.msra.mxu0 0.0
        %5326 = vmatprep.subr.mxu0 0.0
        %5327 = vmatpush1.msra.mxu0 0.0
        %5328 = vmatprep.subr.mxu0 0.0
        %5329 = vmatpush1.msra.mxu0 0.0
        %5330 = vmatprep.subr.mxu0 0.0
        %5331 = vmatpush1.msra.mxu0 0.0
        %5332 = vmatprep.subr.mxu0 0.0
        %5333 = vmatpush1.msra.mxu0 0.0
        %5334 = vmatprep.subr.mxu0 0.0
        %5335 = vmatpush1.msra.mxu0 0.0
        %5336 = vmatprep.subr.mxu0 0.0
        %5337 = vmatpush1.msra.mxu0 0.0
        %5338 = vmatprep.subr.mxu0 0.0
        %5339 = vmatpush1.msra.mxu0 0.0
        %5340 = vmatprep.subr.mxu0 0.0
        %5341 = vmatpush1.msra.mxu0 0.0
        %5342 = vmatprep.subr.mxu0 0.0
        %5343 = vmatpush1.msra.mxu0 0.0
        %5344 = vmatprep.subr.mxu0 0.0
        %5345 = vmatpush1.msra.mxu0 0.0
        %5346 = vmatprep.subr.mxu0 0.0
        %5347 = vmatpush1.msra.mxu0 0.0
        %5348 = vmatprep.subr.mxu0 0.0
        %5349 = vmatpush1.msra.mxu0 0.0
        %5350 = vmatprep.subr.mxu0 0.0
        %5351 = vmatpush1.msra.mxu0 0.0
        %5352 = vmatprep.subr.mxu0 0.0
        %5353 = vmatpush1.msra.mxu0 0.0
        %5354 = vmatprep.subr.mxu0 0.0
        %5355 = vmatpush1.msra.mxu0 0.0
        %5356 = vmatprep.subr.mxu0 0.0
        %5357 = vmatpush1.msra.mxu0 0.0
        %5358 = vmatprep.mubr.f32.mxu0 0.0
        %5359 = vmatmul.mubr.f32.gmra.mrb[0].mxu0 %v5289
        %v5360 = vpop.f32.mrb[0].mxu0
        %v5361 = vadd.f32 0.0, %v5360
        %v5362 = vpop.f32.mrb[0].mxu0
        %5363 = vmatprep.mubr.f32.mxu0 0.0
        %5364 = vmatmul.mubr.f32.gmra.mrb[0].mxu0 %v5292
        %v5365 = vpop.f32.mrb[0].mxu0
        %v5366 = vadd.f32 0.0, %v5365
        %v5367 = vpop.f32.mrb[0].mxu0
        %5368 = vdwg.mxu0
        %v5369 = vadd.f32 %v4813, %v5361
        %v5370 = vadd.f32 %v4814, %v5366
        %s5371 = scalar_lea.vmem %s7, 1
        %v5372 = vld [vmem:[%s5371] sm:$0x1]
        %v5374 = vlaneseq
        %v5375 = vshrl.u32 %v5374, 7
        %v5376 = vsub.s32 0, %v5375
        %v5377 = vrot.slane %v5372, %v5376
        %v5379 = vadd.f32 %v5369, %v5377
        %v5380 = vadd.f32 %v5370, %v5377
        %v5381 = vadd.f32 %v3141, %v5379
        %v5382 = vadd.f32 %v3142, %v5380
        %v5383 = vsel %vm544, %v5381, 0.0
        %5384 = vadd.xlane.f32.xlu0 %v5383
        %v5385 = vpop.xlane.xlu0 %5384
        %v5386 = vsel %vm544, %v5382, 0.0
        %5387 = vadd.xlane.f32.xlu0 %v5386
        %v5388 = vpop.xlane.xlu0 %5387
        %v5389 = vmul.f32 %v5385, %v2777
        %v5390 = vmul.f32 %v5388, %v2777
        %v5391 = vsub.f32 %v5381, %v5389
        %v5392 = vsub.f32 %v5382, %v5390
        %v5393 = vmul.f32 %v5391, %v5391
        %v5394 = vmul.f32 %v5392, %v5392
        %v5395 = vsel %vm544, %v5393, 0.0
        %5396 = vadd.xlane.f32.xlu0 %v5395
        %v5397 = vpop.xlane.xlu0 %5396
        %v5398 = vsel %vm544, %v5394, 0.0
        %5399 = vadd.xlane.f32.xlu0 %v5398
        %v5400 = vpop.xlane.xlu0 %5399
        %v5401 = vmul.f32 %v5397, %v2777
        %v5402 = vmul.f32 %v5400, %v2777
        %v5403 = vadd.f32 %v5401, 1e-05
        %v5404 = vadd.f32 %v5402, 1e-05
        %v5405 = vrsqrt.pop %v5403
        %v5406 = vrsqrt.pop %v5404
        %v5407 = vmul.f32 %v5391, %v5405
        %v5408 = vmul.f32 %v5392, %v5406
        %v5409 = vlaneseq
        %v5410 = vshrl.u32 %v5409, 7
        %v5411 = vsub.s32 0, %v5410
        %v5412 = vrot.slane %v3144, %v5411
        %v5413 = vmul.f32 %v5407, %v5412
        %v5414 = vmul.f32 %v5408, %v5412
        %v5415 = vlaneseq
        %v5416 = vshrl.u32 %v5415, 7
        %v5417 = vsub.s32 1, %v5416
        %v5418 = vrot.slane %v3144, %v5417
        %v5419 = vadd.f32 %v5413, %v5418
        %v5420 = vadd.f32 %v5414, %v5418
        %v5421 = vld [vmem:[%s523 + $0x1] sm:$0x1]
        %v5422 = vlaneseq
        %v5423 = vshrl.u32 %v5422, 7
        %v5424 = vsub.s32 0, %v5423
        %v5425 = vrot.slane %v5421, %v5424
        %v5426 = vadd.f32 %v5419, %v5425
        %v5427 = vadd.f32 %v5420, %v5425
        %v5428 = vsel %vm544, %v5426, 0.0
        %5429 = vadd.xlane.f32.xlu0 %v5428
        %v5430 = vpop.xlane.xlu0 %5429
        %v5431 = vsel %vm544, %v5427, 0.0
        %5432 = vadd.xlane.f32.xlu0 %v5431
        %v5433 = vpop.xlane.xlu0 %5432
        %v5434 = vmul.f32 %v5430, %v2777
        %v5435 = vmul.f32 %v5433, %v2777
        %v5436 = vsub.f32 %v5426, %v5434
        %v5437 = vsub.f32 %v5427, %v5435
        %v5438 = vmul.f32 %v5436, %v5436
        %v5439 = vmul.f32 %v5437, %v5437
        %v5440 = vsel %vm544, %v5438, 0.0
        %5441 = vadd.xlane.f32.xlu0 %v5440
        %v5442 = vpop.xlane.xlu0 %5441
        %v5443 = vsel %vm544, %v5439, 0.0
        %5444 = vadd.xlane.f32.xlu0 %v5443
        %v5445 = vpop.xlane.xlu0 %5444
        %v5446 = vmul.f32 %v5442, %v2777
        %v5447 = vmul.f32 %v5445, %v2777
        %v5448 = vadd.f32 %v5446, 1e-05
        %v5449 = vadd.f32 %v5447, 1e-05
        %v5450 = vrsqrt.pop %v5448
        %v5451 = vrsqrt.pop %v5449
        %v5452 = vmul.f32 %v5436, %v5450
        %v5453 = vmul.f32 %v5437, %v5451
        %v5454 = vlaneseq
        %v5455 = vshrl.u32 %v5454, 7
        %v5456 = vsub.s32 2, %v5455
        %v5457 = vrot.slane %v3144, %v5456
        %v5458 = vmul.f32 %v5452, %v5457
        %v5459 = vmul.f32 %v5453, %v5457
        %v5460 = vlaneseq
        %v5461 = vshrl.u32 %v5460, 7
        %v5462 = vsub.s32 3, %v5461
        %v5463 = vrot.slane %v3144, %v5462
        %v5464 = vadd.f32 %v5458, %v5463
        %v5465 = vadd.f32 %v5459, %v5463
        %s5466 = scalar_lea.vmem %s9, 64
        %v5467 = vld [vmem:[%s5466] sm:$0xff]
        %v5468 = vld [vmem:[%s5466 + $0x8] sm:$0xff]
        %v5469 = vld [vmem:[%s5466 + $0x10] sm:$0xff]
        %v5470 = vld [vmem:[%s5466 + $0x18] sm:$0xff]
        %v5471 = vld [vmem:[%s5466 + $0x20] sm:$0xff]
        %v5472 = vld [vmem:[%s5466 + $0x28] sm:$0xff]
        %v5473 = vld [vmem:[%s5466 + $0x30] sm:$0xff]
        %v5474 = vld [vmem:[%s5466 + $0x38] sm:$0xff]
        %s5475 = scalar_lea.vmem %s10, 1
        %v5476 = vld [vmem:[%s5475] sm:$0x1]
        %v5478 = vlaneseq
        %v5479 = vshrl.u32 %v5478, 7
        %v5480 = vsub.s32 0, %v5479
        %v5481 = vrot.slane %v5476, %v5480
        %v5484 = vsel %vm544, %v5464, 0
        %v5487 = vsel %vm544, %v5465, 0
        %5489 = vmatprep.subr.mxu0 0.0
        %5490 = vmatpush1.msra.mxu0 %v5467
        %5491 = vmatprep.subr.mxu0 0.0
        %5492 = vmatpush1.msra.mxu0 %v5468
        %5493 = vmatprep.subr.mxu0 0.0
        %5494 = vmatpush1.msra.mxu0 %v5469
        %5495 = vmatprep.subr.mxu0 0.0
        %5496 = vmatpush1.msra.mxu0 %v5470
        %5497 = vmatprep.subr.mxu0 0.0
        %5498 = vmatpush1.msra.mxu0 %v5471
        %5499 = vmatprep.subr.mxu0 0.0
        %5500 = vmatpush1.msra.mxu0 %v5472
        %5501 = vmatprep.subr.mxu0 0.0
        %5502 = vmatpush1.msra.mxu0 %v5473
        %5503 = vmatprep.subr.mxu0 0.0
        %5504 = vmatpush1.msra.mxu0 %v5474
        %5505 = vmatprep.subr.mxu0 0.0
        %5506 = vmatpush1.msra.mxu0 0.0
        %5507 = vmatprep.subr.mxu0 0.0
        %5508 = vmatpush1.msra.mxu0 0.0
        %5509 = vmatprep.subr.mxu0 0.0
        %5510 = vmatpush1.msra.mxu0 0.0
        %5511 = vmatprep.subr.mxu0 0.0
        %5512 = vmatpush1.msra.mxu0 0.0
        %5513 = vmatprep.subr.mxu0 0.0
        %5514 = vmatpush1.msra.mxu0 0.0
        %5515 = vmatprep.subr.mxu0 0.0
        %5516 = vmatpush1.msra.mxu0 0.0
        %5517 = vmatprep.subr.mxu0 0.0
        %5518 = vmatpush1.msra.mxu0 0.0
        %5519 = vmatprep.subr.mxu0 0.0
        %5520 = vmatpush1.msra.mxu0 0.0
        %5521 = vmatprep.subr.mxu0 0.0
        %5522 = vmatpush1.msra.mxu0 0.0
        %5523 = vmatprep.subr.mxu0 0.0
        %5524 = vmatpush1.msra.mxu0 0.0
        %5525 = vmatprep.subr.mxu0 0.0
        %5526 = vmatpush1.msra.mxu0 0.0
        %5527 = vmatprep.subr.mxu0 0.0
        %5528 = vmatpush1.msra.mxu0 0.0
        %5529 = vmatprep.subr.mxu0 0.0
        %5530 = vmatpush1.msra.mxu0 0.0
        %5531 = vmatprep.subr.mxu0 0.0
        %5532 = vmatpush1.msra.mxu0 0.0
        %5533 = vmatprep.subr.mxu0 0.0
        %5534 = vmatpush1.msra.mxu0 0.0
        %5535 = vmatprep.subr.mxu0 0.0
        %5536 = vmatpush1.msra.mxu0 0.0
        %5537 = vmatprep.subr.mxu0 0.0
        %5538 = vmatpush1.msra.mxu0 0.0
        %5539 = vmatprep.subr.mxu0 0.0
        %5540 = vmatpush1.msra.mxu0 0.0
        %5541 = vmatprep.subr.mxu0 0.0
        %5542 = vmatpush1.msra.mxu0 0.0
        %5543 = vmatprep.subr.mxu0 0.0
        %5544 = vmatpush1.msra.mxu0 0.0
        %5545 = vmatprep.subr.mxu0 0.0
        %5546 = vmatpush1.msra.mxu0 0.0
        %5547 = vmatprep.subr.mxu0 0.0
        %5548 = vmatpush1.msra.mxu0 0.0
        %5549 = vmatprep.subr.mxu0 0.0
        %5550 = vmatpush1.msra.mxu0 0.0
        %5551 = vmatprep.subr.mxu0 0.0
        %5552 = vmatpush1.msra.mxu0 0.0
        %5553 = vmatprep.mubr.f32.mxu0 0.0
        %5554 = vmatmul.mubr.f32.gmra.mrb[0].mxu0 %v5484
        %v5555 = vpop.f32.mrb[0].mxu0
        %v5556 = vadd.f32 %v5481, %v5555
        %v5557 = vpop.f32.mrb[0].mxu0
        %5558 = vmatprep.mubr.f32.mxu0 0.0
        %5559 = vmatmul.mubr.f32.gmra.mrb[0].mxu0 %v5487
        %v5560 = vpop.f32.mrb[0].mxu0
        %v5561 = vadd.f32 %v5481, %v5560
        %v5562 = vpop.f32.mrb[0].mxu0
        %5563 = vdwg.mxu0
        %v5564 = vmul.f32 %v5556, 0.5
        %v5565 = vmul.f32 %v5561, 0.5
        %v5566 = vmul.f32 %v5556, 0.70710677
        %v5567 = vmul.f32 %v5561, 0.70710677
        %v5568 = vand.u32 2147483647, %v5566
        %v5569 = vand.u32 2147483647, %v5567
        %v5570 = vmul.f32 %v5568, 0.3275911
        %v5571 = vmul.f32 %v5569, 0.3275911
        %v5572 = vadd.f32 %v5570, 1.0
        %v5573 = vadd.f32 %v5571, 1.0
        %v5574 = vrcp.pop %v5572
        %v5575 = vmul.f32 1.0, %v5574
        %v5576 = vrcp.pop %v5573
        %v5577 = vmul.f32 1.0, %v5576
        %v5578 = vmul.f32 %v5575, 1.0614054
        %v5579 = vmul.f32 %v5577, 1.0614054
        %v5580 = vadd.f32 %v5578, -1.4531521
        %v5581 = vadd.f32 %v5579, -1.4531521
        %v5582 = vmul.f32 %v5580, %v5575
        %v5583 = vmul.f32 %v5581, %v5577
        %v5584 = vadd.f32 %v5582, 1.4214138
        %v5585 = vadd.f32 %v5583, 1.4214138
        %v5586 = vmul.f32 %v5584, %v5575
        %v5587 = vmul.f32 %v5585, %v5577
        %v5588 = vadd.f32 %v5586, -0.28449672
        %v5589 = vadd.f32 %v5587, -0.28449672
        %v5590 = vmul.f32 %v5588, %v5575
        %v5591 = vmul.f32 %v5589, %v5577
        %v5592 = vadd.f32 %v5590, 0.2548296
        %v5593 = vadd.f32 %v5591, 0.2548296
        %v5594 = vmul.f32 %v5592, %v5575
        %v5595 = vmul.f32 %v5593, %v5577
        %v5596 = vsub.f32 0.0, %v5568
        %v5597 = vsub.f32 0.0, %v5569
        %v5598 = vmul.f32 %v5596, %v5568
        %v5599 = vmul.f32 %v5597, %v5569
        %v5600 = vmul.f32 %v5598, 1.442695
        %v5601 = vpow.pop %v5600
        %v5602 = vmul.f32 %v5599, 1.442695
        %v5603 = vpow.pop %v5602
        %v5604 = vmul.f32 %v5594, %v5601
        %v5605 = vmul.f32 %v5595, %v5603
        %v5606 = vsub.f32 1.0, %v5604
        %v5607 = vsub.f32 1.0, %v5605
        %vm5608 = vcmp.ge.f32.partialorder %v5566, 0.0
        %vm5609 = vcmp.ge.f32.partialorder %v5567, 0.0
        %v5610 = vsub.f32 0.0, %v5606
        %v5611 = vsub.f32 0.0, %v5607
        %v5612 = vsel %vm5608, %v5606, %v5610
        %v5613 = vsel %vm5609, %v5607, %v5611
        %v5614 = vadd.f32 %v5612, 1.0
        %v5615 = vadd.f32 %v5613, 1.0
        %v5616 = vmul.f32 %v5564, %v5614
        %v5617 = vmul.f32 %v5565, %v5615
        %s5618 = scalar_lea.vmem %s11, 128
        %v5619 = vld [vmem:[%s5618] sm:$0xff]
        %v5620 = vld [vmem:[%s5618 + $0x8] sm:$0xff]
        %v5621 = vld [vmem:[%s5618 + $0x10] sm:$0xff]
        %v5622 = vld [vmem:[%s5618 + $0x18] sm:$0xff]
        %v5623 = vld [vmem:[%s5618 + $0x20] sm:$0xff]
        %v5624 = vld [vmem:[%s5618 + $0x28] sm:$0xff]
        %v5625 = vld [vmem:[%s5618 + $0x30] sm:$0xff]
        %v5626 = vld [vmem:[%s5618 + $0x38] sm:$0xff]
        %v5627 = vld [vmem:[%s5618 + $0x40] sm:$0xff]
        %v5628 = vld [vmem:[%s5618 + $0x48] sm:$0xff]
        %v5629 = vld [vmem:[%s5618 + $0x50] sm:$0xff]
        %v5630 = vld [vmem:[%s5618 + $0x58] sm:$0xff]
        %v5631 = vld [vmem:[%s5618 + $0x60] sm:$0xff]
        %v5632 = vld [vmem:[%s5618 + $0x68] sm:$0xff]
        %v5633 = vld [vmem:[%s5618 + $0x70] sm:$0xff]
        %v5634 = vld [vmem:[%s5618 + $0x78] sm:$0xff]
        %s5635 = scalar_lea.vmem %s12, 1
        %v5636 = vld [vmem:[%s5635] sm:$0x1]
        %v5638 = vlaneseq
        %v5639 = vshrl.u32 %v5638, 7
        %v5640 = vsub.s32 0, %v5639
        %v5641 = vrot.slane %v5636, %v5640
        %5643 = vmatprep.subr.mxu0 0.0
        %5644 = vmatpush1.msra.mxu0 %v5619
        %5645 = vmatprep.subr.mxu0 0.0
        %5646 = vmatpush1.msra.mxu0 %v5620
        %5647 = vmatprep.subr.mxu0 0.0
        %5648 = vmatpush1.msra.mxu0 %v5621
        %5649 = vmatprep.subr.mxu0 0.0
        %5650 = vmatpush1.msra.mxu0 %v5622
        %5651 = vmatprep.subr.mxu0 0.0
        %5652 = vmatpush1.msra.mxu0 %v5623
        %5653 = vmatprep.subr.mxu0 0.0
        %5654 = vmatpush1.msra.mxu0 %v5624
        %5655 = vmatprep.subr.mxu0 0.0
        %5656 = vmatpush1.msra.mxu0 %v5625
        %5657 = vmatprep.subr.mxu0 0.0
        %5658 = vmatpush1.msra.mxu0 %v5626
        %5659 = vmatprep.subr.mxu0 0.0
        %5660 = vmatpush1.msra.mxu0 %v5627
        %5661 = vmatprep.subr.mxu0 0.0
        %5662 = vmatpush1.msra.mxu0 %v5628
        %5663 = vmatprep.subr.mxu0 0.0
        %5664 = vmatpush1.msra.mxu0 %v5629
        %5665 = vmatprep.subr.mxu0 0.0
        %5666 = vmatpush1.msra.mxu0 %v5630
        %5667 = vmatprep.subr.mxu0 0.0
        %5668 = vmatpush1.msra.mxu0 %v5631
        %5669 = vmatprep.subr.mxu0 0.0
        %5670 = vmatpush1.msra.mxu0 %v5632
        %5671 = vmatprep.subr.mxu0 0.0
        %5672 = vmatpush1.msra.mxu0 %v5633
        %5673 = vmatprep.subr.mxu0 0.0
        %5674 = vmatpush1.msra.mxu0 %v5634
        %5675 = vmatprep.subr.mxu0 0.0
        %5676 = vmatpush1.msra.mxu0 0.0
        %5677 = vmatprep.subr.mxu0 0.0
        %5678 = vmatpush1.msra.mxu0 0.0
        %5679 = vmatprep.subr.mxu0 0.0
        %5680 = vmatpush1.msra.mxu0 0.0
        %5681 = vmatprep.subr.mxu0 0.0
        %5682 = vmatpush1.msra.mxu0 0.0
        %5683 = vmatprep.subr.mxu0 0.0
        %5684 = vmatpush1.msra.mxu0 0.0
        %5685 = vmatprep.subr.mxu0 0.0
        %5686 = vmatpush1.msra.mxu0 0.0
        %5687 = vmatprep.subr.mxu0 0.0
        %5688 = vmatpush1.msra.mxu0 0.0
        %5689 = vmatprep.subr.mxu0 0.0
        %5690 = vmatpush1.msra.mxu0 0.0
        %5691 = vmatprep.subr.mxu0 0.0
        %5692 = vmatpush1.msra.mxu0 0.0
        %5693 = vmatprep.subr.mxu0 0.0
        %5694 = vmatpush1.msra.mxu0 0.0
        %5695 = vmatprep.subr.mxu0 0.0
        %5696 = vmatpush1.msra.mxu0 0.0
        %5697 = vmatprep.subr.mxu0 0.0
        %5698 = vmatpush1.msra.mxu0 0.0
        %5699 = vmatprep.subr.mxu0 0.0
        %5700 = vmatpush1.msra.mxu0 0.0
        %5701 = vmatprep.subr.mxu0 0.0
        %5702 = vmatpush1.msra.mxu0 0.0
        %5703 = vmatprep.subr.mxu0 0.0
        %5704 = vmatpush1.msra.mxu0 0.0
        %5705 = vmatprep.subr.mxu0 0.0
        %5706 = vmatpush1.msra.mxu0 0.0
        %5707 = vmatprep.mubr.f32.mxu0 0.0
        %5708 = vmatmul.mubr.f32.gmra.mrb[0].mxu0 %v5616
        %v5709 = vpop.f32.mrb[0].mxu0
        %v5710 = vadd.f32 %v5641, %v5709
        %v5711 = vpop.f32.mrb[0].mxu0
        %5712 = vmatprep.mubr.f32.mxu0 0.0
        %5713 = vmatmul.mubr.f32.gmra.mrb[0].mxu0 %v5617
        %v5714 = vpop.f32.mrb[0].mxu0
        %v5715 = vadd.f32 %v5641, %v5714
        %v5716 = vpop.f32.mrb[0].mxu0
        %5717 = vdwg.mxu0
        %v5718 = vadd.f32 %v5464, %v5710
        %v5719 = vadd.f32 %v5465, %v5715
        %v5720 = vsel %vm544, %v5718, 0.0
        %5721 = vadd.xlane.f32.xlu0 %v5720
        %v5722 = vpop.xlane.xlu0 %5721
        %v5723 = vsel %vm544, %v5719, 0.0
        %5724 = vadd.xlane.f32.xlu0 %v5723
        %v5725 = vpop.xlane.xlu0 %5724
        %v5726 = vmul.f32 %v5722, %v2777
        %v5727 = vmul.f32 %v5725, %v2777
        %v5728 = vsub.f32 %v5718, %v5726
        %v5729 = vsub.f32 %v5719, %v5727
        %v5730 = vmul.f32 %v5728, %v5728
        %v5731 = vmul.f32 %v5729, %v5729
        %v5732 = vsel %vm544, %v5730, 0.0
        %5733 = vadd.xlane.f32.xlu0 %v5732
        %v5734 = vpop.xlane.xlu0 %5733
        %v5735 = vsel %vm544, %v5731, 0.0
        %5736 = vadd.xlane.f32.xlu0 %v5735
        %v5737 = vpop.xlane.xlu0 %5736
        %v5738 = vmul.f32 %v5734, %v2777
        %v5739 = vmul.f32 %v5737, %v2777
        %v5740 = vadd.f32 %v5738, 1e-05
        %v5741 = vadd.f32 %v5739, 1e-05
        %v5742 = vrsqrt.pop %v5740
        %v5743 = vrsqrt.pop %v5741
        %v5744 = vmul.f32 %v5728, %v5742
        %v5745 = vmul.f32 %v5729, %v5743
        %v5746 = vlaneseq
        %v5747 = vshrl.u32 %v5746, 7
        %v5748 = vsub.s32 4, %v5747
        %v5749 = vrot.slane %v3144, %v5748
        %v5750 = vmul.f32 %v5744, %v5749
        %v5751 = vmul.f32 %v5745, %v5749
        %v5752 = vlaneseq
        %v5753 = vshrl.u32 %v5752, 7
        %v5754 = vsub.s32 5, %v5753
        %v5755 = vrot.slane %v3144, %v5754
        %v5756 = vadd.f32 %v5750, %v5755
        %v5757 = vadd.f32 %v5751, %v5755
        %v5758 = vld [vmem:[%s13] sm:$0xff]
        %v5759 = vld [vmem:[%s13 + $0x8] sm:$0xff]
        %v5760 = vld [vmem:[%s13 + $0x10] sm:$0xff]
        %v5761 = vld [vmem:[%s13 + $0x18] sm:$0xff]
        %v5762 = vld [vmem:[%s13 + $0x20] sm:$0xff]
        %v5763 = vld [vmem:[%s13 + $0x28] sm:$0xff]
        %v5764 = vld [vmem:[%s13 + $0x30] sm:$0xff]
        %v5765 = vld [vmem:[%s13 + $0x38] sm:$0xff]
        %v5766 = vld [vmem:[%s14] sm:$0x1]
        %v5768 = vlaneseq
        %v5769 = vshrl.u32 %v5768, 7
        %v5770 = vsub.s32 0, %v5769
        %v5771 = vrot.slane %v5766, %v5770
        %v5774 = vsel %vm544, %v5756, 0
        %v5777 = vsel %vm544, %v5757, 0
        %5779 = vmatprep.subr.mxu0 0.0
        %5780 = vmatpush1.msra.mxu0 %v5758
        %5781 = vmatprep.subr.mxu0 0.0
        %5782 = vmatpush1.msra.mxu0 %v5759
        %5783 = vmatprep.subr.mxu0 0.0
        %5784 = vmatpush1.msra.mxu0 %v5760
        %5785 = vmatprep.subr.mxu0 0.0
        %5786 = vmatpush1.msra.mxu0 %v5761
        %5787 = vmatprep.subr.mxu0 0.0
        %5788 = vmatpush1.msra.mxu0 %v5762
        %5789 = vmatprep.subr.mxu0 0.0
        %5790 = vmatpush1.msra.mxu0 %v5763
        %5791 = vmatprep.subr.mxu0 0.0
        %5792 = vmatpush1.msra.mxu0 %v5764
        %5793 = vmatprep.subr.mxu0 0.0
        %5794 = vmatpush1.msra.mxu0 %v5765
        %5795 = vmatprep.subr.mxu0 0.0
        %5796 = vmatpush1.msra.mxu0 0.0
        %5797 = vmatprep.subr.mxu0 0.0
        %5798 = vmatpush1.msra.mxu0 0.0
        %5799 = vmatprep.subr.mxu0 0.0
        %5800 = vmatpush1.msra.mxu0 0.0
        %5801 = vmatprep.subr.mxu0 0.0
        %5802 = vmatpush1.msra.mxu0 0.0
        %5803 = vmatprep.subr.mxu0 0.0
        %5804 = vmatpush1.msra.mxu0 0.0
        %5805 = vmatprep.subr.mxu0 0.0
        %5806 = vmatpush1.msra.mxu0 0.0
        %5807 = vmatprep.subr.mxu0 0.0
        %5808 = vmatpush1.msra.mxu0 0.0
        %5809 = vmatprep.subr.mxu0 0.0
        %5810 = vmatpush1.msra.mxu0 0.0
        %5811 = vmatprep.subr.mxu0 0.0
        %5812 = vmatpush1.msra.mxu0 0.0
        %5813 = vmatprep.subr.mxu0 0.0
        %5814 = vmatpush1.msra.mxu0 0.0
        %5815 = vmatprep.subr.mxu0 0.0
        %5816 = vmatpush1.msra.mxu0 0.0
        %5817 = vmatprep.subr.mxu0 0.0
        %5818 = vmatpush1.msra.mxu0 0.0
        %5819 = vmatprep.subr.mxu0 0.0
        %5820 = vmatpush1.msra.mxu0 0.0
        %5821 = vmatprep.subr.mxu0 0.0
        %5822 = vmatpush1.msra.mxu0 0.0
        %5823 = vmatprep.subr.mxu0 0.0
        %5824 = vmatpush1.msra.mxu0 0.0
        %5825 = vmatprep.subr.mxu0 0.0
        %5826 = vmatpush1.msra.mxu0 0.0
        %5827 = vmatprep.subr.mxu0 0.0
        %5828 = vmatpush1.msra.mxu0 0.0
        %5829 = vmatprep.subr.mxu0 0.0
        %5830 = vmatpush1.msra.mxu0 0.0
        %5831 = vmatprep.subr.mxu0 0.0
        %5832 = vmatpush1.msra.mxu0 0.0
        %5833 = vmatprep.subr.mxu0 0.0
        %5834 = vmatpush1.msra.mxu0 0.0
        %5835 = vmatprep.subr.mxu0 0.0
        %5836 = vmatpush1.msra.mxu0 0.0
        %5837 = vmatprep.subr.mxu0 0.0
        %5838 = vmatpush1.msra.mxu0 0.0
        %5839 = vmatprep.subr.mxu0 0.0
        %5840 = vmatpush1.msra.mxu0 0.0
        %5841 = vmatprep.subr.mxu0 0.0
        %5842 = vmatpush1.msra.mxu0 0.0
        %5843 = vmatprep.mubr.f32.mxu0 0.0
        %5844 = vmatmul.mubr.f32.gmra.mrb[0].mxu0 %v5774
        %v5845 = vpop.f32.mrb[0].mxu0
        %v5846 = vadd.f32 %v5771, %v5845
        %v5847 = vpop.f32.mrb[0].mxu0
        %5848 = vmatprep.mubr.f32.mxu0 0.0
        %5849 = vmatmul.mubr.f32.gmra.mrb[0].mxu0 %v5777
        %v5850 = vpop.f32.mrb[0].mxu0
        %v5851 = vadd.f32 %v5771, %v5850
        %v5852 = vpop.f32.mrb[0].mxu0
        %5853 = vdwg.mxu0
        %v5854 = vld [vmem:[%s519] sm:$0xff]
        %v5855 = vld [vmem:[%s519 + $0x8] sm:$0xff]
        %5857 = vset.pattern.permute.xlu0 0
        %5858 = vperm.xlu0 %5857, %v5854
        %v5859 = vpop.permute.xlu0 %5858
        %5862 = vset.pattern.permute.xlu0 0
        %5863 = vperm.xlu0 %5862, %v5855
        %v5864 = vpop.permute.xlu0 %5863
        %v5866 = vmul.f32 %v5846, %v5859
        %v5867 = vmul.f32 %v5851, %v5864
        %5868 = vst [vmem:[%s511] sm:$0xff] %v5866
        %5869 = vst [vmem:[%s511 + $0x8] sm:$0xff] %v5867
        %s5870 = sand.u32 %s367, 1
        %s5871 = scalar_lea.sflag [#allocation3], %s5870
        %s5872 = sand.u32 %s367, 1
        %s5873 = smul.addr %s5872, 16
        %s5874 = scalar_lea.vmem [#allocation2], %s5873
        // Predicated region
        $region81: #{tpu_custom_call.1} parent=79 // pred_check
          %p5875 = pneg %p377
        $region82: #{tpu_custom_call.1} parent=79 // pred_check_branch
          %5877 = sbr.rel (%p5875) target = $region84
        $region83: #{tpu_custom_call.1} parent=79 // pred_region
          %s5879 = ssub.s32 256, 256
          %5880 = vsyncadd %s5871, %s5879
          %s5881 = smul.addr %s29, 2
          %s5882 = smul.addr %s5881, 128
          %s5883 = scalar_lea.hbm %s15, %s5882
          %s5884 = sshll.u32 %s5874, 4
          %s5885 = int_to_ptr.vmem [resolvable:$true] %s5884
          %5890 = dma.vmem_to_hbm [thread:$0]  %s5885, 256, %s5883, %s5871, 128, 128, 8
        $region84: #{tpu_custom_call.1} parent=79 // pred_fallthru
          _
      $region80: #{tpu_custom_call.1} parent=5 // pred_fallthru
        _
      %p5891 = scmp.le.s32.totalorder 2, %s24
      // Predicated region
      $region85: #{tpu_custom_call.1} parent=5 // pred_check
        %p5892 = pneg %p5891
      $region86: #{tpu_custom_call.1} parent=5 // pred_check_branch
        %5894 = sbr.rel (%p5892) target = $region88
      $region87: #{tpu_custom_call.1} parent=5 // pred_region
        %s5895 = ssub.s32 %s24, 2
        // Predicated region
        $region89: #{tpu_custom_call.1} parent=87 // pred_check
          %p5896 = pneg %p383
        $region90: #{tpu_custom_call.1} parent=87 // pred_check_branch
          %5898 = sbr.rel (%p5896) target = $region92
        $region91: #{tpu_custom_call.1} parent=87 // pred_region
          %s5899 = sand.u32 %s368, 1
          %s5900 = scalar_lea.sflag [#allocation3], %s5899
          %s5901 = sand.u32 %s368, 1
          %s5902 = smul.addr %s5901, 16
          %s5903 = scalar_lea.vmem [#allocation2], %s5902
          %5904 = dma.done %s5900, 256
        $region92: #{tpu_custom_call.1} parent=87 // pred_fallthru
          _
      $region88: #{tpu_custom_call.1} parent=5 // pred_fallthru
        _
    $region6: #{tpu_custom_call.1} parent=1 // loop_footer
      %s28 = sadd.s32 1, %s24
    $region7: #{tpu_custom_call.1} parent=1 // loop_footer_branch
      %23 = sbr.rel target = $region3
    $region8: #{tpu_custom_call.1} parent=1 // loop_exit
      _
    %5905 = vsyncpa [#allocation3], 1
    %s5906 = scalar_lea.sflag [#allocation3], 1
    %5907 = vsyncpa %s5906, 1

</llo_original>
